<compile_context>
chip_gen: v7x
topology: tpu7x:2x2x1
jax: 0.10.0
libtpu: 0.0.40
codegen_flags: <defaults>
</compile_context>

<pallas_src>
import jax
import jax.numpy as jnp
from jax.experimental import pallas as pl
from jax.experimental.pallas import tpu as pltpu

N_CLASSES = 5
BN_EPS = 1e-5
C_PAD = 128          # lane-dense padded channel width used for every stage
H_IN = W_IN = 32     # spatial size this fused kernel is specialized for

_VMEM = pl.BlockSpec(memory_space=pltpu.MemorySpace.VMEM)


# ------------------------------ fused kernel -------------------------------

def fused_forward_kernel(xq_ref, w1_ref, b1_ref, w2_ref, b2_ref, wl_ref,
                         bl_ref, out_ref, pool_ref, pat_ref):
    n = out_ref.shape[0]
    w1 = w1_ref[...]                                   # (9, 128)  BN1 pre-folded
    b1 = b1_ref[...]                                   # (1, 128)

    # conv1(stride 2) + ReLU restricted to one (row, col) parity of the output
    # grid.  Even rows are oh = 2r (r = 0..7), odd rows are oh = 2r-1
    # (r = 1..7); pool window r covers exactly {2r-1, 2r}, so the four phases
    # line up with the max-pool windows.  xq is the host-side mod-4 phase
    # split of the input, so every tap below is a contiguous slice.
    def conv1_relu_phase(row_odd, col_odd):
        nrow = 7 if row_odd else 8
        ncol = 7 if col_odd else 8
        acc = None
        for i in range(3):
            pi, r0 = ((i, 0) if not row_odd
                      else ((i + 2, 0) if i < 2 else (0, 1)))
            for j in range(3):
                pj, c0 = ((j, 0) if not col_odd
                          else ((j + 2, 0) if j < 2 else (0, 1)))
                lane = 4 * pi + pj
                xs = xq_ref[:, r0:r0 + nrow, c0:c0 + ncol, lane:lane + 1]
                term = xs * w1[3 * i + j:3 * i + j + 1, :]   # (n,nrow,ncol,128)
                acc = term if acc is None else acc + term
        return jnp.maximum(acc + b1, 0.0)

    # conv1 + bn1 + relu + MaxPool2d(2, stride=2, padding=1), all fused.
    # Post-ReLU values are >= 0, so the pool's -inf padding never wins and the
    # windows that only contain the even-even element are covered by the init.
    pool_ref[...] = conv1_relu_phase(False, False)                     # (n,8,8,128)
    pool_ref[:, :, 1:, :] = jnp.maximum(pool_ref[:, :, 1:, :],
                                        conv1_relu_phase(False, True))
    pool_ref[:, 1:, :, :] = jnp.maximum(pool_ref[:, 1:, :, :],
                                        conv1_relu_phase(True, False))
    pool_ref[:, 1:, 1:, :] = jnp.maximum(pool_ref[:, 1:, 1:, :],
                                         conv1_relu_phase(True, True))
    # TODO(synk): Dropout(p=0.1) is eval-mode identity (no stochastic masking).

    # conv2 im2col built directly in VMEM scratch (no HBM patch tensor).
    # Patch rows are position-major (p = 3*oh2 + ow2), batch-minor; columns
    # are tap-major (t = 3*i + j) blocks of 128 padded input channels.
    for p in range(9):
        oh2, ow2 = divmod(p, 3)
        for t in range(9):
            i, j = divmod(t, 3)
            hh = 2 * oh2 + i
            ww = 2 * ow2 + j
            for nn in range(n):
                pat_ref[p * n + nn:p * n + nn + 1,
                        t * C_PAD:(t + 1) * C_PAD] = pool_ref[nn, hh, ww:ww + 1, :]

    # conv2 + bn2 + relu: one MXU matmul, bf16 operands, f32 accumulation,
    # f32 elementwise epilogue.
    acc2 = jnp.dot(pat_ref[...].astype(jnp.bfloat16), w2_ref[...],
                   preferred_element_type=jnp.float32)                 # (9n, 128)
    y2 = jnp.maximum(acc2 + b2_ref[...], 0.0)

    # AdaptiveAvgPool2d(1): sum over the 9 spatial positions (the 1/9 factor is
    # folded into the linear weights), then the Linear layer.  The output is a
    # lane-dense (n, 128) slab; the host slices out the first 5 classes.
    s = y2[0:n, :]
    for p in range(1, 9):
        s = s + y2[p * n:(p + 1) * n, :]
    out_ref[...] = jnp.dot(s, wl_ref[...],
                           preferred_element_type=jnp.float32) + bl_ref[...]


# ----------------------------- host wrappers --------------------------------

def fold_params(p):
    """Fold conv biases + eval-mode BatchNorm into the conv weights, pad all
    channel dims to 128 lanes, pre-transpose to matmul layout, fold the 1/9
    average pool into the linear weights, and cast the conv2 weight to bf16."""
    s1 = p["bn1_gamma"] * jax.lax.rsqrt(p["bn1_var"] + BN_EPS)              # (32,)
    w1 = jnp.transpose(p["conv1_w"][:, 0], (1, 2, 0)).reshape(9, 32) * s1   # (9,32)
    w1 = jnp.zeros((9, C_PAD), jnp.float32).at[:, :32].set(w1)
    b1 = (p["conv1_b"] - p["bn1_mean"]) * s1 + p["bn1_beta"]
    b1 = jnp.zeros((1, C_PAD), jnp.float32).at[0, :32].set(b1)

    s2 = p["bn2_gamma"] * jax.lax.rsqrt(p["bn2_var"] + BN_EPS)              # (64,)
    w2 = jnp.transpose(p["conv2_w"], (2, 3, 1, 0)).reshape(9, 32, 64) * s2  # (9,32,64)
    w2 = jnp.zeros((9, C_PAD, C_PAD), jnp.float32).at[:, :32, :64].set(w2)
    w2 = w2.reshape(9 * C_PAD, C_PAD).astype(jnp.bfloat16)
    b2 = (p["conv2_b"] - p["bn2_mean"]) * s2 + p["bn2_beta"]
    b2 = jnp.zeros((1, C_PAD), jnp.float32).at[0, :64].set(b2)

    wl = jnp.zeros((C_PAD, C_PAD), jnp.float32).at[:64, :N_CLASSES].set(
        p["lin_w"].T / 9.0)
    bl = jnp.zeros((1, C_PAD), jnp.float32).at[0, :N_CLASSES].set(p["lin_b"])
    return {"w1": w1, "b1": b1, "w2": w2, "b2": b2, "wl": wl, "bl": bl}


def audio_classifier_forward(x_nchw, folded):
    n, cin, h, w = x_nchw.shape
    assert cin == 1 and h == H_IN and w == W_IN, (
        "fused kernel is specialized for 1x32x32 spectrogram inputs")
    # Host glue: one tiny reshape/transpose that mod-4 phase-splits the 8 KB
    # input so every in-kernel conv1 tap is a contiguous slice:
    #   xq[n, r, c, 4*pi + pj] == x[n, 0, 4*r + pi, 4*c + pj]
    x = x_nchw[:, 0].astype(jnp.float32)
    xq = x.reshape(n, 8, 4, 8, 4).transpose(0, 1, 3, 2, 4).reshape(n, 8, 8, 16)

    logits_padded = pl.pallas_call(
        fused_forward_kernel,
        out_shape=jax.ShapeDtypeStruct((n, C_PAD), jnp.float32),
        in_specs=[_VMEM] * 7,
        out_specs=_VMEM,
        scratch_shapes=[
            pltpu.VMEM((n, 8, 8, C_PAD), jnp.float32),     # pooled conv1 output
            pltpu.VMEM((9 * n, 9 * C_PAD), jnp.float32),   # conv2 im2col patches
        ],
    )(xq, folded["w1"], folded["b1"], folded["w2"], folded["b2"],
      folded["wl"], folded["bl"])
    return logits_padded[:, :N_CLASSES]


# --------------------------- reference (pure JAX) ---------------------------

def reference_forward(x_nchw, p):
    dn = ("NCHW", "OIHW", "NCHW")
    bn = lambda v, g, b, m, var: (
        (v - m[None, :, None, None])
        * (g * jax.lax.rsqrt(var + BN_EPS))[None, :, None, None]
        + b[None, :, None, None])
    y = jax.lax.conv_general_dilated(x_nchw, p["conv1_w"], (2, 2), "VALID",
                                     dimension_numbers=dn)
    y = y + p["conv1_b"][None, :, None, None]
    y = jnp.maximum(bn(y, p["bn1_gamma"], p["bn1_beta"], p["bn1_mean"], p["bn1_var"]), 0.0)
    y = jax.lax.reduce_window(y, -jnp.inf, jax.lax.max, (1, 1, 2, 2), (1, 1, 2, 2),
                              padding=((0, 0), (0, 0), (1, 1), (1, 1)))
    y = jax.lax.conv_general_dilated(y, p["conv2_w"], (2, 2), "VALID",
                                     dimension_numbers=dn)
    y = y + p["conv2_b"][None, :, None, None]
    y = jnp.maximum(bn(y, p["bn2_gamma"], p["bn2_beta"], p["bn2_mean"], p["bn2_var"]), 0.0)
    y = jnp.mean(y, axis=(2, 3))
    return y @ p["lin_w"].T + p["lin_b"]


# ----------------------------------- main -----------------------------------

def init_params(key):
    ks = jax.random.split(key, 14)
    nrm = lambda k, s: 0.1 * jax.random.normal(k, s, dtype=jnp.float32)
    return {
        "conv1_w": nrm(ks[0], (32, 1, 3, 3)),
        "conv1_b": nrm(ks[1], (32,)),
        "bn1_gamma": 1.0 + nrm(ks[2], (32,)),
        "bn1_beta": nrm(ks[3], (32,)),
        "bn1_mean": nrm(ks[4], (32,)),
        "bn1_var": 1.0 + jnp.abs(nrm(ks[5], (32,))),
        "conv2_w": nrm(ks[6], (64, 32, 3, 3)),
        "conv2_b": nrm(ks[7], (64,)),
        "bn2_gamma": 1.0 + nrm(ks[8], (64,)),
        "bn2_beta": nrm(ks[9], (64,)),
        "bn2_mean": nrm(ks[10], (64,)),
        "bn2_var": 1.0 + jnp.abs(nrm(ks[11], (64,))),
        "lin_w": nrm(ks[12], (N_CLASSES, 64)),
        "lin_b": nrm(ks[13], (N_CLASSES,)),
    }


if __name__ == "__main__":
    key = jax.random.PRNGKey(0)
    k_params, k_x = jax.random.split(key)
    params = init_params(k_params)
    # Module hardwires 1 input channel (audio spectrogram): N=2, C=1, H=W=32
    x = jax.random.normal(k_x, (2, 1, 32, 32), dtype=jnp.float32)

    folded = fold_params(params)          # one-time host-side weight folding
    fwd = jax.jit(audio_classifier_forward)

    out = jax.block_until_ready(fwd(x, folded))
    ref = jax.block_until_ready(reference_forward(x, params))

    assert out.shape == (2, N_CLASSES), out.shape
    # Tolerance loosened slightly because the conv2 matmul uses bf16 operands
    # (f32 accumulation); everything else is f32.
    assert jnp.allclose(out, ref, atol=2e-2, rtol=2e-2), (out, ref)
    print("KERNEL_OK")
</pallas_src>

<mosaic_0001>
module attributes {stable_mosaic.version = 11 : i64} {
  func.func @fused_forward_kernel(%arg0: memref<2x8x8x16xf32, #tpu.memory_space<vmem>>, %arg1: memref<9x128xf32, #tpu.memory_space<vmem>>, %arg2: memref<1x128xf32, #tpu.memory_space<vmem>>, %arg3: memref<1152x128xbf16, #tpu.memory_space<vmem>>, %arg4: memref<1x128xf32, #tpu.memory_space<vmem>>, %arg5: memref<128x128xf32, #tpu.memory_space<vmem>>, %arg6: memref<1x128xf32, #tpu.memory_space<vmem>>, %arg7: memref<2x128xf32, #tpu.memory_space<vmem>>, %arg8: memref<2x8x8x128xf32, #tpu.memory_space<vmem>>, %arg9: memref<18x1152xf32, #tpu.memory_space<vmem>>) attributes {dimension_semantics = [], scalar_prefetch = 0 : i64, scratch_operands = 2 : i64, tpu.core_type = #tpu.core_type<tc>} {
    %c0 = arith.constant 0 : index
    %c0_0 = arith.constant 0 : index
    %0 = vector.load %arg1[%c0, %c0_0] : memref<9x128xf32, #tpu.memory_space<vmem>>, vector<9x128xf32>
    %c0_1 = arith.constant 0 : index
    %c0_2 = arith.constant 0 : index
    %1 = vector.load %arg2[%c0_1, %c0_2] : memref<1x128xf32, #tpu.memory_space<vmem>>, vector<1x128xf32>
    %c0_3 = arith.constant 0 : index
    %c0_4 = arith.constant 0 : index
    %c0_5 = arith.constant 0 : index
    %c0_6 = arith.constant 0 : index
    %2 = vector.load %arg0[%c0_3, %c0_4, %c0_5, %c0_6] : memref<2x8x8x16xf32, #tpu.memory_space<vmem>>, vector<2x8x8x1xf32>
    %3 = vector.extract_strided_slice %0 {offsets = [0, 0], sizes = [1, 128], strides = [1, 1]} : vector<9x128xf32> to vector<1x128xf32>
    %4 = vector.shape_cast %3 : vector<1x128xf32> to vector<1x1x1x128xf32>
    %5 = vector.broadcast %2 : vector<2x8x8x1xf32> to vector<2x8x8x128xf32>
    %6 = vector.broadcast %4 : vector<1x1x1x128xf32> to vector<2x8x8x128xf32>
    %7 = arith.mulf %5, %6 : vector<2x8x8x128xf32>
    %c0_7 = arith.constant 0 : index
    %c0_8 = arith.constant 0 : index
    %c0_9 = arith.constant 0 : index
    %c1 = arith.constant 1 : index
    %8 = vector.load %arg0[%c0_7, %c0_8, %c0_9, %c1] : memref<2x8x8x16xf32, #tpu.memory_space<vmem>>, vector<2x8x8x1xf32>
    %9 = vector.extract_strided_slice %0 {offsets = [1, 0], sizes = [1, 128], strides = [1, 1]} : vector<9x128xf32> to vector<1x128xf32>
    %10 = vector.shape_cast %9 : vector<1x128xf32> to vector<1x1x1x128xf32>
    %11 = vector.broadcast %8 : vector<2x8x8x1xf32> to vector<2x8x8x128xf32>
    %12 = vector.broadcast %10 : vector<1x1x1x128xf32> to vector<2x8x8x128xf32>
    %13 = arith.mulf %11, %12 : vector<2x8x8x128xf32>
    %14 = arith.addf %7, %13 : vector<2x8x8x128xf32>
    %c0_10 = arith.constant 0 : index
    %c0_11 = arith.constant 0 : index
    %c0_12 = arith.constant 0 : index
    %c2 = arith.constant 2 : index
    %15 = vector.load %arg0[%c0_10, %c0_11, %c0_12, %c2] : memref<2x8x8x16xf32, #tpu.memory_space<vmem>>, vector<2x8x8x1xf32>
    %16 = vector.extract_strided_slice %0 {offsets = [2, 0], sizes = [1, 128], strides = [1, 1]} : vector<9x128xf32> to vector<1x128xf32>
    %17 = vector.shape_cast %16 : vector<1x128xf32> to vector<1x1x1x128xf32>
    %18 = vector.broadcast %15 : vector<2x8x8x1xf32> to vector<2x8x8x128xf32>
    %19 = vector.broadcast %17 : vector<1x1x1x128xf32> to vector<2x8x8x128xf32>
    %20 = arith.mulf %18, %19 : vector<2x8x8x128xf32>
    %21 = arith.addf %14, %20 : vector<2x8x8x128xf32>
    %c0_13 = arith.constant 0 : index
    %c0_14 = arith.constant 0 : index
    %c0_15 = arith.constant 0 : index
    %c4 = arith.constant 4 : index
    %22 = vector.load %arg0[%c0_13, %c0_14, %c0_15, %c4] : memref<2x8x8x16xf32, #tpu.memory_space<vmem>>, vector<2x8x8x1xf32>
    %23 = vector.extract_strided_slice %0 {offsets = [3, 0], sizes = [1, 128], strides = [1, 1]} : vector<9x128xf32> to vector<1x128xf32>
    %24 = vector.shape_cast %23 : vector<1x128xf32> to vector<1x1x1x128xf32>
    %25 = vector.broadcast %22 : vector<2x8x8x1xf32> to vector<2x8x8x128xf32>
    %26 = vector.broadcast %24 : vector<1x1x1x128xf32> to vector<2x8x8x128xf32>
    %27 = arith.mulf %25, %26 : vector<2x8x8x128xf32>
    %28 = arith.addf %21, %27 : vector<2x8x8x128xf32>
    %c0_16 = arith.constant 0 : index
    %c0_17 = arith.constant 0 : index
    %c0_18 = arith.constant 0 : index
    %c5 = arith.constant 5 : index
    %29 = vector.load %arg0[%c0_16, %c0_17, %c0_18, %c5] : memref<2x8x8x16xf32, #tpu.memory_space<vmem>>, vector<2x8x8x1xf32>
    %30 = vector.extract_strided_slice %0 {offsets = [4, 0], sizes = [1, 128], strides = [1, 1]} : vector<9x128xf32> to vector<1x128xf32>
    %31 = vector.shape_cast %30 : vector<1x128xf32> to vector<1x1x1x128xf32>
    %32 = vector.broadcast %29 : vector<2x8x8x1xf32> to vector<2x8x8x128xf32>
    %33 = vector.broadcast %31 : vector<1x1x1x128xf32> to vector<2x8x8x128xf32>
    %34 = arith.mulf %32, %33 : vector<2x8x8x128xf32>
    %35 = arith.addf %28, %34 : vector<2x8x8x128xf32>
    %c0_19 = arith.constant 0 : index
    %c0_20 = arith.constant 0 : index
    %c0_21 = arith.constant 0 : index
    %c6 = arith.constant 6 : index
    %36 = vector.load %arg0[%c0_19, %c0_20, %c0_21, %c6] : memref<2x8x8x16xf32, #tpu.memory_space<vmem>>, vector<2x8x8x1xf32>
    %37 = vector.extract_strided_slice %0 {offsets = [5, 0], sizes = [1, 128], strides = [1, 1]} : vector<9x128xf32> to vector<1x128xf32>
    %38 = vector.shape_cast %37 : vector<1x128xf32> to vector<1x1x1x128xf32>
    %39 = vector.broadcast %36 : vector<2x8x8x1xf32> to vector<2x8x8x128xf32>
    %40 = vector.broadcast %38 : vector<1x1x1x128xf32> to vector<2x8x8x128xf32>
    %41 = arith.mulf %39, %40 : vector<2x8x8x128xf32>
    %42 = arith.addf %35, %41 : vector<2x8x8x128xf32>
    %c0_22 = arith.constant 0 : index
    %c0_23 = arith.constant 0 : index
    %c0_24 = arith.constant 0 : index
    %c8 = arith.constant 8 : index
    %43 = vector.load %arg0[%c0_22, %c0_23, %c0_24, %c8] : memref<2x8x8x16xf32, #tpu.memory_space<vmem>>, vector<2x8x8x1xf32>
    %44 = vector.extract_strided_slice %0 {offsets = [6, 0], sizes = [1, 128], strides = [1, 1]} : vector<9x128xf32> to vector<1x128xf32>
    %45 = vector.shape_cast %44 : vector<1x128xf32> to vector<1x1x1x128xf32>
    %46 = vector.broadcast %43 : vector<2x8x8x1xf32> to vector<2x8x8x128xf32>
    %47 = vector.broadcast %45 : vector<1x1x1x128xf32> to vector<2x8x8x128xf32>
    %48 = arith.mulf %46, %47 : vector<2x8x8x128xf32>
    %49 = arith.addf %42, %48 : vector<2x8x8x128xf32>
    %c0_25 = arith.constant 0 : index
    %c0_26 = arith.constant 0 : index
    %c0_27 = arith.constant 0 : index
    %c9 = arith.constant 9 : index
    %50 = vector.load %arg0[%c0_25, %c0_26, %c0_27, %c9] : memref<2x8x8x16xf32, #tpu.memory_space<vmem>>, vector<2x8x8x1xf32>
    %51 = vector.extract_strided_slice %0 {offsets = [7, 0], sizes = [1, 128], strides = [1, 1]} : vector<9x128xf32> to vector<1x128xf32>
    %52 = vector.shape_cast %51 : vector<1x128xf32> to vector<1x1x1x128xf32>
    %53 = vector.broadcast %50 : vector<2x8x8x1xf32> to vector<2x8x8x128xf32>
    %54 = vector.broadcast %52 : vector<1x1x1x128xf32> to vector<2x8x8x128xf32>
    %55 = arith.mulf %53, %54 : vector<2x8x8x128xf32>
    %56 = arith.addf %49, %55 : vector<2x8x8x128xf32>
    %c0_28 = arith.constant 0 : index
    %c0_29 = arith.constant 0 : index
    %c0_30 = arith.constant 0 : index
    %c10 = arith.constant 10 : index
    %57 = vector.load %arg0[%c0_28, %c0_29, %c0_30, %c10] : memref<2x8x8x16xf32, #tpu.memory_space<vmem>>, vector<2x8x8x1xf32>
    %58 = vector.extract_strided_slice %0 {offsets = [8, 0], sizes = [1, 128], strides = [1, 1]} : vector<9x128xf32> to vector<1x128xf32>
    %59 = vector.shape_cast %58 : vector<1x128xf32> to vector<1x1x1x128xf32>
    %60 = vector.broadcast %57 : vector<2x8x8x1xf32> to vector<2x8x8x128xf32>
    %61 = vector.broadcast %59 : vector<1x1x1x128xf32> to vector<2x8x8x128xf32>
    %62 = arith.mulf %60, %61 : vector<2x8x8x128xf32>
    %63 = arith.addf %56, %62 : vector<2x8x8x128xf32>
    %64 = vector.shape_cast %1 : vector<1x128xf32> to vector<1x1x1x128xf32>
    %65 = vector.broadcast %64 : vector<1x1x1x128xf32> to vector<2x8x8x128xf32>
    %66 = arith.addf %63, %65 : vector<2x8x8x128xf32>
    %cst = arith.constant 0.000000e+00 : f32
    %67 = vector.broadcast %cst : f32 to vector<2x8x8x128xf32>
    %68 = arith.maximumf %66, %67 : vector<2x8x8x128xf32>
    %c0_31 = arith.constant 0 : index
    %c0_32 = arith.constant 0 : index
    %c0_33 = arith.constant 0 : index
    %c0_34 = arith.constant 0 : index
    %69 = vector.load %arg8[%c0_31, %c0_32, %c0_33, %c0_34] : memref<2x8x8x128xf32, #tpu.memory_space<vmem>>, vector<2x8x8x128xf32>
    tpu.vector_store %arg8[%c0_31, %c0_32, %c0_33, %c0_34], %68 {strides = array<i32>} : memref<2x8x8x128xf32, #tpu.memory_space<vmem>>, vector<2x8x8x128xf32>,
    %c0_35 = arith.constant 0 : index
    %c0_36 = arith.constant 0 : index
    %c1_37 = arith.constant 1 : index
    %c0_38 = arith.constant 0 : index
    %70 = vector.load %arg8[%c0_35, %c0_36, %c1_37, %c0_38] : memref<2x8x8x128xf32, #tpu.memory_space<vmem>>, vector<2x8x7x128xf32>
    %c0_39 = arith.constant 0 : index
    %c0_40 = arith.constant 0 : index
    %c0_41 = arith.constant 0 : index
    %c2_42 = arith.constant 2 : index
    %71 = vector.load %arg0[%c0_39, %c0_40, %c0_41, %c2_42] : memref<2x8x8x16xf32, #tpu.memory_space<vmem>>, vector<2x8x7x1xf32>
    %72 = vector.extract_strided_slice %0 {offsets = [0, 0], sizes = [1, 128], strides = [1, 1]} : vector<9x128xf32> to vector<1x128xf32>
    %73 = vector.shape_cast %72 : vector<1x128xf32> to vector<1x1x1x128xf32>
    %74 = vector.broadcast %71 : vector<2x8x7x1xf32> to vector<2x8x7x128xf32>
    %75 = vector.broadcast %73 : vector<1x1x1x128xf32> to vector<2x8x7x128xf32>
    %76 = arith.mulf %74, %75 : vector<2x8x7x128xf32>
    %c0_43 = arith.constant 0 : index
    %c0_44 = arith.constant 0 : index
    %c0_45 = arith.constant 0 : index
    %c3 = arith.constant 3 : index
    %77 = vector.load %arg0[%c0_43, %c0_44, %c0_45, %c3] : memref<2x8x8x16xf32, #tpu.memory_space<vmem>>, vector<2x8x7x1xf32>
    %78 = vector.extract_strided_slice %0 {offsets = [1, 0], sizes = [1, 128], strides = [1, 1]} : vector<9x128xf32> to vector<1x128xf32>
    %79 = vector.shape_cast %78 : vector<1x128xf32> to vector<1x1x1x128xf32>
    %80 = vector.broadcast %77 : vector<2x8x7x1xf32> to vector<2x8x7x128xf32>
    %81 = vector.broadcast %79 : vector<1x1x1x128xf32> to vector<2x8x7x128xf32>
    %82 = arith.mulf %80, %81 : vector<2x8x7x128xf32>
    %83 = arith.addf %76, %82 : vector<2x8x7x128xf32>
    %c0_46 = arith.constant 0 : index
    %c0_47 = arith.constant 0 : index
    %c1_48 = arith.constant 1 : index
    %c0_49 = arith.constant 0 : index
    %84 = vector.load %arg0[%c0_46, %c0_47, %c1_48, %c0_49] : memref<2x8x8x16xf32, #tpu.memory_space<vmem>>, vector<2x8x7x1xf32>
    %85 = vector.extract_strided_slice %0 {offsets = [2, 0], sizes = [1, 128], strides = [1, 1]} : vector<9x128xf32> to vector<1x128xf32>
    %86 = vector.shape_cast %85 : vector<1x128xf32> to vector<1x1x1x128xf32>
    %87 = vector.broadcast %84 : vector<2x8x7x1xf32> to vector<2x8x7x128xf32>
    %88 = vector.broadcast %86 : vector<1x1x1x128xf32> to vector<2x8x7x128xf32>
    %89 = arith.mulf %87, %88 : vector<2x8x7x128xf32>
    %90 = arith.addf %83, %89 : vector<2x8x7x128xf32>
    %c0_50 = arith.constant 0 : index
    %c0_51 = arith.constant 0 : index
    %c0_52 = arith.constant 0 : index
    %c6_53 = arith.constant 6 : index
    %91 = vector.load %arg0[%c0_50, %c0_51, %c0_52, %c6_53] : memref<2x8x8x16xf32, #tpu.memory_space<vmem>>, vector<2x8x7x1xf32>
    %92 = vector.extract_strided_slice %0 {offsets = [3, 0], sizes = [1, 128], strides = [1, 1]} : vector<9x128xf32> to vector<1x128xf32>
    %93 = vector.shape_cast %92 : vector<1x128xf32> to vector<1x1x1x128xf32>
    %94 = vector.broadcast %91 : vector<2x8x7x1xf32> to vector<2x8x7x128xf32>
    %95 = vector.broadcast %93 : vector<1x1x1x128xf32> to vector<2x8x7x128xf32>
    %96 = arith.mulf %94, %95 : vector<2x8x7x128xf32>
    %97 = arith.addf %90, %96 : vector<2x8x7x128xf32>
    %c0_54 = arith.constant 0 : index
    %c0_55 = arith.constant 0 : index
    %c0_56 = arith.constant 0 : index
    %c7 = arith.constant 7 : index
    %98 = vector.load %arg0[%c0_54, %c0_55, %c0_56, %c7] : memref<2x8x8x16xf32, #tpu.memory_space<vmem>>, vector<2x8x7x1xf32>
    %99 = vector.extract_strided_slice %0 {offsets = [4, 0], sizes = [1, 128], strides = [1, 1]} : vector<9x128xf32> to vector<1x128xf32>
    %100 = vector.shape_cast %99 : vector<1x128xf32> to vector<1x1x1x128xf32>
    %101 = vector.broadcast %98 : vector<2x8x7x1xf32> to vector<2x8x7x128xf32>
    %102 = vector.broadcast %100 : vector<1x1x1x128xf32> to vector<2x8x7x128xf32>
    %103 = arith.mulf %101, %102 : vector<2x8x7x128xf32>
    %104 = arith.addf %97, %103 : vector<2x8x7x128xf32>
    %c0_57 = arith.constant 0 : index
    %c0_58 = arith.constant 0 : index
    %c1_59 = arith.constant 1 : index
    %c4_60 = arith.constant 4 : index
    %105 = vector.load %arg0[%c0_57, %c0_58, %c1_59, %c4_60] : memref<2x8x8x16xf32, #tpu.memory_space<vmem>>, vector<2x8x7x1xf32>
    %106 = vector.extract_strided_slice %0 {offsets = [5, 0], sizes = [1, 128], strides = [1, 1]} : vector<9x128xf32> to vector<1x128xf32>
    %107 = vector.shape_cast %106 : vector<1x128xf32> to vector<1x1x1x128xf32>
    %108 = vector.broadcast %105 : vector<2x8x7x1xf32> to vector<2x8x7x128xf32>
    %109 = vector.broadcast %107 : vector<1x1x1x128xf32> to vector<2x8x7x128xf32>
    %110 = arith.mulf %108, %109 : vector<2x8x7x128xf32>
    %111 = arith.addf %104, %110 : vector<2x8x7x128xf32>
    %c0_61 = arith.constant 0 : index
    %c0_62 = arith.constant 0 : index
    %c0_63 = arith.constant 0 : index
    %c10_64 = arith.constant 10 : index
    %112 = vector.load %arg0[%c0_61, %c0_62, %c0_63, %c10_64] : memref<2x8x8x16xf32, #tpu.memory_space<vmem>>, vector<2x8x7x1xf32>
    %113 = vector.extract_strided_slice %0 {offsets = [6, 0], sizes = [1, 128], strides = [1, 1]} : vector<9x128xf32> to vector<1x128xf32>
    %114 = vector.shape_cast %113 : vector<1x128xf32> to vector<1x1x1x128xf32>
    %115 = vector.broadcast %112 : vector<2x8x7x1xf32> to vector<2x8x7x128xf32>
    %116 = vector.broadcast %114 : vector<1x1x1x128xf32> to vector<2x8x7x128xf32>
    %117 = arith.mulf %115, %116 : vector<2x8x7x128xf32>
    %118 = arith.addf %111, %117 : vector<2x8x7x128xf32>
    %c0_65 = arith.constant 0 : index
    %c0_66 = arith.constant 0 : index
    %c0_67 = arith.constant 0 : index
    %c11 = arith.constant 11 : index
    %119 = vector.load %arg0[%c0_65, %c0_66, %c0_67, %c11] : memref<2x8x8x16xf32, #tpu.memory_space<vmem>>, vector<2x8x7x1xf32>
    %120 = vector.extract_strided_slice %0 {offsets = [7, 0], sizes = [1, 128], strides = [1, 1]} : vector<9x128xf32> to vector<1x128xf32>
    %121 = vector.shape_cast %120 : vector<1x128xf32> to vector<1x1x1x128xf32>
    %122 = vector.broadcast %119 : vector<2x8x7x1xf32> to vector<2x8x7x128xf32>
    %123 = vector.broadcast %121 : vector<1x1x1x128xf32> to vector<2x8x7x128xf32>
    %124 = arith.mulf %122, %123 : vector<2x8x7x128xf32>
    %125 = arith.addf %118, %124 : vector<2x8x7x128xf32>
    %c0_68 = arith.constant 0 : index
    %c0_69 = arith.constant 0 : index
    %c1_70 = arith.constant 1 : index
    %c8_71 = arith.constant 8 : index
    %126 = vector.load %arg0[%c0_68, %c0_69, %c1_70, %c8_71] : memref<2x8x8x16xf32, #tpu.memory_space<vmem>>, vector<2x8x7x1xf32>
    %127 = vector.extract_strided_slice %0 {offsets = [8, 0], sizes = [1, 128], strides = [1, 1]} : vector<9x128xf32> to vector<1x128xf32>
    %128 = vector.shape_cast %127 : vector<1x128xf32> to vector<1x1x1x128xf32>
    %129 = vector.broadcast %126 : vector<2x8x7x1xf32> to vector<2x8x7x128xf32>
    %130 = vector.broadcast %128 : vector<1x1x1x128xf32> to vector<2x8x7x128xf32>
    %131 = arith.mulf %129, %130 : vector<2x8x7x128xf32>
    %132 = arith.addf %125, %131 : vector<2x8x7x128xf32>
    %133 = vector.shape_cast %1 : vector<1x128xf32> to vector<1x1x1x128xf32>
    %134 = vector.broadcast %133 : vector<1x1x1x128xf32> to vector<2x8x7x128xf32>
    %135 = arith.addf %132, %134 : vector<2x8x7x128xf32>
    %cst_72 = arith.constant 0.000000e+00 : f32
    %136 = vector.broadcast %cst_72 : f32 to vector<2x8x7x128xf32>
    %137 = arith.maximumf %135, %136 : vector<2x8x7x128xf32>
    %138 = arith.maximumf %70, %137 : vector<2x8x7x128xf32>
    %c0_73 = arith.constant 0 : index
    %c0_74 = arith.constant 0 : index
    %c1_75 = arith.constant 1 : index
    %c0_76 = arith.constant 0 : index
    %139 = vector.load %arg8[%c0_73, %c0_74, %c1_75, %c0_76] : memref<2x8x8x128xf32, #tpu.memory_space<vmem>>, vector<2x8x7x128xf32>
    tpu.vector_store %arg8[%c0_73, %c0_74, %c1_75, %c0_76], %138 {strides = array<i32>} : memref<2x8x8x128xf32, #tpu.memory_space<vmem>>, vector<2x8x7x128xf32>,
    %c0_77 = arith.constant 0 : index
    %c1_78 = arith.constant 1 : index
    %c0_79 = arith.constant 0 : index
    %c0_80 = arith.constant 0 : index
    %140 = vector.load %arg8[%c0_77, %c1_78, %c0_79, %c0_80] : memref<2x8x8x128xf32, #tpu.memory_space<vmem>>, vector<2x7x8x128xf32>
    %c0_81 = arith.constant 0 : index
    %c0_82 = arith.constant 0 : index
    %c0_83 = arith.constant 0 : index
    %c8_84 = arith.constant 8 : index
    %141 = vector.load %arg0[%c0_81, %c0_82, %c0_83, %c8_84] : memref<2x8x8x16xf32, #tpu.memory_space<vmem>>, vector<2x7x8x1xf32>
    %142 = vector.extract_strided_slice %0 {offsets = [0, 0], sizes = [1, 128], strides = [1, 1]} : vector<9x128xf32> to vector<1x128xf32>
    %143 = vector.shape_cast %142 : vector<1x128xf32> to vector<1x1x1x128xf32>
    %144 = vector.broadcast %141 : vector<2x7x8x1xf32> to vector<2x7x8x128xf32>
    %145 = vector.broadcast %143 : vector<1x1x1x128xf32> to vector<2x7x8x128xf32>
    %146 = arith.mulf %144, %145 : vector<2x7x8x128xf32>
    %c0_85 = arith.constant 0 : index
    %c0_86 = arith.constant 0 : index
    %c0_87 = arith.constant 0 : index
    %c9_88 = arith.constant 9 : index
    %147 = vector.load %arg0[%c0_85, %c0_86, %c0_87, %c9_88] : memref<2x8x8x16xf32, #tpu.memory_space<vmem>>, vector<2x7x8x1xf32>
    %148 = vector.extract_strided_slice %0 {offsets = [1, 0], sizes = [1, 128], strides = [1, 1]} : vector<9x128xf32> to vector<1x128xf32>
    %149 = vector.shape_cast %148 : vector<1x128xf32> to vector<1x1x1x128xf32>
    %150 = vector.broadcast %147 : vector<2x7x8x1xf32> to vector<2x7x8x128xf32>
    %151 = vector.broadcast %149 : vector<1x1x1x128xf32> to vector<2x7x8x128xf32>
    %152 = arith.mulf %150, %151 : vector<2x7x8x128xf32>
    %153 = arith.addf %146, %152 : vector<2x7x8x128xf32>
    %c0_89 = arith.constant 0 : index
    %c0_90 = arith.constant 0 : index
    %c0_91 = arith.constant 0 : index
    %c10_92 = arith.constant 10 : index
    %154 = vector.load %arg0[%c0_89, %c0_90, %c0_91, %c10_92] : memref<2x8x8x16xf32, #tpu.memory_space<vmem>>, vector<2x7x8x1xf32>
    %155 = vector.extract_strided_slice %0 {offsets = [2, 0], sizes = [1, 128], strides = [1, 1]} : vector<9x128xf32> to vector<1x128xf32>
    %156 = vector.shape_cast %155 : vector<1x128xf32> to vector<1x1x1x128xf32>
    %157 = vector.broadcast %154 : vector<2x7x8x1xf32> to vector<2x7x8x128xf32>
    %158 = vector.broadcast %156 : vector<1x1x1x128xf32> to vector<2x7x8x128xf32>
    %159 = arith.mulf %157, %158 : vector<2x7x8x128xf32>
    %160 = arith.addf %153, %159 : vector<2x7x8x128xf32>
    %c0_93 = arith.constant 0 : index
    %c0_94 = arith.constant 0 : index
    %c0_95 = arith.constant 0 : index
    %c12 = arith.constant 12 : index
    %161 = vector.load %arg0[%c0_93, %c0_94, %c0_95, %c12] : memref<2x8x8x16xf32, #tpu.memory_space<vmem>>, vector<2x7x8x1xf32>
    %162 = vector.extract_strided_slice %0 {offsets = [3, 0], sizes = [1, 128], strides = [1, 1]} : vector<9x128xf32> to vector<1x128xf32>
    %163 = vector.shape_cast %162 : vector<1x128xf32> to vector<1x1x1x128xf32>
    %164 = vector.broadcast %161 : vector<2x7x8x1xf32> to vector<2x7x8x128xf32>
    %165 = vector.broadcast %163 : vector<1x1x1x128xf32> to vector<2x7x8x128xf32>
    %166 = arith.mulf %164, %165 : vector<2x7x8x128xf32>
    %167 = arith.addf %160, %166 : vector<2x7x8x128xf32>
    %c0_96 = arith.constant 0 : index
    %c0_97 = arith.constant 0 : index
    %c0_98 = arith.constant 0 : index
    %c13 = arith.constant 13 : index
    %168 = vector.load %arg0[%c0_96, %c0_97, %c0_98, %c13] : memref<2x8x8x16xf32, #tpu.memory_space<vmem>>, vector<2x7x8x1xf32>
    %169 = vector.extract_strided_slice %0 {offsets = [4, 0], sizes = [1, 128], strides = [1, 1]} : vector<9x128xf32> to vector<1x128xf32>
    %170 = vector.shape_cast %169 : vector<1x128xf32> to vector<1x1x1x128xf32>
    %171 = vector.broadcast %168 : vector<2x7x8x1xf32> to vector<2x7x8x128xf32>
    %172 = vector.broadcast %170 : vector<1x1x1x128xf32> to vector<2x7x8x128xf32>
    %173 = arith.mulf %171, %172 : vector<2x7x8x128xf32>
    %174 = arith.addf %167, %173 : vector<2x7x8x128xf32>
    %c0_99 = arith.constant 0 : index
    %c0_100 = arith.constant 0 : index
    %c0_101 = arith.constant 0 : index
    %c14 = arith.constant 14 : index
    %175 = vector.load %arg0[%c0_99, %c0_100, %c0_101, %c14] : memref<2x8x8x16xf32, #tpu.memory_space<vmem>>, vector<2x7x8x1xf32>
    %176 = vector.extract_strided_slice %0 {offsets = [5, 0], sizes = [1, 128], strides = [1, 1]} : vector<9x128xf32> to vector<1x128xf32>
    %177 = vector.shape_cast %176 : vector<1x128xf32> to vector<1x1x1x128xf32>
    %178 = vector.broadcast %175 : vector<2x7x8x1xf32> to vector<2x7x8x128xf32>
    %179 = vector.broadcast %177 : vector<1x1x1x128xf32> to vector<2x7x8x128xf32>
    %180 = arith.mulf %178, %179 : vector<2x7x8x128xf32>
    %181 = arith.addf %174, %180 : vector<2x7x8x128xf32>
    %c0_102 = arith.constant 0 : index
    %c1_103 = arith.constant 1 : index
    %c0_104 = arith.constant 0 : index
    %c0_105 = arith.constant 0 : index
    %182 = vector.load %arg0[%c0_102, %c1_103, %c0_104, %c0_105] : memref<2x8x8x16xf32, #tpu.memory_space<vmem>>, vector<2x7x8x1xf32>
    %183 = vector.extract_strided_slice %0 {offsets = [6, 0], sizes = [1, 128], strides = [1, 1]} : vector<9x128xf32> to vector<1x128xf32>
    %184 = vector.shape_cast %183 : vector<1x128xf32> to vector<1x1x1x128xf32>
    %185 = vector.broadcast %182 : vector<2x7x8x1xf32> to vector<2x7x8x128xf32>
    %186 = vector.broadcast %184 : vector<1x1x1x128xf32> to vector<2x7x8x128xf32>
    %187 = arith.mulf %185, %186 : vector<2x7x8x128xf32>
    %188 = arith.addf %181, %187 : vector<2x7x8x128xf32>
    %c0_106 = arith.constant 0 : index
    %c1_107 = arith.constant 1 : index
    %c0_108 = arith.constant 0 : index
    %c1_109 = arith.constant 1 : index
    %189 = vector.load %arg0[%c0_106, %c1_107, %c0_108, %c1_109] : memref<2x8x8x16xf32, #tpu.memory_space<vmem>>, vector<2x7x8x1xf32>
    %190 = vector.extract_strided_slice %0 {offsets = [7, 0], sizes = [1, 128], strides = [1, 1]} : vector<9x128xf32> to vector<1x128xf32>
    %191 = vector.shape_cast %190 : vector<1x128xf32> to vector<1x1x1x128xf32>
    %192 = vector.broadcast %189 : vector<2x7x8x1xf32> to vector<2x7x8x128xf32>
    %193 = vector.broadcast %191 : vector<1x1x1x128xf32> to vector<2x7x8x128xf32>
    %194 = arith.mulf %192, %193 : vector<2x7x8x128xf32>
    %195 = arith.addf %188, %194 : vector<2x7x8x128xf32>
    %c0_110 = arith.constant 0 : index
    %c1_111 = arith.constant 1 : index
    %c0_112 = arith.constant 0 : index
    %c2_113 = arith.constant 2 : index
    %196 = vector.load %arg0[%c0_110, %c1_111, %c0_112, %c2_113] : memref<2x8x8x16xf32, #tpu.memory_space<vmem>>, vector<2x7x8x1xf32>
    %197 = vector.extract_strided_slice %0 {offsets = [8, 0], sizes = [1, 128], strides = [1, 1]} : vector<9x128xf32> to vector<1x128xf32>
    %198 = vector.shape_cast %197 : vector<1x128xf32> to vector<1x1x1x128xf32>
    %199 = vector.broadcast %196 : vector<2x7x8x1xf32> to vector<2x7x8x128xf32>
    %200 = vector.broadcast %198 : vector<1x1x1x128xf32> to vector<2x7x8x128xf32>
    %201 = arith.mulf %199, %200 : vector<2x7x8x128xf32>
    %202 = arith.addf %195, %201 : vector<2x7x8x128xf32>
    %203 = vector.shape_cast %1 : vector<1x128xf32> to vector<1x1x1x128xf32>
    %204 = vector.broadcast %203 : vector<1x1x1x128xf32> to vector<2x7x8x128xf32>
    %205 = arith.addf %202, %204 : vector<2x7x8x128xf32>
    %cst_114 = arith.constant 0.000000e+00 : f32
    %206 = vector.broadcast %cst_114 : f32 to vector<2x7x8x128xf32>
    %207 = arith.maximumf %205, %206 : vector<2x7x8x128xf32>
    %208 = arith.maximumf %140, %207 : vector<2x7x8x128xf32>
    %c0_115 = arith.constant 0 : index
    %c1_116 = arith.constant 1 : index
    %c0_117 = arith.constant 0 : index
    %c0_118 = arith.constant 0 : index
    %209 = vector.load %arg8[%c0_115, %c1_116, %c0_117, %c0_118] : memref<2x8x8x128xf32, #tpu.memory_space<vmem>>, vector<2x7x8x128xf32>
    tpu.vector_store %arg8[%c0_115, %c1_116, %c0_117, %c0_118], %208 {strides = array<i32>} : memref<2x8x8x128xf32, #tpu.memory_space<vmem>>, vector<2x7x8x128xf32>,
    %c0_119 = arith.constant 0 : index
    %c1_120 = arith.constant 1 : index
    %c1_121 = arith.constant 1 : index
    %c0_122 = arith.constant 0 : index
    %210 = vector.load %arg8[%c0_119, %c1_120, %c1_121, %c0_122] : memref<2x8x8x128xf32, #tpu.memory_space<vmem>>, vector<2x7x7x128xf32>
    %c0_123 = arith.constant 0 : index
    %c0_124 = arith.constant 0 : index
    %c0_125 = arith.constant 0 : index
    %c10_126 = arith.constant 10 : index
    %211 = vector.load %arg0[%c0_123, %c0_124, %c0_125, %c10_126] : memref<2x8x8x16xf32, #tpu.memory_space<vmem>>, vector<2x7x7x1xf32>
    %212 = vector.extract_strided_slice %0 {offsets = [0, 0], sizes = [1, 128], strides = [1, 1]} : vector<9x128xf32> to vector<1x128xf32>
    %213 = vector.shape_cast %212 : vector<1x128xf32> to vector<1x1x1x128xf32>
    %214 = vector.broadcast %211 : vector<2x7x7x1xf32> to vector<2x7x7x128xf32>
    %215 = vector.broadcast %213 : vector<1x1x1x128xf32> to vector<2x7x7x128xf32>
    %216 = arith.mulf %214, %215 : vector<2x7x7x128xf32>
    %c0_127 = arith.constant 0 : index
    %c0_128 = arith.constant 0 : index
    %c0_129 = arith.constant 0 : index
    %c11_130 = arith.constant 11 : index
    %217 = vector.load %arg0[%c0_127, %c0_128, %c0_129, %c11_130] : memref<2x8x8x16xf32, #tpu.memory_space<vmem>>, vector<2x7x7x1xf32>
    %218 = vector.extract_strided_slice %0 {offsets = [1, 0], sizes = [1, 128], strides = [1, 1]} : vector<9x128xf32> to vector<1x128xf32>
    %219 = vector.shape_cast %218 : vector<1x128xf32> to vector<1x1x1x128xf32>
    %220 = vector.broadcast %217 : vector<2x7x7x1xf32> to vector<2x7x7x128xf32>
    %221 = vector.broadcast %219 : vector<1x1x1x128xf32> to vector<2x7x7x128xf32>
    %222 = arith.mulf %220, %221 : vector<2x7x7x128xf32>
    %223 = arith.addf %216, %222 : vector<2x7x7x128xf32>
    %c0_131 = arith.constant 0 : index
    %c0_132 = arith.constant 0 : index
    %c1_133 = arith.constant 1 : index
    %c8_134 = arith.constant 8 : index
    %224 = vector.load %arg0[%c0_131, %c0_132, %c1_133, %c8_134] : memref<2x8x8x16xf32, #tpu.memory_space<vmem>>, vector<2x7x7x1xf32>
    %225 = vector.extract_strided_slice %0 {offsets = [2, 0], sizes = [1, 128], strides = [1, 1]} : vector<9x128xf32> to vector<1x128xf32>
    %226 = vector.shape_cast %225 : vector<1x128xf32> to vector<1x1x1x128xf32>
    %227 = vector.broadcast %224 : vector<2x7x7x1xf32> to vector<2x7x7x128xf32>
    %228 = vector.broadcast %226 : vector<1x1x1x128xf32> to vector<2x7x7x128xf32>
    %229 = arith.mulf %227, %228 : vector<2x7x7x128xf32>
    %230 = arith.addf %223, %229 : vector<2x7x7x128xf32>
    %c0_135 = arith.constant 0 : index
    %c0_136 = arith.constant 0 : index
    %c0_137 = arith.constant 0 : index
    %c14_138 = arith.constant 14 : index
    %231 = vector.load %arg0[%c0_135, %c0_136, %c0_137, %c14_138] : memref<2x8x8x16xf32, #tpu.memory_space<vmem>>, vector<2x7x7x1xf32>
    %232 = vector.extract_strided_slice %0 {offsets = [3, 0], sizes = [1, 128], strides = [1, 1]} : vector<9x128xf32> to vector<1x128xf32>
    %233 = vector.shape_cast %232 : vector<1x128xf32> to vector<1x1x1x128xf32>
    %234 = vector.broadcast %231 : vector<2x7x7x1xf32> to vector<2x7x7x128xf32>
    %235 = vector.broadcast %233 : vector<1x1x1x128xf32> to vector<2x7x7x128xf32>
    %236 = arith.mulf %234, %235 : vector<2x7x7x128xf32>
    %237 = arith.addf %230, %236 : vector<2x7x7x128xf32>
    %c0_139 = arith.constant 0 : index
    %c0_140 = arith.constant 0 : index
    %c0_141 = arith.constant 0 : index
    %c15 = arith.constant 15 : index
    %238 = vector.load %arg0[%c0_139, %c0_140, %c0_141, %c15] : memref<2x8x8x16xf32, #tpu.memory_space<vmem>>, vector<2x7x7x1xf32>
    %239 = vector.extract_strided_slice %0 {offsets = [4, 0], sizes = [1, 128], strides = [1, 1]} : vector<9x128xf32> to vector<1x128xf32>
    %240 = vector.shape_cast %239 : vector<1x128xf32> to vector<1x1x1x128xf32>
    %241 = vector.broadcast %238 : vector<2x7x7x1xf32> to vector<2x7x7x128xf32>
    %242 = vector.broadcast %240 : vector<1x1x1x128xf32> to vector<2x7x7x128xf32>
    %243 = arith.mulf %241, %242 : vector<2x7x7x128xf32>
    %244 = arith.addf %237, %243 : vector<2x7x7x128xf32>
    %c0_142 = arith.constant 0 : index
    %c0_143 = arith.constant 0 : index
    %c1_144 = arith.constant 1 : index
    %c12_145 = arith.constant 12 : index
    %245 = vector.load %arg0[%c0_142, %c0_143, %c1_144, %c12_145] : memref<2x8x8x16xf32, #tpu.memory_space<vmem>>, vector<2x7x7x1xf32>
    %246 = vector.extract_strided_slice %0 {offsets = [5, 0], sizes = [1, 128], strides = [1, 1]} : vector<9x128xf32> to vector<1x128xf32>
    %247 = vector.shape_cast %246 : vector<1x128xf32> to vector<1x1x1x128xf32>
    %248 = vector.broadcast %245 : vector<2x7x7x1xf32> to vector<2x7x7x128xf32>
    %249 = vector.broadcast %247 : vector<1x1x1x128xf32> to vector<2x7x7x128xf32>
    %250 = arith.mulf %248, %249 : vector<2x7x7x128xf32>
    %251 = arith.addf %244, %250 : vector<2x7x7x128xf32>
    %c0_146 = arith.constant 0 : index
    %c1_147 = arith.constant 1 : index
    %c0_148 = arith.constant 0 : index
    %c2_149 = arith.constant 2 : index
    %252 = vector.load %arg0[%c0_146, %c1_147, %c0_148, %c2_149] : memref<2x8x8x16xf32, #tpu.memory_space<vmem>>, vector<2x7x7x1xf32>
    %253 = vector.extract_strided_slice %0 {offsets = [6, 0], sizes = [1, 128], strides = [1, 1]} : vector<9x128xf32> to vector<1x128xf32>
    %254 = vector.shape_cast %253 : vector<1x128xf32> to vector<1x1x1x128xf32>
    %255 = vector.broadcast %252 : vector<2x7x7x1xf32> to vector<2x7x7x128xf32>
    %256 = vector.broadcast %254 : vector<1x1x1x128xf32> to vector<2x7x7x128xf32>
    %257 = arith.mulf %255, %256 : vector<2x7x7x128xf32>
    %258 = arith.addf %251, %257 : vector<2x7x7x128xf32>
    %c0_150 = arith.constant 0 : index
    %c1_151 = arith.constant 1 : index
    %c0_152 = arith.constant 0 : index
    %c3_153 = arith.constant 3 : index
    %259 = vector.load %arg0[%c0_150, %c1_151, %c0_152, %c3_153] : memref<2x8x8x16xf32, #tpu.memory_space<vmem>>, vector<2x7x7x1xf32>
    %260 = vector.extract_strided_slice %0 {offsets = [7, 0], sizes = [1, 128], strides = [1, 1]} : vector<9x128xf32> to vector<1x128xf32>
    %261 = vector.shape_cast %260 : vector<1x128xf32> to vector<1x1x1x128xf32>
    %262 = vector.broadcast %259 : vector<2x7x7x1xf32> to vector<2x7x7x128xf32>
    %263 = vector.broadcast %261 : vector<1x1x1x128xf32> to vector<2x7x7x128xf32>
    %264 = arith.mulf %262, %263 : vector<2x7x7x128xf32>
    %265 = arith.addf %258, %264 : vector<2x7x7x128xf32>
    %c0_154 = arith.constant 0 : index
    %c1_155 = arith.constant 1 : index
    %c1_156 = arith.constant 1 : index
    %c0_157 = arith.constant 0 : index
    %266 = vector.load %arg0[%c0_154, %c1_155, %c1_156, %c0_157] : memref<2x8x8x16xf32, #tpu.memory_space<vmem>>, vector<2x7x7x1xf32>
    %267 = vector.extract_strided_slice %0 {offsets = [8, 0], sizes = [1, 128], strides = [1, 1]} : vector<9x128xf32> to vector<1x128xf32>
    %268 = vector.shape_cast %267 : vector<1x128xf32> to vector<1x1x1x128xf32>
    %269 = vector.broadcast %266 : vector<2x7x7x1xf32> to vector<2x7x7x128xf32>
    %270 = vector.broadcast %268 : vector<1x1x1x128xf32> to vector<2x7x7x128xf32>
    %271 = arith.mulf %269, %270 : vector<2x7x7x128xf32>
    %272 = arith.addf %265, %271 : vector<2x7x7x128xf32>
    %273 = vector.shape_cast %1 : vector<1x128xf32> to vector<1x1x1x128xf32>
    %274 = vector.broadcast %273 : vector<1x1x1x128xf32> to vector<2x7x7x128xf32>
    %275 = arith.addf %272, %274 : vector<2x7x7x128xf32>
    %cst_158 = arith.constant 0.000000e+00 : f32
    %276 = vector.broadcast %cst_158 : f32 to vector<2x7x7x128xf32>
    %277 = arith.maximumf %275, %276 : vector<2x7x7x128xf32>
    %278 = arith.maximumf %210, %277 : vector<2x7x7x128xf32>
    %c0_159 = arith.constant 0 : index
    %c1_160 = arith.constant 1 : index
    %c1_161 = arith.constant 1 : index
    %c0_162 = arith.constant 0 : index
    %279 = vector.load %arg8[%c0_159, %c1_160, %c1_161, %c0_162] : memref<2x8x8x128xf32, #tpu.memory_space<vmem>>, vector<2x7x7x128xf32>
    tpu.vector_store %arg8[%c0_159, %c1_160, %c1_161, %c0_162], %278 {strides = array<i32>} : memref<2x8x8x128xf32, #tpu.memory_space<vmem>>, vector<2x7x7x128xf32>,
    %c0_163 = arith.constant 0 : index
    %c0_164 = arith.constant 0 : index
    %c0_165 = arith.constant 0 : index
    %c0_166 = arith.constant 0 : index
    %280 = vector.load %arg8[%c0_163, %c0_164, %c0_165, %c0_166] : memref<2x8x8x128xf32, #tpu.memory_space<vmem>>, vector<1x1x1x128xf32>
    %281 = vector.shape_cast %280 : vector<1x1x1x128xf32> to vector<1x128xf32>
    %c0_167 = arith.constant 0 : index
    %c0_168 = arith.constant 0 : index
    %282 = vector.load %arg9[%c0_167, %c0_168] : memref<18x1152xf32, #tpu.memory_space<vmem>>, vector<1x128xf32>
    tpu.vector_store %arg9[%c0_167, %c0_168], %281 {strides = array<i32>} : memref<18x1152xf32, #tpu.memory_space<vmem>>, vector<1x128xf32>,
    %c1_169 = arith.constant 1 : index
    %c0_170 = arith.constant 0 : index
    %c0_171 = arith.constant 0 : index
    %c0_172 = arith.constant 0 : index
    %283 = vector.load %arg8[%c1_169, %c0_170, %c0_171, %c0_172] : memref<2x8x8x128xf32, #tpu.memory_space<vmem>>, vector<1x1x1x128xf32>
    %284 = vector.shape_cast %283 : vector<1x1x1x128xf32> to vector<1x128xf32>
    %c1_173 = arith.constant 1 : index
    %c0_174 = arith.constant 0 : index
    %285 = vector.load %arg9[%c1_173, %c0_174] : memref<18x1152xf32, #tpu.memory_space<vmem>>, vector<1x128xf32>
    tpu.vector_store %arg9[%c1_173, %c0_174], %284 {strides = array<i32>} : memref<18x1152xf32, #tpu.memory_space<vmem>>, vector<1x128xf32>,
    %c0_175 = arith.constant 0 : index
    %c0_176 = arith.constant 0 : index
    %c1_177 = arith.constant 1 : index
    %c0_178 = arith.constant 0 : index
    %286 = vector.load %arg8[%c0_175, %c0_176, %c1_177, %c0_178] : memref<2x8x8x128xf32, #tpu.memory_space<vmem>>, vector<1x1x1x128xf32>
    %287 = vector.shape_cast %286 : vector<1x1x1x128xf32> to vector<1x128xf32>
    %c0_179 = arith.constant 0 : index
    %c128 = arith.constant 128 : index
    %288 = vector.load %arg9[%c0_179, %c128] : memref<18x1152xf32, #tpu.memory_space<vmem>>, vector<1x128xf32>
    tpu.vector_store %arg9[%c0_179, %c128], %287 {strides = array<i32>} : memref<18x1152xf32, #tpu.memory_space<vmem>>, vector<1x128xf32>,
    %c1_180 = arith.constant 1 : index
    %c0_181 = arith.constant 0 : index
    %c1_182 = arith.constant 1 : index
    %c0_183 = arith.constant 0 : index
    %289 = vector.load %arg8[%c1_180, %c0_181, %c1_182, %c0_183] : memref<2x8x8x128xf32, #tpu.memory_space<vmem>>, vector<1x1x1x128xf32>
    %290 = vector.shape_cast %289 : vector<1x1x1x128xf32> to vector<1x128xf32>
    %c1_184 = arith.constant 1 : index
    %c128_185 = arith.constant 128 : index
    %291 = vector.load %arg9[%c1_184, %c128_185] : memref<18x1152xf32, #tpu.memory_space<vmem>>, vector<1x128xf32>
    tpu.vector_store %arg9[%c1_184, %c128_185], %290 {strides = array<i32>} : memref<18x1152xf32, #tpu.memory_space<vmem>>, vector<1x128xf32>,
    %c0_186 = arith.constant 0 : index
    %c0_187 = arith.constant 0 : index
    %c2_188 = arith.constant 2 : index
    %c0_189 = arith.constant 0 : index
    %292 = vector.load %arg8[%c0_186, %c0_187, %c2_188, %c0_189] : memref<2x8x8x128xf32, #tpu.memory_space<vmem>>, vector<1x1x1x128xf32>
    %293 = vector.shape_cast %292 : vector<1x1x1x128xf32> to vector<1x128xf32>
    %c0_190 = arith.constant 0 : index
    %c256 = arith.constant 256 : index
    %294 = vector.load %arg9[%c0_190, %c256] : memref<18x1152xf32, #tpu.memory_space<vmem>>, vector<1x128xf32>
    tpu.vector_store %arg9[%c0_190, %c256], %293 {strides = array<i32>} : memref<18x1152xf32, #tpu.memory_space<vmem>>, vector<1x128xf32>,
    %c1_191 = arith.constant 1 : index
    %c0_192 = arith.constant 0 : index
    %c2_193 = arith.constant 2 : index
    %c0_194 = arith.constant 0 : index
    %295 = vector.load %arg8[%c1_191, %c0_192, %c2_193, %c0_194] : memref<2x8x8x128xf32, #tpu.memory_space<vmem>>, vector<1x1x1x128xf32>
    %296 = vector.shape_cast %295 : vector<1x1x1x128xf32> to vector<1x128xf32>
    %c1_195 = arith.constant 1 : index
    %c256_196 = arith.constant 256 : index
    %297 = vector.load %arg9[%c1_195, %c256_196] : memref<18x1152xf32, #tpu.memory_space<vmem>>, vector<1x128xf32>
    tpu.vector_store %arg9[%c1_195, %c256_196], %296 {strides = array<i32>} : memref<18x1152xf32, #tpu.memory_space<vmem>>, vector<1x128xf32>,
    %c0_197 = arith.constant 0 : index
    %c1_198 = arith.constant 1 : index
    %c0_199 = arith.constant 0 : index
    %c0_200 = arith.constant 0 : index
    %298 = vector.load %arg8[%c0_197, %c1_198, %c0_199, %c0_200] : memref<2x8x8x128xf32, #tpu.memory_space<vmem>>, vector<1x1x1x128xf32>
    %299 = vector.shape_cast %298 : vector<1x1x1x128xf32> to vector<1x128xf32>
    %c0_201 = arith.constant 0 : index
    %c384 = arith.constant 384 : index
    %300 = vector.load %arg9[%c0_201, %c384] : memref<18x1152xf32, #tpu.memory_space<vmem>>, vector<1x128xf32>
    tpu.vector_store %arg9[%c0_201, %c384], %299 {strides = array<i32>} : memref<18x1152xf32, #tpu.memory_space<vmem>>, vector<1x128xf32>,
    %c1_202 = arith.constant 1 : index
    %c1_203 = arith.constant 1 : index
    %c0_204 = arith.constant 0 : index
    %c0_205 = arith.constant 0 : index
    %301 = vector.load %arg8[%c1_202, %c1_203, %c0_204, %c0_205] : memref<2x8x8x128xf32, #tpu.memory_space<vmem>>, vector<1x1x1x128xf32>
    %302 = vector.shape_cast %301 : vector<1x1x1x128xf32> to vector<1x128xf32>
    %c1_206 = arith.constant 1 : index
    %c384_207 = arith.constant 384 : index
    %303 = vector.load %arg9[%c1_206, %c384_207] : memref<18x1152xf32, #tpu.memory_space<vmem>>, vector<1x128xf32>
    tpu.vector_store %arg9[%c1_206, %c384_207], %302 {strides = array<i32>} : memref<18x1152xf32, #tpu.memory_space<vmem>>, vector<1x128xf32>,
    %c0_208 = arith.constant 0 : index
    %c1_209 = arith.constant 1 : index
    %c1_210 = arith.constant 1 : index
    %c0_211 = arith.constant 0 : index
    %304 = vector.load %arg8[%c0_208, %c1_209, %c1_210, %c0_211] : memref<2x8x8x128xf32, #tpu.memory_space<vmem>>, vector<1x1x1x128xf32>
    %305 = vector.shape_cast %304 : vector<1x1x1x128xf32> to vector<1x128xf32>
    %c0_212 = arith.constant 0 : index
    %c512 = arith.constant 512 : index
    %306 = vector.load %arg9[%c0_212, %c512] : memref<18x1152xf32, #tpu.memory_space<vmem>>, vector<1x128xf32>
    tpu.vector_store %arg9[%c0_212, %c512], %305 {strides = array<i32>} : memref<18x1152xf32, #tpu.memory_space<vmem>>, vector<1x128xf32>,
    %c1_213 = arith.constant 1 : index
    %c1_214 = arith.constant 1 : index
    %c1_215 = arith.constant 1 : index
    %c0_216 = arith.constant 0 : index
    %307 = vector.load %arg8[%c1_213, %c1_214, %c1_215, %c0_216] : memref<2x8x8x128xf32, #tpu.memory_space<vmem>>, vector<1x1x1x128xf32>
    %308 = vector.shape_cast %307 : vector<1x1x1x128xf32> to vector<1x128xf32>
    %c1_217 = arith.constant 1 : index
    %c512_218 = arith.constant 512 : index
    %309 = vector.load %arg9[%c1_217, %c512_218] : memref<18x1152xf32, #tpu.memory_space<vmem>>, vector<1x128xf32>
    tpu.vector_store %arg9[%c1_217, %c512_218], %308 {strides = array<i32>} : memref<18x1152xf32, #tpu.memory_space<vmem>>, vector<1x128xf32>,
    %c0_219 = arith.constant 0 : index
    %c1_220 = arith.constant 1 : index
    %c2_221 = arith.constant 2 : index
    %c0_222 = arith.constant 0 : index
    %310 = vector.load %arg8[%c0_219, %c1_220, %c2_221, %c0_222] : memref<2x8x8x128xf32, #tpu.memory_space<vmem>>, vector<1x1x1x128xf32>
    %311 = vector.shape_cast %310 : vector<1x1x1x128xf32> to vector<1x128xf32>
    %c0_223 = arith.constant 0 : index
    %c640 = arith.constant 640 : index
    %312 = vector.load %arg9[%c0_223, %c640] : memref<18x1152xf32, #tpu.memory_space<vmem>>, vector<1x128xf32>
    tpu.vector_store %arg9[%c0_223, %c640], %311 {strides = array<i32>} : memref<18x1152xf32, #tpu.memory_space<vmem>>, vector<1x128xf32>,
    %c1_224 = arith.constant 1 : index
    %c1_225 = arith.constant 1 : index
    %c2_226 = arith.constant 2 : index
    %c0_227 = arith.constant 0 : index
    %313 = vector.load %arg8[%c1_224, %c1_225, %c2_226, %c0_227] : memref<2x8x8x128xf32, #tpu.memory_space<vmem>>, vector<1x1x1x128xf32>
    %314 = vector.shape_cast %313 : vector<1x1x1x128xf32> to vector<1x128xf32>
    %c1_228 = arith.constant 1 : index
    %c640_229 = arith.constant 640 : index
    %315 = vector.load %arg9[%c1_228, %c640_229] : memref<18x1152xf32, #tpu.memory_space<vmem>>, vector<1x128xf32>
    tpu.vector_store %arg9[%c1_228, %c640_229], %314 {strides = array<i32>} : memref<18x1152xf32, #tpu.memory_space<vmem>>, vector<1x128xf32>,
    %c0_230 = arith.constant 0 : index
    %c2_231 = arith.constant 2 : index
    %c0_232 = arith.constant 0 : index
    %c0_233 = arith.constant 0 : index
    %316 = vector.load %arg8[%c0_230, %c2_231, %c0_232, %c0_233] : memref<2x8x8x128xf32, #tpu.memory_space<vmem>>, vector<1x1x1x128xf32>
    %317 = vector.shape_cast %316 : vector<1x1x1x128xf32> to vector<1x128xf32>
    %c0_234 = arith.constant 0 : index
    %c768 = arith.constant 768 : index
    %318 = vector.load %arg9[%c0_234, %c768] : memref<18x1152xf32, #tpu.memory_space<vmem>>, vector<1x128xf32>
    tpu.vector_store %arg9[%c0_234, %c768], %317 {strides = array<i32>} : memref<18x1152xf32, #tpu.memory_space<vmem>>, vector<1x128xf32>,
    %c1_235 = arith.constant 1 : index
    %c2_236 = arith.constant 2 : index
    %c0_237 = arith.constant 0 : index
    %c0_238 = arith.constant 0 : index
    %319 = vector.load %arg8[%c1_235, %c2_236, %c0_237, %c0_238] : memref<2x8x8x128xf32, #tpu.memory_space<vmem>>, vector<1x1x1x128xf32>
    %320 = vector.shape_cast %319 : vector<1x1x1x128xf32> to vector<1x128xf32>
    %c1_239 = arith.constant 1 : index
    %c768_240 = arith.constant 768 : index
    %321 = vector.load %arg9[%c1_239, %c768_240] : memref<18x1152xf32, #tpu.memory_space<vmem>>, vector<1x128xf32>
    tpu.vector_store %arg9[%c1_239, %c768_240], %320 {strides = array<i32>} : memref<18x1152xf32, #tpu.memory_space<vmem>>, vector<1x128xf32>,
    %c0_241 = arith.constant 0 : index
    %c2_242 = arith.constant 2 : index
    %c1_243 = arith.constant 1 : index
    %c0_244 = arith.constant 0 : index
    %322 = vector.load %arg8[%c0_241, %c2_242, %c1_243, %c0_244] : memref<2x8x8x128xf32, #tpu.memory_space<vmem>>, vector<1x1x1x128xf32>
    %323 = vector.shape_cast %322 : vector<1x1x1x128xf32> to vector<1x128xf32>
    %c0_245 = arith.constant 0 : index
    %c896 = arith.constant 896 : index
    %324 = vector.load %arg9[%c0_245, %c896] : memref<18x1152xf32, #tpu.memory_space<vmem>>, vector<1x128xf32>
    tpu.vector_store %arg9[%c0_245, %c896], %323 {strides = array<i32>} : memref<18x1152xf32, #tpu.memory_space<vmem>>, vector<1x128xf32>,
    %c1_246 = arith.constant 1 : index
    %c2_247 = arith.constant 2 : index
    %c1_248 = arith.constant 1 : index
    %c0_249 = arith.constant 0 : index
    %325 = vector.load %arg8[%c1_246, %c2_247, %c1_248, %c0_249] : memref<2x8x8x128xf32, #tpu.memory_space<vmem>>, vector<1x1x1x128xf32>
    %326 = vector.shape_cast %325 : vector<1x1x1x128xf32> to vector<1x128xf32>
    %c1_250 = arith.constant 1 : index
    %c896_251 = arith.constant 896 : index
    %327 = vector.load %arg9[%c1_250, %c896_251] : memref<18x1152xf32, #tpu.memory_space<vmem>>, vector<1x128xf32>
    tpu.vector_store %arg9[%c1_250, %c896_251], %326 {strides = array<i32>} : memref<18x1152xf32, #tpu.memory_space<vmem>>, vector<1x128xf32>,
    %c0_252 = arith.constant 0 : index
    %c2_253 = arith.constant 2 : index
    %c2_254 = arith.constant 2 : index
    %c0_255 = arith.constant 0 : index
    %328 = vector.load %arg8[%c0_252, %c2_253, %c2_254, %c0_255] : memref<2x8x8x128xf32, #tpu.memory_space<vmem>>, vector<1x1x1x128xf32>
    %329 = vector.shape_cast %328 : vector<1x1x1x128xf32> to vector<1x128xf32>
    %c0_256 = arith.constant 0 : index
    %c1024 = arith.constant 1024 : index
    %330 = vector.load %arg9[%c0_256, %c1024] : memref<18x1152xf32, #tpu.memory_space<vmem>>, vector<1x128xf32>
    tpu.vector_store %arg9[%c0_256, %c1024], %329 {strides = array<i32>} : memref<18x1152xf32, #tpu.memory_space<vmem>>, vector<1x128xf32>,
    %c1_257 = arith.constant 1 : index
    %c2_258 = arith.constant 2 : index
    %c2_259 = arith.constant 2 : index
    %c0_260 = arith.constant 0 : index
    %331 = vector.load %arg8[%c1_257, %c2_258, %c2_259, %c0_260] : memref<2x8x8x128xf32, #tpu.memory_space<vmem>>, vector<1x1x1x128xf32>
    %332 = vector.shape_cast %331 : vector<1x1x1x128xf32> to vector<1x128xf32>
    %c1_261 = arith.constant 1 : index
    %c1024_262 = arith.constant 1024 : index
    %333 = vector.load %arg9[%c1_261, %c1024_262] : memref<18x1152xf32, #tpu.memory_space<vmem>>, vector<1x128xf32>
    tpu.vector_store %arg9[%c1_261, %c1024_262], %332 {strides = array<i32>} : memref<18x1152xf32, #tpu.memory_space<vmem>>, vector<1x128xf32>,
    %c0_263 = arith.constant 0 : index
    %c0_264 = arith.constant 0 : index
    %c2_265 = arith.constant 2 : index
    %c0_266 = arith.constant 0 : index
    %334 = vector.load %arg8[%c0_263, %c0_264, %c2_265, %c0_266] : memref<2x8x8x128xf32, #tpu.memory_space<vmem>>, vector<1x1x1x128xf32>
    %335 = vector.shape_cast %334 : vector<1x1x1x128xf32> to vector<1x128xf32>
    %c2_267 = arith.constant 2 : index
    %c0_268 = arith.constant 0 : index
    %336 = vector.load %arg9[%c2_267, %c0_268] : memref<18x1152xf32, #tpu.memory_space<vmem>>, vector<1x128xf32>
    tpu.vector_store %arg9[%c2_267, %c0_268], %335 {strides = array<i32>} : memref<18x1152xf32, #tpu.memory_space<vmem>>, vector<1x128xf32>,
    %c1_269 = arith.constant 1 : index
    %c0_270 = arith.constant 0 : index
    %c2_271 = arith.constant 2 : index
    %c0_272 = arith.constant 0 : index
    %337 = vector.load %arg8[%c1_269, %c0_270, %c2_271, %c0_272] : memref<2x8x8x128xf32, #tpu.memory_space<vmem>>, vector<1x1x1x128xf32>
    %338 = vector.shape_cast %337 : vector<1x1x1x128xf32> to vector<1x128xf32>
    %c3_273 = arith.constant 3 : index
    %c0_274 = arith.constant 0 : index
    %339 = vector.load %arg9[%c3_273, %c0_274] : memref<18x1152xf32, #tpu.memory_space<vmem>>, vector<1x128xf32>
    tpu.vector_store %arg9[%c3_273, %c0_274], %338 {strides = array<i32>} : memref<18x1152xf32, #tpu.memory_space<vmem>>, vector<1x128xf32>,
    %c0_275 = arith.constant 0 : index
    %c0_276 = arith.constant 0 : index
    %c3_277 = arith.constant 3 : index
    %c0_278 = arith.constant 0 : index
    %340 = vector.load %arg8[%c0_275, %c0_276, %c3_277, %c0_278] : memref<2x8x8x128xf32, #tpu.memory_space<vmem>>, vector<1x1x1x128xf32>
    %341 = vector.shape_cast %340 : vector<1x1x1x128xf32> to vector<1x128xf32>
    %c2_279 = arith.constant 2 : index
    %c128_280 = arith.constant 128 : index
    %342 = vector.load %arg9[%c2_279, %c128_280] : memref<18x1152xf32, #tpu.memory_space<vmem>>, vector<1x128xf32>
    tpu.vector_store %arg9[%c2_279, %c128_280], %341 {strides = array<i32>} : memref<18x1152xf32, #tpu.memory_space<vmem>>, vector<1x128xf32>,
    %c1_281 = arith.constant 1 : index
    %c0_282 = arith.constant 0 : index
    %c3_283 = arith.constant 3 : index
    %c0_284 = arith.constant 0 : index
    %343 = vector.load %arg8[%c1_281, %c0_282, %c3_283, %c0_284] : memref<2x8x8x128xf32, #tpu.memory_space<vmem>>, vector<1x1x1x128xf32>
    %344 = vector.shape_cast %343 : vector<1x1x1x128xf32> to vector<1x128xf32>
    %c3_285 = arith.constant 3 : index
    %c128_286 = arith.constant 128 : index
    %345 = vector.load %arg9[%c3_285, %c128_286] : memref<18x1152xf32, #tpu.memory_space<vmem>>, vector<1x128xf32>
    tpu.vector_store %arg9[%c3_285, %c128_286], %344 {strides = array<i32>} : memref<18x1152xf32, #tpu.memory_space<vmem>>, vector<1x128xf32>,
    %c0_287 = arith.constant 0 : index
    %c0_288 = arith.constant 0 : index
    %c4_289 = arith.constant 4 : index
    %c0_290 = arith.constant 0 : index
    %346 = vector.load %arg8[%c0_287, %c0_288, %c4_289, %c0_290] : memref<2x8x8x128xf32, #tpu.memory_space<vmem>>, vector<1x1x1x128xf32>
    %347 = vector.shape_cast %346 : vector<1x1x1x128xf32> to vector<1x128xf32>
    %c2_291 = arith.constant 2 : index
    %c256_292 = arith.constant 256 : index
    %348 = vector.load %arg9[%c2_291, %c256_292] : memref<18x1152xf32, #tpu.memory_space<vmem>>, vector<1x128xf32>
    tpu.vector_store %arg9[%c2_291, %c256_292], %347 {strides = array<i32>} : memref<18x1152xf32, #tpu.memory_space<vmem>>, vector<1x128xf32>,
    %c1_293 = arith.constant 1 : index
    %c0_294 = arith.constant 0 : index
    %c4_295 = arith.constant 4 : index
    %c0_296 = arith.constant 0 : index
    %349 = vector.load %arg8[%c1_293, %c0_294, %c4_295, %c0_296] : memref<2x8x8x128xf32, #tpu.memory_space<vmem>>, vector<1x1x1x128xf32>
    %350 = vector.shape_cast %349 : vector<1x1x1x128xf32> to vector<1x128xf32>
    %c3_297 = arith.constant 3 : index
    %c256_298 = arith.constant 256 : index
    %351 = vector.load %arg9[%c3_297, %c256_298] : memref<18x1152xf32, #tpu.memory_space<vmem>>, vector<1x128xf32>
    tpu.vector_store %arg9[%c3_297, %c256_298], %350 {strides = array<i32>} : memref<18x1152xf32, #tpu.memory_space<vmem>>, vector<1x128xf32>,
    %c0_299 = arith.constant 0 : index
    %c1_300 = arith.constant 1 : index
    %c2_301 = arith.constant 2 : index
    %c0_302 = arith.constant 0 : index
    %352 = vector.load %arg8[%c0_299, %c1_300, %c2_301, %c0_302] : memref<2x8x8x128xf32, #tpu.memory_space<vmem>>, vector<1x1x1x128xf32>
    %353 = vector.shape_cast %352 : vector<1x1x1x128xf32> to vector<1x128xf32>
    %c2_303 = arith.constant 2 : index
    %c384_304 = arith.constant 384 : index
    %354 = vector.load %arg9[%c2_303, %c384_304] : memref<18x1152xf32, #tpu.memory_space<vmem>>, vector<1x128xf32>
    tpu.vector_store %arg9[%c2_303, %c384_304], %353 {strides = array<i32>} : memref<18x1152xf32, #tpu.memory_space<vmem>>, vector<1x128xf32>,
    %c1_305 = arith.constant 1 : index
    %c1_306 = arith.constant 1 : index
    %c2_307 = arith.constant 2 : index
    %c0_308 = arith.constant 0 : index
    %355 = vector.load %arg8[%c1_305, %c1_306, %c2_307, %c0_308] : memref<2x8x8x128xf32, #tpu.memory_space<vmem>>, vector<1x1x1x128xf32>
    %356 = vector.shape_cast %355 : vector<1x1x1x128xf32> to vector<1x128xf32>
    %c3_309 = arith.constant 3 : index
    %c384_310 = arith.constant 384 : index
    %357 = vector.load %arg9[%c3_309, %c384_310] : memref<18x1152xf32, #tpu.memory_space<vmem>>, vector<1x128xf32>
    tpu.vector_store %arg9[%c3_309, %c384_310], %356 {strides = array<i32>} : memref<18x1152xf32, #tpu.memory_space<vmem>>, vector<1x128xf32>,
    %c0_311 = arith.constant 0 : index
    %c1_312 = arith.constant 1 : index
    %c3_313 = arith.constant 3 : index
    %c0_314 = arith.constant 0 : index
    %358 = vector.load %arg8[%c0_311, %c1_312, %c3_313, %c0_314] : memref<2x8x8x128xf32, #tpu.memory_space<vmem>>, vector<1x1x1x128xf32>
    %359 = vector.shape_cast %358 : vector<1x1x1x128xf32> to vector<1x128xf32>
    %c2_315 = arith.constant 2 : index
    %c512_316 = arith.constant 512 : index
    %360 = vector.load %arg9[%c2_315, %c512_316] : memref<18x1152xf32, #tpu.memory_space<vmem>>, vector<1x128xf32>
    tpu.vector_store %arg9[%c2_315, %c512_316], %359 {strides = array<i32>} : memref<18x1152xf32, #tpu.memory_space<vmem>>, vector<1x128xf32>,
    %c1_317 = arith.constant 1 : index
    %c1_318 = arith.constant 1 : index
    %c3_319 = arith.constant 3 : index
    %c0_320 = arith.constant 0 : index
    %361 = vector.load %arg8[%c1_317, %c1_318, %c3_319, %c0_320] : memref<2x8x8x128xf32, #tpu.memory_space<vmem>>, vector<1x1x1x128xf32>
    %362 = vector.shape_cast %361 : vector<1x1x1x128xf32> to vector<1x128xf32>
    %c3_321 = arith.constant 3 : index
    %c512_322 = arith.constant 512 : index
    %363 = vector.load %arg9[%c3_321, %c512_322] : memref<18x1152xf32, #tpu.memory_space<vmem>>, vector<1x128xf32>
    tpu.vector_store %arg9[%c3_321, %c512_322], %362 {strides = array<i32>} : memref<18x1152xf32, #tpu.memory_space<vmem>>, vector<1x128xf32>,
    %c0_323 = arith.constant 0 : index
    %c1_324 = arith.constant 1 : index
    %c4_325 = arith.constant 4 : index
    %c0_326 = arith.constant 0 : index
    %364 = vector.load %arg8[%c0_323, %c1_324, %c4_325, %c0_326] : memref<2x8x8x128xf32, #tpu.memory_space<vmem>>, vector<1x1x1x128xf32>
    %365 = vector.shape_cast %364 : vector<1x1x1x128xf32> to vector<1x128xf32>
    %c2_327 = arith.constant 2 : index
    %c640_328 = arith.constant 640 : index
    %366 = vector.load %arg9[%c2_327, %c640_328] : memref<18x1152xf32, #tpu.memory_space<vmem>>, vector<1x128xf32>
    tpu.vector_store %arg9[%c2_327, %c640_328], %365 {strides = array<i32>} : memref<18x1152xf32, #tpu.memory_space<vmem>>, vector<1x128xf32>,
    %c1_329 = arith.constant 1 : index
    %c1_330 = arith.constant 1 : index
    %c4_331 = arith.constant 4 : index
    %c0_332 = arith.constant 0 : index
    %367 = vector.load %arg8[%c1_329, %c1_330, %c4_331, %c0_332] : memref<2x8x8x128xf32, #tpu.memory_space<vmem>>, vector<1x1x1x128xf32>
    %368 = vector.shape_cast %367 : vector<1x1x1x128xf32> to vector<1x128xf32>
    %c3_333 = arith.constant 3 : index
    %c640_334 = arith.constant 640 : index
    %369 = vector.load %arg9[%c3_333, %c640_334] : memref<18x1152xf32, #tpu.memory_space<vmem>>, vector<1x128xf32>
    tpu.vector_store %arg9[%c3_333, %c640_334], %368 {strides = array<i32>} : memref<18x1152xf32, #tpu.memory_space<vmem>>, vector<1x128xf32>,
    %c0_335 = arith.constant 0 : index
    %c2_336 = arith.constant 2 : index
    %c2_337 = arith.constant 2 : index
    %c0_338 = arith.constant 0 : index
    %370 = vector.load %arg8[%c0_335, %c2_336, %c2_337, %c0_338] : memref<2x8x8x128xf32, #tpu.memory_space<vmem>>, vector<1x1x1x128xf32>
    %371 = vector.shape_cast %370 : vector<1x1x1x128xf32> to vector<1x128xf32>
    %c2_339 = arith.constant 2 : index
    %c768_340 = arith.constant 768 : index
    %372 = vector.load %arg9[%c2_339, %c768_340] : memref<18x1152xf32, #tpu.memory_space<vmem>>, vector<1x128xf32>
    tpu.vector_store %arg9[%c2_339, %c768_340], %371 {strides = array<i32>} : memref<18x1152xf32, #tpu.memory_space<vmem>>, vector<1x128xf32>,
    %c1_341 = arith.constant 1 : index
    %c2_342 = arith.constant 2 : index
    %c2_343 = arith.constant 2 : index
    %c0_344 = arith.constant 0 : index
    %373 = vector.load %arg8[%c1_341, %c2_342, %c2_343, %c0_344] : memref<2x8x8x128xf32, #tpu.memory_space<vmem>>, vector<1x1x1x128xf32>
    %374 = vector.shape_cast %373 : vector<1x1x1x128xf32> to vector<1x128xf32>
    %c3_345 = arith.constant 3 : index
    %c768_346 = arith.constant 768 : index
    %375 = vector.load %arg9[%c3_345, %c768_346] : memref<18x1152xf32, #tpu.memory_space<vmem>>, vector<1x128xf32>
    tpu.vector_store %arg9[%c3_345, %c768_346], %374 {strides = array<i32>} : memref<18x1152xf32, #tpu.memory_space<vmem>>, vector<1x128xf32>,
    %c0_347 = arith.constant 0 : index
    %c2_348 = arith.constant 2 : index
    %c3_349 = arith.constant 3 : index
    %c0_350 = arith.constant 0 : index
    %376 = vector.load %arg8[%c0_347, %c2_348, %c3_349, %c0_350] : memref<2x8x8x128xf32, #tpu.memory_space<vmem>>, vector<1x1x1x128xf32>
    %377 = vector.shape_cast %376 : vector<1x1x1x128xf32> to vector<1x128xf32>
    %c2_351 = arith.constant 2 : index
    %c896_352 = arith.constant 896 : index
    %378 = vector.load %arg9[%c2_351, %c896_352] : memref<18x1152xf32, #tpu.memory_space<vmem>>, vector<1x128xf32>
    tpu.vector_store %arg9[%c2_351, %c896_352], %377 {strides = array<i32>} : memref<18x1152xf32, #tpu.memory_space<vmem>>, vector<1x128xf32>,
    %c1_353 = arith.constant 1 : index
    %c2_354 = arith.constant 2 : index
    %c3_355 = arith.constant 3 : index
    %c0_356 = arith.constant 0 : index
    %379 = vector.load %arg8[%c1_353, %c2_354, %c3_355, %c0_356] : memref<2x8x8x128xf32, #tpu.memory_space<vmem>>, vector<1x1x1x128xf32>
    %380 = vector.shape_cast %379 : vector<1x1x1x128xf32> to vector<1x128xf32>
    %c3_357 = arith.constant 3 : index
    %c896_358 = arith.constant 896 : index
    %381 = vector.load %arg9[%c3_357, %c896_358] : memref<18x1152xf32, #tpu.memory_space<vmem>>, vector<1x128xf32>
    tpu.vector_store %arg9[%c3_357, %c896_358], %380 {strides = array<i32>} : memref<18x1152xf32, #tpu.memory_space<vmem>>, vector<1x128xf32>,
    %c0_359 = arith.constant 0 : index
    %c2_360 = arith.constant 2 : index
    %c4_361 = arith.constant 4 : index
    %c0_362 = arith.constant 0 : index
    %382 = vector.load %arg8[%c0_359, %c2_360, %c4_361, %c0_362] : memref<2x8x8x128xf32, #tpu.memory_space<vmem>>, vector<1x1x1x128xf32>
    %383 = vector.shape_cast %382 : vector<1x1x1x128xf32> to vector<1x128xf32>
    %c2_363 = arith.constant 2 : index
    %c1024_364 = arith.constant 1024 : index
    %384 = vector.load %arg9[%c2_363, %c1024_364] : memref<18x1152xf32, #tpu.memory_space<vmem>>, vector<1x128xf32>
    tpu.vector_store %arg9[%c2_363, %c1024_364], %383 {strides = array<i32>} : memref<18x1152xf32, #tpu.memory_space<vmem>>, vector<1x128xf32>,
    %c1_365 = arith.constant 1 : index
    %c2_366 = arith.constant 2 : index
    %c4_367 = arith.constant 4 : index
    %c0_368 = arith.constant 0 : index
    %385 = vector.load %arg8[%c1_365, %c2_366, %c4_367, %c0_368] : memref<2x8x8x128xf32, #tpu.memory_space<vmem>>, vector<1x1x1x128xf32>
    %386 = vector.shape_cast %385 : vector<1x1x1x128xf32> to vector<1x128xf32>
    %c3_369 = arith.constant 3 : index
    %c1024_370 = arith.constant 1024 : index
    %387 = vector.load %arg9[%c3_369, %c1024_370] : memref<18x1152xf32, #tpu.memory_space<vmem>>, vector<1x128xf32>
    tpu.vector_store %arg9[%c3_369, %c1024_370], %386 {strides = array<i32>} : memref<18x1152xf32, #tpu.memory_space<vmem>>, vector<1x128xf32>,
    %c0_371 = arith.constant 0 : index
    %c0_372 = arith.constant 0 : index
    %c4_373 = arith.constant 4 : index
    %c0_374 = arith.constant 0 : index
    %388 = vector.load %arg8[%c0_371, %c0_372, %c4_373, %c0_374] : memref<2x8x8x128xf32, #tpu.memory_space<vmem>>, vector<1x1x1x128xf32>
    %389 = vector.shape_cast %388 : vector<1x1x1x128xf32> to vector<1x128xf32>
    %c4_375 = arith.constant 4 : index
    %c0_376 = arith.constant 0 : index
    %390 = vector.load %arg9[%c4_375, %c0_376] : memref<18x1152xf32, #tpu.memory_space<vmem>>, vector<1x128xf32>
    tpu.vector_store %arg9[%c4_375, %c0_376], %389 {strides = array<i32>} : memref<18x1152xf32, #tpu.memory_space<vmem>>, vector<1x128xf32>,
    %c1_377 = arith.constant 1 : index
    %c0_378 = arith.constant 0 : index
    %c4_379 = arith.constant 4 : index
    %c0_380 = arith.constant 0 : index
    %391 = vector.load %arg8[%c1_377, %c0_378, %c4_379, %c0_380] : memref<2x8x8x128xf32, #tpu.memory_space<vmem>>, vector<1x1x1x128xf32>
    %392 = vector.shape_cast %391 : vector<1x1x1x128xf32> to vector<1x128xf32>
    %c5_381 = arith.constant 5 : index
    %c0_382 = arith.constant 0 : index
    %393 = vector.load %arg9[%c5_381, %c0_382] : memref<18x1152xf32, #tpu.memory_space<vmem>>, vector<1x128xf32>
    tpu.vector_store %arg9[%c5_381, %c0_382], %392 {strides = array<i32>} : memref<18x1152xf32, #tpu.memory_space<vmem>>, vector<1x128xf32>,
    %c0_383 = arith.constant 0 : index
    %c0_384 = arith.constant 0 : index
    %c5_385 = arith.constant 5 : index
    %c0_386 = arith.constant 0 : index
    %394 = vector.load %arg8[%c0_383, %c0_384, %c5_385, %c0_386] : memref<2x8x8x128xf32, #tpu.memory_space<vmem>>, vector<1x1x1x128xf32>
    %395 = vector.shape_cast %394 : vector<1x1x1x128xf32> to vector<1x128xf32>
    %c4_387 = arith.constant 4 : index
    %c128_388 = arith.constant 128 : index
    %396 = vector.load %arg9[%c4_387, %c128_388] : memref<18x1152xf32, #tpu.memory_space<vmem>>, vector<1x128xf32>
    tpu.vector_store %arg9[%c4_387, %c128_388], %395 {strides = array<i32>} : memref<18x1152xf32, #tpu.memory_space<vmem>>, vector<1x128xf32>,
    %c1_389 = arith.constant 1 : index
    %c0_390 = arith.constant 0 : index
    %c5_391 = arith.constant 5 : index
    %c0_392 = arith.constant 0 : index
    %397 = vector.load %arg8[%c1_389, %c0_390, %c5_391, %c0_392] : memref<2x8x8x128xf32, #tpu.memory_space<vmem>>, vector<1x1x1x128xf32>
    %398 = vector.shape_cast %397 : vector<1x1x1x128xf32> to vector<1x128xf32>
    %c5_393 = arith.constant 5 : index
    %c128_394 = arith.constant 128 : index
    %399 = vector.load %arg9[%c5_393, %c128_394] : memref<18x1152xf32, #tpu.memory_space<vmem>>, vector<1x128xf32>
    tpu.vector_store %arg9[%c5_393, %c128_394], %398 {strides = array<i32>} : memref<18x1152xf32, #tpu.memory_space<vmem>>, vector<1x128xf32>,
    %c0_395 = arith.constant 0 : index
    %c0_396 = arith.constant 0 : index
    %c6_397 = arith.constant 6 : index
    %c0_398 = arith.constant 0 : index
    %400 = vector.load %arg8[%c0_395, %c0_396, %c6_397, %c0_398] : memref<2x8x8x128xf32, #tpu.memory_space<vmem>>, vector<1x1x1x128xf32>
    %401 = vector.shape_cast %400 : vector<1x1x1x128xf32> to vector<1x128xf32>
    %c4_399 = arith.constant 4 : index
    %c256_400 = arith.constant 256 : index
    %402 = vector.load %arg9[%c4_399, %c256_400] : memref<18x1152xf32, #tpu.memory_space<vmem>>, vector<1x128xf32>
    tpu.vector_store %arg9[%c4_399, %c256_400], %401 {strides = array<i32>} : memref<18x1152xf32, #tpu.memory_space<vmem>>, vector<1x128xf32>,
    %c1_401 = arith.constant 1 : index
    %c0_402 = arith.constant 0 : index
    %c6_403 = arith.constant 6 : index
    %c0_404 = arith.constant 0 : index
    %403 = vector.load %arg8[%c1_401, %c0_402, %c6_403, %c0_404] : memref<2x8x8x128xf32, #tpu.memory_space<vmem>>, vector<1x1x1x128xf32>
    %404 = vector.shape_cast %403 : vector<1x1x1x128xf32> to vector<1x128xf32>
    %c5_405 = arith.constant 5 : index
    %c256_406 = arith.constant 256 : index
    %405 = vector.load %arg9[%c5_405, %c256_406] : memref<18x1152xf32, #tpu.memory_space<vmem>>, vector<1x128xf32>
    tpu.vector_store %arg9[%c5_405, %c256_406], %404 {strides = array<i32>} : memref<18x1152xf32, #tpu.memory_space<vmem>>, vector<1x128xf32>,
    %c0_407 = arith.constant 0 : index
    %c1_408 = arith.constant 1 : index
    %c4_409 = arith.constant 4 : index
    %c0_410 = arith.constant 0 : index
    %406 = vector.load %arg8[%c0_407, %c1_408, %c4_409, %c0_410] : memref<2x8x8x128xf32, #tpu.memory_space<vmem>>, vector<1x1x1x128xf32>
    %407 = vector.shape_cast %406 : vector<1x1x1x128xf32> to vector<1x128xf32>
    %c4_411 = arith.constant 4 : index
    %c384_412 = arith.constant 384 : index
    %408 = vector.load %arg9[%c4_411, %c384_412] : memref<18x1152xf32, #tpu.memory_space<vmem>>, vector<1x128xf32>
    tpu.vector_store %arg9[%c4_411, %c384_412], %407 {strides = array<i32>} : memref<18x1152xf32, #tpu.memory_space<vmem>>, vector<1x128xf32>,
    %c1_413 = arith.constant 1 : index
    %c1_414 = arith.constant 1 : index
    %c4_415 = arith.constant 4 : index
    %c0_416 = arith.constant 0 : index
    %409 = vector.load %arg8[%c1_413, %c1_414, %c4_415, %c0_416] : memref<2x8x8x128xf32, #tpu.memory_space<vmem>>, vector<1x1x1x128xf32>
    %410 = vector.shape_cast %409 : vector<1x1x1x128xf32> to vector<1x128xf32>
    %c5_417 = arith.constant 5 : index
    %c384_418 = arith.constant 384 : index
    %411 = vector.load %arg9[%c5_417, %c384_418] : memref<18x1152xf32, #tpu.memory_space<vmem>>, vector<1x128xf32>
    tpu.vector_store %arg9[%c5_417, %c384_418], %410 {strides = array<i32>} : memref<18x1152xf32, #tpu.memory_space<vmem>>, vector<1x128xf32>,
    %c0_419 = arith.constant 0 : index
    %c1_420 = arith.constant 1 : index
    %c5_421 = arith.constant 5 : index
    %c0_422 = arith.constant 0 : index
    %412 = vector.load %arg8[%c0_419, %c1_420, %c5_421, %c0_422] : memref<2x8x8x128xf32, #tpu.memory_space<vmem>>, vector<1x1x1x128xf32>
    %413 = vector.shape_cast %412 : vector<1x1x1x128xf32> to vector<1x128xf32>
    %c4_423 = arith.constant 4 : index
    %c512_424 = arith.constant 512 : index
    %414 = vector.load %arg9[%c4_423, %c512_424] : memref<18x1152xf32, #tpu.memory_space<vmem>>, vector<1x128xf32>
    tpu.vector_store %arg9[%c4_423, %c512_424], %413 {strides = array<i32>} : memref<18x1152xf32, #tpu.memory_space<vmem>>, vector<1x128xf32>,
    %c1_425 = arith.constant 1 : index
    %c1_426 = arith.constant 1 : index
    %c5_427 = arith.constant 5 : index
    %c0_428 = arith.constant 0 : index
    %415 = vector.load %arg8[%c1_425, %c1_426, %c5_427, %c0_428] : memref<2x8x8x128xf32, #tpu.memory_space<vmem>>, vector<1x1x1x128xf32>
    %416 = vector.shape_cast %415 : vector<1x1x1x128xf32> to vector<1x128xf32>
    %c5_429 = arith.constant 5 : index
    %c512_430 = arith.constant 512 : index
    %417 = vector.load %arg9[%c5_429, %c512_430] : memref<18x1152xf32, #tpu.memory_space<vmem>>, vector<1x128xf32>
    tpu.vector_store %arg9[%c5_429, %c512_430], %416 {strides = array<i32>} : memref<18x1152xf32, #tpu.memory_space<vmem>>, vector<1x128xf32>,
    %c0_431 = arith.constant 0 : index
    %c1_432 = arith.constant 1 : index
    %c6_433 = arith.constant 6 : index
    %c0_434 = arith.constant 0 : index
    %418 = vector.load %arg8[%c0_431, %c1_432, %c6_433, %c0_434] : memref<2x8x8x128xf32, #tpu.memory_space<vmem>>, vector<1x1x1x128xf32>
    %419 = vector.shape_cast %418 : vector<1x1x1x128xf32> to vector<1x128xf32>
    %c4_435 = arith.constant 4 : index
    %c640_436 = arith.constant 640 : index
    %420 = vector.load %arg9[%c4_435, %c640_436] : memref<18x1152xf32, #tpu.memory_space<vmem>>, vector<1x128xf32>
    tpu.vector_store %arg9[%c4_435, %c640_436], %419 {strides = array<i32>} : memref<18x1152xf32, #tpu.memory_space<vmem>>, vector<1x128xf32>,
    %c1_437 = arith.constant 1 : index
    %c1_438 = arith.constant 1 : index
    %c6_439 = arith.constant 6 : index
    %c0_440 = arith.constant 0 : index
    %421 = vector.load %arg8[%c1_437, %c1_438, %c6_439, %c0_440] : memref<2x8x8x128xf32, #tpu.memory_space<vmem>>, vector<1x1x1x128xf32>
    %422 = vector.shape_cast %421 : vector<1x1x1x128xf32> to vector<1x128xf32>
    %c5_441 = arith.constant 5 : index
    %c640_442 = arith.constant 640 : index
    %423 = vector.load %arg9[%c5_441, %c640_442] : memref<18x1152xf32, #tpu.memory_space<vmem>>, vector<1x128xf32>
    tpu.vector_store %arg9[%c5_441, %c640_442], %422 {strides = array<i32>} : memref<18x1152xf32, #tpu.memory_space<vmem>>, vector<1x128xf32>,
    %c0_443 = arith.constant 0 : index
    %c2_444 = arith.constant 2 : index
    %c4_445 = arith.constant 4 : index
    %c0_446 = arith.constant 0 : index
    %424 = vector.load %arg8[%c0_443, %c2_444, %c4_445, %c0_446] : memref<2x8x8x128xf32, #tpu.memory_space<vmem>>, vector<1x1x1x128xf32>
    %425 = vector.shape_cast %424 : vector<1x1x1x128xf32> to vector<1x128xf32>
    %c4_447 = arith.constant 4 : index
    %c768_448 = arith.constant 768 : index
    %426 = vector.load %arg9[%c4_447, %c768_448] : memref<18x1152xf32, #tpu.memory_space<vmem>>, vector<1x128xf32>
    tpu.vector_store %arg9[%c4_447, %c768_448], %425 {strides = array<i32>} : memref<18x1152xf32, #tpu.memory_space<vmem>>, vector<1x128xf32>,
    %c1_449 = arith.constant 1 : index
    %c2_450 = arith.constant 2 : index
    %c4_451 = arith.constant 4 : index
    %c0_452 = arith.constant 0 : index
    %427 = vector.load %arg8[%c1_449, %c2_450, %c4_451, %c0_452] : memref<2x8x8x128xf32, #tpu.memory_space<vmem>>, vector<1x1x1x128xf32>
    %428 = vector.shape_cast %427 : vector<1x1x1x128xf32> to vector<1x128xf32>
    %c5_453 = arith.constant 5 : index
    %c768_454 = arith.constant 768 : index
    %429 = vector.load %arg9[%c5_453, %c768_454] : memref<18x1152xf32, #tpu.memory_space<vmem>>, vector<1x128xf32>
    tpu.vector_store %arg9[%c5_453, %c768_454], %428 {strides = array<i32>} : memref<18x1152xf32, #tpu.memory_space<vmem>>, vector<1x128xf32>,
    %c0_455 = arith.constant 0 : index
    %c2_456 = arith.constant 2 : index
    %c5_457 = arith.constant 5 : index
    %c0_458 = arith.constant 0 : index
    %430 = vector.load %arg8[%c0_455, %c2_456, %c5_457, %c0_458] : memref<2x8x8x128xf32, #tpu.memory_space<vmem>>, vector<1x1x1x128xf32>
    %431 = vector.shape_cast %430 : vector<1x1x1x128xf32> to vector<1x128xf32>
    %c4_459 = arith.constant 4 : index
    %c896_460 = arith.constant 896 : index
    %432 = vector.load %arg9[%c4_459, %c896_460] : memref<18x1152xf32, #tpu.memory_space<vmem>>, vector<1x128xf32>
    tpu.vector_store %arg9[%c4_459, %c896_460], %431 {strides = array<i32>} : memref<18x1152xf32, #tpu.memory_space<vmem>>, vector<1x128xf32>,
    %c1_461 = arith.constant 1 : index
    %c2_462 = arith.constant 2 : index
    %c5_463 = arith.constant 5 : index
    %c0_464 = arith.constant 0 : index
    %433 = vector.load %arg8[%c1_461, %c2_462, %c5_463, %c0_464] : memref<2x8x8x128xf32, #tpu.memory_space<vmem>>, vector<1x1x1x128xf32>
    %434 = vector.shape_cast %433 : vector<1x1x1x128xf32> to vector<1x128xf32>
    %c5_465 = arith.constant 5 : index
    %c896_466 = arith.constant 896 : index
    %435 = vector.load %arg9[%c5_465, %c896_466] : memref<18x1152xf32, #tpu.memory_space<vmem>>, vector<1x128xf32>
    tpu.vector_store %arg9[%c5_465, %c896_466], %434 {strides = array<i32>} : memref<18x1152xf32, #tpu.memory_space<vmem>>, vector<1x128xf32>,
    %c0_467 = arith.constant 0 : index
    %c2_468 = arith.constant 2 : index
    %c6_469 = arith.constant 6 : index
    %c0_470 = arith.constant 0 : index
    %436 = vector.load %arg8[%c0_467, %c2_468, %c6_469, %c0_470] : memref<2x8x8x128xf32, #tpu.memory_space<vmem>>, vector<1x1x1x128xf32>
    %437 = vector.shape_cast %436 : vector<1x1x1x128xf32> to vector<1x128xf32>
    %c4_471 = arith.constant 4 : index
    %c1024_472 = arith.constant 1024 : index
    %438 = vector.load %arg9[%c4_471, %c1024_472] : memref<18x1152xf32, #tpu.memory_space<vmem>>, vector<1x128xf32>
    tpu.vector_store %arg9[%c4_471, %c1024_472], %437 {strides = array<i32>} : memref<18x1152xf32, #tpu.memory_space<vmem>>, vector<1x128xf32>,
    %c1_473 = arith.constant 1 : index
    %c2_474 = arith.constant 2 : index
    %c6_475 = arith.constant 6 : index
    %c0_476 = arith.constant 0 : index
    %439 = vector.load %arg8[%c1_473, %c2_474, %c6_475, %c0_476] : memref<2x8x8x128xf32, #tpu.memory_space<vmem>>, vector<1x1x1x128xf32>
    %440 = vector.shape_cast %439 : vector<1x1x1x128xf32> to vector<1x128xf32>
    %c5_477 = arith.constant 5 : index
    %c1024_478 = arith.constant 1024 : index
    %441 = vector.load %arg9[%c5_477, %c1024_478] : memref<18x1152xf32, #tpu.memory_space<vmem>>, vector<1x128xf32>
    tpu.vector_store %arg9[%c5_477, %c1024_478], %440 {strides = array<i32>} : memref<18x1152xf32, #tpu.memory_space<vmem>>, vector<1x128xf32>,
    %c0_479 = arith.constant 0 : index
    %c2_480 = arith.constant 2 : index
    %c0_481 = arith.constant 0 : index
    %c0_482 = arith.constant 0 : index
    %442 = vector.load %arg8[%c0_479, %c2_480, %c0_481, %c0_482] : memref<2x8x8x128xf32, #tpu.memory_space<vmem>>, vector<1x1x1x128xf32>
    %443 = vector.shape_cast %442 : vector<1x1x1x128xf32> to vector<1x128xf32>
    %c6_483 = arith.constant 6 : index
    %c0_484 = arith.constant 0 : index
    %444 = vector.load %arg9[%c6_483, %c0_484] : memref<18x1152xf32, #tpu.memory_space<vmem>>, vector<1x128xf32>
    tpu.vector_store %arg9[%c6_483, %c0_484], %443 {strides = array<i32>} : memref<18x1152xf32, #tpu.memory_space<vmem>>, vector<1x128xf32>,
    %c1_485 = arith.constant 1 : index
    %c2_486 = arith.constant 2 : index
    %c0_487 = arith.constant 0 : index
    %c0_488 = arith.constant 0 : index
    %445 = vector.load %arg8[%c1_485, %c2_486, %c0_487, %c0_488] : memref<2x8x8x128xf32, #tpu.memory_space<vmem>>, vector<1x1x1x128xf32>
    %446 = vector.shape_cast %445 : vector<1x1x1x128xf32> to vector<1x128xf32>
    %c7_489 = arith.constant 7 : index
    %c0_490 = arith.constant 0 : index
    %447 = vector.load %arg9[%c7_489, %c0_490] : memref<18x1152xf32, #tpu.memory_space<vmem>>, vector<1x128xf32>
    tpu.vector_store %arg9[%c7_489, %c0_490], %446 {strides = array<i32>} : memref<18x1152xf32, #tpu.memory_space<vmem>>, vector<1x128xf32>,
    %c0_491 = arith.constant 0 : index
    %c2_492 = arith.constant 2 : index
    %c1_493 = arith.constant 1 : index
    %c0_494 = arith.constant 0 : index
    %448 = vector.load %arg8[%c0_491, %c2_492, %c1_493, %c0_494] : memref<2x8x8x128xf32, #tpu.memory_space<vmem>>, vector<1x1x1x128xf32>
    %449 = vector.shape_cast %448 : vector<1x1x1x128xf32> to vector<1x128xf32>
    %c6_495 = arith.constant 6 : index
    %c128_496 = arith.constant 128 : index
    %450 = vector.load %arg9[%c6_495, %c128_496] : memref<18x1152xf32, #tpu.memory_space<vmem>>, vector<1x128xf32>
    tpu.vector_store %arg9[%c6_495, %c128_496], %449 {strides = array<i32>} : memref<18x1152xf32, #tpu.memory_space<vmem>>, vector<1x128xf32>,
    %c1_497 = arith.constant 1 : index
    %c2_498 = arith.constant 2 : index
    %c1_499 = arith.constant 1 : index
    %c0_500 = arith.constant 0 : index
    %451 = vector.load %arg8[%c1_497, %c2_498, %c1_499, %c0_500] : memref<2x8x8x128xf32, #tpu.memory_space<vmem>>, vector<1x1x1x128xf32>
    %452 = vector.shape_cast %451 : vector<1x1x1x128xf32> to vector<1x128xf32>
    %c7_501 = arith.constant 7 : index
    %c128_502 = arith.constant 128 : index
    %453 = vector.load %arg9[%c7_501, %c128_502] : memref<18x1152xf32, #tpu.memory_space<vmem>>, vector<1x128xf32>
    tpu.vector_store %arg9[%c7_501, %c128_502], %452 {strides = array<i32>} : memref<18x1152xf32, #tpu.memory_space<vmem>>, vector<1x128xf32>,
    %c0_503 = arith.constant 0 : index
    %c2_504 = arith.constant 2 : index
    %c2_505 = arith.constant 2 : index
    %c0_506 = arith.constant 0 : index
    %454 = vector.load %arg8[%c0_503, %c2_504, %c2_505, %c0_506] : memref<2x8x8x128xf32, #tpu.memory_space<vmem>>, vector<1x1x1x128xf32>
    %455 = vector.shape_cast %454 : vector<1x1x1x128xf32> to vector<1x128xf32>
    %c6_507 = arith.constant 6 : index
    %c256_508 = arith.constant 256 : index
    %456 = vector.load %arg9[%c6_507, %c256_508] : memref<18x1152xf32, #tpu.memory_space<vmem>>, vector<1x128xf32>
    tpu.vector_store %arg9[%c6_507, %c256_508], %455 {strides = array<i32>} : memref<18x1152xf32, #tpu.memory_space<vmem>>, vector<1x128xf32>,
    %c1_509 = arith.constant 1 : index
    %c2_510 = arith.constant 2 : index
    %c2_511 = arith.constant 2 : index
    %c0_512 = arith.constant 0 : index
    %457 = vector.load %arg8[%c1_509, %c2_510, %c2_511, %c0_512] : memref<2x8x8x128xf32, #tpu.memory_space<vmem>>, vector<1x1x1x128xf32>
    %458 = vector.shape_cast %457 : vector<1x1x1x128xf32> to vector<1x128xf32>
    %c7_513 = arith.constant 7 : index
    %c256_514 = arith.constant 256 : index
    %459 = vector.load %arg9[%c7_513, %c256_514] : memref<18x1152xf32, #tpu.memory_space<vmem>>, vector<1x128xf32>
    tpu.vector_store %arg9[%c7_513, %c256_514], %458 {strides = array<i32>} : memref<18x1152xf32, #tpu.memory_space<vmem>>, vector<1x128xf32>,
    %c0_515 = arith.constant 0 : index
    %c3_516 = arith.constant 3 : index
    %c0_517 = arith.constant 0 : index
    %c0_518 = arith.constant 0 : index
    %460 = vector.load %arg8[%c0_515, %c3_516, %c0_517, %c0_518] : memref<2x8x8x128xf32, #tpu.memory_space<vmem>>, vector<1x1x1x128xf32>
    %461 = vector.shape_cast %460 : vector<1x1x1x128xf32> to vector<1x128xf32>
    %c6_519 = arith.constant 6 : index
    %c384_520 = arith.constant 384 : index
    %462 = vector.load %arg9[%c6_519, %c384_520] : memref<18x1152xf32, #tpu.memory_space<vmem>>, vector<1x128xf32>
    tpu.vector_store %arg9[%c6_519, %c384_520], %461 {strides = array<i32>} : memref<18x1152xf32, #tpu.memory_space<vmem>>, vector<1x128xf32>,
    %c1_521 = arith.constant 1 : index
    %c3_522 = arith.constant 3 : index
    %c0_523 = arith.constant 0 : index
    %c0_524 = arith.constant 0 : index
    %463 = vector.load %arg8[%c1_521, %c3_522, %c0_523, %c0_524] : memref<2x8x8x128xf32, #tpu.memory_space<vmem>>, vector<1x1x1x128xf32>
    %464 = vector.shape_cast %463 : vector<1x1x1x128xf32> to vector<1x128xf32>
    %c7_525 = arith.constant 7 : index
    %c384_526 = arith.constant 384 : index
    %465 = vector.load %arg9[%c7_525, %c384_526] : memref<18x1152xf32, #tpu.memory_space<vmem>>, vector<1x128xf32>
    tpu.vector_store %arg9[%c7_525, %c384_526], %464 {strides = array<i32>} : memref<18x1152xf32, #tpu.memory_space<vmem>>, vector<1x128xf32>,
    %c0_527 = arith.constant 0 : index
    %c3_528 = arith.constant 3 : index
    %c1_529 = arith.constant 1 : index
    %c0_530 = arith.constant 0 : index
    %466 = vector.load %arg8[%c0_527, %c3_528, %c1_529, %c0_530] : memref<2x8x8x128xf32, #tpu.memory_space<vmem>>, vector<1x1x1x128xf32>
    %467 = vector.shape_cast %466 : vector<1x1x1x128xf32> to vector<1x128xf32>
    %c6_531 = arith.constant 6 : index
    %c512_532 = arith.constant 512 : index
    %468 = vector.load %arg9[%c6_531, %c512_532] : memref<18x1152xf32, #tpu.memory_space<vmem>>, vector<1x128xf32>
    tpu.vector_store %arg9[%c6_531, %c512_532], %467 {strides = array<i32>} : memref<18x1152xf32, #tpu.memory_space<vmem>>, vector<1x128xf32>,
    %c1_533 = arith.constant 1 : index
    %c3_534 = arith.constant 3 : index
    %c1_535 = arith.constant 1 : index
    %c0_536 = arith.constant 0 : index
    %469 = vector.load %arg8[%c1_533, %c3_534, %c1_535, %c0_536] : memref<2x8x8x128xf32, #tpu.memory_space<vmem>>, vector<1x1x1x128xf32>
    %470 = vector.shape_cast %469 : vector<1x1x1x128xf32> to vector<1x128xf32>
    %c7_537 = arith.constant 7 : index
    %c512_538 = arith.constant 512 : index
    %471 = vector.load %arg9[%c7_537, %c512_538] : memref<18x1152xf32, #tpu.memory_space<vmem>>, vector<1x128xf32>
    tpu.vector_store %arg9[%c7_537, %c512_538], %470 {strides = array<i32>} : memref<18x1152xf32, #tpu.memory_space<vmem>>, vector<1x128xf32>,
    %c0_539 = arith.constant 0 : index
    %c3_540 = arith.constant 3 : index
    %c2_541 = arith.constant 2 : index
    %c0_542 = arith.constant 0 : index
    %472 = vector.load %arg8[%c0_539, %c3_540, %c2_541, %c0_542] : memref<2x8x8x128xf32, #tpu.memory_space<vmem>>, vector<1x1x1x128xf32>
    %473 = vector.shape_cast %472 : vector<1x1x1x128xf32> to vector<1x128xf32>
    %c6_543 = arith.constant 6 : index
    %c640_544 = arith.constant 640 : index
    %474 = vector.load %arg9[%c6_543, %c640_544] : memref<18x1152xf32, #tpu.memory_space<vmem>>, vector<1x128xf32>
    tpu.vector_store %arg9[%c6_543, %c640_544], %473 {strides = array<i32>} : memref<18x1152xf32, #tpu.memory_space<vmem>>, vector<1x128xf32>,
    %c1_545 = arith.constant 1 : index
    %c3_546 = arith.constant 3 : index
    %c2_547 = arith.constant 2 : index
    %c0_548 = arith.constant 0 : index
    %475 = vector.load %arg8[%c1_545, %c3_546, %c2_547, %c0_548] : memref<2x8x8x128xf32, #tpu.memory_space<vmem>>, vector<1x1x1x128xf32>
    %476 = vector.shape_cast %475 : vector<1x1x1x128xf32> to vector<1x128xf32>
    %c7_549 = arith.constant 7 : index
    %c640_550 = arith.constant 640 : index
    %477 = vector.load %arg9[%c7_549, %c640_550] : memref<18x1152xf32, #tpu.memory_space<vmem>>, vector<1x128xf32>
    tpu.vector_store %arg9[%c7_549, %c640_550], %476 {strides = array<i32>} : memref<18x1152xf32, #tpu.memory_space<vmem>>, vector<1x128xf32>,
    %c0_551 = arith.constant 0 : index
    %c4_552 = arith.constant 4 : index
    %c0_553 = arith.constant 0 : index
    %c0_554 = arith.constant 0 : index
    %478 = vector.load %arg8[%c0_551, %c4_552, %c0_553, %c0_554] : memref<2x8x8x128xf32, #tpu.memory_space<vmem>>, vector<1x1x1x128xf32>
    %479 = vector.shape_cast %478 : vector<1x1x1x128xf32> to vector<1x128xf32>
    %c6_555 = arith.constant 6 : index
    %c768_556 = arith.constant 768 : index
    %480 = vector.load %arg9[%c6_555, %c768_556] : memref<18x1152xf32, #tpu.memory_space<vmem>>, vector<1x128xf32>
    tpu.vector_store %arg9[%c6_555, %c768_556], %479 {strides = array<i32>} : memref<18x1152xf32, #tpu.memory_space<vmem>>, vector<1x128xf32>,
    %c1_557 = arith.constant 1 : index
    %c4_558 = arith.constant 4 : index
    %c0_559 = arith.constant 0 : index
    %c0_560 = arith.constant 0 : index
    %481 = vector.load %arg8[%c1_557, %c4_558, %c0_559, %c0_560] : memref<2x8x8x128xf32, #tpu.memory_space<vmem>>, vector<1x1x1x128xf32>
    %482 = vector.shape_cast %481 : vector<1x1x1x128xf32> to vector<1x128xf32>
    %c7_561 = arith.constant 7 : index
    %c768_562 = arith.constant 768 : index
    %483 = vector.load %arg9[%c7_561, %c768_562] : memref<18x1152xf32, #tpu.memory_space<vmem>>, vector<1x128xf32>
    tpu.vector_store %arg9[%c7_561, %c768_562], %482 {strides = array<i32>} : memref<18x1152xf32, #tpu.memory_space<vmem>>, vector<1x128xf32>,
    %c0_563 = arith.constant 0 : index
    %c4_564 = arith.constant 4 : index
    %c1_565 = arith.constant 1 : index
    %c0_566 = arith.constant 0 : index
    %484 = vector.load %arg8[%c0_563, %c4_564, %c1_565, %c0_566] : memref<2x8x8x128xf32, #tpu.memory_space<vmem>>, vector<1x1x1x128xf32>
    %485 = vector.shape_cast %484 : vector<1x1x1x128xf32> to vector<1x128xf32>
    %c6_567 = arith.constant 6 : index
    %c896_568 = arith.constant 896 : index
    %486 = vector.load %arg9[%c6_567, %c896_568] : memref<18x1152xf32, #tpu.memory_space<vmem>>, vector<1x128xf32>
    tpu.vector_store %arg9[%c6_567, %c896_568], %485 {strides = array<i32>} : memref<18x1152xf32, #tpu.memory_space<vmem>>, vector<1x128xf32>,
    %c1_569 = arith.constant 1 : index
    %c4_570 = arith.constant 4 : index
    %c1_571 = arith.constant 1 : index
    %c0_572 = arith.constant 0 : index
    %487 = vector.load %arg8[%c1_569, %c4_570, %c1_571, %c0_572] : memref<2x8x8x128xf32, #tpu.memory_space<vmem>>, vector<1x1x1x128xf32>
    %488 = vector.shape_cast %487 : vector<1x1x1x128xf32> to vector<1x128xf32>
    %c7_573 = arith.constant 7 : index
    %c896_574 = arith.constant 896 : index
    %489 = vector.load %arg9[%c7_573, %c896_574] : memref<18x1152xf32, #tpu.memory_space<vmem>>, vector<1x128xf32>
    tpu.vector_store %arg9[%c7_573, %c896_574], %488 {strides = array<i32>} : memref<18x1152xf32, #tpu.memory_space<vmem>>, vector<1x128xf32>,
    %c0_575 = arith.constant 0 : index
    %c4_576 = arith.constant 4 : index
    %c2_577 = arith.constant 2 : index
    %c0_578 = arith.constant 0 : index
    %490 = vector.load %arg8[%c0_575, %c4_576, %c2_577, %c0_578] : memref<2x8x8x128xf32, #tpu.memory_space<vmem>>, vector<1x1x1x128xf32>
    %491 = vector.shape_cast %490 : vector<1x1x1x128xf32> to vector<1x128xf32>
    %c6_579 = arith.constant 6 : index
    %c1024_580 = arith.constant 1024 : index
    %492 = vector.load %arg9[%c6_579, %c1024_580] : memref<18x1152xf32, #tpu.memory_space<vmem>>, vector<1x128xf32>
    tpu.vector_store %arg9[%c6_579, %c1024_580], %491 {strides = array<i32>} : memref<18x1152xf32, #tpu.memory_space<vmem>>, vector<1x128xf32>,
    %c1_581 = arith.constant 1 : index
    %c4_582 = arith.constant 4 : index
    %c2_583 = arith.constant 2 : index
    %c0_584 = arith.constant 0 : index
    %493 = vector.load %arg8[%c1_581, %c4_582, %c2_583, %c0_584] : memref<2x8x8x128xf32, #tpu.memory_space<vmem>>, vector<1x1x1x128xf32>
    %494 = vector.shape_cast %493 : vector<1x1x1x128xf32> to vector<1x128xf32>
    %c7_585 = arith.constant 7 : index
    %c1024_586 = arith.constant 1024 : index
    %495 = vector.load %arg9[%c7_585, %c1024_586] : memref<18x1152xf32, #tpu.memory_space<vmem>>, vector<1x128xf32>
    tpu.vector_store %arg9[%c7_585, %c1024_586], %494 {strides = array<i32>} : memref<18x1152xf32, #tpu.memory_space<vmem>>, vector<1x128xf32>,
    %c0_587 = arith.constant 0 : index
    %c2_588 = arith.constant 2 : index
    %c2_589 = arith.constant 2 : index
    %c0_590 = arith.constant 0 : index
    %496 = vector.load %arg8[%c0_587, %c2_588, %c2_589, %c0_590] : memref<2x8x8x128xf32, #tpu.memory_space<vmem>>, vector<1x1x1x128xf32>
    %497 = vector.shape_cast %496 : vector<1x1x1x128xf32> to vector<1x128xf32>
    %c8_591 = arith.constant 8 : index
    %c0_592 = arith.constant 0 : index
    %498 = vector.load %arg9[%c8_591, %c0_592] : memref<18x1152xf32, #tpu.memory_space<vmem>>, vector<1x128xf32>
    tpu.vector_store %arg9[%c8_591, %c0_592], %497 {strides = array<i32>} : memref<18x1152xf32, #tpu.memory_space<vmem>>, vector<1x128xf32>,
    %c1_593 = arith.constant 1 : index
    %c2_594 = arith.constant 2 : index
    %c2_595 = arith.constant 2 : index
    %c0_596 = arith.constant 0 : index
    %499 = vector.load %arg8[%c1_593, %c2_594, %c2_595, %c0_596] : memref<2x8x8x128xf32, #tpu.memory_space<vmem>>, vector<1x1x1x128xf32>
    %500 = vector.shape_cast %499 : vector<1x1x1x128xf32> to vector<1x128xf32>
    %c9_597 = arith.constant 9 : index
    %c0_598 = arith.constant 0 : index
    %501 = vector.load %arg9[%c9_597, %c0_598] : memref<18x1152xf32, #tpu.memory_space<vmem>>, vector<1x128xf32>
    tpu.vector_store %arg9[%c9_597, %c0_598], %500 {strides = array<i32>} : memref<18x1152xf32, #tpu.memory_space<vmem>>, vector<1x128xf32>,
    %c0_599 = arith.constant 0 : index
    %c2_600 = arith.constant 2 : index
    %c3_601 = arith.constant 3 : index
    %c0_602 = arith.constant 0 : index
    %502 = vector.load %arg8[%c0_599, %c2_600, %c3_601, %c0_602] : memref<2x8x8x128xf32, #tpu.memory_space<vmem>>, vector<1x1x1x128xf32>
    %503 = vector.shape_cast %502 : vector<1x1x1x128xf32> to vector<1x128xf32>
    %c8_603 = arith.constant 8 : index
    %c128_604 = arith.constant 128 : index
    %504 = vector.load %arg9[%c8_603, %c128_604] : memref<18x1152xf32, #tpu.memory_space<vmem>>, vector<1x128xf32>
    tpu.vector_store %arg9[%c8_603, %c128_604], %503 {strides = array<i32>} : memref<18x1152xf32, #tpu.memory_space<vmem>>, vector<1x128xf32>,
    %c1_605 = arith.constant 1 : index
    %c2_606 = arith.constant 2 : index
    %c3_607 = arith.constant 3 : index
    %c0_608 = arith.constant 0 : index
    %505 = vector.load %arg8[%c1_605, %c2_606, %c3_607, %c0_608] : memref<2x8x8x128xf32, #tpu.memory_space<vmem>>, vector<1x1x1x128xf32>
    %506 = vector.shape_cast %505 : vector<1x1x1x128xf32> to vector<1x128xf32>
    %c9_609 = arith.constant 9 : index
    %c128_610 = arith.constant 128 : index
    %507 = vector.load %arg9[%c9_609, %c128_610] : memref<18x1152xf32, #tpu.memory_space<vmem>>, vector<1x128xf32>
    tpu.vector_store %arg9[%c9_609, %c128_610], %506 {strides = array<i32>} : memref<18x1152xf32, #tpu.memory_space<vmem>>, vector<1x128xf32>,
    %c0_611 = arith.constant 0 : index
    %c2_612 = arith.constant 2 : index
    %c4_613 = arith.constant 4 : index
    %c0_614 = arith.constant 0 : index
    %508 = vector.load %arg8[%c0_611, %c2_612, %c4_613, %c0_614] : memref<2x8x8x128xf32, #tpu.memory_space<vmem>>, vector<1x1x1x128xf32>
    %509 = vector.shape_cast %508 : vector<1x1x1x128xf32> to vector<1x128xf32>
    %c8_615 = arith.constant 8 : index
    %c256_616 = arith.constant 256 : index
    %510 = vector.load %arg9[%c8_615, %c256_616] : memref<18x1152xf32, #tpu.memory_space<vmem>>, vector<1x128xf32>
    tpu.vector_store %arg9[%c8_615, %c256_616], %509 {strides = array<i32>} : memref<18x1152xf32, #tpu.memory_space<vmem>>, vector<1x128xf32>,
    %c1_617 = arith.constant 1 : index
    %c2_618 = arith.constant 2 : index
    %c4_619 = arith.constant 4 : index
    %c0_620 = arith.constant 0 : index
    %511 = vector.load %arg8[%c1_617, %c2_618, %c4_619, %c0_620] : memref<2x8x8x128xf32, #tpu.memory_space<vmem>>, vector<1x1x1x128xf32>
    %512 = vector.shape_cast %511 : vector<1x1x1x128xf32> to vector<1x128xf32>
    %c9_621 = arith.constant 9 : index
    %c256_622 = arith.constant 256 : index
    %513 = vector.load %arg9[%c9_621, %c256_622] : memref<18x1152xf32, #tpu.memory_space<vmem>>, vector<1x128xf32>
    tpu.vector_store %arg9[%c9_621, %c256_622], %512 {strides = array<i32>} : memref<18x1152xf32, #tpu.memory_space<vmem>>, vector<1x128xf32>,
    %c0_623 = arith.constant 0 : index
    %c3_624 = arith.constant 3 : index
    %c2_625 = arith.constant 2 : index
    %c0_626 = arith.constant 0 : index
    %514 = vector.load %arg8[%c0_623, %c3_624, %c2_625, %c0_626] : memref<2x8x8x128xf32, #tpu.memory_space<vmem>>, vector<1x1x1x128xf32>
    %515 = vector.shape_cast %514 : vector<1x1x1x128xf32> to vector<1x128xf32>
    %c8_627 = arith.constant 8 : index
    %c384_628 = arith.constant 384 : index
    %516 = vector.load %arg9[%c8_627, %c384_628] : memref<18x1152xf32, #tpu.memory_space<vmem>>, vector<1x128xf32>
    tpu.vector_store %arg9[%c8_627, %c384_628], %515 {strides = array<i32>} : memref<18x1152xf32, #tpu.memory_space<vmem>>, vector<1x128xf32>,
    %c1_629 = arith.constant 1 : index
    %c3_630 = arith.constant 3 : index
    %c2_631 = arith.constant 2 : index
    %c0_632 = arith.constant 0 : index
    %517 = vector.load %arg8[%c1_629, %c3_630, %c2_631, %c0_632] : memref<2x8x8x128xf32, #tpu.memory_space<vmem>>, vector<1x1x1x128xf32>
    %518 = vector.shape_cast %517 : vector<1x1x1x128xf32> to vector<1x128xf32>
    %c9_633 = arith.constant 9 : index
    %c384_634 = arith.constant 384 : index
    %519 = vector.load %arg9[%c9_633, %c384_634] : memref<18x1152xf32, #tpu.memory_space<vmem>>, vector<1x128xf32>
    tpu.vector_store %arg9[%c9_633, %c384_634], %518 {strides = array<i32>} : memref<18x1152xf32, #tpu.memory_space<vmem>>, vector<1x128xf32>,
    %c0_635 = arith.constant 0 : index
    %c3_636 = arith.constant 3 : index
    %c3_637 = arith.constant 3 : index
    %c0_638 = arith.constant 0 : index
    %520 = vector.load %arg8[%c0_635, %c3_636, %c3_637, %c0_638] : memref<2x8x8x128xf32, #tpu.memory_space<vmem>>, vector<1x1x1x128xf32>
    %521 = vector.shape_cast %520 : vector<1x1x1x128xf32> to vector<1x128xf32>
    %c8_639 = arith.constant 8 : index
    %c512_640 = arith.constant 512 : index
    %522 = vector.load %arg9[%c8_639, %c512_640] : memref<18x1152xf32, #tpu.memory_space<vmem>>, vector<1x128xf32>
    tpu.vector_store %arg9[%c8_639, %c512_640], %521 {strides = array<i32>} : memref<18x1152xf32, #tpu.memory_space<vmem>>, vector<1x128xf32>,
    %c1_641 = arith.constant 1 : index
    %c3_642 = arith.constant 3 : index
    %c3_643 = arith.constant 3 : index
    %c0_644 = arith.constant 0 : index
    %523 = vector.load %arg8[%c1_641, %c3_642, %c3_643, %c0_644] : memref<2x8x8x128xf32, #tpu.memory_space<vmem>>, vector<1x1x1x128xf32>
    %524 = vector.shape_cast %523 : vector<1x1x1x128xf32> to vector<1x128xf32>
    %c9_645 = arith.constant 9 : index
    %c512_646 = arith.constant 512 : index
    %525 = vector.load %arg9[%c9_645, %c512_646] : memref<18x1152xf32, #tpu.memory_space<vmem>>, vector<1x128xf32>
    tpu.vector_store %arg9[%c9_645, %c512_646], %524 {strides = array<i32>} : memref<18x1152xf32, #tpu.memory_space<vmem>>, vector<1x128xf32>,
    %c0_647 = arith.constant 0 : index
    %c3_648 = arith.constant 3 : index
    %c4_649 = arith.constant 4 : index
    %c0_650 = arith.constant 0 : index
    %526 = vector.load %arg8[%c0_647, %c3_648, %c4_649, %c0_650] : memref<2x8x8x128xf32, #tpu.memory_space<vmem>>, vector<1x1x1x128xf32>
    %527 = vector.shape_cast %526 : vector<1x1x1x128xf32> to vector<1x128xf32>
    %c8_651 = arith.constant 8 : index
    %c640_652 = arith.constant 640 : index
    %528 = vector.load %arg9[%c8_651, %c640_652] : memref<18x1152xf32, #tpu.memory_space<vmem>>, vector<1x128xf32>
    tpu.vector_store %arg9[%c8_651, %c640_652], %527 {strides = array<i32>} : memref<18x1152xf32, #tpu.memory_space<vmem>>, vector<1x128xf32>,
    %c1_653 = arith.constant 1 : index
    %c3_654 = arith.constant 3 : index
    %c4_655 = arith.constant 4 : index
    %c0_656 = arith.constant 0 : index
    %529 = vector.load %arg8[%c1_653, %c3_654, %c4_655, %c0_656] : memref<2x8x8x128xf32, #tpu.memory_space<vmem>>, vector<1x1x1x128xf32>
    %530 = vector.shape_cast %529 : vector<1x1x1x128xf32> to vector<1x128xf32>
    %c9_657 = arith.constant 9 : index
    %c640_658 = arith.constant 640 : index
    %531 = vector.load %arg9[%c9_657, %c640_658] : memref<18x1152xf32, #tpu.memory_space<vmem>>, vector<1x128xf32>
    tpu.vector_store %arg9[%c9_657, %c640_658], %530 {strides = array<i32>} : memref<18x1152xf32, #tpu.memory_space<vmem>>, vector<1x128xf32>,
    %c0_659 = arith.constant 0 : index
    %c4_660 = arith.constant 4 : index
    %c2_661 = arith.constant 2 : index
    %c0_662 = arith.constant 0 : index
    %532 = vector.load %arg8[%c0_659, %c4_660, %c2_661, %c0_662] : memref<2x8x8x128xf32, #tpu.memory_space<vmem>>, vector<1x1x1x128xf32>
    %533 = vector.shape_cast %532 : vector<1x1x1x128xf32> to vector<1x128xf32>
    %c8_663 = arith.constant 8 : index
    %c768_664 = arith.constant 768 : index
    %534 = vector.load %arg9[%c8_663, %c768_664] : memref<18x1152xf32, #tpu.memory_space<vmem>>, vector<1x128xf32>
    tpu.vector_store %arg9[%c8_663, %c768_664], %533 {strides = array<i32>} : memref<18x1152xf32, #tpu.memory_space<vmem>>, vector<1x128xf32>,
    %c1_665 = arith.constant 1 : index
    %c4_666 = arith.constant 4 : index
    %c2_667 = arith.constant 2 : index
    %c0_668 = arith.constant 0 : index
    %535 = vector.load %arg8[%c1_665, %c4_666, %c2_667, %c0_668] : memref<2x8x8x128xf32, #tpu.memory_space<vmem>>, vector<1x1x1x128xf32>
    %536 = vector.shape_cast %535 : vector<1x1x1x128xf32> to vector<1x128xf32>
    %c9_669 = arith.constant 9 : index
    %c768_670 = arith.constant 768 : index
    %537 = vector.load %arg9[%c9_669, %c768_670] : memref<18x1152xf32, #tpu.memory_space<vmem>>, vector<1x128xf32>
    tpu.vector_store %arg9[%c9_669, %c768_670], %536 {strides = array<i32>} : memref<18x1152xf32, #tpu.memory_space<vmem>>, vector<1x128xf32>,
    %c0_671 = arith.constant 0 : index
    %c4_672 = arith.constant 4 : index
    %c3_673 = arith.constant 3 : index
    %c0_674 = arith.constant 0 : index
    %538 = vector.load %arg8[%c0_671, %c4_672, %c3_673, %c0_674] : memref<2x8x8x128xf32, #tpu.memory_space<vmem>>, vector<1x1x1x128xf32>
    %539 = vector.shape_cast %538 : vector<1x1x1x128xf32> to vector<1x128xf32>
    %c8_675 = arith.constant 8 : index
    %c896_676 = arith.constant 896 : index
    %540 = vector.load %arg9[%c8_675, %c896_676] : memref<18x1152xf32, #tpu.memory_space<vmem>>, vector<1x128xf32>
    tpu.vector_store %arg9[%c8_675, %c896_676], %539 {strides = array<i32>} : memref<18x1152xf32, #tpu.memory_space<vmem>>, vector<1x128xf32>,
    %c1_677 = arith.constant 1 : index
    %c4_678 = arith.constant 4 : index
    %c3_679 = arith.constant 3 : index
    %c0_680 = arith.constant 0 : index
    %541 = vector.load %arg8[%c1_677, %c4_678, %c3_679, %c0_680] : memref<2x8x8x128xf32, #tpu.memory_space<vmem>>, vector<1x1x1x128xf32>
    %542 = vector.shape_cast %541 : vector<1x1x1x128xf32> to vector<1x128xf32>
    %c9_681 = arith.constant 9 : index
    %c896_682 = arith.constant 896 : index
    %543 = vector.load %arg9[%c9_681, %c896_682] : memref<18x1152xf32, #tpu.memory_space<vmem>>, vector<1x128xf32>
    tpu.vector_store %arg9[%c9_681, %c896_682], %542 {strides = array<i32>} : memref<18x1152xf32, #tpu.memory_space<vmem>>, vector<1x128xf32>,
    %c0_683 = arith.constant 0 : index
    %c4_684 = arith.constant 4 : index
    %c4_685 = arith.constant 4 : index
    %c0_686 = arith.constant 0 : index
    %544 = vector.load %arg8[%c0_683, %c4_684, %c4_685, %c0_686] : memref<2x8x8x128xf32, #tpu.memory_space<vmem>>, vector<1x1x1x128xf32>
    %545 = vector.shape_cast %544 : vector<1x1x1x128xf32> to vector<1x128xf32>
    %c8_687 = arith.constant 8 : index
    %c1024_688 = arith.constant 1024 : index
    %546 = vector.load %arg9[%c8_687, %c1024_688] : memref<18x1152xf32, #tpu.memory_space<vmem>>, vector<1x128xf32>
    tpu.vector_store %arg9[%c8_687, %c1024_688], %545 {strides = array<i32>} : memref<18x1152xf32, #tpu.memory_space<vmem>>, vector<1x128xf32>,
    %c1_689 = arith.constant 1 : index
    %c4_690 = arith.constant 4 : index
    %c4_691 = arith.constant 4 : index
    %c0_692 = arith.constant 0 : index
    %547 = vector.load %arg8[%c1_689, %c4_690, %c4_691, %c0_692] : memref<2x8x8x128xf32, #tpu.memory_space<vmem>>, vector<1x1x1x128xf32>
    %548 = vector.shape_cast %547 : vector<1x1x1x128xf32> to vector<1x128xf32>
    %c9_693 = arith.constant 9 : index
    %c1024_694 = arith.constant 1024 : index
    %549 = vector.load %arg9[%c9_693, %c1024_694] : memref<18x1152xf32, #tpu.memory_space<vmem>>, vector<1x128xf32>
    tpu.vector_store %arg9[%c9_693, %c1024_694], %548 {strides = array<i32>} : memref<18x1152xf32, #tpu.memory_space<vmem>>, vector<1x128xf32>,
    %c0_695 = arith.constant 0 : index
    %c2_696 = arith.constant 2 : index
    %c4_697 = arith.constant 4 : index
    %c0_698 = arith.constant 0 : index
    %550 = vector.load %arg8[%c0_695, %c2_696, %c4_697, %c0_698] : memref<2x8x8x128xf32, #tpu.memory_space<vmem>>, vector<1x1x1x128xf32>
    %551 = vector.shape_cast %550 : vector<1x1x1x128xf32> to vector<1x128xf32>
    %c10_699 = arith.constant 10 : index
    %c0_700 = arith.constant 0 : index
    %552 = vector.load %arg9[%c10_699, %c0_700] : memref<18x1152xf32, #tpu.memory_space<vmem>>, vector<1x128xf32>
    tpu.vector_store %arg9[%c10_699, %c0_700], %551 {strides = array<i32>} : memref<18x1152xf32, #tpu.memory_space<vmem>>, vector<1x128xf32>,
    %c1_701 = arith.constant 1 : index
    %c2_702 = arith.constant 2 : index
    %c4_703 = arith.constant 4 : index
    %c0_704 = arith.constant 0 : index
    %553 = vector.load %arg8[%c1_701, %c2_702, %c4_703, %c0_704] : memref<2x8x8x128xf32, #tpu.memory_space<vmem>>, vector<1x1x1x128xf32>
    %554 = vector.shape_cast %553 : vector<1x1x1x128xf32> to vector<1x128xf32>
    %c11_705 = arith.constant 11 : index
    %c0_706 = arith.constant 0 : index
    %555 = vector.load %arg9[%c11_705, %c0_706] : memref<18x1152xf32, #tpu.memory_space<vmem>>, vector<1x128xf32>
    tpu.vector_store %arg9[%c11_705, %c0_706], %554 {strides = array<i32>} : memref<18x1152xf32, #tpu.memory_space<vmem>>, vector<1x128xf32>,
    %c0_707 = arith.constant 0 : index
    %c2_708 = arith.constant 2 : index
    %c5_709 = arith.constant 5 : index
    %c0_710 = arith.constant 0 : index
    %556 = vector.load %arg8[%c0_707, %c2_708, %c5_709, %c0_710] : memref<2x8x8x128xf32, #tpu.memory_space<vmem>>, vector<1x1x1x128xf32>
    %557 = vector.shape_cast %556 : vector<1x1x1x128xf32> to vector<1x128xf32>
    %c10_711 = arith.constant 10 : index
    %c128_712 = arith.constant 128 : index
    %558 = vector.load %arg9[%c10_711, %c128_712] : memref<18x1152xf32, #tpu.memory_space<vmem>>, vector<1x128xf32>
    tpu.vector_store %arg9[%c10_711, %c128_712], %557 {strides = array<i32>} : memref<18x1152xf32, #tpu.memory_space<vmem>>, vector<1x128xf32>,
    %c1_713 = arith.constant 1 : index
    %c2_714 = arith.constant 2 : index
    %c5_715 = arith.constant 5 : index
    %c0_716 = arith.constant 0 : index
    %559 = vector.load %arg8[%c1_713, %c2_714, %c5_715, %c0_716] : memref<2x8x8x128xf32, #tpu.memory_space<vmem>>, vector<1x1x1x128xf32>
    %560 = vector.shape_cast %559 : vector<1x1x1x128xf32> to vector<1x128xf32>
    %c11_717 = arith.constant 11 : index
    %c128_718 = arith.constant 128 : index
    %561 = vector.load %arg9[%c11_717, %c128_718] : memref<18x1152xf32, #tpu.memory_space<vmem>>, vector<1x128xf32>
    tpu.vector_store %arg9[%c11_717, %c128_718], %560 {strides = array<i32>} : memref<18x1152xf32, #tpu.memory_space<vmem>>, vector<1x128xf32>,
    %c0_719 = arith.constant 0 : index
    %c2_720 = arith.constant 2 : index
    %c6_721 = arith.constant 6 : index
    %c0_722 = arith.constant 0 : index
    %562 = vector.load %arg8[%c0_719, %c2_720, %c6_721, %c0_722] : memref<2x8x8x128xf32, #tpu.memory_space<vmem>>, vector<1x1x1x128xf32>
    %563 = vector.shape_cast %562 : vector<1x1x1x128xf32> to vector<1x128xf32>
    %c10_723 = arith.constant 10 : index
    %c256_724 = arith.constant 256 : index
    %564 = vector.load %arg9[%c10_723, %c256_724] : memref<18x1152xf32, #tpu.memory_space<vmem>>, vector<1x128xf32>
    tpu.vector_store %arg9[%c10_723, %c256_724], %563 {strides = array<i32>} : memref<18x1152xf32, #tpu.memory_space<vmem>>, vector<1x128xf32>,
    %c1_725 = arith.constant 1 : index
    %c2_726 = arith.constant 2 : index
    %c6_727 = arith.constant 6 : index
    %c0_728 = arith.constant 0 : index
    %565 = vector.load %arg8[%c1_725, %c2_726, %c6_727, %c0_728] : memref<2x8x8x128xf32, #tpu.memory_space<vmem>>, vector<1x1x1x128xf32>
    %566 = vector.shape_cast %565 : vector<1x1x1x128xf32> to vector<1x128xf32>
    %c11_729 = arith.constant 11 : index
    %c256_730 = arith.constant 256 : index
    %567 = vector.load %arg9[%c11_729, %c256_730] : memref<18x1152xf32, #tpu.memory_space<vmem>>, vector<1x128xf32>
    tpu.vector_store %arg9[%c11_729, %c256_730], %566 {strides = array<i32>} : memref<18x1152xf32, #tpu.memory_space<vmem>>, vector<1x128xf32>,
    %c0_731 = arith.constant 0 : index
    %c3_732 = arith.constant 3 : index
    %c4_733 = arith.constant 4 : index
    %c0_734 = arith.constant 0 : index
    %568 = vector.load %arg8[%c0_731, %c3_732, %c4_733, %c0_734] : memref<2x8x8x128xf32, #tpu.memory_space<vmem>>, vector<1x1x1x128xf32>
    %569 = vector.shape_cast %568 : vector<1x1x1x128xf32> to vector<1x128xf32>
    %c10_735 = arith.constant 10 : index
    %c384_736 = arith.constant 384 : index
    %570 = vector.load %arg9[%c10_735, %c384_736] : memref<18x1152xf32, #tpu.memory_space<vmem>>, vector<1x128xf32>
    tpu.vector_store %arg9[%c10_735, %c384_736], %569 {strides = array<i32>} : memref<18x1152xf32, #tpu.memory_space<vmem>>, vector<1x128xf32>,
    %c1_737 = arith.constant 1 : index
    %c3_738 = arith.constant 3 : index
    %c4_739 = arith.constant 4 : index
    %c0_740 = arith.constant 0 : index
    %571 = vector.load %arg8[%c1_737, %c3_738, %c4_739, %c0_740] : memref<2x8x8x128xf32, #tpu.memory_space<vmem>>, vector<1x1x1x128xf32>
    %572 = vector.shape_cast %571 : vector<1x1x1x128xf32> to vector<1x128xf32>
    %c11_741 = arith.constant 11 : index
    %c384_742 = arith.constant 384 : index
    %573 = vector.load %arg9[%c11_741, %c384_742] : memref<18x1152xf32, #tpu.memory_space<vmem>>, vector<1x128xf32>
    tpu.vector_store %arg9[%c11_741, %c384_742], %572 {strides = array<i32>} : memref<18x1152xf32, #tpu.memory_space<vmem>>, vector<1x128xf32>,
    %c0_743 = arith.constant 0 : index
    %c3_744 = arith.constant 3 : index
    %c5_745 = arith.constant 5 : index
    %c0_746 = arith.constant 0 : index
    %574 = vector.load %arg8[%c0_743, %c3_744, %c5_745, %c0_746] : memref<2x8x8x128xf32, #tpu.memory_space<vmem>>, vector<1x1x1x128xf32>
    %575 = vector.shape_cast %574 : vector<1x1x1x128xf32> to vector<1x128xf32>
    %c10_747 = arith.constant 10 : index
    %c512_748 = arith.constant 512 : index
    %576 = vector.load %arg9[%c10_747, %c512_748] : memref<18x1152xf32, #tpu.memory_space<vmem>>, vector<1x128xf32>
    tpu.vector_store %arg9[%c10_747, %c512_748], %575 {strides = array<i32>} : memref<18x1152xf32, #tpu.memory_space<vmem>>, vector<1x128xf32>,
    %c1_749 = arith.constant 1 : index
    %c3_750 = arith.constant 3 : index
    %c5_751 = arith.constant 5 : index
    %c0_752 = arith.constant 0 : index
    %577 = vector.load %arg8[%c1_749, %c3_750, %c5_751, %c0_752] : memref<2x8x8x128xf32, #tpu.memory_space<vmem>>, vector<1x1x1x128xf32>
    %578 = vector.shape_cast %577 : vector<1x1x1x128xf32> to vector<1x128xf32>
    %c11_753 = arith.constant 11 : index
    %c512_754 = arith.constant 512 : index
    %579 = vector.load %arg9[%c11_753, %c512_754] : memref<18x1152xf32, #tpu.memory_space<vmem>>, vector<1x128xf32>
    tpu.vector_store %arg9[%c11_753, %c512_754], %578 {strides = array<i32>} : memref<18x1152xf32, #tpu.memory_space<vmem>>, vector<1x128xf32>,
    %c0_755 = arith.constant 0 : index
    %c3_756 = arith.constant 3 : index
    %c6_757 = arith.constant 6 : index
    %c0_758 = arith.constant 0 : index
    %580 = vector.load %arg8[%c0_755, %c3_756, %c6_757, %c0_758] : memref<2x8x8x128xf32, #tpu.memory_space<vmem>>, vector<1x1x1x128xf32>
    %581 = vector.shape_cast %580 : vector<1x1x1x128xf32> to vector<1x128xf32>
    %c10_759 = arith.constant 10 : index
    %c640_760 = arith.constant 640 : index
    %582 = vector.load %arg9[%c10_759, %c640_760] : memref<18x1152xf32, #tpu.memory_space<vmem>>, vector<1x128xf32>
    tpu.vector_store %arg9[%c10_759, %c640_760], %581 {strides = array<i32>} : memref<18x1152xf32, #tpu.memory_space<vmem>>, vector<1x128xf32>,
    %c1_761 = arith.constant 1 : index
    %c3_762 = arith.constant 3 : index
    %c6_763 = arith.constant 6 : index
    %c0_764 = arith.constant 0 : index
    %583 = vector.load %arg8[%c1_761, %c3_762, %c6_763, %c0_764] : memref<2x8x8x128xf32, #tpu.memory_space<vmem>>, vector<1x1x1x128xf32>
    %584 = vector.shape_cast %583 : vector<1x1x1x128xf32> to vector<1x128xf32>
    %c11_765 = arith.constant 11 : index
    %c640_766 = arith.constant 640 : index
    %585 = vector.load %arg9[%c11_765, %c640_766] : memref<18x1152xf32, #tpu.memory_space<vmem>>, vector<1x128xf32>
    tpu.vector_store %arg9[%c11_765, %c640_766], %584 {strides = array<i32>} : memref<18x1152xf32, #tpu.memory_space<vmem>>, vector<1x128xf32>,
    %c0_767 = arith.constant 0 : index
    %c4_768 = arith.constant 4 : index
    %c4_769 = arith.constant 4 : index
    %c0_770 = arith.constant 0 : index
    %586 = vector.load %arg8[%c0_767, %c4_768, %c4_769, %c0_770] : memref<2x8x8x128xf32, #tpu.memory_space<vmem>>, vector<1x1x1x128xf32>
    %587 = vector.shape_cast %586 : vector<1x1x1x128xf32> to vector<1x128xf32>
    %c10_771 = arith.constant 10 : index
    %c768_772 = arith.constant 768 : index
    %588 = vector.load %arg9[%c10_771, %c768_772] : memref<18x1152xf32, #tpu.memory_space<vmem>>, vector<1x128xf32>
    tpu.vector_store %arg9[%c10_771, %c768_772], %587 {strides = array<i32>} : memref<18x1152xf32, #tpu.memory_space<vmem>>, vector<1x128xf32>,
    %c1_773 = arith.constant 1 : index
    %c4_774 = arith.constant 4 : index
    %c4_775 = arith.constant 4 : index
    %c0_776 = arith.constant 0 : index
    %589 = vector.load %arg8[%c1_773, %c4_774, %c4_775, %c0_776] : memref<2x8x8x128xf32, #tpu.memory_space<vmem>>, vector<1x1x1x128xf32>
    %590 = vector.shape_cast %589 : vector<1x1x1x128xf32> to vector<1x128xf32>
    %c11_777 = arith.constant 11 : index
    %c768_778 = arith.constant 768 : index
    %591 = vector.load %arg9[%c11_777, %c768_778] : memref<18x1152xf32, #tpu.memory_space<vmem>>, vector<1x128xf32>
    tpu.vector_store %arg9[%c11_777, %c768_778], %590 {strides = array<i32>} : memref<18x1152xf32, #tpu.memory_space<vmem>>, vector<1x128xf32>,
    %c0_779 = arith.constant 0 : index
    %c4_780 = arith.constant 4 : index
    %c5_781 = arith.constant 5 : index
    %c0_782 = arith.constant 0 : index
    %592 = vector.load %arg8[%c0_779, %c4_780, %c5_781, %c0_782] : memref<2x8x8x128xf32, #tpu.memory_space<vmem>>, vector<1x1x1x128xf32>
    %593 = vector.shape_cast %592 : vector<1x1x1x128xf32> to vector<1x128xf32>
    %c10_783 = arith.constant 10 : index
    %c896_784 = arith.constant 896 : index
    %594 = vector.load %arg9[%c10_783, %c896_784] : memref<18x1152xf32, #tpu.memory_space<vmem>>, vector<1x128xf32>
    tpu.vector_store %arg9[%c10_783, %c896_784], %593 {strides = array<i32>} : memref<18x1152xf32, #tpu.memory_space<vmem>>, vector<1x128xf32>,
    %c1_785 = arith.constant 1 : index
    %c4_786 = arith.constant 4 : index
    %c5_787 = arith.constant 5 : index
    %c0_788 = arith.constant 0 : index
    %595 = vector.load %arg8[%c1_785, %c4_786, %c5_787, %c0_788] : memref<2x8x8x128xf32, #tpu.memory_space<vmem>>, vector<1x1x1x128xf32>
    %596 = vector.shape_cast %595 : vector<1x1x1x128xf32> to vector<1x128xf32>
    %c11_789 = arith.constant 11 : index
    %c896_790 = arith.constant 896 : index
    %597 = vector.load %arg9[%c11_789, %c896_790] : memref<18x1152xf32, #tpu.memory_space<vmem>>, vector<1x128xf32>
    tpu.vector_store %arg9[%c11_789, %c896_790], %596 {strides = array<i32>} : memref<18x1152xf32, #tpu.memory_space<vmem>>, vector<1x128xf32>,
    %c0_791 = arith.constant 0 : index
    %c4_792 = arith.constant 4 : index
    %c6_793 = arith.constant 6 : index
    %c0_794 = arith.constant 0 : index
    %598 = vector.load %arg8[%c0_791, %c4_792, %c6_793, %c0_794] : memref<2x8x8x128xf32, #tpu.memory_space<vmem>>, vector<1x1x1x128xf32>
    %599 = vector.shape_cast %598 : vector<1x1x1x128xf32> to vector<1x128xf32>
    %c10_795 = arith.constant 10 : index
    %c1024_796 = arith.constant 1024 : index
    %600 = vector.load %arg9[%c10_795, %c1024_796] : memref<18x1152xf32, #tpu.memory_space<vmem>>, vector<1x128xf32>
    tpu.vector_store %arg9[%c10_795, %c1024_796], %599 {strides = array<i32>} : memref<18x1152xf32, #tpu.memory_space<vmem>>, vector<1x128xf32>,
    %c1_797 = arith.constant 1 : index
    %c4_798 = arith.constant 4 : index
    %c6_799 = arith.constant 6 : index
    %c0_800 = arith.constant 0 : index
    %601 = vector.load %arg8[%c1_797, %c4_798, %c6_799, %c0_800] : memref<2x8x8x128xf32, #tpu.memory_space<vmem>>, vector<1x1x1x128xf32>
    %602 = vector.shape_cast %601 : vector<1x1x1x128xf32> to vector<1x128xf32>
    %c11_801 = arith.constant 11 : index
    %c1024_802 = arith.constant 1024 : index
    %603 = vector.load %arg9[%c11_801, %c1024_802] : memref<18x1152xf32, #tpu.memory_space<vmem>>, vector<1x128xf32>
    tpu.vector_store %arg9[%c11_801, %c1024_802], %602 {strides = array<i32>} : memref<18x1152xf32, #tpu.memory_space<vmem>>, vector<1x128xf32>,
    %c0_803 = arith.constant 0 : index
    %c4_804 = arith.constant 4 : index
    %c0_805 = arith.constant 0 : index
    %c0_806 = arith.constant 0 : index
    %604 = vector.load %arg8[%c0_803, %c4_804, %c0_805, %c0_806] : memref<2x8x8x128xf32, #tpu.memory_space<vmem>>, vector<1x1x1x128xf32>
    %605 = vector.shape_cast %604 : vector<1x1x1x128xf32> to vector<1x128xf32>
    %c12_807 = arith.constant 12 : index
    %c0_808 = arith.constant 0 : index
    %606 = vector.load %arg9[%c12_807, %c0_808] : memref<18x1152xf32, #tpu.memory_space<vmem>>, vector<1x128xf32>
    tpu.vector_store %arg9[%c12_807, %c0_808], %605 {strides = array<i32>} : memref<18x1152xf32, #tpu.memory_space<vmem>>, vector<1x128xf32>,
    %c1_809 = arith.constant 1 : index
    %c4_810 = arith.constant 4 : index
    %c0_811 = arith.constant 0 : index
    %c0_812 = arith.constant 0 : index
    %607 = vector.load %arg8[%c1_809, %c4_810, %c0_811, %c0_812] : memref<2x8x8x128xf32, #tpu.memory_space<vmem>>, vector<1x1x1x128xf32>
    %608 = vector.shape_cast %607 : vector<1x1x1x128xf32> to vector<1x128xf32>
    %c13_813 = arith.constant 13 : index
    %c0_814 = arith.constant 0 : index
    %609 = vector.load %arg9[%c13_813, %c0_814] : memref<18x1152xf32, #tpu.memory_space<vmem>>, vector<1x128xf32>
    tpu.vector_store %arg9[%c13_813, %c0_814], %608 {strides = array<i32>} : memref<18x1152xf32, #tpu.memory_space<vmem>>, vector<1x128xf32>,
    %c0_815 = arith.constant 0 : index
    %c4_816 = arith.constant 4 : index
    %c1_817 = arith.constant 1 : index
    %c0_818 = arith.constant 0 : index
    %610 = vector.load %arg8[%c0_815, %c4_816, %c1_817, %c0_818] : memref<2x8x8x128xf32, #tpu.memory_space<vmem>>, vector<1x1x1x128xf32>
    %611 = vector.shape_cast %610 : vector<1x1x1x128xf32> to vector<1x128xf32>
    %c12_819 = arith.constant 12 : index
    %c128_820 = arith.constant 128 : index
    %612 = vector.load %arg9[%c12_819, %c128_820] : memref<18x1152xf32, #tpu.memory_space<vmem>>, vector<1x128xf32>
    tpu.vector_store %arg9[%c12_819, %c128_820], %611 {strides = array<i32>} : memref<18x1152xf32, #tpu.memory_space<vmem>>, vector<1x128xf32>,
    %c1_821 = arith.constant 1 : index
    %c4_822 = arith.constant 4 : index
    %c1_823 = arith.constant 1 : index
    %c0_824 = arith.constant 0 : index
    %613 = vector.load %arg8[%c1_821, %c4_822, %c1_823, %c0_824] : memref<2x8x8x128xf32, #tpu.memory_space<vmem>>, vector<1x1x1x128xf32>
    %614 = vector.shape_cast %613 : vector<1x1x1x128xf32> to vector<1x128xf32>
    %c13_825 = arith.constant 13 : index
    %c128_826 = arith.constant 128 : index
    %615 = vector.load %arg9[%c13_825, %c128_826] : memref<18x1152xf32, #tpu.memory_space<vmem>>, vector<1x128xf32>
    tpu.vector_store %arg9[%c13_825, %c128_826], %614 {strides = array<i32>} : memref<18x1152xf32, #tpu.memory_space<vmem>>, vector<1x128xf32>,
    %c0_827 = arith.constant 0 : index
    %c4_828 = arith.constant 4 : index
    %c2_829 = arith.constant 2 : index
    %c0_830 = arith.constant 0 : index
    %616 = vector.load %arg8[%c0_827, %c4_828, %c2_829, %c0_830] : memref<2x8x8x128xf32, #tpu.memory_space<vmem>>, vector<1x1x1x128xf32>
    %617 = vector.shape_cast %616 : vector<1x1x1x128xf32> to vector<1x128xf32>
    %c12_831 = arith.constant 12 : index
    %c256_832 = arith.constant 256 : index
    %618 = vector.load %arg9[%c12_831, %c256_832] : memref<18x1152xf32, #tpu.memory_space<vmem>>, vector<1x128xf32>
    tpu.vector_store %arg9[%c12_831, %c256_832], %617 {strides = array<i32>} : memref<18x1152xf32, #tpu.memory_space<vmem>>, vector<1x128xf32>,
    %c1_833 = arith.constant 1 : index
    %c4_834 = arith.constant 4 : index
    %c2_835 = arith.constant 2 : index
    %c0_836 = arith.constant 0 : index
    %619 = vector.load %arg8[%c1_833, %c4_834, %c2_835, %c0_836] : memref<2x8x8x128xf32, #tpu.memory_space<vmem>>, vector<1x1x1x128xf32>
    %620 = vector.shape_cast %619 : vector<1x1x1x128xf32> to vector<1x128xf32>
    %c13_837 = arith.constant 13 : index
    %c256_838 = arith.constant 256 : index
    %621 = vector.load %arg9[%c13_837, %c256_838] : memref<18x1152xf32, #tpu.memory_space<vmem>>, vector<1x128xf32>
    tpu.vector_store %arg9[%c13_837, %c256_838], %620 {strides = array<i32>} : memref<18x1152xf32, #tpu.memory_space<vmem>>, vector<1x128xf32>,
    %c0_839 = arith.constant 0 : index
    %c5_840 = arith.constant 5 : index
    %c0_841 = arith.constant 0 : index
    %c0_842 = arith.constant 0 : index
    %622 = vector.load %arg8[%c0_839, %c5_840, %c0_841, %c0_842] : memref<2x8x8x128xf32, #tpu.memory_space<vmem>>, vector<1x1x1x128xf32>
    %623 = vector.shape_cast %622 : vector<1x1x1x128xf32> to vector<1x128xf32>
    %c12_843 = arith.constant 12 : index
    %c384_844 = arith.constant 384 : index
    %624 = vector.load %arg9[%c12_843, %c384_844] : memref<18x1152xf32, #tpu.memory_space<vmem>>, vector<1x128xf32>
    tpu.vector_store %arg9[%c12_843, %c384_844], %623 {strides = array<i32>} : memref<18x1152xf32, #tpu.memory_space<vmem>>, vector<1x128xf32>,
    %c1_845 = arith.constant 1 : index
    %c5_846 = arith.constant 5 : index
    %c0_847 = arith.constant 0 : index
    %c0_848 = arith.constant 0 : index
    %625 = vector.load %arg8[%c1_845, %c5_846, %c0_847, %c0_848] : memref<2x8x8x128xf32, #tpu.memory_space<vmem>>, vector<1x1x1x128xf32>
    %626 = vector.shape_cast %625 : vector<1x1x1x128xf32> to vector<1x128xf32>
    %c13_849 = arith.constant 13 : index
    %c384_850 = arith.constant 384 : index
    %627 = vector.load %arg9[%c13_849, %c384_850] : memref<18x1152xf32, #tpu.memory_space<vmem>>, vector<1x128xf32>
    tpu.vector_store %arg9[%c13_849, %c384_850], %626 {strides = array<i32>} : memref<18x1152xf32, #tpu.memory_space<vmem>>, vector<1x128xf32>,
    %c0_851 = arith.constant 0 : index
    %c5_852 = arith.constant 5 : index
    %c1_853 = arith.constant 1 : index
    %c0_854 = arith.constant 0 : index
    %628 = vector.load %arg8[%c0_851, %c5_852, %c1_853, %c0_854] : memref<2x8x8x128xf32, #tpu.memory_space<vmem>>, vector<1x1x1x128xf32>
    %629 = vector.shape_cast %628 : vector<1x1x1x128xf32> to vector<1x128xf32>
    %c12_855 = arith.constant 12 : index
    %c512_856 = arith.constant 512 : index
    %630 = vector.load %arg9[%c12_855, %c512_856] : memref<18x1152xf32, #tpu.memory_space<vmem>>, vector<1x128xf32>
    tpu.vector_store %arg9[%c12_855, %c512_856], %629 {strides = array<i32>} : memref<18x1152xf32, #tpu.memory_space<vmem>>, vector<1x128xf32>,
    %c1_857 = arith.constant 1 : index
    %c5_858 = arith.constant 5 : index
    %c1_859 = arith.constant 1 : index
    %c0_860 = arith.constant 0 : index
    %631 = vector.load %arg8[%c1_857, %c5_858, %c1_859, %c0_860] : memref<2x8x8x128xf32, #tpu.memory_space<vmem>>, vector<1x1x1x128xf32>
    %632 = vector.shape_cast %631 : vector<1x1x1x128xf32> to vector<1x128xf32>
    %c13_861 = arith.constant 13 : index
    %c512_862 = arith.constant 512 : index
    %633 = vector.load %arg9[%c13_861, %c512_862] : memref<18x1152xf32, #tpu.memory_space<vmem>>, vector<1x128xf32>
    tpu.vector_store %arg9[%c13_861, %c512_862], %632 {strides = array<i32>} : memref<18x1152xf32, #tpu.memory_space<vmem>>, vector<1x128xf32>,
    %c0_863 = arith.constant 0 : index
    %c5_864 = arith.constant 5 : index
    %c2_865 = arith.constant 2 : index
    %c0_866 = arith.constant 0 : index
    %634 = vector.load %arg8[%c0_863, %c5_864, %c2_865, %c0_866] : memref<2x8x8x128xf32, #tpu.memory_space<vmem>>, vector<1x1x1x128xf32>
    %635 = vector.shape_cast %634 : vector<1x1x1x128xf32> to vector<1x128xf32>
    %c12_867 = arith.constant 12 : index
    %c640_868 = arith.constant 640 : index
    %636 = vector.load %arg9[%c12_867, %c640_868] : memref<18x1152xf32, #tpu.memory_space<vmem>>, vector<1x128xf32>
    tpu.vector_store %arg9[%c12_867, %c640_868], %635 {strides = array<i32>} : memref<18x1152xf32, #tpu.memory_space<vmem>>, vector<1x128xf32>,
    %c1_869 = arith.constant 1 : index
    %c5_870 = arith.constant 5 : index
    %c2_871 = arith.constant 2 : index
    %c0_872 = arith.constant 0 : index
    %637 = vector.load %arg8[%c1_869, %c5_870, %c2_871, %c0_872] : memref<2x8x8x128xf32, #tpu.memory_space<vmem>>, vector<1x1x1x128xf32>
    %638 = vector.shape_cast %637 : vector<1x1x1x128xf32> to vector<1x128xf32>
    %c13_873 = arith.constant 13 : index
    %c640_874 = arith.constant 640 : index
    %639 = vector.load %arg9[%c13_873, %c640_874] : memref<18x1152xf32, #tpu.memory_space<vmem>>, vector<1x128xf32>
    tpu.vector_store %arg9[%c13_873, %c640_874], %638 {strides = array<i32>} : memref<18x1152xf32, #tpu.memory_space<vmem>>, vector<1x128xf32>,
    %c0_875 = arith.constant 0 : index
    %c6_876 = arith.constant 6 : index
    %c0_877 = arith.constant 0 : index
    %c0_878 = arith.constant 0 : index
    %640 = vector.load %arg8[%c0_875, %c6_876, %c0_877, %c0_878] : memref<2x8x8x128xf32, #tpu.memory_space<vmem>>, vector<1x1x1x128xf32>
    %641 = vector.shape_cast %640 : vector<1x1x1x128xf32> to vector<1x128xf32>
    %c12_879 = arith.constant 12 : index
    %c768_880 = arith.constant 768 : index
    %642 = vector.load %arg9[%c12_879, %c768_880] : memref<18x1152xf32, #tpu.memory_space<vmem>>, vector<1x128xf32>
    tpu.vector_store %arg9[%c12_879, %c768_880], %641 {strides = array<i32>} : memref<18x1152xf32, #tpu.memory_space<vmem>>, vector<1x128xf32>,
    %c1_881 = arith.constant 1 : index
    %c6_882 = arith.constant 6 : index
    %c0_883 = arith.constant 0 : index
    %c0_884 = arith.constant 0 : index
    %643 = vector.load %arg8[%c1_881, %c6_882, %c0_883, %c0_884] : memref<2x8x8x128xf32, #tpu.memory_space<vmem>>, vector<1x1x1x128xf32>
    %644 = vector.shape_cast %643 : vector<1x1x1x128xf32> to vector<1x128xf32>
    %c13_885 = arith.constant 13 : index
    %c768_886 = arith.constant 768 : index
    %645 = vector.load %arg9[%c13_885, %c768_886] : memref<18x1152xf32, #tpu.memory_space<vmem>>, vector<1x128xf32>
    tpu.vector_store %arg9[%c13_885, %c768_886], %644 {strides = array<i32>} : memref<18x1152xf32, #tpu.memory_space<vmem>>, vector<1x128xf32>,
    %c0_887 = arith.constant 0 : index
    %c6_888 = arith.constant 6 : index
    %c1_889 = arith.constant 1 : index
    %c0_890 = arith.constant 0 : index
    %646 = vector.load %arg8[%c0_887, %c6_888, %c1_889, %c0_890] : memref<2x8x8x128xf32, #tpu.memory_space<vmem>>, vector<1x1x1x128xf32>
    %647 = vector.shape_cast %646 : vector<1x1x1x128xf32> to vector<1x128xf32>
    %c12_891 = arith.constant 12 : index
    %c896_892 = arith.constant 896 : index
    %648 = vector.load %arg9[%c12_891, %c896_892] : memref<18x1152xf32, #tpu.memory_space<vmem>>, vector<1x128xf32>
    tpu.vector_store %arg9[%c12_891, %c896_892], %647 {strides = array<i32>} : memref<18x1152xf32, #tpu.memory_space<vmem>>, vector<1x128xf32>,
    %c1_893 = arith.constant 1 : index
    %c6_894 = arith.constant 6 : index
    %c1_895 = arith.constant 1 : index
    %c0_896 = arith.constant 0 : index
    %649 = vector.load %arg8[%c1_893, %c6_894, %c1_895, %c0_896] : memref<2x8x8x128xf32, #tpu.memory_space<vmem>>, vector<1x1x1x128xf32>
    %650 = vector.shape_cast %649 : vector<1x1x1x128xf32> to vector<1x128xf32>
    %c13_897 = arith.constant 13 : index
    %c896_898 = arith.constant 896 : index
    %651 = vector.load %arg9[%c13_897, %c896_898] : memref<18x1152xf32, #tpu.memory_space<vmem>>, vector<1x128xf32>
    tpu.vector_store %arg9[%c13_897, %c896_898], %650 {strides = array<i32>} : memref<18x1152xf32, #tpu.memory_space<vmem>>, vector<1x128xf32>,
    %c0_899 = arith.constant 0 : index
    %c6_900 = arith.constant 6 : index
    %c2_901 = arith.constant 2 : index
    %c0_902 = arith.constant 0 : index
    %652 = vector.load %arg8[%c0_899, %c6_900, %c2_901, %c0_902] : memref<2x8x8x128xf32, #tpu.memory_space<vmem>>, vector<1x1x1x128xf32>
    %653 = vector.shape_cast %652 : vector<1x1x1x128xf32> to vector<1x128xf32>
    %c12_903 = arith.constant 12 : index
    %c1024_904 = arith.constant 1024 : index
    %654 = vector.load %arg9[%c12_903, %c1024_904] : memref<18x1152xf32, #tpu.memory_space<vmem>>, vector<1x128xf32>
    tpu.vector_store %arg9[%c12_903, %c1024_904], %653 {strides = array<i32>} : memref<18x1152xf32, #tpu.memory_space<vmem>>, vector<1x128xf32>,
    %c1_905 = arith.constant 1 : index
    %c6_906 = arith.constant 6 : index
    %c2_907 = arith.constant 2 : index
    %c0_908 = arith.constant 0 : index
    %655 = vector.load %arg8[%c1_905, %c6_906, %c2_907, %c0_908] : memref<2x8x8x128xf32, #tpu.memory_space<vmem>>, vector<1x1x1x128xf32>
    %656 = vector.shape_cast %655 : vector<1x1x1x128xf32> to vector<1x128xf32>
    %c13_909 = arith.constant 13 : index
    %c1024_910 = arith.constant 1024 : index
    %657 = vector.load %arg9[%c13_909, %c1024_910] : memref<18x1152xf32, #tpu.memory_space<vmem>>, vector<1x128xf32>
    tpu.vector_store %arg9[%c13_909, %c1024_910], %656 {strides = array<i32>} : memref<18x1152xf32, #tpu.memory_space<vmem>>, vector<1x128xf32>,
    %c0_911 = arith.constant 0 : index
    %c4_912 = arith.constant 4 : index
    %c2_913 = arith.constant 2 : index
    %c0_914 = arith.constant 0 : index
    %658 = vector.load %arg8[%c0_911, %c4_912, %c2_913, %c0_914] : memref<2x8x8x128xf32, #tpu.memory_space<vmem>>, vector<1x1x1x128xf32>
    %659 = vector.shape_cast %658 : vector<1x1x1x128xf32> to vector<1x128xf32>
    %c14_915 = arith.constant 14 : index
    %c0_916 = arith.constant 0 : index
    %660 = vector.load %arg9[%c14_915, %c0_916] : memref<18x1152xf32, #tpu.memory_space<vmem>>, vector<1x128xf32>
    tpu.vector_store %arg9[%c14_915, %c0_916], %659 {strides = array<i32>} : memref<18x1152xf32, #tpu.memory_space<vmem>>, vector<1x128xf32>,
    %c1_917 = arith.constant 1 : index
    %c4_918 = arith.constant 4 : index
    %c2_919 = arith.constant 2 : index
    %c0_920 = arith.constant 0 : index
    %661 = vector.load %arg8[%c1_917, %c4_918, %c2_919, %c0_920] : memref<2x8x8x128xf32, #tpu.memory_space<vmem>>, vector<1x1x1x128xf32>
    %662 = vector.shape_cast %661 : vector<1x1x1x128xf32> to vector<1x128xf32>
    %c15_921 = arith.constant 15 : index
    %c0_922 = arith.constant 0 : index
    %663 = vector.load %arg9[%c15_921, %c0_922] : memref<18x1152xf32, #tpu.memory_space<vmem>>, vector<1x128xf32>
    tpu.vector_store %arg9[%c15_921, %c0_922], %662 {strides = array<i32>} : memref<18x1152xf32, #tpu.memory_space<vmem>>, vector<1x128xf32>,
    %c0_923 = arith.constant 0 : index
    %c4_924 = arith.constant 4 : index
    %c3_925 = arith.constant 3 : index
    %c0_926 = arith.constant 0 : index
    %664 = vector.load %arg8[%c0_923, %c4_924, %c3_925, %c0_926] : memref<2x8x8x128xf32, #tpu.memory_space<vmem>>, vector<1x1x1x128xf32>
    %665 = vector.shape_cast %664 : vector<1x1x1x128xf32> to vector<1x128xf32>
    %c14_927 = arith.constant 14 : index
    %c128_928 = arith.constant 128 : index
    %666 = vector.load %arg9[%c14_927, %c128_928] : memref<18x1152xf32, #tpu.memory_space<vmem>>, vector<1x128xf32>
    tpu.vector_store %arg9[%c14_927, %c128_928], %665 {strides = array<i32>} : memref<18x1152xf32, #tpu.memory_space<vmem>>, vector<1x128xf32>,
    %c1_929 = arith.constant 1 : index
    %c4_930 = arith.constant 4 : index
    %c3_931 = arith.constant 3 : index
    %c0_932 = arith.constant 0 : index
    %667 = vector.load %arg8[%c1_929, %c4_930, %c3_931, %c0_932] : memref<2x8x8x128xf32, #tpu.memory_space<vmem>>, vector<1x1x1x128xf32>
    %668 = vector.shape_cast %667 : vector<1x1x1x128xf32> to vector<1x128xf32>
    %c15_933 = arith.constant 15 : index
    %c128_934 = arith.constant 128 : index
    %669 = vector.load %arg9[%c15_933, %c128_934] : memref<18x1152xf32, #tpu.memory_space<vmem>>, vector<1x128xf32>
    tpu.vector_store %arg9[%c15_933, %c128_934], %668 {strides = array<i32>} : memref<18x1152xf32, #tpu.memory_space<vmem>>, vector<1x128xf32>,
    %c0_935 = arith.constant 0 : index
    %c4_936 = arith.constant 4 : index
    %c4_937 = arith.constant 4 : index
    %c0_938 = arith.constant 0 : index
    %670 = vector.load %arg8[%c0_935, %c4_936, %c4_937, %c0_938] : memref<2x8x8x128xf32, #tpu.memory_space<vmem>>, vector<1x1x1x128xf32>
    %671 = vector.shape_cast %670 : vector<1x1x1x128xf32> to vector<1x128xf32>
    %c14_939 = arith.constant 14 : index
    %c256_940 = arith.constant 256 : index
    %672 = vector.load %arg9[%c14_939, %c256_940] : memref<18x1152xf32, #tpu.memory_space<vmem>>, vector<1x128xf32>
    tpu.vector_store %arg9[%c14_939, %c256_940], %671 {strides = array<i32>} : memref<18x1152xf32, #tpu.memory_space<vmem>>, vector<1x128xf32>,
    %c1_941 = arith.constant 1 : index
    %c4_942 = arith.constant 4 : index
    %c4_943 = arith.constant 4 : index
    %c0_944 = arith.constant 0 : index
    %673 = vector.load %arg8[%c1_941, %c4_942, %c4_943, %c0_944] : memref<2x8x8x128xf32, #tpu.memory_space<vmem>>, vector<1x1x1x128xf32>
    %674 = vector.shape_cast %673 : vector<1x1x1x128xf32> to vector<1x128xf32>
    %c15_945 = arith.constant 15 : index
    %c256_946 = arith.constant 256 : index
    %675 = vector.load %arg9[%c15_945, %c256_946] : memref<18x1152xf32, #tpu.memory_space<vmem>>, vector<1x128xf32>
    tpu.vector_store %arg9[%c15_945, %c256_946], %674 {strides = array<i32>} : memref<18x1152xf32, #tpu.memory_space<vmem>>, vector<1x128xf32>,
    %c0_947 = arith.constant 0 : index
    %c5_948 = arith.constant 5 : index
    %c2_949 = arith.constant 2 : index
    %c0_950 = arith.constant 0 : index
    %676 = vector.load %arg8[%c0_947, %c5_948, %c2_949, %c0_950] : memref<2x8x8x128xf32, #tpu.memory_space<vmem>>, vector<1x1x1x128xf32>
    %677 = vector.shape_cast %676 : vector<1x1x1x128xf32> to vector<1x128xf32>
    %c14_951 = arith.constant 14 : index
    %c384_952 = arith.constant 384 : index
    %678 = vector.load %arg9[%c14_951, %c384_952] : memref<18x1152xf32, #tpu.memory_space<vmem>>, vector<1x128xf32>
    tpu.vector_store %arg9[%c14_951, %c384_952], %677 {strides = array<i32>} : memref<18x1152xf32, #tpu.memory_space<vmem>>, vector<1x128xf32>,
    %c1_953 = arith.constant 1 : index
    %c5_954 = arith.constant 5 : index
    %c2_955 = arith.constant 2 : index
    %c0_956 = arith.constant 0 : index
    %679 = vector.load %arg8[%c1_953, %c5_954, %c2_955, %c0_956] : memref<2x8x8x128xf32, #tpu.memory_space<vmem>>, vector<1x1x1x128xf32>
    %680 = vector.shape_cast %679 : vector<1x1x1x128xf32> to vector<1x128xf32>
    %c15_957 = arith.constant 15 : index
    %c384_958 = arith.constant 384 : index
    %681 = vector.load %arg9[%c15_957, %c384_958] : memref<18x1152xf32, #tpu.memory_space<vmem>>, vector<1x128xf32>
    tpu.vector_store %arg9[%c15_957, %c384_958], %680 {strides = array<i32>} : memref<18x1152xf32, #tpu.memory_space<vmem>>, vector<1x128xf32>,
    %c0_959 = arith.constant 0 : index
    %c5_960 = arith.constant 5 : index
    %c3_961 = arith.constant 3 : index
    %c0_962 = arith.constant 0 : index
    %682 = vector.load %arg8[%c0_959, %c5_960, %c3_961, %c0_962] : memref<2x8x8x128xf32, #tpu.memory_space<vmem>>, vector<1x1x1x128xf32>
    %683 = vector.shape_cast %682 : vector<1x1x1x128xf32> to vector<1x128xf32>
    %c14_963 = arith.constant 14 : index
    %c512_964 = arith.constant 512 : index
    %684 = vector.load %arg9[%c14_963, %c512_964] : memref<18x1152xf32, #tpu.memory_space<vmem>>, vector<1x128xf32>
    tpu.vector_store %arg9[%c14_963, %c512_964], %683 {strides = array<i32>} : memref<18x1152xf32, #tpu.memory_space<vmem>>, vector<1x128xf32>,
    %c1_965 = arith.constant 1 : index
    %c5_966 = arith.constant 5 : index
    %c3_967 = arith.constant 3 : index
    %c0_968 = arith.constant 0 : index
    %685 = vector.load %arg8[%c1_965, %c5_966, %c3_967, %c0_968] : memref<2x8x8x128xf32, #tpu.memory_space<vmem>>, vector<1x1x1x128xf32>
    %686 = vector.shape_cast %685 : vector<1x1x1x128xf32> to vector<1x128xf32>
    %c15_969 = arith.constant 15 : index
    %c512_970 = arith.constant 512 : index
    %687 = vector.load %arg9[%c15_969, %c512_970] : memref<18x1152xf32, #tpu.memory_space<vmem>>, vector<1x128xf32>
    tpu.vector_store %arg9[%c15_969, %c512_970], %686 {strides = array<i32>} : memref<18x1152xf32, #tpu.memory_space<vmem>>, vector<1x128xf32>,
    %c0_971 = arith.constant 0 : index
    %c5_972 = arith.constant 5 : index
    %c4_973 = arith.constant 4 : index
    %c0_974 = arith.constant 0 : index
    %688 = vector.load %arg8[%c0_971, %c5_972, %c4_973, %c0_974] : memref<2x8x8x128xf32, #tpu.memory_space<vmem>>, vector<1x1x1x128xf32>
    %689 = vector.shape_cast %688 : vector<1x1x1x128xf32> to vector<1x128xf32>
    %c14_975 = arith.constant 14 : index
    %c640_976 = arith.constant 640 : index
    %690 = vector.load %arg9[%c14_975, %c640_976] : memref<18x1152xf32, #tpu.memory_space<vmem>>, vector<1x128xf32>
    tpu.vector_store %arg9[%c14_975, %c640_976], %689 {strides = array<i32>} : memref<18x1152xf32, #tpu.memory_space<vmem>>, vector<1x128xf32>,
    %c1_977 = arith.constant 1 : index
    %c5_978 = arith.constant 5 : index
    %c4_979 = arith.constant 4 : index
    %c0_980 = arith.constant 0 : index
    %691 = vector.load %arg8[%c1_977, %c5_978, %c4_979, %c0_980] : memref<2x8x8x128xf32, #tpu.memory_space<vmem>>, vector<1x1x1x128xf32>
    %692 = vector.shape_cast %691 : vector<1x1x1x128xf32> to vector<1x128xf32>
    %c15_981 = arith.constant 15 : index
    %c640_982 = arith.constant 640 : index
    %693 = vector.load %arg9[%c15_981, %c640_982] : memref<18x1152xf32, #tpu.memory_space<vmem>>, vector<1x128xf32>
    tpu.vector_store %arg9[%c15_981, %c640_982], %692 {strides = array<i32>} : memref<18x1152xf32, #tpu.memory_space<vmem>>, vector<1x128xf32>,
    %c0_983 = arith.constant 0 : index
    %c6_984 = arith.constant 6 : index
    %c2_985 = arith.constant 2 : index
    %c0_986 = arith.constant 0 : index
    %694 = vector.load %arg8[%c0_983, %c6_984, %c2_985, %c0_986] : memref<2x8x8x128xf32, #tpu.memory_space<vmem>>, vector<1x1x1x128xf32>
    %695 = vector.shape_cast %694 : vector<1x1x1x128xf32> to vector<1x128xf32>
    %c14_987 = arith.constant 14 : index
    %c768_988 = arith.constant 768 : index
    %696 = vector.load %arg9[%c14_987, %c768_988] : memref<18x1152xf32, #tpu.memory_space<vmem>>, vector<1x128xf32>
    tpu.vector_store %arg9[%c14_987, %c768_988], %695 {strides = array<i32>} : memref<18x1152xf32, #tpu.memory_space<vmem>>, vector<1x128xf32>,
    %c1_989 = arith.constant 1 : index
    %c6_990 = arith.constant 6 : index
    %c2_991 = arith.constant 2 : index
    %c0_992 = arith.constant 0 : index
    %697 = vector.load %arg8[%c1_989, %c6_990, %c2_991, %c0_992] : memref<2x8x8x128xf32, #tpu.memory_space<vmem>>, vector<1x1x1x128xf32>
    %698 = vector.shape_cast %697 : vector<1x1x1x128xf32> to vector<1x128xf32>
    %c15_993 = arith.constant 15 : index
    %c768_994 = arith.constant 768 : index
    %699 = vector.load %arg9[%c15_993, %c768_994] : memref<18x1152xf32, #tpu.memory_space<vmem>>, vector<1x128xf32>
    tpu.vector_store %arg9[%c15_993, %c768_994], %698 {strides = array<i32>} : memref<18x1152xf32, #tpu.memory_space<vmem>>, vector<1x128xf32>,
    %c0_995 = arith.constant 0 : index
    %c6_996 = arith.constant 6 : index
    %c3_997 = arith.constant 3 : index
    %c0_998 = arith.constant 0 : index
    %700 = vector.load %arg8[%c0_995, %c6_996, %c3_997, %c0_998] : memref<2x8x8x128xf32, #tpu.memory_space<vmem>>, vector<1x1x1x128xf32>
    %701 = vector.shape_cast %700 : vector<1x1x1x128xf32> to vector<1x128xf32>
    %c14_999 = arith.constant 14 : index
    %c896_1000 = arith.constant 896 : index
    %702 = vector.load %arg9[%c14_999, %c896_1000] : memref<18x1152xf32, #tpu.memory_space<vmem>>, vector<1x128xf32>
    tpu.vector_store %arg9[%c14_999, %c896_1000], %701 {strides = array<i32>} : memref<18x1152xf32, #tpu.memory_space<vmem>>, vector<1x128xf32>,
    %c1_1001 = arith.constant 1 : index
    %c6_1002 = arith.constant 6 : index
    %c3_1003 = arith.constant 3 : index
    %c0_1004 = arith.constant 0 : index
    %703 = vector.load %arg8[%c1_1001, %c6_1002, %c3_1003, %c0_1004] : memref<2x8x8x128xf32, #tpu.memory_space<vmem>>, vector<1x1x1x128xf32>
    %704 = vector.shape_cast %703 : vector<1x1x1x128xf32> to vector<1x128xf32>
    %c15_1005 = arith.constant 15 : index
    %c896_1006 = arith.constant 896 : index
    %705 = vector.load %arg9[%c15_1005, %c896_1006] : memref<18x1152xf32, #tpu.memory_space<vmem>>, vector<1x128xf32>
    tpu.vector_store %arg9[%c15_1005, %c896_1006], %704 {strides = array<i32>} : memref<18x1152xf32, #tpu.memory_space<vmem>>, vector<1x128xf32>,
    %c0_1007 = arith.constant 0 : index
    %c6_1008 = arith.constant 6 : index
    %c4_1009 = arith.constant 4 : index
    %c0_1010 = arith.constant 0 : index
    %706 = vector.load %arg8[%c0_1007, %c6_1008, %c4_1009, %c0_1010] : memref<2x8x8x128xf32, #tpu.memory_space<vmem>>, vector<1x1x1x128xf32>
    %707 = vector.shape_cast %706 : vector<1x1x1x128xf32> to vector<1x128xf32>
    %c14_1011 = arith.constant 14 : index
    %c1024_1012 = arith.constant 1024 : index
    %708 = vector.load %arg9[%c14_1011, %c1024_1012] : memref<18x1152xf32, #tpu.memory_space<vmem>>, vector<1x128xf32>
    tpu.vector_store %arg9[%c14_1011, %c1024_1012], %707 {strides = array<i32>} : memref<18x1152xf32, #tpu.memory_space<vmem>>, vector<1x128xf32>,
    %c1_1013 = arith.constant 1 : index
    %c6_1014 = arith.constant 6 : index
    %c4_1015 = arith.constant 4 : index
    %c0_1016 = arith.constant 0 : index
    %709 = vector.load %arg8[%c1_1013, %c6_1014, %c4_1015, %c0_1016] : memref<2x8x8x128xf32, #tpu.memory_space<vmem>>, vector<1x1x1x128xf32>
    %710 = vector.shape_cast %709 : vector<1x1x1x128xf32> to vector<1x128xf32>
    %c15_1017 = arith.constant 15 : index
    %c1024_1018 = arith.constant 1024 : index
    %711 = vector.load %arg9[%c15_1017, %c1024_1018] : memref<18x1152xf32, #tpu.memory_space<vmem>>, vector<1x128xf32>
    tpu.vector_store %arg9[%c15_1017, %c1024_1018], %710 {strides = array<i32>} : memref<18x1152xf32, #tpu.memory_space<vmem>>, vector<1x128xf32>,
    %c0_1019 = arith.constant 0 : index
    %c4_1020 = arith.constant 4 : index
    %c4_1021 = arith.constant 4 : index
    %c0_1022 = arith.constant 0 : index
    %712 = vector.load %arg8[%c0_1019, %c4_1020, %c4_1021, %c0_1022] : memref<2x8x8x128xf32, #tpu.memory_space<vmem>>, vector<1x1x1x128xf32>
    %713 = vector.shape_cast %712 : vector<1x1x1x128xf32> to vector<1x128xf32>
    %c16 = arith.constant 16 : index
    %c0_1023 = arith.constant 0 : index
    %714 = vector.load %arg9[%c16, %c0_1023] : memref<18x1152xf32, #tpu.memory_space<vmem>>, vector<1x128xf32>
    tpu.vector_store %arg9[%c16, %c0_1023], %713 {strides = array<i32>} : memref<18x1152xf32, #tpu.memory_space<vmem>>, vector<1x128xf32>,
    %c1_1024 = arith.constant 1 : index
    %c4_1025 = arith.constant 4 : index
    %c4_1026 = arith.constant 4 : index
    %c0_1027 = arith.constant 0 : index
    %715 = vector.load %arg8[%c1_1024, %c4_1025, %c4_1026, %c0_1027] : memref<2x8x8x128xf32, #tpu.memory_space<vmem>>, vector<1x1x1x128xf32>
    %716 = vector.shape_cast %715 : vector<1x1x1x128xf32> to vector<1x128xf32>
    %c17 = arith.constant 17 : index
    %c0_1028 = arith.constant 0 : index
    %717 = vector.load %arg9[%c17, %c0_1028] : memref<18x1152xf32, #tpu.memory_space<vmem>>, vector<1x128xf32>
    tpu.vector_store %arg9[%c17, %c0_1028], %716 {strides = array<i32>} : memref<18x1152xf32, #tpu.memory_space<vmem>>, vector<1x128xf32>,
    %c0_1029 = arith.constant 0 : index
    %c4_1030 = arith.constant 4 : index
    %c5_1031 = arith.constant 5 : index
    %c0_1032 = arith.constant 0 : index
    %718 = vector.load %arg8[%c0_1029, %c4_1030, %c5_1031, %c0_1032] : memref<2x8x8x128xf32, #tpu.memory_space<vmem>>, vector<1x1x1x128xf32>
    %719 = vector.shape_cast %718 : vector<1x1x1x128xf32> to vector<1x128xf32>
    %c16_1033 = arith.constant 16 : index
    %c128_1034 = arith.constant 128 : index
    %720 = vector.load %arg9[%c16_1033, %c128_1034] : memref<18x1152xf32, #tpu.memory_space<vmem>>, vector<1x128xf32>
    tpu.vector_store %arg9[%c16_1033, %c128_1034], %719 {strides = array<i32>} : memref<18x1152xf32, #tpu.memory_space<vmem>>, vector<1x128xf32>,
    %c1_1035 = arith.constant 1 : index
    %c4_1036 = arith.constant 4 : index
    %c5_1037 = arith.constant 5 : index
    %c0_1038 = arith.constant 0 : index
    %721 = vector.load %arg8[%c1_1035, %c4_1036, %c5_1037, %c0_1038] : memref<2x8x8x128xf32, #tpu.memory_space<vmem>>, vector<1x1x1x128xf32>
    %722 = vector.shape_cast %721 : vector<1x1x1x128xf32> to vector<1x128xf32>
    %c17_1039 = arith.constant 17 : index
    %c128_1040 = arith.constant 128 : index
    %723 = vector.load %arg9[%c17_1039, %c128_1040] : memref<18x1152xf32, #tpu.memory_space<vmem>>, vector<1x128xf32>
    tpu.vector_store %arg9[%c17_1039, %c128_1040], %722 {strides = array<i32>} : memref<18x1152xf32, #tpu.memory_space<vmem>>, vector<1x128xf32>,
    %c0_1041 = arith.constant 0 : index
    %c4_1042 = arith.constant 4 : index
    %c6_1043 = arith.constant 6 : index
    %c0_1044 = arith.constant 0 : index
    %724 = vector.load %arg8[%c0_1041, %c4_1042, %c6_1043, %c0_1044] : memref<2x8x8x128xf32, #tpu.memory_space<vmem>>, vector<1x1x1x128xf32>
    %725 = vector.shape_cast %724 : vector<1x1x1x128xf32> to vector<1x128xf32>
    %c16_1045 = arith.constant 16 : index
    %c256_1046 = arith.constant 256 : index
    %726 = vector.load %arg9[%c16_1045, %c256_1046] : memref<18x1152xf32, #tpu.memory_space<vmem>>, vector<1x128xf32>
    tpu.vector_store %arg9[%c16_1045, %c256_1046], %725 {strides = array<i32>} : memref<18x1152xf32, #tpu.memory_space<vmem>>, vector<1x128xf32>,
    %c1_1047 = arith.constant 1 : index
    %c4_1048 = arith.constant 4 : index
    %c6_1049 = arith.constant 6 : index
    %c0_1050 = arith.constant 0 : index
    %727 = vector.load %arg8[%c1_1047, %c4_1048, %c6_1049, %c0_1050] : memref<2x8x8x128xf32, #tpu.memory_space<vmem>>, vector<1x1x1x128xf32>
    %728 = vector.shape_cast %727 : vector<1x1x1x128xf32> to vector<1x128xf32>
    %c17_1051 = arith.constant 17 : index
    %c256_1052 = arith.constant 256 : index
    %729 = vector.load %arg9[%c17_1051, %c256_1052] : memref<18x1152xf32, #tpu.memory_space<vmem>>, vector<1x128xf32>
    tpu.vector_store %arg9[%c17_1051, %c256_1052], %728 {strides = array<i32>} : memref<18x1152xf32, #tpu.memory_space<vmem>>, vector<1x128xf32>,
    %c0_1053 = arith.constant 0 : index
    %c5_1054 = arith.constant 5 : index
    %c4_1055 = arith.constant 4 : index
    %c0_1056 = arith.constant 0 : index
    %730 = vector.load %arg8[%c0_1053, %c5_1054, %c4_1055, %c0_1056] : memref<2x8x8x128xf32, #tpu.memory_space<vmem>>, vector<1x1x1x128xf32>
    %731 = vector.shape_cast %730 : vector<1x1x1x128xf32> to vector<1x128xf32>
    %c16_1057 = arith.constant 16 : index
    %c384_1058 = arith.constant 384 : index
    %732 = vector.load %arg9[%c16_1057, %c384_1058] : memref<18x1152xf32, #tpu.memory_space<vmem>>, vector<1x128xf32>
    tpu.vector_store %arg9[%c16_1057, %c384_1058], %731 {strides = array<i32>} : memref<18x1152xf32, #tpu.memory_space<vmem>>, vector<1x128xf32>,
    %c1_1059 = arith.constant 1 : index
    %c5_1060 = arith.constant 5 : index
    %c4_1061 = arith.constant 4 : index
    %c0_1062 = arith.constant 0 : index
    %733 = vector.load %arg8[%c1_1059, %c5_1060, %c4_1061, %c0_1062] : memref<2x8x8x128xf32, #tpu.memory_space<vmem>>, vector<1x1x1x128xf32>
    %734 = vector.shape_cast %733 : vector<1x1x1x128xf32> to vector<1x128xf32>
    %c17_1063 = arith.constant 17 : index
    %c384_1064 = arith.constant 384 : index
    %735 = vector.load %arg9[%c17_1063, %c384_1064] : memref<18x1152xf32, #tpu.memory_space<vmem>>, vector<1x128xf32>
    tpu.vector_store %arg9[%c17_1063, %c384_1064], %734 {strides = array<i32>} : memref<18x1152xf32, #tpu.memory_space<vmem>>, vector<1x128xf32>,
    %c0_1065 = arith.constant 0 : index
    %c5_1066 = arith.constant 5 : index
    %c5_1067 = arith.constant 5 : index
    %c0_1068 = arith.constant 0 : index
    %736 = vector.load %arg8[%c0_1065, %c5_1066, %c5_1067, %c0_1068] : memref<2x8x8x128xf32, #tpu.memory_space<vmem>>, vector<1x1x1x128xf32>
    %737 = vector.shape_cast %736 : vector<1x1x1x128xf32> to vector<1x128xf32>
    %c16_1069 = arith.constant 16 : index
    %c512_1070 = arith.constant 512 : index
    %738 = vector.load %arg9[%c16_1069, %c512_1070] : memref<18x1152xf32, #tpu.memory_space<vmem>>, vector<1x128xf32>
    tpu.vector_store %arg9[%c16_1069, %c512_1070], %737 {strides = array<i32>} : memref<18x1152xf32, #tpu.memory_space<vmem>>, vector<1x128xf32>,
    %c1_1071 = arith.constant 1 : index
    %c5_1072 = arith.constant 5 : index
    %c5_1073 = arith.constant 5 : index
    %c0_1074 = arith.constant 0 : index
    %739 = vector.load %arg8[%c1_1071, %c5_1072, %c5_1073, %c0_1074] : memref<2x8x8x128xf32, #tpu.memory_space<vmem>>, vector<1x1x1x128xf32>
    %740 = vector.shape_cast %739 : vector<1x1x1x128xf32> to vector<1x128xf32>
    %c17_1075 = arith.constant 17 : index
    %c512_1076 = arith.constant 512 : index
    %741 = vector.load %arg9[%c17_1075, %c512_1076] : memref<18x1152xf32, #tpu.memory_space<vmem>>, vector<1x128xf32>
    tpu.vector_store %arg9[%c17_1075, %c512_1076], %740 {strides = array<i32>} : memref<18x1152xf32, #tpu.memory_space<vmem>>, vector<1x128xf32>,
    %c0_1077 = arith.constant 0 : index
    %c5_1078 = arith.constant 5 : index
    %c6_1079 = arith.constant 6 : index
    %c0_1080 = arith.constant 0 : index
    %742 = vector.load %arg8[%c0_1077, %c5_1078, %c6_1079, %c0_1080] : memref<2x8x8x128xf32, #tpu.memory_space<vmem>>, vector<1x1x1x128xf32>
    %743 = vector.shape_cast %742 : vector<1x1x1x128xf32> to vector<1x128xf32>
    %c16_1081 = arith.constant 16 : index
    %c640_1082 = arith.constant 640 : index
    %744 = vector.load %arg9[%c16_1081, %c640_1082] : memref<18x1152xf32, #tpu.memory_space<vmem>>, vector<1x128xf32>
    tpu.vector_store %arg9[%c16_1081, %c640_1082], %743 {strides = array<i32>} : memref<18x1152xf32, #tpu.memory_space<vmem>>, vector<1x128xf32>,
    %c1_1083 = arith.constant 1 : index
    %c5_1084 = arith.constant 5 : index
    %c6_1085 = arith.constant 6 : index
    %c0_1086 = arith.constant 0 : index
    %745 = vector.load %arg8[%c1_1083, %c5_1084, %c6_1085, %c0_1086] : memref<2x8x8x128xf32, #tpu.memory_space<vmem>>, vector<1x1x1x128xf32>
    %746 = vector.shape_cast %745 : vector<1x1x1x128xf32> to vector<1x128xf32>
    %c17_1087 = arith.constant 17 : index
    %c640_1088 = arith.constant 640 : index
    %747 = vector.load %arg9[%c17_1087, %c640_1088] : memref<18x1152xf32, #tpu.memory_space<vmem>>, vector<1x128xf32>
    tpu.vector_store %arg9[%c17_1087, %c640_1088], %746 {strides = array<i32>} : memref<18x1152xf32, #tpu.memory_space<vmem>>, vector<1x128xf32>,
    %c0_1089 = arith.constant 0 : index
    %c6_1090 = arith.constant 6 : index
    %c4_1091 = arith.constant 4 : index
    %c0_1092 = arith.constant 0 : index
    %748 = vector.load %arg8[%c0_1089, %c6_1090, %c4_1091, %c0_1092] : memref<2x8x8x128xf32, #tpu.memory_space<vmem>>, vector<1x1x1x128xf32>
    %749 = vector.shape_cast %748 : vector<1x1x1x128xf32> to vector<1x128xf32>
    %c16_1093 = arith.constant 16 : index
    %c768_1094 = arith.constant 768 : index
    %750 = vector.load %arg9[%c16_1093, %c768_1094] : memref<18x1152xf32, #tpu.memory_space<vmem>>, vector<1x128xf32>
    tpu.vector_store %arg9[%c16_1093, %c768_1094], %749 {strides = array<i32>} : memref<18x1152xf32, #tpu.memory_space<vmem>>, vector<1x128xf32>,
    %c1_1095 = arith.constant 1 : index
    %c6_1096 = arith.constant 6 : index
    %c4_1097 = arith.constant 4 : index
    %c0_1098 = arith.constant 0 : index
    %751 = vector.load %arg8[%c1_1095, %c6_1096, %c4_1097, %c0_1098] : memref<2x8x8x128xf32, #tpu.memory_space<vmem>>, vector<1x1x1x128xf32>
    %752 = vector.shape_cast %751 : vector<1x1x1x128xf32> to vector<1x128xf32>
    %c17_1099 = arith.constant 17 : index
    %c768_1100 = arith.constant 768 : index
    %753 = vector.load %arg9[%c17_1099, %c768_1100] : memref<18x1152xf32, #tpu.memory_space<vmem>>, vector<1x128xf32>
    tpu.vector_store %arg9[%c17_1099, %c768_1100], %752 {strides = array<i32>} : memref<18x1152xf32, #tpu.memory_space<vmem>>, vector<1x128xf32>,
    %c0_1101 = arith.constant 0 : index
    %c6_1102 = arith.constant 6 : index
    %c5_1103 = arith.constant 5 : index
    %c0_1104 = arith.constant 0 : index
    %754 = vector.load %arg8[%c0_1101, %c6_1102, %c5_1103, %c0_1104] : memref<2x8x8x128xf32, #tpu.memory_space<vmem>>, vector<1x1x1x128xf32>
    %755 = vector.shape_cast %754 : vector<1x1x1x128xf32> to vector<1x128xf32>
    %c16_1105 = arith.constant 16 : index
    %c896_1106 = arith.constant 896 : index
    %756 = vector.load %arg9[%c16_1105, %c896_1106] : memref<18x1152xf32, #tpu.memory_space<vmem>>, vector<1x128xf32>
    tpu.vector_store %arg9[%c16_1105, %c896_1106], %755 {strides = array<i32>} : memref<18x1152xf32, #tpu.memory_space<vmem>>, vector<1x128xf32>,
    %c1_1107 = arith.constant 1 : index
    %c6_1108 = arith.constant 6 : index
    %c5_1109 = arith.constant 5 : index
    %c0_1110 = arith.constant 0 : index
    %757 = vector.load %arg8[%c1_1107, %c6_1108, %c5_1109, %c0_1110] : memref<2x8x8x128xf32, #tpu.memory_space<vmem>>, vector<1x1x1x128xf32>
    %758 = vector.shape_cast %757 : vector<1x1x1x128xf32> to vector<1x128xf32>
    %c17_1111 = arith.constant 17 : index
    %c896_1112 = arith.constant 896 : index
    %759 = vector.load %arg9[%c17_1111, %c896_1112] : memref<18x1152xf32, #tpu.memory_space<vmem>>, vector<1x128xf32>
    tpu.vector_store %arg9[%c17_1111, %c896_1112], %758 {strides = array<i32>} : memref<18x1152xf32, #tpu.memory_space<vmem>>, vector<1x128xf32>,
    %c0_1113 = arith.constant 0 : index
    %c6_1114 = arith.constant 6 : index
    %c6_1115 = arith.constant 6 : index
    %c0_1116 = arith.constant 0 : index
    %760 = vector.load %arg8[%c0_1113, %c6_1114, %c6_1115, %c0_1116] : memref<2x8x8x128xf32, #tpu.memory_space<vmem>>, vector<1x1x1x128xf32>
    %761 = vector.shape_cast %760 : vector<1x1x1x128xf32> to vector<1x128xf32>
    %c16_1117 = arith.constant 16 : index
    %c1024_1118 = arith.constant 1024 : index
    %762 = vector.load %arg9[%c16_1117, %c1024_1118] : memref<18x1152xf32, #tpu.memory_space<vmem>>, vector<1x128xf32>
    tpu.vector_store %arg9[%c16_1117, %c1024_1118], %761 {strides = array<i32>} : memref<18x1152xf32, #tpu.memory_space<vmem>>, vector<1x128xf32>,
    %c1_1119 = arith.constant 1 : index
    %c6_1120 = arith.constant 6 : index
    %c6_1121 = arith.constant 6 : index
    %c0_1122 = arith.constant 0 : index
    %763 = vector.load %arg8[%c1_1119, %c6_1120, %c6_1121, %c0_1122] : memref<2x8x8x128xf32, #tpu.memory_space<vmem>>, vector<1x1x1x128xf32>
    %764 = vector.shape_cast %763 : vector<1x1x1x128xf32> to vector<1x128xf32>
    %c17_1123 = arith.constant 17 : index
    %c1024_1124 = arith.constant 1024 : index
    %765 = vector.load %arg9[%c17_1123, %c1024_1124] : memref<18x1152xf32, #tpu.memory_space<vmem>>, vector<1x128xf32>
    tpu.vector_store %arg9[%c17_1123, %c1024_1124], %764 {strides = array<i32>} : memref<18x1152xf32, #tpu.memory_space<vmem>>, vector<1x128xf32>,
    %c0_1125 = arith.constant 0 : index
    %c0_1126 = arith.constant 0 : index
    %766 = vector.load %arg9[%c0_1125, %c0_1126] : memref<18x1152xf32, #tpu.memory_space<vmem>>, vector<18x1152xf32>
    %767 = arith.truncf %766 : vector<18x1152xf32> to vector<18x1152xbf16>
    %c0_1127 = arith.constant 0 : index
    %c0_1128 = arith.constant 0 : index
    %768 = vector.load %arg3[%c0_1127, %c0_1128] : memref<1152x128xbf16, #tpu.memory_space<vmem>>, vector<1152x128xbf16>
    %cst_1129 = arith.constant dense<0.000000e+00> : vector<18x128xf32>
    %769 = tpu.matmul %767, %768, %cst_1129 {dimension_numbers = #tpu.dot_dimension_numbers<[1], [0], [0], [1], [0, 0, 1, 1], [], []>} : vector<18x1152xbf16>, vector<1152x128xbf16>, vector<18x128xf32> -> vector<18x128xf32>
    %c0_1130 = arith.constant 0 : index
    %c0_1131 = arith.constant 0 : index
    %770 = vector.load %arg4[%c0_1130, %c0_1131] : memref<1x128xf32, #tpu.memory_space<vmem>>, vector<1x128xf32>
    %771 = vector.broadcast %770 : vector<1x128xf32> to vector<18x128xf32>
    %772 = arith.addf %769, %771 : vector<18x128xf32>
    %cst_1132 = arith.constant 0.000000e+00 : f32
    %773 = vector.broadcast %cst_1132 : f32 to vector<18x128xf32>
    %774 = arith.maximumf %772, %773 : vector<18x128xf32>
    %775 = vector.extract_strided_slice %774 {offsets = [0, 0], sizes = [2, 128], strides = [1, 1]} : vector<18x128xf32> to vector<2x128xf32>
    %776 = vector.extract_strided_slice %774 {offsets = [2, 0], sizes = [2, 128], strides = [1, 1]} : vector<18x128xf32> to vector<2x128xf32>
    %777 = arith.addf %775, %776 : vector<2x128xf32>
    %778 = vector.extract_strided_slice %774 {offsets = [4, 0], sizes = [2, 128], strides = [1, 1]} : vector<18x128xf32> to vector<2x128xf32>
    %779 = arith.addf %777, %778 : vector<2x128xf32>
    %780 = vector.extract_strided_slice %774 {offsets = [6, 0], sizes = [2, 128], strides = [1, 1]} : vector<18x128xf32> to vector<2x128xf32>
    %781 = arith.addf %779, %780 : vector<2x128xf32>
    %782 = vector.extract_strided_slice %774 {offsets = [8, 0], sizes = [2, 128], strides = [1, 1]} : vector<18x128xf32> to vector<2x128xf32>
    %783 = arith.addf %781, %782 : vector<2x128xf32>
    %784 = vector.extract_strided_slice %774 {offsets = [10, 0], sizes = [2, 128], strides = [1, 1]} : vector<18x128xf32> to vector<2x128xf32>
    %785 = arith.addf %783, %784 : vector<2x128xf32>
    %786 = vector.extract_strided_slice %774 {offsets = [12, 0], sizes = [2, 128], strides = [1, 1]} : vector<18x128xf32> to vector<2x128xf32>
    %787 = arith.addf %785, %786 : vector<2x128xf32>
    %788 = vector.extract_strided_slice %774 {offsets = [14, 0], sizes = [2, 128], strides = [1, 1]} : vector<18x128xf32> to vector<2x128xf32>
    %789 = arith.addf %787, %788 : vector<2x128xf32>
    %790 = vector.extract_strided_slice %774 {offsets = [16, 0], sizes = [2, 128], strides = [1, 1]} : vector<18x128xf32> to vector<2x128xf32>
    %791 = arith.addf %789, %790 : vector<2x128xf32>
    %c0_1133 = arith.constant 0 : index
    %c0_1134 = arith.constant 0 : index
    %792 = vector.load %arg5[%c0_1133, %c0_1134] : memref<128x128xf32, #tpu.memory_space<vmem>>, vector<128x128xf32>
    %cst_1135 = arith.constant dense<0.000000e+00> : vector<2x128xf32>
    %793 = tpu.matmul %791, %792, %cst_1135 {dimension_numbers = #tpu.dot_dimension_numbers<[1], [0], [0], [1], [0, 0, 1, 1], [], []>} : vector<2x128xf32>, vector<128x128xf32>, vector<2x128xf32> -> vector<2x128xf32>
    %c0_1136 = arith.constant 0 : index
    %c0_1137 = arith.constant 0 : index
    %794 = vector.load %arg6[%c0_1136, %c0_1137] : memref<1x128xf32, #tpu.memory_space<vmem>>, vector<1x128xf32>
    %795 = vector.broadcast %794 : vector<1x128xf32> to vector<2x128xf32>
    %796 = arith.addf %793, %795 : vector<2x128xf32>
    %c0_1138 = arith.constant 0 : index
    %c0_1139 = arith.constant 0 : index
    %797 = vector.load %arg7[%c0_1138, %c0_1139] : memref<2x128xf32, #tpu.memory_space<vmem>>, vector<2x128xf32>
    tpu.vector_store %arg7[%c0_1138, %c0_1139], %796 {strides = array<i32>} : memref<2x128xf32, #tpu.memory_space<vmem>>, vector<2x128xf32>,
    return
  }
}

</mosaic_0001>

<llo_original>
// kernel: squeeze.1
$region0: #{squeeze.1}
  %s0 = inlined_call_operand.hbm [shape: f32[2,1,32,32], index: 0, kind: input, shape index: {}]
  %s1 = inlined_call_operand.vmem [shape: f32[2,8,4,8,4], index: 1, kind: output, shape index: {}]
  $region1: #{squeeze.1} parent=0
    #allocation0 [shape = 'u8[32768]{0}', space=vmem, size = 0x8000, scoped, tag = 'operand span for operand 0']
    #allocation1 [shape = 's32[1]{0}', space=sflag, size = 0x4, scoped, tag = 'scoped memory for squeeze.1']
    %2 = vsyncpa [#allocation1], 0
    %s4 = ssub.s32 1024, 1024
    %5 = vsyncadd [#allocation1], %s4
    %s7 = sshll.u32 [#allocation0], 4
    %s8 = int_to_ptr.vmem [resolvable:$true] %s7
    %10 = dma.hbm_to_vmem [thread:$0]  %s0, 1024, %s8, [#allocation1]
    %11 = dma.done [#allocation1], 1024
    %v12 = vld [vmem:[#allocation0] sm:$0xff]
    %vm13 = vcmask 31744
    %14 = vst.msk [vmem:[%s1] ss:$8 sm:$0xf] %vm13, %v12
    %15 = vst.msk [vmem:[%s1] ss:$8 sm:$0xf0] %vm13, %v12
    %s16 = scalar_lea.vmem [#allocation0], 8
    %v17 = vld [vmem:[%s16] sm:$0xff]
    %vm18 = vcmask 31744
    %s19 = scalar_lea.vmem %s1, 64
    %20 = vst.msk [vmem:[%s19] ss:$8 sm:$0xf] %vm18, %v17
    %s21 = scalar_lea.vmem %s1, 64
    %22 = vst.msk [vmem:[%s21] ss:$8 sm:$0xf0] %vm18, %v17
    %s23 = scalar_lea.vmem [#allocation0], 16
    %v24 = vld [vmem:[%s23] sm:$0xff]
    %vm25 = vcmask 31744
    %s26 = scalar_lea.vmem %s1, 128
    %27 = vst.msk [vmem:[%s26] ss:$8 sm:$0xf] %vm25, %v24
    %s28 = scalar_lea.vmem %s1, 128
    %29 = vst.msk [vmem:[%s28] ss:$8 sm:$0xf0] %vm25, %v24
    %s30 = scalar_lea.vmem [#allocation0], 24
    %v31 = vld [vmem:[%s30] sm:$0xff]
    %vm32 = vcmask 31744
    %s33 = scalar_lea.vmem %s1, 192
    %34 = vst.msk [vmem:[%s33] ss:$8 sm:$0xf] %vm32, %v31
    %s35 = scalar_lea.vmem %s1, 192
    %36 = vst.msk [vmem:[%s35] ss:$8 sm:$0xf0] %vm32, %v31
    %s37 = scalar_lea.vmem [#allocation0], 32
    %v38 = vld [vmem:[%s37] sm:$0xff]
    %vm39 = vcmask 31744
    %s40 = scalar_lea.vmem %s1, 256
    %41 = vst.msk [vmem:[%s40] ss:$8 sm:$0xf] %vm39, %v38
    %s42 = scalar_lea.vmem %s1, 256
    %43 = vst.msk [vmem:[%s42] ss:$8 sm:$0xf0] %vm39, %v38
    %s44 = scalar_lea.vmem [#allocation0], 40
    %v45 = vld [vmem:[%s44] sm:$0xff]
    %vm46 = vcmask 31744
    %s47 = scalar_lea.vmem %s1, 320
    %48 = vst.msk [vmem:[%s47] ss:$8 sm:$0xf] %vm46, %v45
    %s49 = scalar_lea.vmem %s1, 320
    %50 = vst.msk [vmem:[%s49] ss:$8 sm:$0xf0] %vm46, %v45
    %s51 = scalar_lea.vmem [#allocation0], 48
    %v52 = vld [vmem:[%s51] sm:$0xff]
    %vm53 = vcmask 31744
    %s54 = scalar_lea.vmem %s1, 384
    %55 = vst.msk [vmem:[%s54] ss:$8 sm:$0xf] %vm53, %v52
    %s56 = scalar_lea.vmem %s1, 384
    %57 = vst.msk [vmem:[%s56] ss:$8 sm:$0xf0] %vm53, %v52
    %s58 = scalar_lea.vmem [#allocation0], 56
    %v59 = vld [vmem:[%s58] sm:$0xff]
    %vm60 = vcmask 31744
    %s61 = scalar_lea.vmem %s1, 448
    %62 = vst.msk [vmem:[%s61] ss:$8 sm:$0xf] %vm60, %v59
    %s63 = scalar_lea.vmem %s1, 448
    %64 = vst.msk [vmem:[%s63] ss:$8 sm:$0xf0] %vm60, %v59
    %v65 = vld [vmem:[#allocation0] sm:$0xff]
    %66 = vrot.lane.b32.xlu0 %v65, 124
    %v67 = vpop.permute.xlu0 %66
    %vm68 = vcmask 31744
    %s69 = scalar_lea.vmem %s1, 1
    %70 = vst.msk [vmem:[%s69] ss:$8 sm:$0xf] %vm68, %v67
    %s71 = scalar_lea.vmem %s1, 1
    %72 = vst.msk [vmem:[%s71] ss:$8 sm:$0xf0] %vm68, %v67
    %s73 = scalar_lea.vmem [#allocation0], 8
    %v74 = vld [vmem:[%s73] sm:$0xff]
    %75 = vrot.lane.b32.xlu0 %v74, 124
    %v76 = vpop.permute.xlu0 %75
    %vm77 = vcmask 31744
    %s78 = scalar_lea.vmem %s1, 65
    %79 = vst.msk [vmem:[%s78] ss:$8 sm:$0xf] %vm77, %v76
    %s80 = scalar_lea.vmem %s1, 65
    %81 = vst.msk [vmem:[%s80] ss:$8 sm:$0xf0] %vm77, %v76
    %s82 = scalar_lea.vmem [#allocation0], 16
    %v83 = vld [vmem:[%s82] sm:$0xff]
    %84 = vrot.lane.b32.xlu0 %v83, 124
    %v85 = vpop.permute.xlu0 %84
    %vm86 = vcmask 31744
    %s87 = scalar_lea.vmem %s1, 129
    %88 = vst.msk [vmem:[%s87] ss:$8 sm:$0xf] %vm86, %v85
    %s89 = scalar_lea.vmem %s1, 129
    %90 = vst.msk [vmem:[%s89] ss:$8 sm:$0xf0] %vm86, %v85
    %s91 = scalar_lea.vmem [#allocation0], 24
    %v92 = vld [vmem:[%s91] sm:$0xff]
    %93 = vrot.lane.b32.xlu0 %v92, 124
    %v94 = vpop.permute.xlu0 %93
    %vm95 = vcmask 31744
    %s96 = scalar_lea.vmem %s1, 193
    %97 = vst.msk [vmem:[%s96] ss:$8 sm:$0xf] %vm95, %v94
    %s98 = scalar_lea.vmem %s1, 193
    %99 = vst.msk [vmem:[%s98] ss:$8 sm:$0xf0] %vm95, %v94
    %s100 = scalar_lea.vmem [#allocation0], 32
    %v101 = vld [vmem:[%s100] sm:$0xff]
    %102 = vrot.lane.b32.xlu0 %v101, 124
    %v103 = vpop.permute.xlu0 %102
    %vm104 = vcmask 31744
    %s105 = scalar_lea.vmem %s1, 257
    %106 = vst.msk [vmem:[%s105] ss:$8 sm:$0xf] %vm104, %v103
    %s107 = scalar_lea.vmem %s1, 257
    %108 = vst.msk [vmem:[%s107] ss:$8 sm:$0xf0] %vm104, %v103
    %s109 = scalar_lea.vmem [#allocation0], 40
    %v110 = vld [vmem:[%s109] sm:$0xff]
    %111 = vrot.lane.b32.xlu0 %v110, 124
    %v112 = vpop.permute.xlu0 %111
    %vm113 = vcmask 31744
    %s114 = scalar_lea.vmem %s1, 321
    %115 = vst.msk [vmem:[%s114] ss:$8 sm:$0xf] %vm113, %v112
    %s116 = scalar_lea.vmem %s1, 321
    %117 = vst.msk [vmem:[%s116] ss:$8 sm:$0xf0] %vm113, %v112
    %s118 = scalar_lea.vmem [#allocation0], 48
    %v119 = vld [vmem:[%s118] sm:$0xff]
    %120 = vrot.lane.b32.xlu0 %v119, 124
    %v121 = vpop.permute.xlu0 %120
    %vm122 = vcmask 31744
    %s123 = scalar_lea.vmem %s1, 385
    %124 = vst.msk [vmem:[%s123] ss:$8 sm:$0xf] %vm122, %v121
    %s125 = scalar_lea.vmem %s1, 385
    %126 = vst.msk [vmem:[%s125] ss:$8 sm:$0xf0] %vm122, %v121
    %s127 = scalar_lea.vmem [#allocation0], 56
    %v128 = vld [vmem:[%s127] sm:$0xff]
    %129 = vrot.lane.b32.xlu0 %v128, 124
    %v130 = vpop.permute.xlu0 %129
    %vm131 = vcmask 31744
    %s132 = scalar_lea.vmem %s1, 449
    %133 = vst.msk [vmem:[%s132] ss:$8 sm:$0xf] %vm131, %v130
    %s134 = scalar_lea.vmem %s1, 449
    %135 = vst.msk [vmem:[%s134] ss:$8 sm:$0xf0] %vm131, %v130
    %v136 = vld [vmem:[#allocation0] sm:$0xff]
    %137 = vrot.lane.b32.xlu0 %v136, 120
    %v138 = vpop.permute.xlu0 %137
    %vm139 = vcmask 31744
    %s140 = scalar_lea.vmem %s1, 2
    %141 = vst.msk [vmem:[%s140] ss:$8 sm:$0xf] %vm139, %v138
    %s142 = scalar_lea.vmem %s1, 2
    %143 = vst.msk [vmem:[%s142] ss:$8 sm:$0xf0] %vm139, %v138
    %s144 = scalar_lea.vmem [#allocation0], 8
    %v145 = vld [vmem:[%s144] sm:$0xff]
    %146 = vrot.lane.b32.xlu0 %v145, 120
    %v147 = vpop.permute.xlu0 %146
    %vm148 = vcmask 31744
    %s149 = scalar_lea.vmem %s1, 66
    %150 = vst.msk [vmem:[%s149] ss:$8 sm:$0xf] %vm148, %v147
    %s151 = scalar_lea.vmem %s1, 66
    %152 = vst.msk [vmem:[%s151] ss:$8 sm:$0xf0] %vm148, %v147
    %s153 = scalar_lea.vmem [#allocation0], 16
    %v154 = vld [vmem:[%s153] sm:$0xff]
    %155 = vrot.lane.b32.xlu0 %v154, 120
    %v156 = vpop.permute.xlu0 %155
    %vm157 = vcmask 31744
    %s158 = scalar_lea.vmem %s1, 130
    %159 = vst.msk [vmem:[%s158] ss:$8 sm:$0xf] %vm157, %v156
    %s160 = scalar_lea.vmem %s1, 130
    %161 = vst.msk [vmem:[%s160] ss:$8 sm:$0xf0] %vm157, %v156
    %s162 = scalar_lea.vmem [#allocation0], 24
    %v163 = vld [vmem:[%s162] sm:$0xff]
    %164 = vrot.lane.b32.xlu0 %v163, 120
    %v165 = vpop.permute.xlu0 %164
    %vm166 = vcmask 31744
    %s167 = scalar_lea.vmem %s1, 194
    %168 = vst.msk [vmem:[%s167] ss:$8 sm:$0xf] %vm166, %v165
    %s169 = scalar_lea.vmem %s1, 194
    %170 = vst.msk [vmem:[%s169] ss:$8 sm:$0xf0] %vm166, %v165
    %s171 = scalar_lea.vmem [#allocation0], 32
    %v172 = vld [vmem:[%s171] sm:$0xff]
    %173 = vrot.lane.b32.xlu0 %v172, 120
    %v174 = vpop.permute.xlu0 %173
    %vm175 = vcmask 31744
    %s176 = scalar_lea.vmem %s1, 258
    %177 = vst.msk [vmem:[%s176] ss:$8 sm:$0xf] %vm175, %v174
    %s178 = scalar_lea.vmem %s1, 258
    %179 = vst.msk [vmem:[%s178] ss:$8 sm:$0xf0] %vm175, %v174
    %s180 = scalar_lea.vmem [#allocation0], 40
    %v181 = vld [vmem:[%s180] sm:$0xff]
    %182 = vrot.lane.b32.xlu0 %v181, 120
    %v183 = vpop.permute.xlu0 %182
    %vm184 = vcmask 31744
    %s185 = scalar_lea.vmem %s1, 322
    %186 = vst.msk [vmem:[%s185] ss:$8 sm:$0xf] %vm184, %v183
    %s187 = scalar_lea.vmem %s1, 322
    %188 = vst.msk [vmem:[%s187] ss:$8 sm:$0xf0] %vm184, %v183
    %s189 = scalar_lea.vmem [#allocation0], 48
    %v190 = vld [vmem:[%s189] sm:$0xff]
    %191 = vrot.lane.b32.xlu0 %v190, 120
    %v192 = vpop.permute.xlu0 %191
    %vm193 = vcmask 31744
    %s194 = scalar_lea.vmem %s1, 386
    %195 = vst.msk [vmem:[%s194] ss:$8 sm:$0xf] %vm193, %v192
    %s196 = scalar_lea.vmem %s1, 386
    %197 = vst.msk [vmem:[%s196] ss:$8 sm:$0xf0] %vm193, %v192
    %s198 = scalar_lea.vmem [#allocation0], 56
    %v199 = vld [vmem:[%s198] sm:$0xff]
    %200 = vrot.lane.b32.xlu0 %v199, 120
    %v201 = vpop.permute.xlu0 %200
    %vm202 = vcmask 31744
    %s203 = scalar_lea.vmem %s1, 450
    %204 = vst.msk [vmem:[%s203] ss:$8 sm:$0xf] %vm202, %v201
    %s205 = scalar_lea.vmem %s1, 450
    %206 = vst.msk [vmem:[%s205] ss:$8 sm:$0xf0] %vm202, %v201
    %v207 = vld [vmem:[#allocation0] sm:$0xff]
    %208 = vrot.lane.b32.xlu0 %v207, 116
    %v209 = vpop.permute.xlu0 %208
    %vm210 = vcmask 31744
    %s211 = scalar_lea.vmem %s1, 3
    %212 = vst.msk [vmem:[%s211] ss:$8 sm:$0xf] %vm210, %v209
    %s213 = scalar_lea.vmem %s1, 3
    %214 = vst.msk [vmem:[%s213] ss:$8 sm:$0xf0] %vm210, %v209
    %s215 = scalar_lea.vmem [#allocation0], 8
    %v216 = vld [vmem:[%s215] sm:$0xff]
    %217 = vrot.lane.b32.xlu0 %v216, 116
    %v218 = vpop.permute.xlu0 %217
    %vm219 = vcmask 31744
    %s220 = scalar_lea.vmem %s1, 67
    %221 = vst.msk [vmem:[%s220] ss:$8 sm:$0xf] %vm219, %v218
    %s222 = scalar_lea.vmem %s1, 67
    %223 = vst.msk [vmem:[%s222] ss:$8 sm:$0xf0] %vm219, %v218
    %s224 = scalar_lea.vmem [#allocation0], 16
    %v225 = vld [vmem:[%s224] sm:$0xff]
    %226 = vrot.lane.b32.xlu0 %v225, 116
    %v227 = vpop.permute.xlu0 %226
    %vm228 = vcmask 31744
    %s229 = scalar_lea.vmem %s1, 131
    %230 = vst.msk [vmem:[%s229] ss:$8 sm:$0xf] %vm228, %v227
    %s231 = scalar_lea.vmem %s1, 131
    %232 = vst.msk [vmem:[%s231] ss:$8 sm:$0xf0] %vm228, %v227
    %s233 = scalar_lea.vmem [#allocation0], 24
    %v234 = vld [vmem:[%s233] sm:$0xff]
    %235 = vrot.lane.b32.xlu0 %v234, 116
    %v236 = vpop.permute.xlu0 %235
    %vm237 = vcmask 31744
    %s238 = scalar_lea.vmem %s1, 195
    %239 = vst.msk [vmem:[%s238] ss:$8 sm:$0xf] %vm237, %v236
    %s240 = scalar_lea.vmem %s1, 195
    %241 = vst.msk [vmem:[%s240] ss:$8 sm:$0xf0] %vm237, %v236
    %s242 = scalar_lea.vmem [#allocation0], 32
    %v243 = vld [vmem:[%s242] sm:$0xff]
    %244 = vrot.lane.b32.xlu0 %v243, 116
    %v245 = vpop.permute.xlu0 %244
    %vm246 = vcmask 31744
    %s247 = scalar_lea.vmem %s1, 259
    %248 = vst.msk [vmem:[%s247] ss:$8 sm:$0xf] %vm246, %v245
    %s249 = scalar_lea.vmem %s1, 259
    %250 = vst.msk [vmem:[%s249] ss:$8 sm:$0xf0] %vm246, %v245
    %s251 = scalar_lea.vmem [#allocation0], 40
    %v252 = vld [vmem:[%s251] sm:$0xff]
    %253 = vrot.lane.b32.xlu0 %v252, 116
    %v254 = vpop.permute.xlu0 %253
    %vm255 = vcmask 31744
    %s256 = scalar_lea.vmem %s1, 323
    %257 = vst.msk [vmem:[%s256] ss:$8 sm:$0xf] %vm255, %v254
    %s258 = scalar_lea.vmem %s1, 323
    %259 = vst.msk [vmem:[%s258] ss:$8 sm:$0xf0] %vm255, %v254
    %s260 = scalar_lea.vmem [#allocation0], 48
    %v261 = vld [vmem:[%s260] sm:$0xff]
    %262 = vrot.lane.b32.xlu0 %v261, 116
    %v263 = vpop.permute.xlu0 %262
    %vm264 = vcmask 31744
    %s265 = scalar_lea.vmem %s1, 387
    %266 = vst.msk [vmem:[%s265] ss:$8 sm:$0xf] %vm264, %v263
    %s267 = scalar_lea.vmem %s1, 387
    %268 = vst.msk [vmem:[%s267] ss:$8 sm:$0xf0] %vm264, %v263
    %s269 = scalar_lea.vmem [#allocation0], 56
    %v270 = vld [vmem:[%s269] sm:$0xff]
    %271 = vrot.lane.b32.xlu0 %v270, 116
    %v272 = vpop.permute.xlu0 %271
    %vm273 = vcmask 31744
    %s274 = scalar_lea.vmem %s1, 451
    %275 = vst.msk [vmem:[%s274] ss:$8 sm:$0xf] %vm273, %v272
    %s276 = scalar_lea.vmem %s1, 451
    %277 = vst.msk [vmem:[%s276] ss:$8 sm:$0xf0] %vm273, %v272
    %v278 = vld [vmem:[#allocation0] sm:$0xff]
    %279 = vrot.lane.b32.xlu0 %v278, 112
    %v280 = vpop.permute.xlu0 %279
    %vm281 = vcmask 31744
    %s282 = scalar_lea.vmem %s1, 4
    %283 = vst.msk [vmem:[%s282] ss:$8 sm:$0xf] %vm281, %v280
    %s284 = scalar_lea.vmem %s1, 4
    %285 = vst.msk [vmem:[%s284] ss:$8 sm:$0xf0] %vm281, %v280
    %s286 = scalar_lea.vmem [#allocation0], 8
    %v287 = vld [vmem:[%s286] sm:$0xff]
    %288 = vrot.lane.b32.xlu0 %v287, 112
    %v289 = vpop.permute.xlu0 %288
    %vm290 = vcmask 31744
    %s291 = scalar_lea.vmem %s1, 68
    %292 = vst.msk [vmem:[%s291] ss:$8 sm:$0xf] %vm290, %v289
    %s293 = scalar_lea.vmem %s1, 68
    %294 = vst.msk [vmem:[%s293] ss:$8 sm:$0xf0] %vm290, %v289
    %s295 = scalar_lea.vmem [#allocation0], 16
    %v296 = vld [vmem:[%s295] sm:$0xff]
    %297 = vrot.lane.b32.xlu0 %v296, 112
    %v298 = vpop.permute.xlu0 %297
    %vm299 = vcmask 31744
    %s300 = scalar_lea.vmem %s1, 132
    %301 = vst.msk [vmem:[%s300] ss:$8 sm:$0xf] %vm299, %v298
    %s302 = scalar_lea.vmem %s1, 132
    %303 = vst.msk [vmem:[%s302] ss:$8 sm:$0xf0] %vm299, %v298
    %s304 = scalar_lea.vmem [#allocation0], 24
    %v305 = vld [vmem:[%s304] sm:$0xff]
    %306 = vrot.lane.b32.xlu0 %v305, 112
    %v307 = vpop.permute.xlu0 %306
    %vm308 = vcmask 31744
    %s309 = scalar_lea.vmem %s1, 196
    %310 = vst.msk [vmem:[%s309] ss:$8 sm:$0xf] %vm308, %v307
    %s311 = scalar_lea.vmem %s1, 196
    %312 = vst.msk [vmem:[%s311] ss:$8 sm:$0xf0] %vm308, %v307
    %s313 = scalar_lea.vmem [#allocation0], 32
    %v314 = vld [vmem:[%s313] sm:$0xff]
    %315 = vrot.lane.b32.xlu0 %v314, 112
    %v316 = vpop.permute.xlu0 %315
    %vm317 = vcmask 31744
    %s318 = scalar_lea.vmem %s1, 260
    %319 = vst.msk [vmem:[%s318] ss:$8 sm:$0xf] %vm317, %v316
    %s320 = scalar_lea.vmem %s1, 260
    %321 = vst.msk [vmem:[%s320] ss:$8 sm:$0xf0] %vm317, %v316
    %s322 = scalar_lea.vmem [#allocation0], 40
    %v323 = vld [vmem:[%s322] sm:$0xff]
    %324 = vrot.lane.b32.xlu0 %v323, 112
    %v325 = vpop.permute.xlu0 %324
    %vm326 = vcmask 31744
    %s327 = scalar_lea.vmem %s1, 324
    %328 = vst.msk [vmem:[%s327] ss:$8 sm:$0xf] %vm326, %v325
    %s329 = scalar_lea.vmem %s1, 324
    %330 = vst.msk [vmem:[%s329] ss:$8 sm:$0xf0] %vm326, %v325
    %s331 = scalar_lea.vmem [#allocation0], 48
    %v332 = vld [vmem:[%s331] sm:$0xff]
    %333 = vrot.lane.b32.xlu0 %v332, 112
    %v334 = vpop.permute.xlu0 %333
    %vm335 = vcmask 31744
    %s336 = scalar_lea.vmem %s1, 388
    %337 = vst.msk [vmem:[%s336] ss:$8 sm:$0xf] %vm335, %v334
    %s338 = scalar_lea.vmem %s1, 388
    %339 = vst.msk [vmem:[%s338] ss:$8 sm:$0xf0] %vm335, %v334
    %s340 = scalar_lea.vmem [#allocation0], 56
    %v341 = vld [vmem:[%s340] sm:$0xff]
    %342 = vrot.lane.b32.xlu0 %v341, 112
    %v343 = vpop.permute.xlu0 %342
    %vm344 = vcmask 31744
    %s345 = scalar_lea.vmem %s1, 452
    %346 = vst.msk [vmem:[%s345] ss:$8 sm:$0xf] %vm344, %v343
    %s347 = scalar_lea.vmem %s1, 452
    %348 = vst.msk [vmem:[%s347] ss:$8 sm:$0xf0] %vm344, %v343
    %v349 = vld [vmem:[#allocation0] sm:$0xff]
    %350 = vrot.lane.b32.xlu0 %v349, 108
    %v351 = vpop.permute.xlu0 %350
    %vm352 = vcmask 31744
    %s353 = scalar_lea.vmem %s1, 5
    %354 = vst.msk [vmem:[%s353] ss:$8 sm:$0xf] %vm352, %v351
    %s355 = scalar_lea.vmem %s1, 5
    %356 = vst.msk [vmem:[%s355] ss:$8 sm:$0xf0] %vm352, %v351
    %s357 = scalar_lea.vmem [#allocation0], 8
    %v358 = vld [vmem:[%s357] sm:$0xff]
    %359 = vrot.lane.b32.xlu0 %v358, 108
    %v360 = vpop.permute.xlu0 %359
    %vm361 = vcmask 31744
    %s362 = scalar_lea.vmem %s1, 69
    %363 = vst.msk [vmem:[%s362] ss:$8 sm:$0xf] %vm361, %v360
    %s364 = scalar_lea.vmem %s1, 69
    %365 = vst.msk [vmem:[%s364] ss:$8 sm:$0xf0] %vm361, %v360
    %s366 = scalar_lea.vmem [#allocation0], 16
    %v367 = vld [vmem:[%s366] sm:$0xff]
    %368 = vrot.lane.b32.xlu0 %v367, 108
    %v369 = vpop.permute.xlu0 %368
    %vm370 = vcmask 31744
    %s371 = scalar_lea.vmem %s1, 133
    %372 = vst.msk [vmem:[%s371] ss:$8 sm:$0xf] %vm370, %v369
    %s373 = scalar_lea.vmem %s1, 133
    %374 = vst.msk [vmem:[%s373] ss:$8 sm:$0xf0] %vm370, %v369
    %s375 = scalar_lea.vmem [#allocation0], 24
    %v376 = vld [vmem:[%s375] sm:$0xff]
    %377 = vrot.lane.b32.xlu0 %v376, 108
    %v378 = vpop.permute.xlu0 %377
    %vm379 = vcmask 31744
    %s380 = scalar_lea.vmem %s1, 197
    %381 = vst.msk [vmem:[%s380] ss:$8 sm:$0xf] %vm379, %v378
    %s382 = scalar_lea.vmem %s1, 197
    %383 = vst.msk [vmem:[%s382] ss:$8 sm:$0xf0] %vm379, %v378
    %s384 = scalar_lea.vmem [#allocation0], 32
    %v385 = vld [vmem:[%s384] sm:$0xff]
    %386 = vrot.lane.b32.xlu0 %v385, 108
    %v387 = vpop.permute.xlu0 %386
    %vm388 = vcmask 31744
    %s389 = scalar_lea.vmem %s1, 261
    %390 = vst.msk [vmem:[%s389] ss:$8 sm:$0xf] %vm388, %v387
    %s391 = scalar_lea.vmem %s1, 261
    %392 = vst.msk [vmem:[%s391] ss:$8 sm:$0xf0] %vm388, %v387
    %s393 = scalar_lea.vmem [#allocation0], 40
    %v394 = vld [vmem:[%s393] sm:$0xff]
    %395 = vrot.lane.b32.xlu0 %v394, 108
    %v396 = vpop.permute.xlu0 %395
    %vm397 = vcmask 31744
    %s398 = scalar_lea.vmem %s1, 325
    %399 = vst.msk [vmem:[%s398] ss:$8 sm:$0xf] %vm397, %v396
    %s400 = scalar_lea.vmem %s1, 325
    %401 = vst.msk [vmem:[%s400] ss:$8 sm:$0xf0] %vm397, %v396
    %s402 = scalar_lea.vmem [#allocation0], 48
    %v403 = vld [vmem:[%s402] sm:$0xff]
    %404 = vrot.lane.b32.xlu0 %v403, 108
    %v405 = vpop.permute.xlu0 %404
    %vm406 = vcmask 31744
    %s407 = scalar_lea.vmem %s1, 389
    %408 = vst.msk [vmem:[%s407] ss:$8 sm:$0xf] %vm406, %v405
    %s409 = scalar_lea.vmem %s1, 389
    %410 = vst.msk [vmem:[%s409] ss:$8 sm:$0xf0] %vm406, %v405
    %s411 = scalar_lea.vmem [#allocation0], 56
    %v412 = vld [vmem:[%s411] sm:$0xff]
    %413 = vrot.lane.b32.xlu0 %v412, 108
    %v414 = vpop.permute.xlu0 %413
    %vm415 = vcmask 31744
    %s416 = scalar_lea.vmem %s1, 453
    %417 = vst.msk [vmem:[%s416] ss:$8 sm:$0xf] %vm415, %v414
    %s418 = scalar_lea.vmem %s1, 453
    %419 = vst.msk [vmem:[%s418] ss:$8 sm:$0xf0] %vm415, %v414
    %v420 = vld [vmem:[#allocation0] sm:$0xff]
    %421 = vrot.lane.b32.xlu0 %v420, 104
    %v422 = vpop.permute.xlu0 %421
    %vm423 = vcmask 31744
    %s424 = scalar_lea.vmem %s1, 6
    %425 = vst.msk [vmem:[%s424] ss:$8 sm:$0xf] %vm423, %v422
    %s426 = scalar_lea.vmem %s1, 6
    %427 = vst.msk [vmem:[%s426] ss:$8 sm:$0xf0] %vm423, %v422
    %s428 = scalar_lea.vmem [#allocation0], 8
    %v429 = vld [vmem:[%s428] sm:$0xff]
    %430 = vrot.lane.b32.xlu0 %v429, 104
    %v431 = vpop.permute.xlu0 %430
    %vm432 = vcmask 31744
    %s433 = scalar_lea.vmem %s1, 70
    %434 = vst.msk [vmem:[%s433] ss:$8 sm:$0xf] %vm432, %v431
    %s435 = scalar_lea.vmem %s1, 70
    %436 = vst.msk [vmem:[%s435] ss:$8 sm:$0xf0] %vm432, %v431
    %s437 = scalar_lea.vmem [#allocation0], 16
    %v438 = vld [vmem:[%s437] sm:$0xff]
    %439 = vrot.lane.b32.xlu0 %v438, 104
    %v440 = vpop.permute.xlu0 %439
    %vm441 = vcmask 31744
    %s442 = scalar_lea.vmem %s1, 134
    %443 = vst.msk [vmem:[%s442] ss:$8 sm:$0xf] %vm441, %v440
    %s444 = scalar_lea.vmem %s1, 134
    %445 = vst.msk [vmem:[%s444] ss:$8 sm:$0xf0] %vm441, %v440
    %s446 = scalar_lea.vmem [#allocation0], 24
    %v447 = vld [vmem:[%s446] sm:$0xff]
    %448 = vrot.lane.b32.xlu0 %v447, 104
    %v449 = vpop.permute.xlu0 %448
    %vm450 = vcmask 31744
    %s451 = scalar_lea.vmem %s1, 198
    %452 = vst.msk [vmem:[%s451] ss:$8 sm:$0xf] %vm450, %v449
    %s453 = scalar_lea.vmem %s1, 198
    %454 = vst.msk [vmem:[%s453] ss:$8 sm:$0xf0] %vm450, %v449
    %s455 = scalar_lea.vmem [#allocation0], 32
    %v456 = vld [vmem:[%s455] sm:$0xff]
    %457 = vrot.lane.b32.xlu0 %v456, 104
    %v458 = vpop.permute.xlu0 %457
    %vm459 = vcmask 31744
    %s460 = scalar_lea.vmem %s1, 262
    %461 = vst.msk [vmem:[%s460] ss:$8 sm:$0xf] %vm459, %v458
    %s462 = scalar_lea.vmem %s1, 262
    %463 = vst.msk [vmem:[%s462] ss:$8 sm:$0xf0] %vm459, %v458
    %s464 = scalar_lea.vmem [#allocation0], 40
    %v465 = vld [vmem:[%s464] sm:$0xff]
    %466 = vrot.lane.b32.xlu0 %v465, 104
    %v467 = vpop.permute.xlu0 %466
    %vm468 = vcmask 31744
    %s469 = scalar_lea.vmem %s1, 326
    %470 = vst.msk [vmem:[%s469] ss:$8 sm:$0xf] %vm468, %v467
    %s471 = scalar_lea.vmem %s1, 326
    %472 = vst.msk [vmem:[%s471] ss:$8 sm:$0xf0] %vm468, %v467
    %s473 = scalar_lea.vmem [#allocation0], 48
    %v474 = vld [vmem:[%s473] sm:$0xff]
    %475 = vrot.lane.b32.xlu0 %v474, 104
    %v476 = vpop.permute.xlu0 %475
    %vm477 = vcmask 31744
    %s478 = scalar_lea.vmem %s1, 390
    %479 = vst.msk [vmem:[%s478] ss:$8 sm:$0xf] %vm477, %v476
    %s480 = scalar_lea.vmem %s1, 390
    %481 = vst.msk [vmem:[%s480] ss:$8 sm:$0xf0] %vm477, %v476
    %s482 = scalar_lea.vmem [#allocation0], 56
    %v483 = vld [vmem:[%s482] sm:$0xff]
    %484 = vrot.lane.b32.xlu0 %v483, 104
    %v485 = vpop.permute.xlu0 %484
    %vm486 = vcmask 31744
    %s487 = scalar_lea.vmem %s1, 454
    %488 = vst.msk [vmem:[%s487] ss:$8 sm:$0xf] %vm486, %v485
    %s489 = scalar_lea.vmem %s1, 454
    %490 = vst.msk [vmem:[%s489] ss:$8 sm:$0xf0] %vm486, %v485
    %v491 = vld [vmem:[#allocation0] sm:$0xff]
    %492 = vrot.lane.b32.xlu0 %v491, 100
    %v493 = vpop.permute.xlu0 %492
    %vm494 = vcmask 31744
    %s495 = scalar_lea.vmem %s1, 7
    %496 = vst.msk [vmem:[%s495] ss:$8 sm:$0xf] %vm494, %v493
    %s497 = scalar_lea.vmem %s1, 7
    %498 = vst.msk [vmem:[%s497] ss:$8 sm:$0xf0] %vm494, %v493
    %s499 = scalar_lea.vmem [#allocation0], 8
    %v500 = vld [vmem:[%s499] sm:$0xff]
    %501 = vrot.lane.b32.xlu0 %v500, 100
    %v502 = vpop.permute.xlu0 %501
    %vm503 = vcmask 31744
    %s504 = scalar_lea.vmem %s1, 71
    %505 = vst.msk [vmem:[%s504] ss:$8 sm:$0xf] %vm503, %v502
    %s506 = scalar_lea.vmem %s1, 71
    %507 = vst.msk [vmem:[%s506] ss:$8 sm:$0xf0] %vm503, %v502
    %s508 = scalar_lea.vmem [#allocation0], 16
    %v509 = vld [vmem:[%s508] sm:$0xff]
    %510 = vrot.lane.b32.xlu0 %v509, 100
    %v511 = vpop.permute.xlu0 %510
    %vm512 = vcmask 31744
    %s513 = scalar_lea.vmem %s1, 135
    %514 = vst.msk [vmem:[%s513] ss:$8 sm:$0xf] %vm512, %v511
    %s515 = scalar_lea.vmem %s1, 135
    %516 = vst.msk [vmem:[%s515] ss:$8 sm:$0xf0] %vm512, %v511
    %s517 = scalar_lea.vmem [#allocation0], 24
    %v518 = vld [vmem:[%s517] sm:$0xff]
    %519 = vrot.lane.b32.xlu0 %v518, 100
    %v520 = vpop.permute.xlu0 %519
    %vm521 = vcmask 31744
    %s522 = scalar_lea.vmem %s1, 199
    %523 = vst.msk [vmem:[%s522] ss:$8 sm:$0xf] %vm521, %v520
    %s524 = scalar_lea.vmem %s1, 199
    %525 = vst.msk [vmem:[%s524] ss:$8 sm:$0xf0] %vm521, %v520
    %s526 = scalar_lea.vmem [#allocation0], 32
    %v527 = vld [vmem:[%s526] sm:$0xff]
    %528 = vrot.lane.b32.xlu0 %v527, 100
    %v529 = vpop.permute.xlu0 %528
    %vm530 = vcmask 31744
    %s531 = scalar_lea.vmem %s1, 263
    %532 = vst.msk [vmem:[%s531] ss:$8 sm:$0xf] %vm530, %v529
    %s533 = scalar_lea.vmem %s1, 263
    %534 = vst.msk [vmem:[%s533] ss:$8 sm:$0xf0] %vm530, %v529
    %s535 = scalar_lea.vmem [#allocation0], 40
    %v536 = vld [vmem:[%s535] sm:$0xff]
    %537 = vrot.lane.b32.xlu0 %v536, 100
    %v538 = vpop.permute.xlu0 %537
    %vm539 = vcmask 31744
    %s540 = scalar_lea.vmem %s1, 327
    %541 = vst.msk [vmem:[%s540] ss:$8 sm:$0xf] %vm539, %v538
    %s542 = scalar_lea.vmem %s1, 327
    %543 = vst.msk [vmem:[%s542] ss:$8 sm:$0xf0] %vm539, %v538
    %s544 = scalar_lea.vmem [#allocation0], 48
    %v545 = vld [vmem:[%s544] sm:$0xff]
    %546 = vrot.lane.b32.xlu0 %v545, 100
    %v547 = vpop.permute.xlu0 %546
    %vm548 = vcmask 31744
    %s549 = scalar_lea.vmem %s1, 391
    %550 = vst.msk [vmem:[%s549] ss:$8 sm:$0xf] %vm548, %v547
    %s551 = scalar_lea.vmem %s1, 391
    %552 = vst.msk [vmem:[%s551] ss:$8 sm:$0xf0] %vm548, %v547
    %s553 = scalar_lea.vmem [#allocation0], 56
    %v554 = vld [vmem:[%s553] sm:$0xff]
    %555 = vrot.lane.b32.xlu0 %v554, 100
    %v556 = vpop.permute.xlu0 %555
    %vm557 = vcmask 31744
    %s558 = scalar_lea.vmem %s1, 455
    %559 = vst.msk [vmem:[%s558] ss:$8 sm:$0xf] %vm557, %v556
    %s560 = scalar_lea.vmem %s1, 455
    %561 = vst.msk [vmem:[%s560] ss:$8 sm:$0xf0] %vm557, %v556
    %562 = vsyncpa [#allocation1], 1

// kernel: audio_classifier_forward.1
$region0: #{audio_classifier_forward.1}
  #allocation0 [shape = 'u32[]', space=smem, size = 0x4, offset = 0x4, fixed_abs, tag = 'smem constant byte address 0x4 - core index']
  #allocation1 [shape = 'u32[144,128]{1,0:T(1,128)}', space=vmem, size = 0x12000, scoped, tag = 'internal scratch']
  #allocation2 [shape = 'f32[2,8,8,128]{3,2,1,0:T(8,128)}', space=vmem, size = 0x10000, scoped, tag = 'scratch operand']
  #allocation3 [shape = 'f32[18,1152]{1,0:T(8,128)}', space=vmem, size = 0x1b000, scoped, tag = 'scratch operand']
  %s0 = inlined_call_operand.vmem [shape: f32[2,8,8,16], index: 0, kind: input, shape index: {}]
  %s1 = inlined_call_operand.vmem [shape: f32[9,128], index: 1, kind: input, shape index: {}]
  %s2 = inlined_call_operand.vmem [shape: f32[1,128], index: 2, kind: input, shape index: {}]
  %s3 = inlined_call_operand.vmem [shape: bf16[1152,128], index: 3, kind: input, shape index: {}]
  %s4 = inlined_call_operand.vmem [shape: f32[1,128], index: 4, kind: input, shape index: {}]
  %s5 = inlined_call_operand.vmem [shape: f32[128,128], index: 5, kind: input, shape index: {}]
  %s6 = inlined_call_operand.vmem [shape: f32[1,128], index: 6, kind: input, shape index: {}]
  %s7 = inlined_call_operand.hbm [shape: f32[2,128], index: 7, kind: output, shape index: {}]
  %s8 = sld [smem:[#allocation0]]
  $region38: #{audio_classifier_forward.1} parent=0
    _
  %s10 = ssub.s32 1, %s8
  %s11 = scalar_select 0, %s10, %s8
  $region1: #{audio_classifier_forward.1} parent=0
    #allocation4 [shape = 'u8[1024]{0}', space=vmem, size = 0x400, scoped, tag = 'output window, operand 0, single buffered']
    #allocation5 [shape = 's32[1]{0}', space=sflag, size = 0x4, scoped, tag = 'scoped memory for audio_classifier_forward.1']
    %12 = vsyncpa [#allocation5], 0
    // Predicated region
    $region2: #{audio_classifier_forward.1} parent=1 // pred_check
      _
    $region3: #{audio_classifier_forward.1} parent=1 // pred_check_branch
      %14 = sbr.rel (0) target = $region5
    $region4: #{audio_classifier_forward.1} parent=1 // pred_region
      _
    $region5: #{audio_classifier_forward.1} parent=1 // pred_fallthru
      _
    // Predicated region
    $region6: #{audio_classifier_forward.1} parent=1 // pred_check
      _
    $region7: #{audio_classifier_forward.1} parent=1 // pred_check_branch
      %16 = sbr.rel (0) target = $region9
    $region8: #{audio_classifier_forward.1} parent=1 // pred_region
      _
    $region9: #{audio_classifier_forward.1} parent=1 // pred_fallthru
      _
    // Predicated region
    $region10: #{audio_classifier_forward.1} parent=1 // pred_check
      _
    $region11: #{audio_classifier_forward.1} parent=1 // pred_check_branch
      %18 = sbr.rel (0) target = $region13
    $region12: #{audio_classifier_forward.1} parent=1 // pred_region
      _
    $region13: #{audio_classifier_forward.1} parent=1 // pred_fallthru
      _
    // Predicated region
    $region14: #{audio_classifier_forward.1} parent=1 // pred_check
      _
    $region15: #{audio_classifier_forward.1} parent=1 // pred_check_branch
      %20 = sbr.rel (0) target = $region17
    $region16: #{audio_classifier_forward.1} parent=1 // pred_region
      _
    $region17: #{audio_classifier_forward.1} parent=1 // pred_fallthru
      _
    // Predicated region
    $region18: #{audio_classifier_forward.1} parent=1 // pred_check
      _
    $region19: #{audio_classifier_forward.1} parent=1 // pred_check_branch
      %22 = sbr.rel (0) target = $region21
    $region20: #{audio_classifier_forward.1} parent=1 // pred_region
      _
    $region21: #{audio_classifier_forward.1} parent=1 // pred_fallthru
      _
    // Predicated region
    $region22: #{audio_classifier_forward.1} parent=1 // pred_check
      _
    $region23: #{audio_classifier_forward.1} parent=1 // pred_check_branch
      %24 = sbr.rel (0) target = $region25
    $region24: #{audio_classifier_forward.1} parent=1 // pred_region
      _
    $region25: #{audio_classifier_forward.1} parent=1 // pred_fallthru
      _
    // Predicated region
    $region26: #{audio_classifier_forward.1} parent=1 // pred_check
      _
    $region27: #{audio_classifier_forward.1} parent=1 // pred_check_branch
      %26 = sbr.rel (0) target = $region29
    $region28: #{audio_classifier_forward.1} parent=1 // pred_region
      _
    $region29: #{audio_classifier_forward.1} parent=1 // pred_fallthru
      _
    %v28 = vld [vmem:[%s1] sm:$0xff]
    %v29 = vld [vmem:[%s1 + $0x8] sm:$0x1]
    %v30 = vld [vmem:[%s2] sm:$0x1]
    %v31 = vld [vmem:[%s0] sm:$0xff]
    %v32 = vld [vmem:[%s0 + $0x8] sm:$0xff]
    %v33 = vld [vmem:[%s0 + $0x10] sm:$0xff]
    %v34 = vld [vmem:[%s0 + $0x18] sm:$0xff]
    %v35 = vld [vmem:[%s0 + $0x20] sm:$0xff]
    %v36 = vld [vmem:[%s0 + $0x28] sm:$0xff]
    %v37 = vld [vmem:[%s0 + $0x30] sm:$0xff]
    %v38 = vld [vmem:[%s0 + $0x38] sm:$0xff]
    %v39 = vld [vmem:[%s0 + $0x40] sm:$0xff]
    %v40 = vld [vmem:[%s0 + $0x48] sm:$0xff]
    %v41 = vld [vmem:[%s0 + $0x50] sm:$0xff]
    %v42 = vld [vmem:[%s0 + $0x58] sm:$0xff]
    %v43 = vld [vmem:[%s0 + $0x60] sm:$0xff]
    %v44 = vld [vmem:[%s0 + $0x68] sm:$0xff]
    %v45 = vld [vmem:[%s0 + $0x70] sm:$0xff]
    %v46 = vld [vmem:[%s0 + $0x78] sm:$0xff]
    %48 = vset.pattern.permute.xlu0 0
    %49 = vperm.xlu0 %48, %v31
    %v50 = vpop.permute.xlu0 %49
    %53 = vset.pattern.permute.xlu0 0
    %54 = vperm.xlu0 %53, %v32
    %v55 = vpop.permute.xlu0 %54
    %58 = vset.pattern.permute.xlu0 0
    %59 = vperm.xlu0 %58, %v33
    %v60 = vpop.permute.xlu0 %59
    %63 = vset.pattern.permute.xlu0 0
    %64 = vperm.xlu0 %63, %v34
    %v65 = vpop.permute.xlu0 %64
    %68 = vset.pattern.permute.xlu0 0
    %69 = vperm.xlu0 %68, %v35
    %v70 = vpop.permute.xlu0 %69
    %73 = vset.pattern.permute.xlu0 0
    %74 = vperm.xlu0 %73, %v36
    %v75 = vpop.permute.xlu0 %74
    %78 = vset.pattern.permute.xlu0 0
    %79 = vperm.xlu0 %78, %v37
    %v80 = vpop.permute.xlu0 %79
    %83 = vset.pattern.permute.xlu0 0
    %84 = vperm.xlu0 %83, %v38
    %v85 = vpop.permute.xlu0 %84
    %88 = vset.pattern.permute.xlu0 0
    %89 = vperm.xlu0 %88, %v39
    %v90 = vpop.permute.xlu0 %89
    %93 = vset.pattern.permute.xlu0 0
    %94 = vperm.xlu0 %93, %v40
    %v95 = vpop.permute.xlu0 %94
    %98 = vset.pattern.permute.xlu0 0
    %99 = vperm.xlu0 %98, %v41
    %v100 = vpop.permute.xlu0 %99
    %103 = vset.pattern.permute.xlu0 0
    %104 = vperm.xlu0 %103, %v42
    %v105 = vpop.permute.xlu0 %104
    %108 = vset.pattern.permute.xlu0 0
    %109 = vperm.xlu0 %108, %v43
    %v110 = vpop.permute.xlu0 %109
    %113 = vset.pattern.permute.xlu0 0
    %114 = vperm.xlu0 %113, %v44
    %v115 = vpop.permute.xlu0 %114
    %118 = vset.pattern.permute.xlu0 0
    %119 = vperm.xlu0 %118, %v45
    %v120 = vpop.permute.xlu0 %119
    %123 = vset.pattern.permute.xlu0 0
    %124 = vperm.xlu0 %123, %v46
    %v125 = vpop.permute.xlu0 %124
    %v127 = vlaneseq
    %v128 = vshrl.u32 %v127, 7
    %v129 = vsub.s32 0, %v128
    %v130 = vrot.slane %v28, %v129
    %v131 = vmul.f32 %v50, %v130
    %v132 = vmul.f32 %v55, %v130
    %v133 = vmul.f32 %v60, %v130
    %v134 = vmul.f32 %v65, %v130
    %v135 = vmul.f32 %v70, %v130
    %v136 = vmul.f32 %v75, %v130
    %v137 = vmul.f32 %v80, %v130
    %v138 = vmul.f32 %v85, %v130
    %v139 = vmul.f32 %v90, %v130
    %v140 = vmul.f32 %v95, %v130
    %v141 = vmul.f32 %v100, %v130
    %v142 = vmul.f32 %v105, %v130
    %v143 = vmul.f32 %v110, %v130
    %v144 = vmul.f32 %v115, %v130
    %v145 = vmul.f32 %v120, %v130
    %v146 = vmul.f32 %v125, %v130
    %147 = vset.pattern.permute.xlu0 1
    %148 = vperm.xlu0 %147, %v31
    %v149 = vpop.permute.xlu0 %148
    %151 = vset.pattern.permute.xlu0 1
    %152 = vperm.xlu0 %151, %v32
    %v153 = vpop.permute.xlu0 %152
    %155 = vset.pattern.permute.xlu0 1
    %156 = vperm.xlu0 %155, %v33
    %v157 = vpop.permute.xlu0 %156
    %159 = vset.pattern.permute.xlu0 1
    %160 = vperm.xlu0 %159, %v34
    %v161 = vpop.permute.xlu0 %160
    %163 = vset.pattern.permute.xlu0 1
    %164 = vperm.xlu0 %163, %v35
    %v165 = vpop.permute.xlu0 %164
    %167 = vset.pattern.permute.xlu0 1
    %168 = vperm.xlu0 %167, %v36
    %v169 = vpop.permute.xlu0 %168
    %171 = vset.pattern.permute.xlu0 1
    %172 = vperm.xlu0 %171, %v37
    %v173 = vpop.permute.xlu0 %172
    %175 = vset.pattern.permute.xlu0 1
    %176 = vperm.xlu0 %175, %v38
    %v177 = vpop.permute.xlu0 %176
    %179 = vset.pattern.permute.xlu0 1
    %180 = vperm.xlu0 %179, %v39
    %v181 = vpop.permute.xlu0 %180
    %183 = vset.pattern.permute.xlu0 1
    %184 = vperm.xlu0 %183, %v40
    %v185 = vpop.permute.xlu0 %184
    %187 = vset.pattern.permute.xlu0 1
    %188 = vperm.xlu0 %187, %v41
    %v189 = vpop.permute.xlu0 %188
    %191 = vset.pattern.permute.xlu0 1
    %192 = vperm.xlu0 %191, %v42
    %v193 = vpop.permute.xlu0 %192
    %195 = vset.pattern.permute.xlu0 1
    %196 = vperm.xlu0 %195, %v43
    %v197 = vpop.permute.xlu0 %196
    %199 = vset.pattern.permute.xlu0 1
    %200 = vperm.xlu0 %199, %v44
    %v201 = vpop.permute.xlu0 %200
    %203 = vset.pattern.permute.xlu0 1
    %204 = vperm.xlu0 %203, %v45
    %v205 = vpop.permute.xlu0 %204
    %207 = vset.pattern.permute.xlu0 1
    %208 = vperm.xlu0 %207, %v46
    %v209 = vpop.permute.xlu0 %208
    %v211 = vlaneseq
    %v212 = vshrl.u32 %v211, 7
    %v213 = vsub.s32 1, %v212
    %v214 = vrot.slane %v28, %v213
    %v215 = vmul.f32 %v149, %v214
    %v216 = vmul.f32 %v153, %v214
    %v217 = vmul.f32 %v157, %v214
    %v218 = vmul.f32 %v161, %v214
    %v219 = vmul.f32 %v165, %v214
    %v220 = vmul.f32 %v169, %v214
    %v221 = vmul.f32 %v173, %v214
    %v222 = vmul.f32 %v177, %v214
    %v223 = vmul.f32 %v181, %v214
    %v224 = vmul.f32 %v185, %v214
    %v225 = vmul.f32 %v189, %v214
    %v226 = vmul.f32 %v193, %v214
    %v227 = vmul.f32 %v197, %v214
    %v228 = vmul.f32 %v201, %v214
    %v229 = vmul.f32 %v205, %v214
    %v230 = vmul.f32 %v209, %v214
    %v231 = vadd.f32 %v131, %v215
    %v232 = vadd.f32 %v132, %v216
    %v233 = vadd.f32 %v133, %v217
    %v234 = vadd.f32 %v134, %v218
    %v235 = vadd.f32 %v135, %v219
    %v236 = vadd.f32 %v136, %v220
    %v237 = vadd.f32 %v137, %v221
    %v238 = vadd.f32 %v138, %v222
    %v239 = vadd.f32 %v139, %v223
    %v240 = vadd.f32 %v140, %v224
    %v241 = vadd.f32 %v141, %v225
    %v242 = vadd.f32 %v142, %v226
    %v243 = vadd.f32 %v143, %v227
    %v244 = vadd.f32 %v144, %v228
    %v245 = vadd.f32 %v145, %v229
    %v246 = vadd.f32 %v146, %v230
    %247 = vset.pattern.permute.xlu0 2
    %248 = vperm.xlu0 %247, %v31
    %v249 = vpop.permute.xlu0 %248
    %251 = vset.pattern.permute.xlu0 2
    %252 = vperm.xlu0 %251, %v32
    %v253 = vpop.permute.xlu0 %252
    %255 = vset.pattern.permute.xlu0 2
    %256 = vperm.xlu0 %255, %v33
    %v257 = vpop.permute.xlu0 %256
    %259 = vset.pattern.permute.xlu0 2
    %260 = vperm.xlu0 %259, %v34
    %v261 = vpop.permute.xlu0 %260
    %263 = vset.pattern.permute.xlu0 2
    %264 = vperm.xlu0 %263, %v35
    %v265 = vpop.permute.xlu0 %264
    %267 = vset.pattern.permute.xlu0 2
    %268 = vperm.xlu0 %267, %v36
    %v269 = vpop.permute.xlu0 %268
    %271 = vset.pattern.permute.xlu0 2
    %272 = vperm.xlu0 %271, %v37
    %v273 = vpop.permute.xlu0 %272
    %275 = vset.pattern.permute.xlu0 2
    %276 = vperm.xlu0 %275, %v38
    %v277 = vpop.permute.xlu0 %276
    %279 = vset.pattern.permute.xlu0 2
    %280 = vperm.xlu0 %279, %v39
    %v281 = vpop.permute.xlu0 %280
    %283 = vset.pattern.permute.xlu0 2
    %284 = vperm.xlu0 %283, %v40
    %v285 = vpop.permute.xlu0 %284
    %287 = vset.pattern.permute.xlu0 2
    %288 = vperm.xlu0 %287, %v41
    %v289 = vpop.permute.xlu0 %288
    %291 = vset.pattern.permute.xlu0 2
    %292 = vperm.xlu0 %291, %v42
    %v293 = vpop.permute.xlu0 %292
    %295 = vset.pattern.permute.xlu0 2
    %296 = vperm.xlu0 %295, %v43
    %v297 = vpop.permute.xlu0 %296
    %299 = vset.pattern.permute.xlu0 2
    %300 = vperm.xlu0 %299, %v44
    %v301 = vpop.permute.xlu0 %300
    %303 = vset.pattern.permute.xlu0 2
    %304 = vperm.xlu0 %303, %v45
    %v305 = vpop.permute.xlu0 %304
    %307 = vset.pattern.permute.xlu0 2
    %308 = vperm.xlu0 %307, %v46
    %v309 = vpop.permute.xlu0 %308
    %v311 = vlaneseq
    %v312 = vshrl.u32 %v311, 7
    %v313 = vsub.s32 2, %v312
    %v314 = vrot.slane %v28, %v313
    %v315 = vmul.f32 %v249, %v314
    %v316 = vmul.f32 %v253, %v314
    %v317 = vmul.f32 %v257, %v314
    %v318 = vmul.f32 %v261, %v314
    %v319 = vmul.f32 %v265, %v314
    %v320 = vmul.f32 %v269, %v314
    %v321 = vmul.f32 %v273, %v314
    %v322 = vmul.f32 %v277, %v314
    %v323 = vmul.f32 %v281, %v314
    %v324 = vmul.f32 %v285, %v314
    %v325 = vmul.f32 %v289, %v314
    %v326 = vmul.f32 %v293, %v314
    %v327 = vmul.f32 %v297, %v314
    %v328 = vmul.f32 %v301, %v314
    %v329 = vmul.f32 %v305, %v314
    %v330 = vmul.f32 %v309, %v314
    %v331 = vadd.f32 %v231, %v315
    %v332 = vadd.f32 %v232, %v316
    %v333 = vadd.f32 %v233, %v317
    %v334 = vadd.f32 %v234, %v318
    %v335 = vadd.f32 %v235, %v319
    %v336 = vadd.f32 %v236, %v320
    %v337 = vadd.f32 %v237, %v321
    %v338 = vadd.f32 %v238, %v322
    %v339 = vadd.f32 %v239, %v323
    %v340 = vadd.f32 %v240, %v324
    %v341 = vadd.f32 %v241, %v325
    %v342 = vadd.f32 %v242, %v326
    %v343 = vadd.f32 %v243, %v327
    %v344 = vadd.f32 %v244, %v328
    %v345 = vadd.f32 %v245, %v329
    %v346 = vadd.f32 %v246, %v330
    %347 = vset.pattern.permute.xlu0 4
    %348 = vperm.xlu0 %347, %v31
    %v349 = vpop.permute.xlu0 %348
    %351 = vset.pattern.permute.xlu0 4
    %352 = vperm.xlu0 %351, %v32
    %v353 = vpop.permute.xlu0 %352
    %355 = vset.pattern.permute.xlu0 4
    %356 = vperm.xlu0 %355, %v33
    %v357 = vpop.permute.xlu0 %356
    %359 = vset.pattern.permute.xlu0 4
    %360 = vperm.xlu0 %359, %v34
    %v361 = vpop.permute.xlu0 %360
    %363 = vset.pattern.permute.xlu0 4
    %364 = vperm.xlu0 %363, %v35
    %v365 = vpop.permute.xlu0 %364
    %367 = vset.pattern.permute.xlu0 4
    %368 = vperm.xlu0 %367, %v36
    %v369 = vpop.permute.xlu0 %368
    %371 = vset.pattern.permute.xlu0 4
    %372 = vperm.xlu0 %371, %v37
    %v373 = vpop.permute.xlu0 %372
    %375 = vset.pattern.permute.xlu0 4
    %376 = vperm.xlu0 %375, %v38
    %v377 = vpop.permute.xlu0 %376
    %379 = vset.pattern.permute.xlu0 4
    %380 = vperm.xlu0 %379, %v39
    %v381 = vpop.permute.xlu0 %380
    %383 = vset.pattern.permute.xlu0 4
    %384 = vperm.xlu0 %383, %v40
    %v385 = vpop.permute.xlu0 %384
    %387 = vset.pattern.permute.xlu0 4
    %388 = vperm.xlu0 %387, %v41
    %v389 = vpop.permute.xlu0 %388
    %391 = vset.pattern.permute.xlu0 4
    %392 = vperm.xlu0 %391, %v42
    %v393 = vpop.permute.xlu0 %392
    %395 = vset.pattern.permute.xlu0 4
    %396 = vperm.xlu0 %395, %v43
    %v397 = vpop.permute.xlu0 %396
    %399 = vset.pattern.permute.xlu0 4
    %400 = vperm.xlu0 %399, %v44
    %v401 = vpop.permute.xlu0 %400
    %403 = vset.pattern.permute.xlu0 4
    %404 = vperm.xlu0 %403, %v45
    %v405 = vpop.permute.xlu0 %404
    %407 = vset.pattern.permute.xlu0 4
    %408 = vperm.xlu0 %407, %v46
    %v409 = vpop.permute.xlu0 %408
    %v411 = vlaneseq
    %v412 = vshrl.u32 %v411, 7
    %v413 = vsub.s32 3, %v412
    %v414 = vrot.slane %v28, %v413
    %v415 = vmul.f32 %v349, %v414
    %v416 = vmul.f32 %v353, %v414
    %v417 = vmul.f32 %v357, %v414
    %v418 = vmul.f32 %v361, %v414
    %v419 = vmul.f32 %v365, %v414
    %v420 = vmul.f32 %v369, %v414
    %v421 = vmul.f32 %v373, %v414
    %v422 = vmul.f32 %v377, %v414
    %v423 = vmul.f32 %v381, %v414
    %v424 = vmul.f32 %v385, %v414
    %v425 = vmul.f32 %v389, %v414
    %v426 = vmul.f32 %v393, %v414
    %v427 = vmul.f32 %v397, %v414
    %v428 = vmul.f32 %v401, %v414
    %v429 = vmul.f32 %v405, %v414
    %v430 = vmul.f32 %v409, %v414
    %v431 = vadd.f32 %v331, %v415
    %v432 = vadd.f32 %v332, %v416
    %v433 = vadd.f32 %v333, %v417
    %v434 = vadd.f32 %v334, %v418
    %v435 = vadd.f32 %v335, %v419
    %v436 = vadd.f32 %v336, %v420
    %v437 = vadd.f32 %v337, %v421
    %v438 = vadd.f32 %v338, %v422
    %v439 = vadd.f32 %v339, %v423
    %v440 = vadd.f32 %v340, %v424
    %v441 = vadd.f32 %v341, %v425
    %v442 = vadd.f32 %v342, %v426
    %v443 = vadd.f32 %v343, %v427
    %v444 = vadd.f32 %v344, %v428
    %v445 = vadd.f32 %v345, %v429
    %v446 = vadd.f32 %v346, %v430
    %447 = vset.pattern.permute.xlu0 5
    %448 = vperm.xlu0 %447, %v31
    %v449 = vpop.permute.xlu0 %448
    %451 = vset.pattern.permute.xlu0 5
    %452 = vperm.xlu0 %451, %v32
    %v453 = vpop.permute.xlu0 %452
    %455 = vset.pattern.permute.xlu0 5
    %456 = vperm.xlu0 %455, %v33
    %v457 = vpop.permute.xlu0 %456
    %459 = vset.pattern.permute.xlu0 5
    %460 = vperm.xlu0 %459, %v34
    %v461 = vpop.permute.xlu0 %460
    %463 = vset.pattern.permute.xlu0 5
    %464 = vperm.xlu0 %463, %v35
    %v465 = vpop.permute.xlu0 %464
    %467 = vset.pattern.permute.xlu0 5
    %468 = vperm.xlu0 %467, %v36
    %v469 = vpop.permute.xlu0 %468
    %471 = vset.pattern.permute.xlu0 5
    %472 = vperm.xlu0 %471, %v37
    %v473 = vpop.permute.xlu0 %472
    %475 = vset.pattern.permute.xlu0 5
    %476 = vperm.xlu0 %475, %v38
    %v477 = vpop.permute.xlu0 %476
    %479 = vset.pattern.permute.xlu0 5
    %480 = vperm.xlu0 %479, %v39
    %v481 = vpop.permute.xlu0 %480
    %483 = vset.pattern.permute.xlu0 5
    %484 = vperm.xlu0 %483, %v40
    %v485 = vpop.permute.xlu0 %484
    %487 = vset.pattern.permute.xlu0 5
    %488 = vperm.xlu0 %487, %v41
    %v489 = vpop.permute.xlu0 %488
    %491 = vset.pattern.permute.xlu0 5
    %492 = vperm.xlu0 %491, %v42
    %v493 = vpop.permute.xlu0 %492
    %495 = vset.pattern.permute.xlu0 5
    %496 = vperm.xlu0 %495, %v43
    %v497 = vpop.permute.xlu0 %496
    %499 = vset.pattern.permute.xlu0 5
    %500 = vperm.xlu0 %499, %v44
    %v501 = vpop.permute.xlu0 %500
    %503 = vset.pattern.permute.xlu0 5
    %504 = vperm.xlu0 %503, %v45
    %v505 = vpop.permute.xlu0 %504
    %507 = vset.pattern.permute.xlu0 5
    %508 = vperm.xlu0 %507, %v46
    %v509 = vpop.permute.xlu0 %508
    %v511 = vlaneseq
    %v512 = vshrl.u32 %v511, 7
    %v513 = vsub.s32 4, %v512
    %v514 = vrot.slane %v28, %v513
    %v515 = vmul.f32 %v449, %v514
    %v516 = vmul.f32 %v453, %v514
    %v517 = vmul.f32 %v457, %v514
    %v518 = vmul.f32 %v461, %v514
    %v519 = vmul.f32 %v465, %v514
    %v520 = vmul.f32 %v469, %v514
    %v521 = vmul.f32 %v473, %v514
    %v522 = vmul.f32 %v477, %v514
    %v523 = vmul.f32 %v481, %v514
    %v524 = vmul.f32 %v485, %v514
    %v525 = vmul.f32 %v489, %v514
    %v526 = vmul.f32 %v493, %v514
    %v527 = vmul.f32 %v497, %v514
    %v528 = vmul.f32 %v501, %v514
    %v529 = vmul.f32 %v505, %v514
    %v530 = vmul.f32 %v509, %v514
    %v531 = vadd.f32 %v431, %v515
    %v532 = vadd.f32 %v432, %v516
    %v533 = vadd.f32 %v433, %v517
    %v534 = vadd.f32 %v434, %v518
    %v535 = vadd.f32 %v435, %v519
    %v536 = vadd.f32 %v436, %v520
    %v537 = vadd.f32 %v437, %v521
    %v538 = vadd.f32 %v438, %v522
    %v539 = vadd.f32 %v439, %v523
    %v540 = vadd.f32 %v440, %v524
    %v541 = vadd.f32 %v441, %v525
    %v542 = vadd.f32 %v442, %v526
    %v543 = vadd.f32 %v443, %v527
    %v544 = vadd.f32 %v444, %v528
    %v545 = vadd.f32 %v445, %v529
    %v546 = vadd.f32 %v446, %v530
    %547 = vset.pattern.permute.xlu0 6
    %548 = vperm.xlu0 %547, %v31
    %v549 = vpop.permute.xlu0 %548
    %551 = vset.pattern.permute.xlu0 6
    %552 = vperm.xlu0 %551, %v32
    %v553 = vpop.permute.xlu0 %552
    %555 = vset.pattern.permute.xlu0 6
    %556 = vperm.xlu0 %555, %v33
    %v557 = vpop.permute.xlu0 %556
    %559 = vset.pattern.permute.xlu0 6
    %560 = vperm.xlu0 %559, %v34
    %v561 = vpop.permute.xlu0 %560
    %563 = vset.pattern.permute.xlu0 6
    %564 = vperm.xlu0 %563, %v35
    %v565 = vpop.permute.xlu0 %564
    %567 = vset.pattern.permute.xlu0 6
    %568 = vperm.xlu0 %567, %v36
    %v569 = vpop.permute.xlu0 %568
    %571 = vset.pattern.permute.xlu0 6
    %572 = vperm.xlu0 %571, %v37
    %v573 = vpop.permute.xlu0 %572
    %575 = vset.pattern.permute.xlu0 6
    %576 = vperm.xlu0 %575, %v38
    %v577 = vpop.permute.xlu0 %576
    %579 = vset.pattern.permute.xlu0 6
    %580 = vperm.xlu0 %579, %v39
    %v581 = vpop.permute.xlu0 %580
    %583 = vset.pattern.permute.xlu0 6
    %584 = vperm.xlu0 %583, %v40
    %v585 = vpop.permute.xlu0 %584
    %587 = vset.pattern.permute.xlu0 6
    %588 = vperm.xlu0 %587, %v41
    %v589 = vpop.permute.xlu0 %588
    %591 = vset.pattern.permute.xlu0 6
    %592 = vperm.xlu0 %591, %v42
    %v593 = vpop.permute.xlu0 %592
    %595 = vset.pattern.permute.xlu0 6
    %596 = vperm.xlu0 %595, %v43
    %v597 = vpop.permute.xlu0 %596
    %599 = vset.pattern.permute.xlu0 6
    %600 = vperm.xlu0 %599, %v44
    %v601 = vpop.permute.xlu0 %600
    %603 = vset.pattern.permute.xlu0 6
    %604 = vperm.xlu0 %603, %v45
    %v605 = vpop.permute.xlu0 %604
    %607 = vset.pattern.permute.xlu0 6
    %608 = vperm.xlu0 %607, %v46
    %v609 = vpop.permute.xlu0 %608
    %v611 = vlaneseq
    %v612 = vshrl.u32 %v611, 7
    %v613 = vsub.s32 5, %v612
    %v614 = vrot.slane %v28, %v613
    %v615 = vmul.f32 %v549, %v614
    %v616 = vmul.f32 %v553, %v614
    %v617 = vmul.f32 %v557, %v614
    %v618 = vmul.f32 %v561, %v614
    %v619 = vmul.f32 %v565, %v614
    %v620 = vmul.f32 %v569, %v614
    %v621 = vmul.f32 %v573, %v614
    %v622 = vmul.f32 %v577, %v614
    %v623 = vmul.f32 %v581, %v614
    %v624 = vmul.f32 %v585, %v614
    %v625 = vmul.f32 %v589, %v614
    %v626 = vmul.f32 %v593, %v614
    %v627 = vmul.f32 %v597, %v614
    %v628 = vmul.f32 %v601, %v614
    %v629 = vmul.f32 %v605, %v614
    %v630 = vmul.f32 %v609, %v614
    %v631 = vadd.f32 %v531, %v615
    %v632 = vadd.f32 %v532, %v616
    %v633 = vadd.f32 %v533, %v617
    %v634 = vadd.f32 %v534, %v618
    %v635 = vadd.f32 %v535, %v619
    %v636 = vadd.f32 %v536, %v620
    %v637 = vadd.f32 %v537, %v621
    %v638 = vadd.f32 %v538, %v622
    %v639 = vadd.f32 %v539, %v623
    %v640 = vadd.f32 %v540, %v624
    %v641 = vadd.f32 %v541, %v625
    %v642 = vadd.f32 %v542, %v626
    %v643 = vadd.f32 %v543, %v627
    %v644 = vadd.f32 %v544, %v628
    %v645 = vadd.f32 %v545, %v629
    %v646 = vadd.f32 %v546, %v630
    %647 = vset.pattern.permute.xlu0 8
    %648 = vperm.xlu0 %647, %v31
    %v649 = vpop.permute.xlu0 %648
    %651 = vset.pattern.permute.xlu0 8
    %652 = vperm.xlu0 %651, %v32
    %v653 = vpop.permute.xlu0 %652
    %655 = vset.pattern.permute.xlu0 8
    %656 = vperm.xlu0 %655, %v33
    %v657 = vpop.permute.xlu0 %656
    %659 = vset.pattern.permute.xlu0 8
    %660 = vperm.xlu0 %659, %v34
    %v661 = vpop.permute.xlu0 %660
    %663 = vset.pattern.permute.xlu0 8
    %664 = vperm.xlu0 %663, %v35
    %v665 = vpop.permute.xlu0 %664
    %667 = vset.pattern.permute.xlu0 8
    %668 = vperm.xlu0 %667, %v36
    %v669 = vpop.permute.xlu0 %668
    %671 = vset.pattern.permute.xlu0 8
    %672 = vperm.xlu0 %671, %v37
    %v673 = vpop.permute.xlu0 %672
    %675 = vset.pattern.permute.xlu0 8
    %676 = vperm.xlu0 %675, %v38
    %v677 = vpop.permute.xlu0 %676
    %679 = vset.pattern.permute.xlu0 8
    %680 = vperm.xlu0 %679, %v39
    %v681 = vpop.permute.xlu0 %680
    %683 = vset.pattern.permute.xlu0 8
    %684 = vperm.xlu0 %683, %v40
    %v685 = vpop.permute.xlu0 %684
    %687 = vset.pattern.permute.xlu0 8
    %688 = vperm.xlu0 %687, %v41
    %v689 = vpop.permute.xlu0 %688
    %691 = vset.pattern.permute.xlu0 8
    %692 = vperm.xlu0 %691, %v42
    %v693 = vpop.permute.xlu0 %692
    %695 = vset.pattern.permute.xlu0 8
    %696 = vperm.xlu0 %695, %v43
    %v697 = vpop.permute.xlu0 %696
    %699 = vset.pattern.permute.xlu0 8
    %700 = vperm.xlu0 %699, %v44
    %v701 = vpop.permute.xlu0 %700
    %703 = vset.pattern.permute.xlu0 8
    %704 = vperm.xlu0 %703, %v45
    %v705 = vpop.permute.xlu0 %704
    %707 = vset.pattern.permute.xlu0 8
    %708 = vperm.xlu0 %707, %v46
    %v709 = vpop.permute.xlu0 %708
    %v711 = vlaneseq
    %v712 = vshrl.u32 %v711, 7
    %v713 = vsub.s32 6, %v712
    %v714 = vrot.slane %v28, %v713
    %v715 = vmul.f32 %v649, %v714
    %v716 = vmul.f32 %v653, %v714
    %v717 = vmul.f32 %v657, %v714
    %v718 = vmul.f32 %v661, %v714
    %v719 = vmul.f32 %v665, %v714
    %v720 = vmul.f32 %v669, %v714
    %v721 = vmul.f32 %v673, %v714
    %v722 = vmul.f32 %v677, %v714
    %v723 = vmul.f32 %v681, %v714
    %v724 = vmul.f32 %v685, %v714
    %v725 = vmul.f32 %v689, %v714
    %v726 = vmul.f32 %v693, %v714
    %v727 = vmul.f32 %v697, %v714
    %v728 = vmul.f32 %v701, %v714
    %v729 = vmul.f32 %v705, %v714
    %v730 = vmul.f32 %v709, %v714
    %v731 = vadd.f32 %v631, %v715
    %v732 = vadd.f32 %v632, %v716
    %v733 = vadd.f32 %v633, %v717
    %v734 = vadd.f32 %v634, %v718
    %v735 = vadd.f32 %v635, %v719
    %v736 = vadd.f32 %v636, %v720
    %v737 = vadd.f32 %v637, %v721
    %v738 = vadd.f32 %v638, %v722
    %v739 = vadd.f32 %v639, %v723
    %v740 = vadd.f32 %v640, %v724
    %v741 = vadd.f32 %v641, %v725
    %v742 = vadd.f32 %v642, %v726
    %v743 = vadd.f32 %v643, %v727
    %v744 = vadd.f32 %v644, %v728
    %v745 = vadd.f32 %v645, %v729
    %v746 = vadd.f32 %v646, %v730
    %747 = vset.pattern.permute.xlu0 9
    %748 = vperm.xlu0 %747, %v31
    %v749 = vpop.permute.xlu0 %748
    %751 = vset.pattern.permute.xlu0 9
    %752 = vperm.xlu0 %751, %v32
    %v753 = vpop.permute.xlu0 %752
    %755 = vset.pattern.permute.xlu0 9
    %756 = vperm.xlu0 %755, %v33
    %v757 = vpop.permute.xlu0 %756
    %759 = vset.pattern.permute.xlu0 9
    %760 = vperm.xlu0 %759, %v34
    %v761 = vpop.permute.xlu0 %760
    %763 = vset.pattern.permute.xlu0 9
    %764 = vperm.xlu0 %763, %v35
    %v765 = vpop.permute.xlu0 %764
    %767 = vset.pattern.permute.xlu0 9
    %768 = vperm.xlu0 %767, %v36
    %v769 = vpop.permute.xlu0 %768
    %771 = vset.pattern.permute.xlu0 9
    %772 = vperm.xlu0 %771, %v37
    %v773 = vpop.permute.xlu0 %772
    %775 = vset.pattern.permute.xlu0 9
    %776 = vperm.xlu0 %775, %v38
    %v777 = vpop.permute.xlu0 %776
    %779 = vset.pattern.permute.xlu0 9
    %780 = vperm.xlu0 %779, %v39
    %v781 = vpop.permute.xlu0 %780
    %783 = vset.pattern.permute.xlu0 9
    %784 = vperm.xlu0 %783, %v40
    %v785 = vpop.permute.xlu0 %784
    %787 = vset.pattern.permute.xlu0 9
    %788 = vperm.xlu0 %787, %v41
    %v789 = vpop.permute.xlu0 %788
    %791 = vset.pattern.permute.xlu0 9
    %792 = vperm.xlu0 %791, %v42
    %v793 = vpop.permute.xlu0 %792
    %795 = vset.pattern.permute.xlu0 9
    %796 = vperm.xlu0 %795, %v43
    %v797 = vpop.permute.xlu0 %796
    %799 = vset.pattern.permute.xlu0 9
    %800 = vperm.xlu0 %799, %v44
    %v801 = vpop.permute.xlu0 %800
    %803 = vset.pattern.permute.xlu0 9
    %804 = vperm.xlu0 %803, %v45
    %v805 = vpop.permute.xlu0 %804
    %807 = vset.pattern.permute.xlu0 9
    %808 = vperm.xlu0 %807, %v46
    %v809 = vpop.permute.xlu0 %808
    %v811 = vlaneseq
    %v812 = vshrl.u32 %v811, 7
    %v813 = vsub.s32 7, %v812
    %v814 = vrot.slane %v28, %v813
    %v815 = vmul.f32 %v749, %v814
    %v816 = vmul.f32 %v753, %v814
    %v817 = vmul.f32 %v757, %v814
    %v818 = vmul.f32 %v761, %v814
    %v819 = vmul.f32 %v765, %v814
    %v820 = vmul.f32 %v769, %v814
    %v821 = vmul.f32 %v773, %v814
    %v822 = vmul.f32 %v777, %v814
    %v823 = vmul.f32 %v781, %v814
    %v824 = vmul.f32 %v785, %v814
    %v825 = vmul.f32 %v789, %v814
    %v826 = vmul.f32 %v793, %v814
    %v827 = vmul.f32 %v797, %v814
    %v828 = vmul.f32 %v801, %v814
    %v829 = vmul.f32 %v805, %v814
    %v830 = vmul.f32 %v809, %v814
    %v831 = vadd.f32 %v731, %v815
    %v832 = vadd.f32 %v732, %v816
    %v833 = vadd.f32 %v733, %v817
    %v834 = vadd.f32 %v734, %v818
    %v835 = vadd.f32 %v735, %v819
    %v836 = vadd.f32 %v736, %v820
    %v837 = vadd.f32 %v737, %v821
    %v838 = vadd.f32 %v738, %v822
    %v839 = vadd.f32 %v739, %v823
    %v840 = vadd.f32 %v740, %v824
    %v841 = vadd.f32 %v741, %v825
    %v842 = vadd.f32 %v742, %v826
    %v843 = vadd.f32 %v743, %v827
    %v844 = vadd.f32 %v744, %v828
    %v845 = vadd.f32 %v745, %v829
    %v846 = vadd.f32 %v746, %v830
    %847 = vset.pattern.permute.xlu0 10
    %848 = vperm.xlu0 %847, %v31
    %v849 = vpop.permute.xlu0 %848
    %851 = vset.pattern.permute.xlu0 10
    %852 = vperm.xlu0 %851, %v32
    %v853 = vpop.permute.xlu0 %852
    %855 = vset.pattern.permute.xlu0 10
    %856 = vperm.xlu0 %855, %v33
    %v857 = vpop.permute.xlu0 %856
    %859 = vset.pattern.permute.xlu0 10
    %860 = vperm.xlu0 %859, %v34
    %v861 = vpop.permute.xlu0 %860
    %863 = vset.pattern.permute.xlu0 10
    %864 = vperm.xlu0 %863, %v35
    %v865 = vpop.permute.xlu0 %864
    %867 = vset.pattern.permute.xlu0 10
    %868 = vperm.xlu0 %867, %v36
    %v869 = vpop.permute.xlu0 %868
    %871 = vset.pattern.permute.xlu0 10
    %872 = vperm.xlu0 %871, %v37
    %v873 = vpop.permute.xlu0 %872
    %875 = vset.pattern.permute.xlu0 10
    %876 = vperm.xlu0 %875, %v38
    %v877 = vpop.permute.xlu0 %876
    %879 = vset.pattern.permute.xlu0 10
    %880 = vperm.xlu0 %879, %v39
    %v881 = vpop.permute.xlu0 %880
    %883 = vset.pattern.permute.xlu0 10
    %884 = vperm.xlu0 %883, %v40
    %v885 = vpop.permute.xlu0 %884
    %887 = vset.pattern.permute.xlu0 10
    %888 = vperm.xlu0 %887, %v41
    %v889 = vpop.permute.xlu0 %888
    %891 = vset.pattern.permute.xlu0 10
    %892 = vperm.xlu0 %891, %v42
    %v893 = vpop.permute.xlu0 %892
    %895 = vset.pattern.permute.xlu0 10
    %896 = vperm.xlu0 %895, %v43
    %v897 = vpop.permute.xlu0 %896
    %899 = vset.pattern.permute.xlu0 10
    %900 = vperm.xlu0 %899, %v44
    %v901 = vpop.permute.xlu0 %900
    %903 = vset.pattern.permute.xlu0 10
    %904 = vperm.xlu0 %903, %v45
    %v905 = vpop.permute.xlu0 %904
    %907 = vset.pattern.permute.xlu0 10
    %908 = vperm.xlu0 %907, %v46
    %v909 = vpop.permute.xlu0 %908
    %v911 = vlaneseq
    %v912 = vshrl.u32 %v911, 7
    %v913 = vsub.s32 0, %v912
    %v914 = vrot.slane %v29, %v913
    %v915 = vmul.f32 %v849, %v914
    %v916 = vmul.f32 %v853, %v914
    %v917 = vmul.f32 %v857, %v914
    %v918 = vmul.f32 %v861, %v914
    %v919 = vmul.f32 %v865, %v914
    %v920 = vmul.f32 %v869, %v914
    %v921 = vmul.f32 %v873, %v914
    %v922 = vmul.f32 %v877, %v914
    %v923 = vmul.f32 %v881, %v914
    %v924 = vmul.f32 %v885, %v914
    %v925 = vmul.f32 %v889, %v914
    %v926 = vmul.f32 %v893, %v914
    %v927 = vmul.f32 %v897, %v914
    %v928 = vmul.f32 %v901, %v914
    %v929 = vmul.f32 %v905, %v914
    %v930 = vmul.f32 %v909, %v914
    %v931 = vadd.f32 %v831, %v915
    %v932 = vadd.f32 %v832, %v916
    %v933 = vadd.f32 %v833, %v917
    %v934 = vadd.f32 %v834, %v918
    %v935 = vadd.f32 %v835, %v919
    %v936 = vadd.f32 %v836, %v920
    %v937 = vadd.f32 %v837, %v921
    %v938 = vadd.f32 %v838, %v922
    %v939 = vadd.f32 %v839, %v923
    %v940 = vadd.f32 %v840, %v924
    %v941 = vadd.f32 %v841, %v925
    %v942 = vadd.f32 %v842, %v926
    %v943 = vadd.f32 %v843, %v927
    %v944 = vadd.f32 %v844, %v928
    %v945 = vadd.f32 %v845, %v929
    %v946 = vadd.f32 %v846, %v930
    %v948 = vlaneseq
    %v949 = vshrl.u32 %v948, 7
    %v950 = vsub.s32 0, %v949
    %v951 = vrot.slane %v30, %v950
    %v953 = vadd.f32 %v931, %v951
    %v954 = vadd.f32 %v932, %v951
    %v955 = vadd.f32 %v933, %v951
    %v956 = vadd.f32 %v934, %v951
    %v957 = vadd.f32 %v935, %v951
    %v958 = vadd.f32 %v936, %v951
    %v959 = vadd.f32 %v937, %v951
    %v960 = vadd.f32 %v938, %v951
    %v961 = vadd.f32 %v939, %v951
    %v962 = vadd.f32 %v940, %v951
    %v963 = vadd.f32 %v941, %v951
    %v964 = vadd.f32 %v942, %v951
    %v965 = vadd.f32 %v943, %v951
    %v966 = vadd.f32 %v944, %v951
    %v967 = vadd.f32 %v945, %v951
    %v968 = vadd.f32 %v946, %v951
    %v969 = vmax.f32 %v953, 0.0
    %v970 = vmax.f32 %v954, 0.0
    %v971 = vmax.f32 %v955, 0.0
    %v972 = vmax.f32 %v956, 0.0
    %v973 = vmax.f32 %v957, 0.0
    %v974 = vmax.f32 %v958, 0.0
    %v975 = vmax.f32 %v959, 0.0
    %v976 = vmax.f32 %v960, 0.0
    %v977 = vmax.f32 %v961, 0.0
    %v978 = vmax.f32 %v962, 0.0
    %v979 = vmax.f32 %v963, 0.0
    %v980 = vmax.f32 %v964, 0.0
    %v981 = vmax.f32 %v965, 0.0
    %v982 = vmax.f32 %v966, 0.0
    %v983 = vmax.f32 %v967, 0.0
    %v984 = vmax.f32 %v968, 0.0
    %985 = vst [vmem:[#allocation2] sm:$0xff] %v969
    %986 = vst [vmem:[#allocation2 + $0x8] sm:$0xff] %v970
    %987 = vst [vmem:[#allocation2 + $0x10] sm:$0xff] %v971
    %988 = vst [vmem:[#allocation2 + $0x18] sm:$0xff] %v972
    %989 = vst [vmem:[#allocation2 + $0x20] sm:$0xff] %v973
    %990 = vst [vmem:[#allocation2 + $0x28] sm:$0xff] %v974
    %991 = vst [vmem:[#allocation2 + $0x30] sm:$0xff] %v975
    %992 = vst [vmem:[#allocation2 + $0x38] sm:$0xff] %v976
    %993 = vst [vmem:[#allocation2 + $0x40] sm:$0xff] %v977
    %994 = vst [vmem:[#allocation2 + $0x48] sm:$0xff] %v978
    %995 = vst [vmem:[#allocation2 + $0x50] sm:$0xff] %v979
    %996 = vst [vmem:[#allocation2 + $0x58] sm:$0xff] %v980
    %997 = vst [vmem:[#allocation2 + $0x60] sm:$0xff] %v981
    %998 = vst [vmem:[#allocation2 + $0x68] sm:$0xff] %v982
    %999 = vst [vmem:[#allocation2 + $0x70] sm:$0xff] %v983
    %1000 = vst [vmem:[#allocation2 + $0x78] sm:$0xff] %v984
    %v1001 = vld [vmem:[#allocation2 + $0x1] sm:$0x7f]
    %v1002 = vld [vmem:[#allocation2 + $0x9] sm:$0x7f]
    %v1003 = vld [vmem:[#allocation2 + $0x11] sm:$0x7f]
    %v1004 = vld [vmem:[#allocation2 + $0x19] sm:$0x7f]
    %v1005 = vld [vmem:[#allocation2 + $0x21] sm:$0x7f]
    %v1006 = vld [vmem:[#allocation2 + $0x29] sm:$0x7f]
    %v1007 = vld [vmem:[#allocation2 + $0x31] sm:$0x7f]
    %v1008 = vld [vmem:[#allocation2 + $0x39] sm:$0x7f]
    %v1009 = vld [vmem:[#allocation2 + $0x41] sm:$0x7f]
    %v1010 = vld [vmem:[#allocation2 + $0x49] sm:$0x7f]
    %v1011 = vld [vmem:[#allocation2 + $0x51] sm:$0x7f]
    %v1012 = vld [vmem:[#allocation2 + $0x59] sm:$0x7f]
    %v1013 = vld [vmem:[#allocation2 + $0x61] sm:$0x7f]
    %v1014 = vld [vmem:[#allocation2 + $0x69] sm:$0x7f]
    %v1015 = vld [vmem:[#allocation2 + $0x71] sm:$0x7f]
    %v1016 = vld [vmem:[#allocation2 + $0x79] sm:$0x7f]
    %v1017 = vld [vmem:[%s0] sm:$0x7f]
    %v1018 = vld [vmem:[%s0 + $0x8] sm:$0x7f]
    %v1019 = vld [vmem:[%s0 + $0x10] sm:$0x7f]
    %v1020 = vld [vmem:[%s0 + $0x18] sm:$0x7f]
    %v1021 = vld [vmem:[%s0 + $0x20] sm:$0x7f]
    %v1022 = vld [vmem:[%s0 + $0x28] sm:$0x7f]
    %v1023 = vld [vmem:[%s0 + $0x30] sm:$0x7f]
    %v1024 = vld [vmem:[%s0 + $0x38] sm:$0x7f]
    %v1025 = vld [vmem:[%s0 + $0x40] sm:$0x7f]
    %v1026 = vld [vmem:[%s0 + $0x48] sm:$0x7f]
    %v1027 = vld [vmem:[%s0 + $0x50] sm:$0x7f]
    %v1028 = vld [vmem:[%s0 + $0x58] sm:$0x7f]
    %v1029 = vld [vmem:[%s0 + $0x60] sm:$0x7f]
    %v1030 = vld [vmem:[%s0 + $0x68] sm:$0x7f]
    %v1031 = vld [vmem:[%s0 + $0x70] sm:$0x7f]
    %v1032 = vld [vmem:[%s0 + $0x78] sm:$0x7f]
    %1034 = vset.pattern.permute.xlu0 2
    %1035 = vperm.xlu0 %1034, %v1017
    %v1036 = vpop.permute.xlu0 %1035
    %1039 = vset.pattern.permute.xlu0 2
    %1040 = vperm.xlu0 %1039, %v1018
    %v1041 = vpop.permute.xlu0 %1040
    %1044 = vset.pattern.permute.xlu0 2
    %1045 = vperm.xlu0 %1044, %v1019
    %v1046 = vpop.permute.xlu0 %1045
    %1049 = vset.pattern.permute.xlu0 2
    %1050 = vperm.xlu0 %1049, %v1020
    %v1051 = vpop.permute.xlu0 %1050
    %1054 = vset.pattern.permute.xlu0 2
    %1055 = vperm.xlu0 %1054, %v1021
    %v1056 = vpop.permute.xlu0 %1055
    %1059 = vset.pattern.permute.xlu0 2
    %1060 = vperm.xlu0 %1059, %v1022
    %v1061 = vpop.permute.xlu0 %1060
    %1064 = vset.pattern.permute.xlu0 2
    %1065 = vperm.xlu0 %1064, %v1023
    %v1066 = vpop.permute.xlu0 %1065
    %1069 = vset.pattern.permute.xlu0 2
    %1070 = vperm.xlu0 %1069, %v1024
    %v1071 = vpop.permute.xlu0 %1070
    %1074 = vset.pattern.permute.xlu0 2
    %1075 = vperm.xlu0 %1074, %v1025
    %v1076 = vpop.permute.xlu0 %1075
    %1079 = vset.pattern.permute.xlu0 2
    %1080 = vperm.xlu0 %1079, %v1026
    %v1081 = vpop.permute.xlu0 %1080
    %1084 = vset.pattern.permute.xlu0 2
    %1085 = vperm.xlu0 %1084, %v1027
    %v1086 = vpop.permute.xlu0 %1085
    %1089 = vset.pattern.permute.xlu0 2
    %1090 = vperm.xlu0 %1089, %v1028
    %v1091 = vpop.permute.xlu0 %1090
    %1094 = vset.pattern.permute.xlu0 2
    %1095 = vperm.xlu0 %1094, %v1029
    %v1096 = vpop.permute.xlu0 %1095
    %1099 = vset.pattern.permute.xlu0 2
    %1100 = vperm.xlu0 %1099, %v1030
    %v1101 = vpop.permute.xlu0 %1100
    %1104 = vset.pattern.permute.xlu0 2
    %1105 = vperm.xlu0 %1104, %v1031
    %v1106 = vpop.permute.xlu0 %1105
    %1109 = vset.pattern.permute.xlu0 2
    %1110 = vperm.xlu0 %1109, %v1032
    %v1111 = vpop.permute.xlu0 %1110
    %v1113 = vmul.f32 %v1036, %v130
    %v1114 = vmul.f32 %v1041, %v130
    %v1115 = vmul.f32 %v1046, %v130
    %v1116 = vmul.f32 %v1051, %v130
    %v1117 = vmul.f32 %v1056, %v130
    %v1118 = vmul.f32 %v1061, %v130
    %v1119 = vmul.f32 %v1066, %v130
    %v1120 = vmul.f32 %v1071, %v130
    %v1121 = vmul.f32 %v1076, %v130
    %v1122 = vmul.f32 %v1081, %v130
    %v1123 = vmul.f32 %v1086, %v130
    %v1124 = vmul.f32 %v1091, %v130
    %v1125 = vmul.f32 %v1096, %v130
    %v1126 = vmul.f32 %v1101, %v130
    %v1127 = vmul.f32 %v1106, %v130
    %v1128 = vmul.f32 %v1111, %v130
    %1129 = vset.pattern.permute.xlu0 3
    %1130 = vperm.xlu0 %1129, %v1017
    %v1131 = vpop.permute.xlu0 %1130
    %1133 = vset.pattern.permute.xlu0 3
    %1134 = vperm.xlu0 %1133, %v1018
    %v1135 = vpop.permute.xlu0 %1134
    %1137 = vset.pattern.permute.xlu0 3
    %1138 = vperm.xlu0 %1137, %v1019
    %v1139 = vpop.permute.xlu0 %1138
    %1141 = vset.pattern.permute.xlu0 3
    %1142 = vperm.xlu0 %1141, %v1020
    %v1143 = vpop.permute.xlu0 %1142
    %1145 = vset.pattern.permute.xlu0 3
    %1146 = vperm.xlu0 %1145, %v1021
    %v1147 = vpop.permute.xlu0 %1146
    %1149 = vset.pattern.permute.xlu0 3
    %1150 = vperm.xlu0 %1149, %v1022
    %v1151 = vpop.permute.xlu0 %1150
    %1153 = vset.pattern.permute.xlu0 3
    %1154 = vperm.xlu0 %1153, %v1023
    %v1155 = vpop.permute.xlu0 %1154
    %1157 = vset.pattern.permute.xlu0 3
    %1158 = vperm.xlu0 %1157, %v1024
    %v1159 = vpop.permute.xlu0 %1158
    %1161 = vset.pattern.permute.xlu0 3
    %1162 = vperm.xlu0 %1161, %v1025
    %v1163 = vpop.permute.xlu0 %1162
    %1165 = vset.pattern.permute.xlu0 3
    %1166 = vperm.xlu0 %1165, %v1026
    %v1167 = vpop.permute.xlu0 %1166
    %1169 = vset.pattern.permute.xlu0 3
    %1170 = vperm.xlu0 %1169, %v1027
    %v1171 = vpop.permute.xlu0 %1170
    %1173 = vset.pattern.permute.xlu0 3
    %1174 = vperm.xlu0 %1173, %v1028
    %v1175 = vpop.permute.xlu0 %1174
    %1177 = vset.pattern.permute.xlu0 3
    %1178 = vperm.xlu0 %1177, %v1029
    %v1179 = vpop.permute.xlu0 %1178
    %1181 = vset.pattern.permute.xlu0 3
    %1182 = vperm.xlu0 %1181, %v1030
    %v1183 = vpop.permute.xlu0 %1182
    %1185 = vset.pattern.permute.xlu0 3
    %1186 = vperm.xlu0 %1185, %v1031
    %v1187 = vpop.permute.xlu0 %1186
    %1189 = vset.pattern.permute.xlu0 3
    %1190 = vperm.xlu0 %1189, %v1032
    %v1191 = vpop.permute.xlu0 %1190
    %v1193 = vmul.f32 %v1131, %v214
    %v1194 = vmul.f32 %v1135, %v214
    %v1195 = vmul.f32 %v1139, %v214
    %v1196 = vmul.f32 %v1143, %v214
    %v1197 = vmul.f32 %v1147, %v214
    %v1198 = vmul.f32 %v1151, %v214
    %v1199 = vmul.f32 %v1155, %v214
    %v1200 = vmul.f32 %v1159, %v214
    %v1201 = vmul.f32 %v1163, %v214
    %v1202 = vmul.f32 %v1167, %v214
    %v1203 = vmul.f32 %v1171, %v214
    %v1204 = vmul.f32 %v1175, %v214
    %v1205 = vmul.f32 %v1179, %v214
    %v1206 = vmul.f32 %v1183, %v214
    %v1207 = vmul.f32 %v1187, %v214
    %v1208 = vmul.f32 %v1191, %v214
    %v1209 = vadd.f32 %v1113, %v1193
    %v1210 = vadd.f32 %v1114, %v1194
    %v1211 = vadd.f32 %v1115, %v1195
    %v1212 = vadd.f32 %v1116, %v1196
    %v1213 = vadd.f32 %v1117, %v1197
    %v1214 = vadd.f32 %v1118, %v1198
    %v1215 = vadd.f32 %v1119, %v1199
    %v1216 = vadd.f32 %v1120, %v1200
    %v1217 = vadd.f32 %v1121, %v1201
    %v1218 = vadd.f32 %v1122, %v1202
    %v1219 = vadd.f32 %v1123, %v1203
    %v1220 = vadd.f32 %v1124, %v1204
    %v1221 = vadd.f32 %v1125, %v1205
    %v1222 = vadd.f32 %v1126, %v1206
    %v1223 = vadd.f32 %v1127, %v1207
    %v1224 = vadd.f32 %v1128, %v1208
    %v1225 = vld [vmem:[%s0 + $0x1] sm:$0x7f]
    %v1226 = vld [vmem:[%s0 + $0x9] sm:$0x7f]
    %v1227 = vld [vmem:[%s0 + $0x11] sm:$0x7f]
    %v1228 = vld [vmem:[%s0 + $0x19] sm:$0x7f]
    %v1229 = vld [vmem:[%s0 + $0x21] sm:$0x7f]
    %v1230 = vld [vmem:[%s0 + $0x29] sm:$0x7f]
    %v1231 = vld [vmem:[%s0 + $0x31] sm:$0x7f]
    %v1232 = vld [vmem:[%s0 + $0x39] sm:$0x7f]
    %v1233 = vld [vmem:[%s0 + $0x41] sm:$0x7f]
    %v1234 = vld [vmem:[%s0 + $0x49] sm:$0x7f]
    %v1235 = vld [vmem:[%s0 + $0x51] sm:$0x7f]
    %v1236 = vld [vmem:[%s0 + $0x59] sm:$0x7f]
    %v1237 = vld [vmem:[%s0 + $0x61] sm:$0x7f]
    %v1238 = vld [vmem:[%s0 + $0x69] sm:$0x7f]
    %v1239 = vld [vmem:[%s0 + $0x71] sm:$0x7f]
    %v1240 = vld [vmem:[%s0 + $0x79] sm:$0x7f]
    %1242 = vset.pattern.permute.xlu0 0
    %1243 = vperm.xlu0 %1242, %v1225
    %v1244 = vpop.permute.xlu0 %1243
    %1247 = vset.pattern.permute.xlu0 0
    %1248 = vperm.xlu0 %1247, %v1226
    %v1249 = vpop.permute.xlu0 %1248
    %1252 = vset.pattern.permute.xlu0 0
    %1253 = vperm.xlu0 %1252, %v1227
    %v1254 = vpop.permute.xlu0 %1253
    %1257 = vset.pattern.permute.xlu0 0
    %1258 = vperm.xlu0 %1257, %v1228
    %v1259 = vpop.permute.xlu0 %1258
    %1262 = vset.pattern.permute.xlu0 0
    %1263 = vperm.xlu0 %1262, %v1229
    %v1264 = vpop.permute.xlu0 %1263
    %1267 = vset.pattern.permute.xlu0 0
    %1268 = vperm.xlu0 %1267, %v1230
    %v1269 = vpop.permute.xlu0 %1268
    %1272 = vset.pattern.permute.xlu0 0
    %1273 = vperm.xlu0 %1272, %v1231
    %v1274 = vpop.permute.xlu0 %1273
    %1277 = vset.pattern.permute.xlu0 0
    %1278 = vperm.xlu0 %1277, %v1232
    %v1279 = vpop.permute.xlu0 %1278
    %1282 = vset.pattern.permute.xlu0 0
    %1283 = vperm.xlu0 %1282, %v1233
    %v1284 = vpop.permute.xlu0 %1283
    %1287 = vset.pattern.permute.xlu0 0
    %1288 = vperm.xlu0 %1287, %v1234
    %v1289 = vpop.permute.xlu0 %1288
    %1292 = vset.pattern.permute.xlu0 0
    %1293 = vperm.xlu0 %1292, %v1235
    %v1294 = vpop.permute.xlu0 %1293
    %1297 = vset.pattern.permute.xlu0 0
    %1298 = vperm.xlu0 %1297, %v1236
    %v1299 = vpop.permute.xlu0 %1298
    %1302 = vset.pattern.permute.xlu0 0
    %1303 = vperm.xlu0 %1302, %v1237
    %v1304 = vpop.permute.xlu0 %1303
    %1307 = vset.pattern.permute.xlu0 0
    %1308 = vperm.xlu0 %1307, %v1238
    %v1309 = vpop.permute.xlu0 %1308
    %1312 = vset.pattern.permute.xlu0 0
    %1313 = vperm.xlu0 %1312, %v1239
    %v1314 = vpop.permute.xlu0 %1313
    %1317 = vset.pattern.permute.xlu0 0
    %1318 = vperm.xlu0 %1317, %v1240
    %v1319 = vpop.permute.xlu0 %1318
    %v1321 = vmul.f32 %v1244, %v314
    %v1322 = vmul.f32 %v1249, %v314
    %v1323 = vmul.f32 %v1254, %v314
    %v1324 = vmul.f32 %v1259, %v314
    %v1325 = vmul.f32 %v1264, %v314
    %v1326 = vmul.f32 %v1269, %v314
    %v1327 = vmul.f32 %v1274, %v314
    %v1328 = vmul.f32 %v1279, %v314
    %v1329 = vmul.f32 %v1284, %v314
    %v1330 = vmul.f32 %v1289, %v314
    %v1331 = vmul.f32 %v1294, %v314
    %v1332 = vmul.f32 %v1299, %v314
    %v1333 = vmul.f32 %v1304, %v314
    %v1334 = vmul.f32 %v1309, %v314
    %v1335 = vmul.f32 %v1314, %v314
    %v1336 = vmul.f32 %v1319, %v314
    %v1337 = vadd.f32 %v1209, %v1321
    %v1338 = vadd.f32 %v1210, %v1322
    %v1339 = vadd.f32 %v1211, %v1323
    %v1340 = vadd.f32 %v1212, %v1324
    %v1341 = vadd.f32 %v1213, %v1325
    %v1342 = vadd.f32 %v1214, %v1326
    %v1343 = vadd.f32 %v1215, %v1327
    %v1344 = vadd.f32 %v1216, %v1328
    %v1345 = vadd.f32 %v1217, %v1329
    %v1346 = vadd.f32 %v1218, %v1330
    %v1347 = vadd.f32 %v1219, %v1331
    %v1348 = vadd.f32 %v1220, %v1332
    %v1349 = vadd.f32 %v1221, %v1333
    %v1350 = vadd.f32 %v1222, %v1334
    %v1351 = vadd.f32 %v1223, %v1335
    %v1352 = vadd.f32 %v1224, %v1336
    %1353 = vset.pattern.permute.xlu0 6
    %1354 = vperm.xlu0 %1353, %v1017
    %v1355 = vpop.permute.xlu0 %1354
    %1357 = vset.pattern.permute.xlu0 6
    %1358 = vperm.xlu0 %1357, %v1018
    %v1359 = vpop.permute.xlu0 %1358
    %1361 = vset.pattern.permute.xlu0 6
    %1362 = vperm.xlu0 %1361, %v1019
    %v1363 = vpop.permute.xlu0 %1362
    %1365 = vset.pattern.permute.xlu0 6
    %1366 = vperm.xlu0 %1365, %v1020
    %v1367 = vpop.permute.xlu0 %1366
    %1369 = vset.pattern.permute.xlu0 6
    %1370 = vperm.xlu0 %1369, %v1021
    %v1371 = vpop.permute.xlu0 %1370
    %1373 = vset.pattern.permute.xlu0 6
    %1374 = vperm.xlu0 %1373, %v1022
    %v1375 = vpop.permute.xlu0 %1374
    %1377 = vset.pattern.permute.xlu0 6
    %1378 = vperm.xlu0 %1377, %v1023
    %v1379 = vpop.permute.xlu0 %1378
    %1381 = vset.pattern.permute.xlu0 6
    %1382 = vperm.xlu0 %1381, %v1024
    %v1383 = vpop.permute.xlu0 %1382
    %1385 = vset.pattern.permute.xlu0 6
    %1386 = vperm.xlu0 %1385, %v1025
    %v1387 = vpop.permute.xlu0 %1386
    %1389 = vset.pattern.permute.xlu0 6
    %1390 = vperm.xlu0 %1389, %v1026
    %v1391 = vpop.permute.xlu0 %1390
    %1393 = vset.pattern.permute.xlu0 6
    %1394 = vperm.xlu0 %1393, %v1027
    %v1395 = vpop.permute.xlu0 %1394
    %1397 = vset.pattern.permute.xlu0 6
    %1398 = vperm.xlu0 %1397, %v1028
    %v1399 = vpop.permute.xlu0 %1398
    %1401 = vset.pattern.permute.xlu0 6
    %1402 = vperm.xlu0 %1401, %v1029
    %v1403 = vpop.permute.xlu0 %1402
    %1405 = vset.pattern.permute.xlu0 6
    %1406 = vperm.xlu0 %1405, %v1030
    %v1407 = vpop.permute.xlu0 %1406
    %1409 = vset.pattern.permute.xlu0 6
    %1410 = vperm.xlu0 %1409, %v1031
    %v1411 = vpop.permute.xlu0 %1410
    %1413 = vset.pattern.permute.xlu0 6
    %1414 = vperm.xlu0 %1413, %v1032
    %v1415 = vpop.permute.xlu0 %1414
    %v1417 = vmul.f32 %v1355, %v414
    %v1418 = vmul.f32 %v1359, %v414
    %v1419 = vmul.f32 %v1363, %v414
    %v1420 = vmul.f32 %v1367, %v414
    %v1421 = vmul.f32 %v1371, %v414
    %v1422 = vmul.f32 %v1375, %v414
    %v1423 = vmul.f32 %v1379, %v414
    %v1424 = vmul.f32 %v1383, %v414
    %v1425 = vmul.f32 %v1387, %v414
    %v1426 = vmul.f32 %v1391, %v414
    %v1427 = vmul.f32 %v1395, %v414
    %v1428 = vmul.f32 %v1399, %v414
    %v1429 = vmul.f32 %v1403, %v414
    %v1430 = vmul.f32 %v1407, %v414
    %v1431 = vmul.f32 %v1411, %v414
    %v1432 = vmul.f32 %v1415, %v414
    %v1433 = vadd.f32 %v1337, %v1417
    %v1434 = vadd.f32 %v1338, %v1418
    %v1435 = vadd.f32 %v1339, %v1419
    %v1436 = vadd.f32 %v1340, %v1420
    %v1437 = vadd.f32 %v1341, %v1421
    %v1438 = vadd.f32 %v1342, %v1422
    %v1439 = vadd.f32 %v1343, %v1423
    %v1440 = vadd.f32 %v1344, %v1424
    %v1441 = vadd.f32 %v1345, %v1425
    %v1442 = vadd.f32 %v1346, %v1426
    %v1443 = vadd.f32 %v1347, %v1427
    %v1444 = vadd.f32 %v1348, %v1428
    %v1445 = vadd.f32 %v1349, %v1429
    %v1446 = vadd.f32 %v1350, %v1430
    %v1447 = vadd.f32 %v1351, %v1431
    %v1448 = vadd.f32 %v1352, %v1432
    %1449 = vset.pattern.permute.xlu0 7
    %1450 = vperm.xlu0 %1449, %v1017
    %v1451 = vpop.permute.xlu0 %1450
    %1453 = vset.pattern.permute.xlu0 7
    %1454 = vperm.xlu0 %1453, %v1018
    %v1455 = vpop.permute.xlu0 %1454
    %1457 = vset.pattern.permute.xlu0 7
    %1458 = vperm.xlu0 %1457, %v1019
    %v1459 = vpop.permute.xlu0 %1458
    %1461 = vset.pattern.permute.xlu0 7
    %1462 = vperm.xlu0 %1461, %v1020
    %v1463 = vpop.permute.xlu0 %1462
    %1465 = vset.pattern.permute.xlu0 7
    %1466 = vperm.xlu0 %1465, %v1021
    %v1467 = vpop.permute.xlu0 %1466
    %1469 = vset.pattern.permute.xlu0 7
    %1470 = vperm.xlu0 %1469, %v1022
    %v1471 = vpop.permute.xlu0 %1470
    %1473 = vset.pattern.permute.xlu0 7
    %1474 = vperm.xlu0 %1473, %v1023
    %v1475 = vpop.permute.xlu0 %1474
    %1477 = vset.pattern.permute.xlu0 7
    %1478 = vperm.xlu0 %1477, %v1024
    %v1479 = vpop.permute.xlu0 %1478
    %1481 = vset.pattern.permute.xlu0 7
    %1482 = vperm.xlu0 %1481, %v1025
    %v1483 = vpop.permute.xlu0 %1482
    %1485 = vset.pattern.permute.xlu0 7
    %1486 = vperm.xlu0 %1485, %v1026
    %v1487 = vpop.permute.xlu0 %1486
    %1489 = vset.pattern.permute.xlu0 7
    %1490 = vperm.xlu0 %1489, %v1027
    %v1491 = vpop.permute.xlu0 %1490
    %1493 = vset.pattern.permute.xlu0 7
    %1494 = vperm.xlu0 %1493, %v1028
    %v1495 = vpop.permute.xlu0 %1494
    %1497 = vset.pattern.permute.xlu0 7
    %1498 = vperm.xlu0 %1497, %v1029
    %v1499 = vpop.permute.xlu0 %1498
    %1501 = vset.pattern.permute.xlu0 7
    %1502 = vperm.xlu0 %1501, %v1030
    %v1503 = vpop.permute.xlu0 %1502
    %1505 = vset.pattern.permute.xlu0 7
    %1506 = vperm.xlu0 %1505, %v1031
    %v1507 = vpop.permute.xlu0 %1506
    %1509 = vset.pattern.permute.xlu0 7
    %1510 = vperm.xlu0 %1509, %v1032
    %v1511 = vpop.permute.xlu0 %1510
    %v1513 = vmul.f32 %v1451, %v514
    %v1514 = vmul.f32 %v1455, %v514
    %v1515 = vmul.f32 %v1459, %v514
    %v1516 = vmul.f32 %v1463, %v514
    %v1517 = vmul.f32 %v1467, %v514
    %v1518 = vmul.f32 %v1471, %v514
    %v1519 = vmul.f32 %v1475, %v514
    %v1520 = vmul.f32 %v1479, %v514
    %v1521 = vmul.f32 %v1483, %v514
    %v1522 = vmul.f32 %v1487, %v514
    %v1523 = vmul.f32 %v1491, %v514
    %v1524 = vmul.f32 %v1495, %v514
    %v1525 = vmul.f32 %v1499, %v514
    %v1526 = vmul.f32 %v1503, %v514
    %v1527 = vmul.f32 %v1507, %v514
    %v1528 = vmul.f32 %v1511, %v514
    %v1529 = vadd.f32 %v1433, %v1513
    %v1530 = vadd.f32 %v1434, %v1514
    %v1531 = vadd.f32 %v1435, %v1515
    %v1532 = vadd.f32 %v1436, %v1516
    %v1533 = vadd.f32 %v1437, %v1517
    %v1534 = vadd.f32 %v1438, %v1518
    %v1535 = vadd.f32 %v1439, %v1519
    %v1536 = vadd.f32 %v1440, %v1520
    %v1537 = vadd.f32 %v1441, %v1521
    %v1538 = vadd.f32 %v1442, %v1522
    %v1539 = vadd.f32 %v1443, %v1523
    %v1540 = vadd.f32 %v1444, %v1524
    %v1541 = vadd.f32 %v1445, %v1525
    %v1542 = vadd.f32 %v1446, %v1526
    %v1543 = vadd.f32 %v1447, %v1527
    %v1544 = vadd.f32 %v1448, %v1528
    %1545 = vset.pattern.permute.xlu0 4
    %1546 = vperm.xlu0 %1545, %v1225
    %v1547 = vpop.permute.xlu0 %1546
    %1549 = vset.pattern.permute.xlu0 4
    %1550 = vperm.xlu0 %1549, %v1226
    %v1551 = vpop.permute.xlu0 %1550
    %1553 = vset.pattern.permute.xlu0 4
    %1554 = vperm.xlu0 %1553, %v1227
    %v1555 = vpop.permute.xlu0 %1554
    %1557 = vset.pattern.permute.xlu0 4
    %1558 = vperm.xlu0 %1557, %v1228
    %v1559 = vpop.permute.xlu0 %1558
    %1561 = vset.pattern.permute.xlu0 4
    %1562 = vperm.xlu0 %1561, %v1229
    %v1563 = vpop.permute.xlu0 %1562
    %1565 = vset.pattern.permute.xlu0 4
    %1566 = vperm.xlu0 %1565, %v1230
    %v1567 = vpop.permute.xlu0 %1566
    %1569 = vset.pattern.permute.xlu0 4
    %1570 = vperm.xlu0 %1569, %v1231
    %v1571 = vpop.permute.xlu0 %1570
    %1573 = vset.pattern.permute.xlu0 4
    %1574 = vperm.xlu0 %1573, %v1232
    %v1575 = vpop.permute.xlu0 %1574
    %1577 = vset.pattern.permute.xlu0 4
    %1578 = vperm.xlu0 %1577, %v1233
    %v1579 = vpop.permute.xlu0 %1578
    %1581 = vset.pattern.permute.xlu0 4
    %1582 = vperm.xlu0 %1581, %v1234
    %v1583 = vpop.permute.xlu0 %1582
    %1585 = vset.pattern.permute.xlu0 4
    %1586 = vperm.xlu0 %1585, %v1235
    %v1587 = vpop.permute.xlu0 %1586
    %1589 = vset.pattern.permute.xlu0 4
    %1590 = vperm.xlu0 %1589, %v1236
    %v1591 = vpop.permute.xlu0 %1590
    %1593 = vset.pattern.permute.xlu0 4
    %1594 = vperm.xlu0 %1593, %v1237
    %v1595 = vpop.permute.xlu0 %1594
    %1597 = vset.pattern.permute.xlu0 4
    %1598 = vperm.xlu0 %1597, %v1238
    %v1599 = vpop.permute.xlu0 %1598
    %1601 = vset.pattern.permute.xlu0 4
    %1602 = vperm.xlu0 %1601, %v1239
    %v1603 = vpop.permute.xlu0 %1602
    %1605 = vset.pattern.permute.xlu0 4
    %1606 = vperm.xlu0 %1605, %v1240
    %v1607 = vpop.permute.xlu0 %1606
    %v1609 = vmul.f32 %v1547, %v614
    %v1610 = vmul.f32 %v1551, %v614
    %v1611 = vmul.f32 %v1555, %v614
    %v1612 = vmul.f32 %v1559, %v614
    %v1613 = vmul.f32 %v1563, %v614
    %v1614 = vmul.f32 %v1567, %v614
    %v1615 = vmul.f32 %v1571, %v614
    %v1616 = vmul.f32 %v1575, %v614
    %v1617 = vmul.f32 %v1579, %v614
    %v1618 = vmul.f32 %v1583, %v614
    %v1619 = vmul.f32 %v1587, %v614
    %v1620 = vmul.f32 %v1591, %v614
    %v1621 = vmul.f32 %v1595, %v614
    %v1622 = vmul.f32 %v1599, %v614
    %v1623 = vmul.f32 %v1603, %v614
    %v1624 = vmul.f32 %v1607, %v614
    %v1625 = vadd.f32 %v1529, %v1609
    %v1626 = vadd.f32 %v1530, %v1610
    %v1627 = vadd.f32 %v1531, %v1611
    %v1628 = vadd.f32 %v1532, %v1612
    %v1629 = vadd.f32 %v1533, %v1613
    %v1630 = vadd.f32 %v1534, %v1614
    %v1631 = vadd.f32 %v1535, %v1615
    %v1632 = vadd.f32 %v1536, %v1616
    %v1633 = vadd.f32 %v1537, %v1617
    %v1634 = vadd.f32 %v1538, %v1618
    %v1635 = vadd.f32 %v1539, %v1619
    %v1636 = vadd.f32 %v1540, %v1620
    %v1637 = vadd.f32 %v1541, %v1621
    %v1638 = vadd.f32 %v1542, %v1622
    %v1639 = vadd.f32 %v1543, %v1623
    %v1640 = vadd.f32 %v1544, %v1624
    %1641 = vset.pattern.permute.xlu0 10
    %1642 = vperm.xlu0 %1641, %v1017
    %v1643 = vpop.permute.xlu0 %1642
    %1645 = vset.pattern.permute.xlu0 10
    %1646 = vperm.xlu0 %1645, %v1018
    %v1647 = vpop.permute.xlu0 %1646
    %1649 = vset.pattern.permute.xlu0 10
    %1650 = vperm.xlu0 %1649, %v1019
    %v1651 = vpop.permute.xlu0 %1650
    %1653 = vset.pattern.permute.xlu0 10
    %1654 = vperm.xlu0 %1653, %v1020
    %v1655 = vpop.permute.xlu0 %1654
    %1657 = vset.pattern.permute.xlu0 10
    %1658 = vperm.xlu0 %1657, %v1021
    %v1659 = vpop.permute.xlu0 %1658
    %1661 = vset.pattern.permute.xlu0 10
    %1662 = vperm.xlu0 %1661, %v1022
    %v1663 = vpop.permute.xlu0 %1662
    %1665 = vset.pattern.permute.xlu0 10
    %1666 = vperm.xlu0 %1665, %v1023
    %v1667 = vpop.permute.xlu0 %1666
    %1669 = vset.pattern.permute.xlu0 10
    %1670 = vperm.xlu0 %1669, %v1024
    %v1671 = vpop.permute.xlu0 %1670
    %1673 = vset.pattern.permute.xlu0 10
    %1674 = vperm.xlu0 %1673, %v1025
    %v1675 = vpop.permute.xlu0 %1674
    %1677 = vset.pattern.permute.xlu0 10
    %1678 = vperm.xlu0 %1677, %v1026
    %v1679 = vpop.permute.xlu0 %1678
    %1681 = vset.pattern.permute.xlu0 10
    %1682 = vperm.xlu0 %1681, %v1027
    %v1683 = vpop.permute.xlu0 %1682
    %1685 = vset.pattern.permute.xlu0 10
    %1686 = vperm.xlu0 %1685, %v1028
    %v1687 = vpop.permute.xlu0 %1686
    %1689 = vset.pattern.permute.xlu0 10
    %1690 = vperm.xlu0 %1689, %v1029
    %v1691 = vpop.permute.xlu0 %1690
    %1693 = vset.pattern.permute.xlu0 10
    %1694 = vperm.xlu0 %1693, %v1030
    %v1695 = vpop.permute.xlu0 %1694
    %1697 = vset.pattern.permute.xlu0 10
    %1698 = vperm.xlu0 %1697, %v1031
    %v1699 = vpop.permute.xlu0 %1698
    %1701 = vset.pattern.permute.xlu0 10
    %1702 = vperm.xlu0 %1701, %v1032
    %v1703 = vpop.permute.xlu0 %1702
    %v1705 = vmul.f32 %v1643, %v714
    %v1706 = vmul.f32 %v1647, %v714
    %v1707 = vmul.f32 %v1651, %v714
    %v1708 = vmul.f32 %v1655, %v714
    %v1709 = vmul.f32 %v1659, %v714
    %v1710 = vmul.f32 %v1663, %v714
    %v1711 = vmul.f32 %v1667, %v714
    %v1712 = vmul.f32 %v1671, %v714
    %v1713 = vmul.f32 %v1675, %v714
    %v1714 = vmul.f32 %v1679, %v714
    %v1715 = vmul.f32 %v1683, %v714
    %v1716 = vmul.f32 %v1687, %v714
    %v1717 = vmul.f32 %v1691, %v714
    %v1718 = vmul.f32 %v1695, %v714
    %v1719 = vmul.f32 %v1699, %v714
    %v1720 = vmul.f32 %v1703, %v714
    %v1721 = vadd.f32 %v1625, %v1705
    %v1722 = vadd.f32 %v1626, %v1706
    %v1723 = vadd.f32 %v1627, %v1707
    %v1724 = vadd.f32 %v1628, %v1708
    %v1725 = vadd.f32 %v1629, %v1709
    %v1726 = vadd.f32 %v1630, %v1710
    %v1727 = vadd.f32 %v1631, %v1711
    %v1728 = vadd.f32 %v1632, %v1712
    %v1729 = vadd.f32 %v1633, %v1713
    %v1730 = vadd.f32 %v1634, %v1714
    %v1731 = vadd.f32 %v1635, %v1715
    %v1732 = vadd.f32 %v1636, %v1716
    %v1733 = vadd.f32 %v1637, %v1717
    %v1734 = vadd.f32 %v1638, %v1718
    %v1735 = vadd.f32 %v1639, %v1719
    %v1736 = vadd.f32 %v1640, %v1720
    %1737 = vset.pattern.permute.xlu0 11
    %1738 = vperm.xlu0 %1737, %v1017
    %v1739 = vpop.permute.xlu0 %1738
    %1741 = vset.pattern.permute.xlu0 11
    %1742 = vperm.xlu0 %1741, %v1018
    %v1743 = vpop.permute.xlu0 %1742
    %1745 = vset.pattern.permute.xlu0 11
    %1746 = vperm.xlu0 %1745, %v1019
    %v1747 = vpop.permute.xlu0 %1746
    %1749 = vset.pattern.permute.xlu0 11
    %1750 = vperm.xlu0 %1749, %v1020
    %v1751 = vpop.permute.xlu0 %1750
    %1753 = vset.pattern.permute.xlu0 11
    %1754 = vperm.xlu0 %1753, %v1021
    %v1755 = vpop.permute.xlu0 %1754
    %1757 = vset.pattern.permute.xlu0 11
    %1758 = vperm.xlu0 %1757, %v1022
    %v1759 = vpop.permute.xlu0 %1758
    %1761 = vset.pattern.permute.xlu0 11
    %1762 = vperm.xlu0 %1761, %v1023
    %v1763 = vpop.permute.xlu0 %1762
    %1765 = vset.pattern.permute.xlu0 11
    %1766 = vperm.xlu0 %1765, %v1024
    %v1767 = vpop.permute.xlu0 %1766
    %1769 = vset.pattern.permute.xlu0 11
    %1770 = vperm.xlu0 %1769, %v1025
    %v1771 = vpop.permute.xlu0 %1770
    %1773 = vset.pattern.permute.xlu0 11
    %1774 = vperm.xlu0 %1773, %v1026
    %v1775 = vpop.permute.xlu0 %1774
    %1777 = vset.pattern.permute.xlu0 11
    %1778 = vperm.xlu0 %1777, %v1027
    %v1779 = vpop.permute.xlu0 %1778
    %1781 = vset.pattern.permute.xlu0 11
    %1782 = vperm.xlu0 %1781, %v1028
    %v1783 = vpop.permute.xlu0 %1782
    %1785 = vset.pattern.permute.xlu0 11
    %1786 = vperm.xlu0 %1785, %v1029
    %v1787 = vpop.permute.xlu0 %1786
    %1789 = vset.pattern.permute.xlu0 11
    %1790 = vperm.xlu0 %1789, %v1030
    %v1791 = vpop.permute.xlu0 %1790
    %1793 = vset.pattern.permute.xlu0 11
    %1794 = vperm.xlu0 %1793, %v1031
    %v1795 = vpop.permute.xlu0 %1794
    %1797 = vset.pattern.permute.xlu0 11
    %1798 = vperm.xlu0 %1797, %v1032
    %v1799 = vpop.permute.xlu0 %1798
    %v1801 = vmul.f32 %v1739, %v814
    %v1802 = vmul.f32 %v1743, %v814
    %v1803 = vmul.f32 %v1747, %v814
    %v1804 = vmul.f32 %v1751, %v814
    %v1805 = vmul.f32 %v1755, %v814
    %v1806 = vmul.f32 %v1759, %v814
    %v1807 = vmul.f32 %v1763, %v814
    %v1808 = vmul.f32 %v1767, %v814
    %v1809 = vmul.f32 %v1771, %v814
    %v1810 = vmul.f32 %v1775, %v814
    %v1811 = vmul.f32 %v1779, %v814
    %v1812 = vmul.f32 %v1783, %v814
    %v1813 = vmul.f32 %v1787, %v814
    %v1814 = vmul.f32 %v1791, %v814
    %v1815 = vmul.f32 %v1795, %v814
    %v1816 = vmul.f32 %v1799, %v814
    %v1817 = vadd.f32 %v1721, %v1801
    %v1818 = vadd.f32 %v1722, %v1802
    %v1819 = vadd.f32 %v1723, %v1803
    %v1820 = vadd.f32 %v1724, %v1804
    %v1821 = vadd.f32 %v1725, %v1805
    %v1822 = vadd.f32 %v1726, %v1806
    %v1823 = vadd.f32 %v1727, %v1807
    %v1824 = vadd.f32 %v1728, %v1808
    %v1825 = vadd.f32 %v1729, %v1809
    %v1826 = vadd.f32 %v1730, %v1810
    %v1827 = vadd.f32 %v1731, %v1811
    %v1828 = vadd.f32 %v1732, %v1812
    %v1829 = vadd.f32 %v1733, %v1813
    %v1830 = vadd.f32 %v1734, %v1814
    %v1831 = vadd.f32 %v1735, %v1815
    %v1832 = vadd.f32 %v1736, %v1816
    %1833 = vset.pattern.permute.xlu0 8
    %1834 = vperm.xlu0 %1833, %v1225
    %v1835 = vpop.permute.xlu0 %1834
    %1837 = vset.pattern.permute.xlu0 8
    %1838 = vperm.xlu0 %1837, %v1226
    %v1839 = vpop.permute.xlu0 %1838
    %1841 = vset.pattern.permute.xlu0 8
    %1842 = vperm.xlu0 %1841, %v1227
    %v1843 = vpop.permute.xlu0 %1842
    %1845 = vset.pattern.permute.xlu0 8
    %1846 = vperm.xlu0 %1845, %v1228
    %v1847 = vpop.permute.xlu0 %1846
    %1849 = vset.pattern.permute.xlu0 8
    %1850 = vperm.xlu0 %1849, %v1229
    %v1851 = vpop.permute.xlu0 %1850
    %1853 = vset.pattern.permute.xlu0 8
    %1854 = vperm.xlu0 %1853, %v1230
    %v1855 = vpop.permute.xlu0 %1854
    %1857 = vset.pattern.permute.xlu0 8
    %1858 = vperm.xlu0 %1857, %v1231
    %v1859 = vpop.permute.xlu0 %1858
    %1861 = vset.pattern.permute.xlu0 8
    %1862 = vperm.xlu0 %1861, %v1232
    %v1863 = vpop.permute.xlu0 %1862
    %1865 = vset.pattern.permute.xlu0 8
    %1866 = vperm.xlu0 %1865, %v1233
    %v1867 = vpop.permute.xlu0 %1866
    %1869 = vset.pattern.permute.xlu0 8
    %1870 = vperm.xlu0 %1869, %v1234
    %v1871 = vpop.permute.xlu0 %1870
    %1873 = vset.pattern.permute.xlu0 8
    %1874 = vperm.xlu0 %1873, %v1235
    %v1875 = vpop.permute.xlu0 %1874
    %1877 = vset.pattern.permute.xlu0 8
    %1878 = vperm.xlu0 %1877, %v1236
    %v1879 = vpop.permute.xlu0 %1878
    %1881 = vset.pattern.permute.xlu0 8
    %1882 = vperm.xlu0 %1881, %v1237
    %v1883 = vpop.permute.xlu0 %1882
    %1885 = vset.pattern.permute.xlu0 8
    %1886 = vperm.xlu0 %1885, %v1238
    %v1887 = vpop.permute.xlu0 %1886
    %1889 = vset.pattern.permute.xlu0 8
    %1890 = vperm.xlu0 %1889, %v1239
    %v1891 = vpop.permute.xlu0 %1890
    %1893 = vset.pattern.permute.xlu0 8
    %1894 = vperm.xlu0 %1893, %v1240
    %v1895 = vpop.permute.xlu0 %1894
    %v1897 = vmul.f32 %v1835, %v914
    %v1898 = vmul.f32 %v1839, %v914
    %v1899 = vmul.f32 %v1843, %v914
    %v1900 = vmul.f32 %v1847, %v914
    %v1901 = vmul.f32 %v1851, %v914
    %v1902 = vmul.f32 %v1855, %v914
    %v1903 = vmul.f32 %v1859, %v914
    %v1904 = vmul.f32 %v1863, %v914
    %v1905 = vmul.f32 %v1867, %v914
    %v1906 = vmul.f32 %v1871, %v914
    %v1907 = vmul.f32 %v1875, %v914
    %v1908 = vmul.f32 %v1879, %v914
    %v1909 = vmul.f32 %v1883, %v914
    %v1910 = vmul.f32 %v1887, %v914
    %v1911 = vmul.f32 %v1891, %v914
    %v1912 = vmul.f32 %v1895, %v914
    %v1913 = vadd.f32 %v1817, %v1897
    %v1914 = vadd.f32 %v1818, %v1898
    %v1915 = vadd.f32 %v1819, %v1899
    %v1916 = vadd.f32 %v1820, %v1900
    %v1917 = vadd.f32 %v1821, %v1901
    %v1918 = vadd.f32 %v1822, %v1902
    %v1919 = vadd.f32 %v1823, %v1903
    %v1920 = vadd.f32 %v1824, %v1904
    %v1921 = vadd.f32 %v1825, %v1905
    %v1922 = vadd.f32 %v1826, %v1906
    %v1923 = vadd.f32 %v1827, %v1907
    %v1924 = vadd.f32 %v1828, %v1908
    %v1925 = vadd.f32 %v1829, %v1909
    %v1926 = vadd.f32 %v1830, %v1910
    %v1927 = vadd.f32 %v1831, %v1911
    %v1928 = vadd.f32 %v1832, %v1912
    %v1929 = vadd.f32 %v1913, %v951
    %v1930 = vadd.f32 %v1914, %v951
    %v1931 = vadd.f32 %v1915, %v951
    %v1932 = vadd.f32 %v1916, %v951
    %v1933 = vadd.f32 %v1917, %v951
    %v1934 = vadd.f32 %v1918, %v951
    %v1935 = vadd.f32 %v1919, %v951
    %v1936 = vadd.f32 %v1920, %v951
    %v1937 = vadd.f32 %v1921, %v951
    %v1938 = vadd.f32 %v1922, %v951
    %v1939 = vadd.f32 %v1923, %v951
    %v1940 = vadd.f32 %v1924, %v951
    %v1941 = vadd.f32 %v1925, %v951
    %v1942 = vadd.f32 %v1926, %v951
    %v1943 = vadd.f32 %v1927, %v951
    %v1944 = vadd.f32 %v1928, %v951
    %v1945 = vmax.f32 %v1929, 0.0
    %v1946 = vmax.f32 %v1930, 0.0
    %v1947 = vmax.f32 %v1931, 0.0
    %v1948 = vmax.f32 %v1932, 0.0
    %v1949 = vmax.f32 %v1933, 0.0
    %v1950 = vmax.f32 %v1934, 0.0
    %v1951 = vmax.f32 %v1935, 0.0
    %v1952 = vmax.f32 %v1936, 0.0
    %v1953 = vmax.f32 %v1937, 0.0
    %v1954 = vmax.f32 %v1938, 0.0
    %v1955 = vmax.f32 %v1939, 0.0
    %v1956 = vmax.f32 %v1940, 0.0
    %v1957 = vmax.f32 %v1941, 0.0
    %v1958 = vmax.f32 %v1942, 0.0
    %v1959 = vmax.f32 %v1943, 0.0
    %v1960 = vmax.f32 %v1944, 0.0
    %v1961 = vmax.f32 %v1001, %v1945
    %v1962 = vmax.f32 %v1002, %v1946
    %v1963 = vmax.f32 %v1003, %v1947
    %v1964 = vmax.f32 %v1004, %v1948
    %v1965 = vmax.f32 %v1005, %v1949
    %v1966 = vmax.f32 %v1006, %v1950
    %v1967 = vmax.f32 %v1007, %v1951
    %v1968 = vmax.f32 %v1008, %v1952
    %v1969 = vmax.f32 %v1009, %v1953
    %v1970 = vmax.f32 %v1010, %v1954
    %v1971 = vmax.f32 %v1011, %v1955
    %v1972 = vmax.f32 %v1012, %v1956
    %v1973 = vmax.f32 %v1013, %v1957
    %v1974 = vmax.f32 %v1014, %v1958
    %v1975 = vmax.f32 %v1015, %v1959
    %v1976 = vmax.f32 %v1016, %v1960
    %1977 = vst [vmem:[#allocation2 + $0x1] sm:$0x7f] %v1961
    %1978 = vst [vmem:[#allocation2 + $0x9] sm:$0x7f] %v1962
    %1979 = vst [vmem:[#allocation2 + $0x11] sm:$0x7f] %v1963
    %1980 = vst [vmem:[#allocation2 + $0x19] sm:$0x7f] %v1964
    %1981 = vst [vmem:[#allocation2 + $0x21] sm:$0x7f] %v1965
    %1982 = vst [vmem:[#allocation2 + $0x29] sm:$0x7f] %v1966
    %1983 = vst [vmem:[#allocation2 + $0x31] sm:$0x7f] %v1967
    %1984 = vst [vmem:[#allocation2 + $0x39] sm:$0x7f] %v1968
    %1985 = vst [vmem:[#allocation2 + $0x41] sm:$0x7f] %v1969
    %1986 = vst [vmem:[#allocation2 + $0x49] sm:$0x7f] %v1970
    %1987 = vst [vmem:[#allocation2 + $0x51] sm:$0x7f] %v1971
    %1988 = vst [vmem:[#allocation2 + $0x59] sm:$0x7f] %v1972
    %1989 = vst [vmem:[#allocation2 + $0x61] sm:$0x7f] %v1973
    %1990 = vst [vmem:[#allocation2 + $0x69] sm:$0x7f] %v1974
    %1991 = vst [vmem:[#allocation2 + $0x71] sm:$0x7f] %v1975
    %1992 = vst [vmem:[#allocation2 + $0x79] sm:$0x7f] %v1976
    %s1993 = scalar_lea.vmem [#allocation2], 8
    %v1994 = vld [vmem:[%s1993] sm:$0xff]
    %v1995 = vld [vmem:[%s1993 + $0x8] sm:$0xff]
    %v1996 = vld [vmem:[%s1993 + $0x10] sm:$0xff]
    %v1997 = vld [vmem:[%s1993 + $0x18] sm:$0xff]
    %v1998 = vld [vmem:[%s1993 + $0x20] sm:$0xff]
    %v1999 = vld [vmem:[%s1993 + $0x28] sm:$0xff]
    %v2000 = vld [vmem:[%s1993 + $0x30] sm:$0xff]
    %v2001 = vld [vmem:[%s1993 + $0x40] sm:$0xff]
    %v2002 = vld [vmem:[%s1993 + $0x48] sm:$0xff]
    %v2003 = vld [vmem:[%s1993 + $0x50] sm:$0xff]
    %v2004 = vld [vmem:[%s1993 + $0x58] sm:$0xff]
    %v2005 = vld [vmem:[%s1993 + $0x60] sm:$0xff]
    %v2006 = vld [vmem:[%s1993 + $0x68] sm:$0xff]
    %v2007 = vld [vmem:[%s1993 + $0x70] sm:$0xff]
    %v2008 = vld [vmem:[%s0] sm:$0xff]
    %v2009 = vld [vmem:[%s0 + $0x8] sm:$0xff]
    %v2010 = vld [vmem:[%s0 + $0x10] sm:$0xff]
    %v2011 = vld [vmem:[%s0 + $0x18] sm:$0xff]
    %v2012 = vld [vmem:[%s0 + $0x20] sm:$0xff]
    %v2013 = vld [vmem:[%s0 + $0x28] sm:$0xff]
    %v2014 = vld [vmem:[%s0 + $0x30] sm:$0xff]
    %v2015 = vld [vmem:[%s0 + $0x40] sm:$0xff]
    %v2016 = vld [vmem:[%s0 + $0x48] sm:$0xff]
    %v2017 = vld [vmem:[%s0 + $0x50] sm:$0xff]
    %v2018 = vld [vmem:[%s0 + $0x58] sm:$0xff]
    %v2019 = vld [vmem:[%s0 + $0x60] sm:$0xff]
    %v2020 = vld [vmem:[%s0 + $0x68] sm:$0xff]
    %v2021 = vld [vmem:[%s0 + $0x70] sm:$0xff]
    %2023 = vset.pattern.permute.xlu0 8
    %2024 = vperm.xlu0 %2023, %v2008
    %v2025 = vpop.permute.xlu0 %2024
    %2028 = vset.pattern.permute.xlu0 8
    %2029 = vperm.xlu0 %2028, %v2009
    %v2030 = vpop.permute.xlu0 %2029
    %2033 = vset.pattern.permute.xlu0 8
    %2034 = vperm.xlu0 %2033, %v2010
    %v2035 = vpop.permute.xlu0 %2034
    %2038 = vset.pattern.permute.xlu0 8
    %2039 = vperm.xlu0 %2038, %v2011
    %v2040 = vpop.permute.xlu0 %2039
    %2043 = vset.pattern.permute.xlu0 8
    %2044 = vperm.xlu0 %2043, %v2012
    %v2045 = vpop.permute.xlu0 %2044
    %2048 = vset.pattern.permute.xlu0 8
    %2049 = vperm.xlu0 %2048, %v2013
    %v2050 = vpop.permute.xlu0 %2049
    %2053 = vset.pattern.permute.xlu0 8
    %2054 = vperm.xlu0 %2053, %v2014
    %v2055 = vpop.permute.xlu0 %2054
    %2058 = vset.pattern.permute.xlu0 8
    %2059 = vperm.xlu0 %2058, %v2015
    %v2060 = vpop.permute.xlu0 %2059
    %2063 = vset.pattern.permute.xlu0 8
    %2064 = vperm.xlu0 %2063, %v2016
    %v2065 = vpop.permute.xlu0 %2064
    %2068 = vset.pattern.permute.xlu0 8
    %2069 = vperm.xlu0 %2068, %v2017
    %v2070 = vpop.permute.xlu0 %2069
    %2073 = vset.pattern.permute.xlu0 8
    %2074 = vperm.xlu0 %2073, %v2018
    %v2075 = vpop.permute.xlu0 %2074
    %2078 = vset.pattern.permute.xlu0 8
    %2079 = vperm.xlu0 %2078, %v2019
    %v2080 = vpop.permute.xlu0 %2079
    %2083 = vset.pattern.permute.xlu0 8
    %2084 = vperm.xlu0 %2083, %v2020
    %v2085 = vpop.permute.xlu0 %2084
    %2088 = vset.pattern.permute.xlu0 8
    %2089 = vperm.xlu0 %2088, %v2021
    %v2090 = vpop.permute.xlu0 %2089
    %v2092 = vmul.f32 %v2025, %v130
    %v2093 = vmul.f32 %v2030, %v130
    %v2094 = vmul.f32 %v2035, %v130
    %v2095 = vmul.f32 %v2040, %v130
    %v2096 = vmul.f32 %v2045, %v130
    %v2097 = vmul.f32 %v2050, %v130
    %v2098 = vmul.f32 %v2055, %v130
    %v2099 = vmul.f32 %v2060, %v130
    %v2100 = vmul.f32 %v2065, %v130
    %v2101 = vmul.f32 %v2070, %v130
    %v2102 = vmul.f32 %v2075, %v130
    %v2103 = vmul.f32 %v2080, %v130
    %v2104 = vmul.f32 %v2085, %v130
    %v2105 = vmul.f32 %v2090, %v130
    %2106 = vset.pattern.permute.xlu0 9
    %2107 = vperm.xlu0 %2106, %v2008
    %v2108 = vpop.permute.xlu0 %2107
    %2110 = vset.pattern.permute.xlu0 9
    %2111 = vperm.xlu0 %2110, %v2009
    %v2112 = vpop.permute.xlu0 %2111
    %2114 = vset.pattern.permute.xlu0 9
    %2115 = vperm.xlu0 %2114, %v2010
    %v2116 = vpop.permute.xlu0 %2115
    %2118 = vset.pattern.permute.xlu0 9
    %2119 = vperm.xlu0 %2118, %v2011
    %v2120 = vpop.permute.xlu0 %2119
    %2122 = vset.pattern.permute.xlu0 9
    %2123 = vperm.xlu0 %2122, %v2012
    %v2124 = vpop.permute.xlu0 %2123
    %2126 = vset.pattern.permute.xlu0 9
    %2127 = vperm.xlu0 %2126, %v2013
    %v2128 = vpop.permute.xlu0 %2127
    %2130 = vset.pattern.permute.xlu0 9
    %2131 = vperm.xlu0 %2130, %v2014
    %v2132 = vpop.permute.xlu0 %2131
    %2134 = vset.pattern.permute.xlu0 9
    %2135 = vperm.xlu0 %2134, %v2015
    %v2136 = vpop.permute.xlu0 %2135
    %2138 = vset.pattern.permute.xlu0 9
    %2139 = vperm.xlu0 %2138, %v2016
    %v2140 = vpop.permute.xlu0 %2139
    %2142 = vset.pattern.permute.xlu0 9
    %2143 = vperm.xlu0 %2142, %v2017
    %v2144 = vpop.permute.xlu0 %2143
    %2146 = vset.pattern.permute.xlu0 9
    %2147 = vperm.xlu0 %2146, %v2018
    %v2148 = vpop.permute.xlu0 %2147
    %2150 = vset.pattern.permute.xlu0 9
    %2151 = vperm.xlu0 %2150, %v2019
    %v2152 = vpop.permute.xlu0 %2151
    %2154 = vset.pattern.permute.xlu0 9
    %2155 = vperm.xlu0 %2154, %v2020
    %v2156 = vpop.permute.xlu0 %2155
    %2158 = vset.pattern.permute.xlu0 9
    %2159 = vperm.xlu0 %2158, %v2021
    %v2160 = vpop.permute.xlu0 %2159
    %v2162 = vmul.f32 %v2108, %v214
    %v2163 = vmul.f32 %v2112, %v214
    %v2164 = vmul.f32 %v2116, %v214
    %v2165 = vmul.f32 %v2120, %v214
    %v2166 = vmul.f32 %v2124, %v214
    %v2167 = vmul.f32 %v2128, %v214
    %v2168 = vmul.f32 %v2132, %v214
    %v2169 = vmul.f32 %v2136, %v214
    %v2170 = vmul.f32 %v2140, %v214
    %v2171 = vmul.f32 %v2144, %v214
    %v2172 = vmul.f32 %v2148, %v214
    %v2173 = vmul.f32 %v2152, %v214
    %v2174 = vmul.f32 %v2156, %v214
    %v2175 = vmul.f32 %v2160, %v214
    %v2176 = vadd.f32 %v2092, %v2162
    %v2177 = vadd.f32 %v2093, %v2163
    %v2178 = vadd.f32 %v2094, %v2164
    %v2179 = vadd.f32 %v2095, %v2165
    %v2180 = vadd.f32 %v2096, %v2166
    %v2181 = vadd.f32 %v2097, %v2167
    %v2182 = vadd.f32 %v2098, %v2168
    %v2183 = vadd.f32 %v2099, %v2169
    %v2184 = vadd.f32 %v2100, %v2170
    %v2185 = vadd.f32 %v2101, %v2171
    %v2186 = vadd.f32 %v2102, %v2172
    %v2187 = vadd.f32 %v2103, %v2173
    %v2188 = vadd.f32 %v2104, %v2174
    %v2189 = vadd.f32 %v2105, %v2175
    %2190 = vset.pattern.permute.xlu0 10
    %2191 = vperm.xlu0 %2190, %v2008
    %v2192 = vpop.permute.xlu0 %2191
    %2194 = vset.pattern.permute.xlu0 10
    %2195 = vperm.xlu0 %2194, %v2009
    %v2196 = vpop.permute.xlu0 %2195
    %2198 = vset.pattern.permute.xlu0 10
    %2199 = vperm.xlu0 %2198, %v2010
    %v2200 = vpop.permute.xlu0 %2199
    %2202 = vset.pattern.permute.xlu0 10
    %2203 = vperm.xlu0 %2202, %v2011
    %v2204 = vpop.permute.xlu0 %2203
    %2206 = vset.pattern.permute.xlu0 10
    %2207 = vperm.xlu0 %2206, %v2012
    %v2208 = vpop.permute.xlu0 %2207
    %2210 = vset.pattern.permute.xlu0 10
    %2211 = vperm.xlu0 %2210, %v2013
    %v2212 = vpop.permute.xlu0 %2211
    %2214 = vset.pattern.permute.xlu0 10
    %2215 = vperm.xlu0 %2214, %v2014
    %v2216 = vpop.permute.xlu0 %2215
    %2218 = vset.pattern.permute.xlu0 10
    %2219 = vperm.xlu0 %2218, %v2015
    %v2220 = vpop.permute.xlu0 %2219
    %2222 = vset.pattern.permute.xlu0 10
    %2223 = vperm.xlu0 %2222, %v2016
    %v2224 = vpop.permute.xlu0 %2223
    %2226 = vset.pattern.permute.xlu0 10
    %2227 = vperm.xlu0 %2226, %v2017
    %v2228 = vpop.permute.xlu0 %2227
    %2230 = vset.pattern.permute.xlu0 10
    %2231 = vperm.xlu0 %2230, %v2018
    %v2232 = vpop.permute.xlu0 %2231
    %2234 = vset.pattern.permute.xlu0 10
    %2235 = vperm.xlu0 %2234, %v2019
    %v2236 = vpop.permute.xlu0 %2235
    %2238 = vset.pattern.permute.xlu0 10
    %2239 = vperm.xlu0 %2238, %v2020
    %v2240 = vpop.permute.xlu0 %2239
    %2242 = vset.pattern.permute.xlu0 10
    %2243 = vperm.xlu0 %2242, %v2021
    %v2244 = vpop.permute.xlu0 %2243
    %v2246 = vmul.f32 %v2192, %v314
    %v2247 = vmul.f32 %v2196, %v314
    %v2248 = vmul.f32 %v2200, %v314
    %v2249 = vmul.f32 %v2204, %v314
    %v2250 = vmul.f32 %v2208, %v314
    %v2251 = vmul.f32 %v2212, %v314
    %v2252 = vmul.f32 %v2216, %v314
    %v2253 = vmul.f32 %v2220, %v314
    %v2254 = vmul.f32 %v2224, %v314
    %v2255 = vmul.f32 %v2228, %v314
    %v2256 = vmul.f32 %v2232, %v314
    %v2257 = vmul.f32 %v2236, %v314
    %v2258 = vmul.f32 %v2240, %v314
    %v2259 = vmul.f32 %v2244, %v314
    %v2260 = vadd.f32 %v2176, %v2246
    %v2261 = vadd.f32 %v2177, %v2247
    %v2262 = vadd.f32 %v2178, %v2248
    %v2263 = vadd.f32 %v2179, %v2249
    %v2264 = vadd.f32 %v2180, %v2250
    %v2265 = vadd.f32 %v2181, %v2251
    %v2266 = vadd.f32 %v2182, %v2252
    %v2267 = vadd.f32 %v2183, %v2253
    %v2268 = vadd.f32 %v2184, %v2254
    %v2269 = vadd.f32 %v2185, %v2255
    %v2270 = vadd.f32 %v2186, %v2256
    %v2271 = vadd.f32 %v2187, %v2257
    %v2272 = vadd.f32 %v2188, %v2258
    %v2273 = vadd.f32 %v2189, %v2259
    %2274 = vset.pattern.permute.xlu0 12
    %2275 = vperm.xlu0 %2274, %v2008
    %v2276 = vpop.permute.xlu0 %2275
    %2278 = vset.pattern.permute.xlu0 12
    %2279 = vperm.xlu0 %2278, %v2009
    %v2280 = vpop.permute.xlu0 %2279
    %2282 = vset.pattern.permute.xlu0 12
    %2283 = vperm.xlu0 %2282, %v2010
    %v2284 = vpop.permute.xlu0 %2283
    %2286 = vset.pattern.permute.xlu0 12
    %2287 = vperm.xlu0 %2286, %v2011
    %v2288 = vpop.permute.xlu0 %2287
    %2290 = vset.pattern.permute.xlu0 12
    %2291 = vperm.xlu0 %2290, %v2012
    %v2292 = vpop.permute.xlu0 %2291
    %2294 = vset.pattern.permute.xlu0 12
    %2295 = vperm.xlu0 %2294, %v2013
    %v2296 = vpop.permute.xlu0 %2295
    %2298 = vset.pattern.permute.xlu0 12
    %2299 = vperm.xlu0 %2298, %v2014
    %v2300 = vpop.permute.xlu0 %2299
    %2302 = vset.pattern.permute.xlu0 12
    %2303 = vperm.xlu0 %2302, %v2015
    %v2304 = vpop.permute.xlu0 %2303
    %2306 = vset.pattern.permute.xlu0 12
    %2307 = vperm.xlu0 %2306, %v2016
    %v2308 = vpop.permute.xlu0 %2307
    %2310 = vset.pattern.permute.xlu0 12
    %2311 = vperm.xlu0 %2310, %v2017
    %v2312 = vpop.permute.xlu0 %2311
    %2314 = vset.pattern.permute.xlu0 12
    %2315 = vperm.xlu0 %2314, %v2018
    %v2316 = vpop.permute.xlu0 %2315
    %2318 = vset.pattern.permute.xlu0 12
    %2319 = vperm.xlu0 %2318, %v2019
    %v2320 = vpop.permute.xlu0 %2319
    %2322 = vset.pattern.permute.xlu0 12
    %2323 = vperm.xlu0 %2322, %v2020
    %v2324 = vpop.permute.xlu0 %2323
    %2326 = vset.pattern.permute.xlu0 12
    %2327 = vperm.xlu0 %2326, %v2021
    %v2328 = vpop.permute.xlu0 %2327
    %v2330 = vmul.f32 %v2276, %v414
    %v2331 = vmul.f32 %v2280, %v414
    %v2332 = vmul.f32 %v2284, %v414
    %v2333 = vmul.f32 %v2288, %v414
    %v2334 = vmul.f32 %v2292, %v414
    %v2335 = vmul.f32 %v2296, %v414
    %v2336 = vmul.f32 %v2300, %v414
    %v2337 = vmul.f32 %v2304, %v414
    %v2338 = vmul.f32 %v2308, %v414
    %v2339 = vmul.f32 %v2312, %v414
    %v2340 = vmul.f32 %v2316, %v414
    %v2341 = vmul.f32 %v2320, %v414
    %v2342 = vmul.f32 %v2324, %v414
    %v2343 = vmul.f32 %v2328, %v414
    %v2344 = vadd.f32 %v2260, %v2330
    %v2345 = vadd.f32 %v2261, %v2331
    %v2346 = vadd.f32 %v2262, %v2332
    %v2347 = vadd.f32 %v2263, %v2333
    %v2348 = vadd.f32 %v2264, %v2334
    %v2349 = vadd.f32 %v2265, %v2335
    %v2350 = vadd.f32 %v2266, %v2336
    %v2351 = vadd.f32 %v2267, %v2337
    %v2352 = vadd.f32 %v2268, %v2338
    %v2353 = vadd.f32 %v2269, %v2339
    %v2354 = vadd.f32 %v2270, %v2340
    %v2355 = vadd.f32 %v2271, %v2341
    %v2356 = vadd.f32 %v2272, %v2342
    %v2357 = vadd.f32 %v2273, %v2343
    %2358 = vset.pattern.permute.xlu0 13
    %2359 = vperm.xlu0 %2358, %v2008
    %v2360 = vpop.permute.xlu0 %2359
    %2362 = vset.pattern.permute.xlu0 13
    %2363 = vperm.xlu0 %2362, %v2009
    %v2364 = vpop.permute.xlu0 %2363
    %2366 = vset.pattern.permute.xlu0 13
    %2367 = vperm.xlu0 %2366, %v2010
    %v2368 = vpop.permute.xlu0 %2367
    %2370 = vset.pattern.permute.xlu0 13
    %2371 = vperm.xlu0 %2370, %v2011
    %v2372 = vpop.permute.xlu0 %2371
    %2374 = vset.pattern.permute.xlu0 13
    %2375 = vperm.xlu0 %2374, %v2012
    %v2376 = vpop.permute.xlu0 %2375
    %2378 = vset.pattern.permute.xlu0 13
    %2379 = vperm.xlu0 %2378, %v2013
    %v2380 = vpop.permute.xlu0 %2379
    %2382 = vset.pattern.permute.xlu0 13
    %2383 = vperm.xlu0 %2382, %v2014
    %v2384 = vpop.permute.xlu0 %2383
    %2386 = vset.pattern.permute.xlu0 13
    %2387 = vperm.xlu0 %2386, %v2015
    %v2388 = vpop.permute.xlu0 %2387
    %2390 = vset.pattern.permute.xlu0 13
    %2391 = vperm.xlu0 %2390, %v2016
    %v2392 = vpop.permute.xlu0 %2391
    %2394 = vset.pattern.permute.xlu0 13
    %2395 = vperm.xlu0 %2394, %v2017
    %v2396 = vpop.permute.xlu0 %2395
    %2398 = vset.pattern.permute.xlu0 13
    %2399 = vperm.xlu0 %2398, %v2018
    %v2400 = vpop.permute.xlu0 %2399
    %2402 = vset.pattern.permute.xlu0 13
    %2403 = vperm.xlu0 %2402, %v2019
    %v2404 = vpop.permute.xlu0 %2403
    %2406 = vset.pattern.permute.xlu0 13
    %2407 = vperm.xlu0 %2406, %v2020
    %v2408 = vpop.permute.xlu0 %2407
    %2410 = vset.pattern.permute.xlu0 13
    %2411 = vperm.xlu0 %2410, %v2021
    %v2412 = vpop.permute.xlu0 %2411
    %v2414 = vmul.f32 %v2360, %v514
    %v2415 = vmul.f32 %v2364, %v514
    %v2416 = vmul.f32 %v2368, %v514
    %v2417 = vmul.f32 %v2372, %v514
    %v2418 = vmul.f32 %v2376, %v514
    %v2419 = vmul.f32 %v2380, %v514
    %v2420 = vmul.f32 %v2384, %v514
    %v2421 = vmul.f32 %v2388, %v514
    %v2422 = vmul.f32 %v2392, %v514
    %v2423 = vmul.f32 %v2396, %v514
    %v2424 = vmul.f32 %v2400, %v514
    %v2425 = vmul.f32 %v2404, %v514
    %v2426 = vmul.f32 %v2408, %v514
    %v2427 = vmul.f32 %v2412, %v514
    %v2428 = vadd.f32 %v2344, %v2414
    %v2429 = vadd.f32 %v2345, %v2415
    %v2430 = vadd.f32 %v2346, %v2416
    %v2431 = vadd.f32 %v2347, %v2417
    %v2432 = vadd.f32 %v2348, %v2418
    %v2433 = vadd.f32 %v2349, %v2419
    %v2434 = vadd.f32 %v2350, %v2420
    %v2435 = vadd.f32 %v2351, %v2421
    %v2436 = vadd.f32 %v2352, %v2422
    %v2437 = vadd.f32 %v2353, %v2423
    %v2438 = vadd.f32 %v2354, %v2424
    %v2439 = vadd.f32 %v2355, %v2425
    %v2440 = vadd.f32 %v2356, %v2426
    %v2441 = vadd.f32 %v2357, %v2427
    %2442 = vset.pattern.permute.xlu0 14
    %2443 = vperm.xlu0 %2442, %v2008
    %v2444 = vpop.permute.xlu0 %2443
    %2446 = vset.pattern.permute.xlu0 14
    %2447 = vperm.xlu0 %2446, %v2009
    %v2448 = vpop.permute.xlu0 %2447
    %2450 = vset.pattern.permute.xlu0 14
    %2451 = vperm.xlu0 %2450, %v2010
    %v2452 = vpop.permute.xlu0 %2451
    %2454 = vset.pattern.permute.xlu0 14
    %2455 = vperm.xlu0 %2454, %v2011
    %v2456 = vpop.permute.xlu0 %2455
    %2458 = vset.pattern.permute.xlu0 14
    %2459 = vperm.xlu0 %2458, %v2012
    %v2460 = vpop.permute.xlu0 %2459
    %2462 = vset.pattern.permute.xlu0 14
    %2463 = vperm.xlu0 %2462, %v2013
    %v2464 = vpop.permute.xlu0 %2463
    %2466 = vset.pattern.permute.xlu0 14
    %2467 = vperm.xlu0 %2466, %v2014
    %v2468 = vpop.permute.xlu0 %2467
    %2470 = vset.pattern.permute.xlu0 14
    %2471 = vperm.xlu0 %2470, %v2015
    %v2472 = vpop.permute.xlu0 %2471
    %2474 = vset.pattern.permute.xlu0 14
    %2475 = vperm.xlu0 %2474, %v2016
    %v2476 = vpop.permute.xlu0 %2475
    %2478 = vset.pattern.permute.xlu0 14
    %2479 = vperm.xlu0 %2478, %v2017
    %v2480 = vpop.permute.xlu0 %2479
    %2482 = vset.pattern.permute.xlu0 14
    %2483 = vperm.xlu0 %2482, %v2018
    %v2484 = vpop.permute.xlu0 %2483
    %2486 = vset.pattern.permute.xlu0 14
    %2487 = vperm.xlu0 %2486, %v2019
    %v2488 = vpop.permute.xlu0 %2487
    %2490 = vset.pattern.permute.xlu0 14
    %2491 = vperm.xlu0 %2490, %v2020
    %v2492 = vpop.permute.xlu0 %2491
    %2494 = vset.pattern.permute.xlu0 14
    %2495 = vperm.xlu0 %2494, %v2021
    %v2496 = vpop.permute.xlu0 %2495
    %v2498 = vmul.f32 %v2444, %v614
    %v2499 = vmul.f32 %v2448, %v614
    %v2500 = vmul.f32 %v2452, %v614
    %v2501 = vmul.f32 %v2456, %v614
    %v2502 = vmul.f32 %v2460, %v614
    %v2503 = vmul.f32 %v2464, %v614
    %v2504 = vmul.f32 %v2468, %v614
    %v2505 = vmul.f32 %v2472, %v614
    %v2506 = vmul.f32 %v2476, %v614
    %v2507 = vmul.f32 %v2480, %v614
    %v2508 = vmul.f32 %v2484, %v614
    %v2509 = vmul.f32 %v2488, %v614
    %v2510 = vmul.f32 %v2492, %v614
    %v2511 = vmul.f32 %v2496, %v614
    %v2512 = vadd.f32 %v2428, %v2498
    %v2513 = vadd.f32 %v2429, %v2499
    %v2514 = vadd.f32 %v2430, %v2500
    %v2515 = vadd.f32 %v2431, %v2501
    %v2516 = vadd.f32 %v2432, %v2502
    %v2517 = vadd.f32 %v2433, %v2503
    %v2518 = vadd.f32 %v2434, %v2504
    %v2519 = vadd.f32 %v2435, %v2505
    %v2520 = vadd.f32 %v2436, %v2506
    %v2521 = vadd.f32 %v2437, %v2507
    %v2522 = vadd.f32 %v2438, %v2508
    %v2523 = vadd.f32 %v2439, %v2509
    %v2524 = vadd.f32 %v2440, %v2510
    %v2525 = vadd.f32 %v2441, %v2511
    %s2526 = scalar_lea.vmem %s0, 8
    %v2527 = vld [vmem:[%s2526] sm:$0xff]
    %v2528 = vld [vmem:[%s2526 + $0x8] sm:$0xff]
    %v2529 = vld [vmem:[%s2526 + $0x10] sm:$0xff]
    %v2530 = vld [vmem:[%s2526 + $0x18] sm:$0xff]
    %v2531 = vld [vmem:[%s2526 + $0x20] sm:$0xff]
    %v2532 = vld [vmem:[%s2526 + $0x28] sm:$0xff]
    %v2533 = vld [vmem:[%s2526 + $0x30] sm:$0xff]
    %v2534 = vld [vmem:[%s2526 + $0x40] sm:$0xff]
    %v2535 = vld [vmem:[%s2526 + $0x48] sm:$0xff]
    %v2536 = vld [vmem:[%s2526 + $0x50] sm:$0xff]
    %v2537 = vld [vmem:[%s2526 + $0x58] sm:$0xff]
    %v2538 = vld [vmem:[%s2526 + $0x60] sm:$0xff]
    %v2539 = vld [vmem:[%s2526 + $0x68] sm:$0xff]
    %v2540 = vld [vmem:[%s2526 + $0x70] sm:$0xff]
    %2542 = vset.pattern.permute.xlu0 0
    %2543 = vperm.xlu0 %2542, %v2527
    %v2544 = vpop.permute.xlu0 %2543
    %2547 = vset.pattern.permute.xlu0 0
    %2548 = vperm.xlu0 %2547, %v2528
    %v2549 = vpop.permute.xlu0 %2548
    %2552 = vset.pattern.permute.xlu0 0
    %2553 = vperm.xlu0 %2552, %v2529
    %v2554 = vpop.permute.xlu0 %2553
    %2557 = vset.pattern.permute.xlu0 0
    %2558 = vperm.xlu0 %2557, %v2530
    %v2559 = vpop.permute.xlu0 %2558
    %2562 = vset.pattern.permute.xlu0 0
    %2563 = vperm.xlu0 %2562, %v2531
    %v2564 = vpop.permute.xlu0 %2563
    %2567 = vset.pattern.permute.xlu0 0
    %2568 = vperm.xlu0 %2567, %v2532
    %v2569 = vpop.permute.xlu0 %2568
    %2572 = vset.pattern.permute.xlu0 0
    %2573 = vperm.xlu0 %2572, %v2533
    %v2574 = vpop.permute.xlu0 %2573
    %2577 = vset.pattern.permute.xlu0 0
    %2578 = vperm.xlu0 %2577, %v2534
    %v2579 = vpop.permute.xlu0 %2578
    %2582 = vset.pattern.permute.xlu0 0
    %2583 = vperm.xlu0 %2582, %v2535
    %v2584 = vpop.permute.xlu0 %2583
    %2587 = vset.pattern.permute.xlu0 0
    %2588 = vperm.xlu0 %2587, %v2536
    %v2589 = vpop.permute.xlu0 %2588
    %2592 = vset.pattern.permute.xlu0 0
    %2593 = vperm.xlu0 %2592, %v2537
    %v2594 = vpop.permute.xlu0 %2593
    %2597 = vset.pattern.permute.xlu0 0
    %2598 = vperm.xlu0 %2597, %v2538
    %v2599 = vpop.permute.xlu0 %2598
    %2602 = vset.pattern.permute.xlu0 0
    %2603 = vperm.xlu0 %2602, %v2539
    %v2604 = vpop.permute.xlu0 %2603
    %2607 = vset.pattern.permute.xlu0 0
    %2608 = vperm.xlu0 %2607, %v2540
    %v2609 = vpop.permute.xlu0 %2608
    %v2611 = vmul.f32 %v2544, %v714
    %v2612 = vmul.f32 %v2549, %v714
    %v2613 = vmul.f32 %v2554, %v714
    %v2614 = vmul.f32 %v2559, %v714
    %v2615 = vmul.f32 %v2564, %v714
    %v2616 = vmul.f32 %v2569, %v714
    %v2617 = vmul.f32 %v2574, %v714
    %v2618 = vmul.f32 %v2579, %v714
    %v2619 = vmul.f32 %v2584, %v714
    %v2620 = vmul.f32 %v2589, %v714
    %v2621 = vmul.f32 %v2594, %v714
    %v2622 = vmul.f32 %v2599, %v714
    %v2623 = vmul.f32 %v2604, %v714
    %v2624 = vmul.f32 %v2609, %v714
    %v2625 = vadd.f32 %v2512, %v2611
    %v2626 = vadd.f32 %v2513, %v2612
    %v2627 = vadd.f32 %v2514, %v2613
    %v2628 = vadd.f32 %v2515, %v2614
    %v2629 = vadd.f32 %v2516, %v2615
    %v2630 = vadd.f32 %v2517, %v2616
    %v2631 = vadd.f32 %v2518, %v2617
    %v2632 = vadd.f32 %v2519, %v2618
    %v2633 = vadd.f32 %v2520, %v2619
    %v2634 = vadd.f32 %v2521, %v2620
    %v2635 = vadd.f32 %v2522, %v2621
    %v2636 = vadd.f32 %v2523, %v2622
    %v2637 = vadd.f32 %v2524, %v2623
    %v2638 = vadd.f32 %v2525, %v2624
    %2639 = vset.pattern.permute.xlu0 1
    %2640 = vperm.xlu0 %2639, %v2527
    %v2641 = vpop.permute.xlu0 %2640
    %2643 = vset.pattern.permute.xlu0 1
    %2644 = vperm.xlu0 %2643, %v2528
    %v2645 = vpop.permute.xlu0 %2644
    %2647 = vset.pattern.permute.xlu0 1
    %2648 = vperm.xlu0 %2647, %v2529
    %v2649 = vpop.permute.xlu0 %2648
    %2651 = vset.pattern.permute.xlu0 1
    %2652 = vperm.xlu0 %2651, %v2530
    %v2653 = vpop.permute.xlu0 %2652
    %2655 = vset.pattern.permute.xlu0 1
    %2656 = vperm.xlu0 %2655, %v2531
    %v2657 = vpop.permute.xlu0 %2656
    %2659 = vset.pattern.permute.xlu0 1
    %2660 = vperm.xlu0 %2659, %v2532
    %v2661 = vpop.permute.xlu0 %2660
    %2663 = vset.pattern.permute.xlu0 1
    %2664 = vperm.xlu0 %2663, %v2533
    %v2665 = vpop.permute.xlu0 %2664
    %2667 = vset.pattern.permute.xlu0 1
    %2668 = vperm.xlu0 %2667, %v2534
    %v2669 = vpop.permute.xlu0 %2668
    %2671 = vset.pattern.permute.xlu0 1
    %2672 = vperm.xlu0 %2671, %v2535
    %v2673 = vpop.permute.xlu0 %2672
    %2675 = vset.pattern.permute.xlu0 1
    %2676 = vperm.xlu0 %2675, %v2536
    %v2677 = vpop.permute.xlu0 %2676
    %2679 = vset.pattern.permute.xlu0 1
    %2680 = vperm.xlu0 %2679, %v2537
    %v2681 = vpop.permute.xlu0 %2680
    %2683 = vset.pattern.permute.xlu0 1
    %2684 = vperm.xlu0 %2683, %v2538
    %v2685 = vpop.permute.xlu0 %2684
    %2687 = vset.pattern.permute.xlu0 1
    %2688 = vperm.xlu0 %2687, %v2539
    %v2689 = vpop.permute.xlu0 %2688
    %2691 = vset.pattern.permute.xlu0 1
    %2692 = vperm.xlu0 %2691, %v2540
    %v2693 = vpop.permute.xlu0 %2692
    %v2695 = vmul.f32 %v2641, %v814
    %v2696 = vmul.f32 %v2645, %v814
    %v2697 = vmul.f32 %v2649, %v814
    %v2698 = vmul.f32 %v2653, %v814
    %v2699 = vmul.f32 %v2657, %v814
    %v2700 = vmul.f32 %v2661, %v814
    %v2701 = vmul.f32 %v2665, %v814
    %v2702 = vmul.f32 %v2669, %v814
    %v2703 = vmul.f32 %v2673, %v814
    %v2704 = vmul.f32 %v2677, %v814
    %v2705 = vmul.f32 %v2681, %v814
    %v2706 = vmul.f32 %v2685, %v814
    %v2707 = vmul.f32 %v2689, %v814
    %v2708 = vmul.f32 %v2693, %v814
    %v2709 = vadd.f32 %v2625, %v2695
    %v2710 = vadd.f32 %v2626, %v2696
    %v2711 = vadd.f32 %v2627, %v2697
    %v2712 = vadd.f32 %v2628, %v2698
    %v2713 = vadd.f32 %v2629, %v2699
    %v2714 = vadd.f32 %v2630, %v2700
    %v2715 = vadd.f32 %v2631, %v2701
    %v2716 = vadd.f32 %v2632, %v2702
    %v2717 = vadd.f32 %v2633, %v2703
    %v2718 = vadd.f32 %v2634, %v2704
    %v2719 = vadd.f32 %v2635, %v2705
    %v2720 = vadd.f32 %v2636, %v2706
    %v2721 = vadd.f32 %v2637, %v2707
    %v2722 = vadd.f32 %v2638, %v2708
    %2723 = vset.pattern.permute.xlu0 2
    %2724 = vperm.xlu0 %2723, %v2527
    %v2725 = vpop.permute.xlu0 %2724
    %2727 = vset.pattern.permute.xlu0 2
    %2728 = vperm.xlu0 %2727, %v2528
    %v2729 = vpop.permute.xlu0 %2728
    %2731 = vset.pattern.permute.xlu0 2
    %2732 = vperm.xlu0 %2731, %v2529
    %v2733 = vpop.permute.xlu0 %2732
    %2735 = vset.pattern.permute.xlu0 2
    %2736 = vperm.xlu0 %2735, %v2530
    %v2737 = vpop.permute.xlu0 %2736
    %2739 = vset.pattern.permute.xlu0 2
    %2740 = vperm.xlu0 %2739, %v2531
    %v2741 = vpop.permute.xlu0 %2740
    %2743 = vset.pattern.permute.xlu0 2
    %2744 = vperm.xlu0 %2743, %v2532
    %v2745 = vpop.permute.xlu0 %2744
    %2747 = vset.pattern.permute.xlu0 2
    %2748 = vperm.xlu0 %2747, %v2533
    %v2749 = vpop.permute.xlu0 %2748
    %2751 = vset.pattern.permute.xlu0 2
    %2752 = vperm.xlu0 %2751, %v2534
    %v2753 = vpop.permute.xlu0 %2752
    %2755 = vset.pattern.permute.xlu0 2
    %2756 = vperm.xlu0 %2755, %v2535
    %v2757 = vpop.permute.xlu0 %2756
    %2759 = vset.pattern.permute.xlu0 2
    %2760 = vperm.xlu0 %2759, %v2536
    %v2761 = vpop.permute.xlu0 %2760
    %2763 = vset.pattern.permute.xlu0 2
    %2764 = vperm.xlu0 %2763, %v2537
    %v2765 = vpop.permute.xlu0 %2764
    %2767 = vset.pattern.permute.xlu0 2
    %2768 = vperm.xlu0 %2767, %v2538
    %v2769 = vpop.permute.xlu0 %2768
    %2771 = vset.pattern.permute.xlu0 2
    %2772 = vperm.xlu0 %2771, %v2539
    %v2773 = vpop.permute.xlu0 %2772
    %2775 = vset.pattern.permute.xlu0 2
    %2776 = vperm.xlu0 %2775, %v2540
    %v2777 = vpop.permute.xlu0 %2776
    %v2779 = vmul.f32 %v2725, %v914
    %v2780 = vmul.f32 %v2729, %v914
    %v2781 = vmul.f32 %v2733, %v914
    %v2782 = vmul.f32 %v2737, %v914
    %v2783 = vmul.f32 %v2741, %v914
    %v2784 = vmul.f32 %v2745, %v914
    %v2785 = vmul.f32 %v2749, %v914
    %v2786 = vmul.f32 %v2753, %v914
    %v2787 = vmul.f32 %v2757, %v914
    %v2788 = vmul.f32 %v2761, %v914
    %v2789 = vmul.f32 %v2765, %v914
    %v2790 = vmul.f32 %v2769, %v914
    %v2791 = vmul.f32 %v2773, %v914
    %v2792 = vmul.f32 %v2777, %v914
    %v2793 = vadd.f32 %v2709, %v2779
    %v2794 = vadd.f32 %v2710, %v2780
    %v2795 = vadd.f32 %v2711, %v2781
    %v2796 = vadd.f32 %v2712, %v2782
    %v2797 = vadd.f32 %v2713, %v2783
    %v2798 = vadd.f32 %v2714, %v2784
    %v2799 = vadd.f32 %v2715, %v2785
    %v2800 = vadd.f32 %v2716, %v2786
    %v2801 = vadd.f32 %v2717, %v2787
    %v2802 = vadd.f32 %v2718, %v2788
    %v2803 = vadd.f32 %v2719, %v2789
    %v2804 = vadd.f32 %v2720, %v2790
    %v2805 = vadd.f32 %v2721, %v2791
    %v2806 = vadd.f32 %v2722, %v2792
    %v2807 = vadd.f32 %v2793, %v951
    %v2808 = vadd.f32 %v2794, %v951
    %v2809 = vadd.f32 %v2795, %v951
    %v2810 = vadd.f32 %v2796, %v951
    %v2811 = vadd.f32 %v2797, %v951
    %v2812 = vadd.f32 %v2798, %v951
    %v2813 = vadd.f32 %v2799, %v951
    %v2814 = vadd.f32 %v2800, %v951
    %v2815 = vadd.f32 %v2801, %v951
    %v2816 = vadd.f32 %v2802, %v951
    %v2817 = vadd.f32 %v2803, %v951
    %v2818 = vadd.f32 %v2804, %v951
    %v2819 = vadd.f32 %v2805, %v951
    %v2820 = vadd.f32 %v2806, %v951
    %v2821 = vmax.f32 %v2807, 0.0
    %v2822 = vmax.f32 %v2808, 0.0
    %v2823 = vmax.f32 %v2809, 0.0
    %v2824 = vmax.f32 %v2810, 0.0
    %v2825 = vmax.f32 %v2811, 0.0
    %v2826 = vmax.f32 %v2812, 0.0
    %v2827 = vmax.f32 %v2813, 0.0
    %v2828 = vmax.f32 %v2814, 0.0
    %v2829 = vmax.f32 %v2815, 0.0
    %v2830 = vmax.f32 %v2816, 0.0
    %v2831 = vmax.f32 %v2817, 0.0
    %v2832 = vmax.f32 %v2818, 0.0
    %v2833 = vmax.f32 %v2819, 0.0
    %v2834 = vmax.f32 %v2820, 0.0
    %v2835 = vmax.f32 %v1994, %v2821
    %v2836 = vmax.f32 %v1995, %v2822
    %v2837 = vmax.f32 %v1996, %v2823
    %v2838 = vmax.f32 %v1997, %v2824
    %v2839 = vmax.f32 %v1998, %v2825
    %v2840 = vmax.f32 %v1999, %v2826
    %v2841 = vmax.f32 %v2000, %v2827
    %v2842 = vmax.f32 %v2001, %v2828
    %v2843 = vmax.f32 %v2002, %v2829
    %v2844 = vmax.f32 %v2003, %v2830
    %v2845 = vmax.f32 %v2004, %v2831
    %v2846 = vmax.f32 %v2005, %v2832
    %v2847 = vmax.f32 %v2006, %v2833
    %v2848 = vmax.f32 %v2007, %v2834
    %2849 = vst [vmem:[%s1993] sm:$0xff] %v2835
    %2850 = vst [vmem:[%s1993 + $0x8] sm:$0xff] %v2836
    %2851 = vst [vmem:[%s1993 + $0x10] sm:$0xff] %v2837
    %2852 = vst [vmem:[%s1993 + $0x18] sm:$0xff] %v2838
    %2853 = vst [vmem:[%s1993 + $0x20] sm:$0xff] %v2839
    %2854 = vst [vmem:[%s1993 + $0x28] sm:$0xff] %v2840
    %2855 = vst [vmem:[%s1993 + $0x30] sm:$0xff] %v2841
    %2856 = vst [vmem:[%s1993 + $0x40] sm:$0xff] %v2842
    %2857 = vst [vmem:[%s1993 + $0x48] sm:$0xff] %v2843
    %2858 = vst [vmem:[%s1993 + $0x50] sm:$0xff] %v2844
    %2859 = vst [vmem:[%s1993 + $0x58] sm:$0xff] %v2845
    %2860 = vst [vmem:[%s1993 + $0x60] sm:$0xff] %v2846
    %2861 = vst [vmem:[%s1993 + $0x68] sm:$0xff] %v2847
    %2862 = vst [vmem:[%s1993 + $0x70] sm:$0xff] %v2848
    %v2863 = vld [vmem:[%s1993 + $0x1] sm:$0x7f]
    %v2864 = vld [vmem:[%s1993 + $0x9] sm:$0x7f]
    %v2865 = vld [vmem:[%s1993 + $0x11] sm:$0x7f]
    %v2866 = vld [vmem:[%s1993 + $0x19] sm:$0x7f]
    %v2867 = vld [vmem:[%s1993 + $0x21] sm:$0x7f]
    %v2868 = vld [vmem:[%s1993 + $0x29] sm:$0x7f]
    %v2869 = vld [vmem:[%s1993 + $0x31] sm:$0x7f]
    %v2870 = vld [vmem:[%s1993 + $0x41] sm:$0x7f]
    %v2871 = vld [vmem:[%s1993 + $0x49] sm:$0x7f]
    %v2872 = vld [vmem:[%s1993 + $0x51] sm:$0x7f]
    %v2873 = vld [vmem:[%s1993 + $0x59] sm:$0x7f]
    %v2874 = vld [vmem:[%s1993 + $0x61] sm:$0x7f]
    %v2875 = vld [vmem:[%s1993 + $0x69] sm:$0x7f]
    %v2876 = vld [vmem:[%s1993 + $0x71] sm:$0x7f]
    %v2877 = vld [vmem:[%s0] sm:$0x7f]
    %v2878 = vld [vmem:[%s0 + $0x8] sm:$0x7f]
    %v2879 = vld [vmem:[%s0 + $0x10] sm:$0x7f]
    %v2880 = vld [vmem:[%s0 + $0x18] sm:$0x7f]
    %v2881 = vld [vmem:[%s0 + $0x20] sm:$0x7f]
    %v2882 = vld [vmem:[%s0 + $0x28] sm:$0x7f]
    %v2883 = vld [vmem:[%s0 + $0x30] sm:$0x7f]
    %v2884 = vld [vmem:[%s0 + $0x40] sm:$0x7f]
    %v2885 = vld [vmem:[%s0 + $0x48] sm:$0x7f]
    %v2886 = vld [vmem:[%s0 + $0x50] sm:$0x7f]
    %v2887 = vld [vmem:[%s0 + $0x58] sm:$0x7f]
    %v2888 = vld [vmem:[%s0 + $0x60] sm:$0x7f]
    %v2889 = vld [vmem:[%s0 + $0x68] sm:$0x7f]
    %v2890 = vld [vmem:[%s0 + $0x70] sm:$0x7f]
    %2892 = vset.pattern.permute.xlu0 10
    %2893 = vperm.xlu0 %2892, %v2877
    %v2894 = vpop.permute.xlu0 %2893
    %2897 = vset.pattern.permute.xlu0 10
    %2898 = vperm.xlu0 %2897, %v2878
    %v2899 = vpop.permute.xlu0 %2898
    %2902 = vset.pattern.permute.xlu0 10
    %2903 = vperm.xlu0 %2902, %v2879
    %v2904 = vpop.permute.xlu0 %2903
    %2907 = vset.pattern.permute.xlu0 10
    %2908 = vperm.xlu0 %2907, %v2880
    %v2909 = vpop.permute.xlu0 %2908
    %2912 = vset.pattern.permute.xlu0 10
    %2913 = vperm.xlu0 %2912, %v2881
    %v2914 = vpop.permute.xlu0 %2913
    %2917 = vset.pattern.permute.xlu0 10
    %2918 = vperm.xlu0 %2917, %v2882
    %v2919 = vpop.permute.xlu0 %2918
    %2922 = vset.pattern.permute.xlu0 10
    %2923 = vperm.xlu0 %2922, %v2883
    %v2924 = vpop.permute.xlu0 %2923
    %2927 = vset.pattern.permute.xlu0 10
    %2928 = vperm.xlu0 %2927, %v2884
    %v2929 = vpop.permute.xlu0 %2928
    %2932 = vset.pattern.permute.xlu0 10
    %2933 = vperm.xlu0 %2932, %v2885
    %v2934 = vpop.permute.xlu0 %2933
    %2937 = vset.pattern.permute.xlu0 10
    %2938 = vperm.xlu0 %2937, %v2886
    %v2939 = vpop.permute.xlu0 %2938
    %2942 = vset.pattern.permute.xlu0 10
    %2943 = vperm.xlu0 %2942, %v2887
    %v2944 = vpop.permute.xlu0 %2943
    %2947 = vset.pattern.permute.xlu0 10
    %2948 = vperm.xlu0 %2947, %v2888
    %v2949 = vpop.permute.xlu0 %2948
    %2952 = vset.pattern.permute.xlu0 10
    %2953 = vperm.xlu0 %2952, %v2889
    %v2954 = vpop.permute.xlu0 %2953
    %2957 = vset.pattern.permute.xlu0 10
    %2958 = vperm.xlu0 %2957, %v2890
    %v2959 = vpop.permute.xlu0 %2958
    %v2961 = vmul.f32 %v2894, %v130
    %v2962 = vmul.f32 %v2899, %v130
    %v2963 = vmul.f32 %v2904, %v130
    %v2964 = vmul.f32 %v2909, %v130
    %v2965 = vmul.f32 %v2914, %v130
    %v2966 = vmul.f32 %v2919, %v130
    %v2967 = vmul.f32 %v2924, %v130
    %v2968 = vmul.f32 %v2929, %v130
    %v2969 = vmul.f32 %v2934, %v130
    %v2970 = vmul.f32 %v2939, %v130
    %v2971 = vmul.f32 %v2944, %v130
    %v2972 = vmul.f32 %v2949, %v130
    %v2973 = vmul.f32 %v2954, %v130
    %v2974 = vmul.f32 %v2959, %v130
    %2975 = vset.pattern.permute.xlu0 11
    %2976 = vperm.xlu0 %2975, %v2877
    %v2977 = vpop.permute.xlu0 %2976
    %2979 = vset.pattern.permute.xlu0 11
    %2980 = vperm.xlu0 %2979, %v2878
    %v2981 = vpop.permute.xlu0 %2980
    %2983 = vset.pattern.permute.xlu0 11
    %2984 = vperm.xlu0 %2983, %v2879
    %v2985 = vpop.permute.xlu0 %2984
    %2987 = vset.pattern.permute.xlu0 11
    %2988 = vperm.xlu0 %2987, %v2880
    %v2989 = vpop.permute.xlu0 %2988
    %2991 = vset.pattern.permute.xlu0 11
    %2992 = vperm.xlu0 %2991, %v2881
    %v2993 = vpop.permute.xlu0 %2992
    %2995 = vset.pattern.permute.xlu0 11
    %2996 = vperm.xlu0 %2995, %v2882
    %v2997 = vpop.permute.xlu0 %2996
    %2999 = vset.pattern.permute.xlu0 11
    %3000 = vperm.xlu0 %2999, %v2883
    %v3001 = vpop.permute.xlu0 %3000
    %3003 = vset.pattern.permute.xlu0 11
    %3004 = vperm.xlu0 %3003, %v2884
    %v3005 = vpop.permute.xlu0 %3004
    %3007 = vset.pattern.permute.xlu0 11
    %3008 = vperm.xlu0 %3007, %v2885
    %v3009 = vpop.permute.xlu0 %3008
    %3011 = vset.pattern.permute.xlu0 11
    %3012 = vperm.xlu0 %3011, %v2886
    %v3013 = vpop.permute.xlu0 %3012
    %3015 = vset.pattern.permute.xlu0 11
    %3016 = vperm.xlu0 %3015, %v2887
    %v3017 = vpop.permute.xlu0 %3016
    %3019 = vset.pattern.permute.xlu0 11
    %3020 = vperm.xlu0 %3019, %v2888
    %v3021 = vpop.permute.xlu0 %3020
    %3023 = vset.pattern.permute.xlu0 11
    %3024 = vperm.xlu0 %3023, %v2889
    %v3025 = vpop.permute.xlu0 %3024
    %3027 = vset.pattern.permute.xlu0 11
    %3028 = vperm.xlu0 %3027, %v2890
    %v3029 = vpop.permute.xlu0 %3028
    %v3031 = vmul.f32 %v2977, %v214
    %v3032 = vmul.f32 %v2981, %v214
    %v3033 = vmul.f32 %v2985, %v214
    %v3034 = vmul.f32 %v2989, %v214
    %v3035 = vmul.f32 %v2993, %v214
    %v3036 = vmul.f32 %v2997, %v214
    %v3037 = vmul.f32 %v3001, %v214
    %v3038 = vmul.f32 %v3005, %v214
    %v3039 = vmul.f32 %v3009, %v214
    %v3040 = vmul.f32 %v3013, %v214
    %v3041 = vmul.f32 %v3017, %v214
    %v3042 = vmul.f32 %v3021, %v214
    %v3043 = vmul.f32 %v3025, %v214
    %v3044 = vmul.f32 %v3029, %v214
    %v3045 = vadd.f32 %v2961, %v3031
    %v3046 = vadd.f32 %v2962, %v3032
    %v3047 = vadd.f32 %v2963, %v3033
    %v3048 = vadd.f32 %v2964, %v3034
    %v3049 = vadd.f32 %v2965, %v3035
    %v3050 = vadd.f32 %v2966, %v3036
    %v3051 = vadd.f32 %v2967, %v3037
    %v3052 = vadd.f32 %v2968, %v3038
    %v3053 = vadd.f32 %v2969, %v3039
    %v3054 = vadd.f32 %v2970, %v3040
    %v3055 = vadd.f32 %v2971, %v3041
    %v3056 = vadd.f32 %v2972, %v3042
    %v3057 = vadd.f32 %v2973, %v3043
    %v3058 = vadd.f32 %v2974, %v3044
    %v3059 = vld [vmem:[%s0 + $0x1] sm:$0x7f]
    %v3060 = vld [vmem:[%s0 + $0x9] sm:$0x7f]
    %v3061 = vld [vmem:[%s0 + $0x11] sm:$0x7f]
    %v3062 = vld [vmem:[%s0 + $0x19] sm:$0x7f]
    %v3063 = vld [vmem:[%s0 + $0x21] sm:$0x7f]
    %v3064 = vld [vmem:[%s0 + $0x29] sm:$0x7f]
    %v3065 = vld [vmem:[%s0 + $0x31] sm:$0x7f]
    %v3066 = vld [vmem:[%s0 + $0x41] sm:$0x7f]
    %v3067 = vld [vmem:[%s0 + $0x49] sm:$0x7f]
    %v3068 = vld [vmem:[%s0 + $0x51] sm:$0x7f]
    %v3069 = vld [vmem:[%s0 + $0x59] sm:$0x7f]
    %v3070 = vld [vmem:[%s0 + $0x61] sm:$0x7f]
    %v3071 = vld [vmem:[%s0 + $0x69] sm:$0x7f]
    %v3072 = vld [vmem:[%s0 + $0x71] sm:$0x7f]
    %3074 = vset.pattern.permute.xlu0 8
    %3075 = vperm.xlu0 %3074, %v3059
    %v3076 = vpop.permute.xlu0 %3075
    %3079 = vset.pattern.permute.xlu0 8
    %3080 = vperm.xlu0 %3079, %v3060
    %v3081 = vpop.permute.xlu0 %3080
    %3084 = vset.pattern.permute.xlu0 8
    %3085 = vperm.xlu0 %3084, %v3061
    %v3086 = vpop.permute.xlu0 %3085
    %3089 = vset.pattern.permute.xlu0 8
    %3090 = vperm.xlu0 %3089, %v3062
    %v3091 = vpop.permute.xlu0 %3090
    %3094 = vset.pattern.permute.xlu0 8
    %3095 = vperm.xlu0 %3094, %v3063
    %v3096 = vpop.permute.xlu0 %3095
    %3099 = vset.pattern.permute.xlu0 8
    %3100 = vperm.xlu0 %3099, %v3064
    %v3101 = vpop.permute.xlu0 %3100
    %3104 = vset.pattern.permute.xlu0 8
    %3105 = vperm.xlu0 %3104, %v3065
    %v3106 = vpop.permute.xlu0 %3105
    %3109 = vset.pattern.permute.xlu0 8
    %3110 = vperm.xlu0 %3109, %v3066
    %v3111 = vpop.permute.xlu0 %3110
    %3114 = vset.pattern.permute.xlu0 8
    %3115 = vperm.xlu0 %3114, %v3067
    %v3116 = vpop.permute.xlu0 %3115
    %3119 = vset.pattern.permute.xlu0 8
    %3120 = vperm.xlu0 %3119, %v3068
    %v3121 = vpop.permute.xlu0 %3120
    %3124 = vset.pattern.permute.xlu0 8
    %3125 = vperm.xlu0 %3124, %v3069
    %v3126 = vpop.permute.xlu0 %3125
    %3129 = vset.pattern.permute.xlu0 8
    %3130 = vperm.xlu0 %3129, %v3070
    %v3131 = vpop.permute.xlu0 %3130
    %3134 = vset.pattern.permute.xlu0 8
    %3135 = vperm.xlu0 %3134, %v3071
    %v3136 = vpop.permute.xlu0 %3135
    %3139 = vset.pattern.permute.xlu0 8
    %3140 = vperm.xlu0 %3139, %v3072
    %v3141 = vpop.permute.xlu0 %3140
    %v3143 = vmul.f32 %v3076, %v314
    %v3144 = vmul.f32 %v3081, %v314
    %v3145 = vmul.f32 %v3086, %v314
    %v3146 = vmul.f32 %v3091, %v314
    %v3147 = vmul.f32 %v3096, %v314
    %v3148 = vmul.f32 %v3101, %v314
    %v3149 = vmul.f32 %v3106, %v314
    %v3150 = vmul.f32 %v3111, %v314
    %v3151 = vmul.f32 %v3116, %v314
    %v3152 = vmul.f32 %v3121, %v314
    %v3153 = vmul.f32 %v3126, %v314
    %v3154 = vmul.f32 %v3131, %v314
    %v3155 = vmul.f32 %v3136, %v314
    %v3156 = vmul.f32 %v3141, %v314
    %v3157 = vadd.f32 %v3045, %v3143
    %v3158 = vadd.f32 %v3046, %v3144
    %v3159 = vadd.f32 %v3047, %v3145
    %v3160 = vadd.f32 %v3048, %v3146
    %v3161 = vadd.f32 %v3049, %v3147
    %v3162 = vadd.f32 %v3050, %v3148
    %v3163 = vadd.f32 %v3051, %v3149
    %v3164 = vadd.f32 %v3052, %v3150
    %v3165 = vadd.f32 %v3053, %v3151
    %v3166 = vadd.f32 %v3054, %v3152
    %v3167 = vadd.f32 %v3055, %v3153
    %v3168 = vadd.f32 %v3056, %v3154
    %v3169 = vadd.f32 %v3057, %v3155
    %v3170 = vadd.f32 %v3058, %v3156
    %3171 = vset.pattern.permute.xlu0 14
    %3172 = vperm.xlu0 %3171, %v2877
    %v3173 = vpop.permute.xlu0 %3172
    %3175 = vset.pattern.permute.xlu0 14
    %3176 = vperm.xlu0 %3175, %v2878
    %v3177 = vpop.permute.xlu0 %3176
    %3179 = vset.pattern.permute.xlu0 14
    %3180 = vperm.xlu0 %3179, %v2879
    %v3181 = vpop.permute.xlu0 %3180
    %3183 = vset.pattern.permute.xlu0 14
    %3184 = vperm.xlu0 %3183, %v2880
    %v3185 = vpop.permute.xlu0 %3184
    %3187 = vset.pattern.permute.xlu0 14
    %3188 = vperm.xlu0 %3187, %v2881
    %v3189 = vpop.permute.xlu0 %3188
    %3191 = vset.pattern.permute.xlu0 14
    %3192 = vperm.xlu0 %3191, %v2882
    %v3193 = vpop.permute.xlu0 %3192
    %3195 = vset.pattern.permute.xlu0 14
    %3196 = vperm.xlu0 %3195, %v2883
    %v3197 = vpop.permute.xlu0 %3196
    %3199 = vset.pattern.permute.xlu0 14
    %3200 = vperm.xlu0 %3199, %v2884
    %v3201 = vpop.permute.xlu0 %3200
    %3203 = vset.pattern.permute.xlu0 14
    %3204 = vperm.xlu0 %3203, %v2885
    %v3205 = vpop.permute.xlu0 %3204
    %3207 = vset.pattern.permute.xlu0 14
    %3208 = vperm.xlu0 %3207, %v2886
    %v3209 = vpop.permute.xlu0 %3208
    %3211 = vset.pattern.permute.xlu0 14
    %3212 = vperm.xlu0 %3211, %v2887
    %v3213 = vpop.permute.xlu0 %3212
    %3215 = vset.pattern.permute.xlu0 14
    %3216 = vperm.xlu0 %3215, %v2888
    %v3217 = vpop.permute.xlu0 %3216
    %3219 = vset.pattern.permute.xlu0 14
    %3220 = vperm.xlu0 %3219, %v2889
    %v3221 = vpop.permute.xlu0 %3220
    %3223 = vset.pattern.permute.xlu0 14
    %3224 = vperm.xlu0 %3223, %v2890
    %v3225 = vpop.permute.xlu0 %3224
    %v3227 = vmul.f32 %v3173, %v414
    %v3228 = vmul.f32 %v3177, %v414
    %v3229 = vmul.f32 %v3181, %v414
    %v3230 = vmul.f32 %v3185, %v414
    %v3231 = vmul.f32 %v3189, %v414
    %v3232 = vmul.f32 %v3193, %v414
    %v3233 = vmul.f32 %v3197, %v414
    %v3234 = vmul.f32 %v3201, %v414
    %v3235 = vmul.f32 %v3205, %v414
    %v3236 = vmul.f32 %v3209, %v414
    %v3237 = vmul.f32 %v3213, %v414
    %v3238 = vmul.f32 %v3217, %v414
    %v3239 = vmul.f32 %v3221, %v414
    %v3240 = vmul.f32 %v3225, %v414
    %v3241 = vadd.f32 %v3157, %v3227
    %v3242 = vadd.f32 %v3158, %v3228
    %v3243 = vadd.f32 %v3159, %v3229
    %v3244 = vadd.f32 %v3160, %v3230
    %v3245 = vadd.f32 %v3161, %v3231
    %v3246 = vadd.f32 %v3162, %v3232
    %v3247 = vadd.f32 %v3163, %v3233
    %v3248 = vadd.f32 %v3164, %v3234
    %v3249 = vadd.f32 %v3165, %v3235
    %v3250 = vadd.f32 %v3166, %v3236
    %v3251 = vadd.f32 %v3167, %v3237
    %v3252 = vadd.f32 %v3168, %v3238
    %v3253 = vadd.f32 %v3169, %v3239
    %v3254 = vadd.f32 %v3170, %v3240
    %3255 = vset.pattern.permute.xlu0 15
    %3256 = vperm.xlu0 %3255, %v2877
    %v3257 = vpop.permute.xlu0 %3256
    %3259 = vset.pattern.permute.xlu0 15
    %3260 = vperm.xlu0 %3259, %v2878
    %v3261 = vpop.permute.xlu0 %3260
    %3263 = vset.pattern.permute.xlu0 15
    %3264 = vperm.xlu0 %3263, %v2879
    %v3265 = vpop.permute.xlu0 %3264
    %3267 = vset.pattern.permute.xlu0 15
    %3268 = vperm.xlu0 %3267, %v2880
    %v3269 = vpop.permute.xlu0 %3268
    %3271 = vset.pattern.permute.xlu0 15
    %3272 = vperm.xlu0 %3271, %v2881
    %v3273 = vpop.permute.xlu0 %3272
    %3275 = vset.pattern.permute.xlu0 15
    %3276 = vperm.xlu0 %3275, %v2882
    %v3277 = vpop.permute.xlu0 %3276
    %3279 = vset.pattern.permute.xlu0 15
    %3280 = vperm.xlu0 %3279, %v2883
    %v3281 = vpop.permute.xlu0 %3280
    %3283 = vset.pattern.permute.xlu0 15
    %3284 = vperm.xlu0 %3283, %v2884
    %v3285 = vpop.permute.xlu0 %3284
    %3287 = vset.pattern.permute.xlu0 15
    %3288 = vperm.xlu0 %3287, %v2885
    %v3289 = vpop.permute.xlu0 %3288
    %3291 = vset.pattern.permute.xlu0 15
    %3292 = vperm.xlu0 %3291, %v2886
    %v3293 = vpop.permute.xlu0 %3292
    %3295 = vset.pattern.permute.xlu0 15
    %3296 = vperm.xlu0 %3295, %v2887
    %v3297 = vpop.permute.xlu0 %3296
    %3299 = vset.pattern.permute.xlu0 15
    %3300 = vperm.xlu0 %3299, %v2888
    %v3301 = vpop.permute.xlu0 %3300
    %3303 = vset.pattern.permute.xlu0 15
    %3304 = vperm.xlu0 %3303, %v2889
    %v3305 = vpop.permute.xlu0 %3304
    %3307 = vset.pattern.permute.xlu0 15
    %3308 = vperm.xlu0 %3307, %v2890
    %v3309 = vpop.permute.xlu0 %3308
    %v3311 = vmul.f32 %v3257, %v514
    %v3312 = vmul.f32 %v3261, %v514
    %v3313 = vmul.f32 %v3265, %v514
    %v3314 = vmul.f32 %v3269, %v514
    %v3315 = vmul.f32 %v3273, %v514
    %v3316 = vmul.f32 %v3277, %v514
    %v3317 = vmul.f32 %v3281, %v514
    %v3318 = vmul.f32 %v3285, %v514
    %v3319 = vmul.f32 %v3289, %v514
    %v3320 = vmul.f32 %v3293, %v514
    %v3321 = vmul.f32 %v3297, %v514
    %v3322 = vmul.f32 %v3301, %v514
    %v3323 = vmul.f32 %v3305, %v514
    %v3324 = vmul.f32 %v3309, %v514
    %v3325 = vadd.f32 %v3241, %v3311
    %v3326 = vadd.f32 %v3242, %v3312
    %v3327 = vadd.f32 %v3243, %v3313
    %v3328 = vadd.f32 %v3244, %v3314
    %v3329 = vadd.f32 %v3245, %v3315
    %v3330 = vadd.f32 %v3246, %v3316
    %v3331 = vadd.f32 %v3247, %v3317
    %v3332 = vadd.f32 %v3248, %v3318
    %v3333 = vadd.f32 %v3249, %v3319
    %v3334 = vadd.f32 %v3250, %v3320
    %v3335 = vadd.f32 %v3251, %v3321
    %v3336 = vadd.f32 %v3252, %v3322
    %v3337 = vadd.f32 %v3253, %v3323
    %v3338 = vadd.f32 %v3254, %v3324
    %3339 = vset.pattern.permute.xlu0 12
    %3340 = vperm.xlu0 %3339, %v3059
    %v3341 = vpop.permute.xlu0 %3340
    %3343 = vset.pattern.permute.xlu0 12
    %3344 = vperm.xlu0 %3343, %v3060
    %v3345 = vpop.permute.xlu0 %3344
    %3347 = vset.pattern.permute.xlu0 12
    %3348 = vperm.xlu0 %3347, %v3061
    %v3349 = vpop.permute.xlu0 %3348
    %3351 = vset.pattern.permute.xlu0 12
    %3352 = vperm.xlu0 %3351, %v3062
    %v3353 = vpop.permute.xlu0 %3352
    %3355 = vset.pattern.permute.xlu0 12
    %3356 = vperm.xlu0 %3355, %v3063
    %v3357 = vpop.permute.xlu0 %3356
    %3359 = vset.pattern.permute.xlu0 12
    %3360 = vperm.xlu0 %3359, %v3064
    %v3361 = vpop.permute.xlu0 %3360
    %3363 = vset.pattern.permute.xlu0 12
    %3364 = vperm.xlu0 %3363, %v3065
    %v3365 = vpop.permute.xlu0 %3364
    %3367 = vset.pattern.permute.xlu0 12
    %3368 = vperm.xlu0 %3367, %v3066
    %v3369 = vpop.permute.xlu0 %3368
    %3371 = vset.pattern.permute.xlu0 12
    %3372 = vperm.xlu0 %3371, %v3067
    %v3373 = vpop.permute.xlu0 %3372
    %3375 = vset.pattern.permute.xlu0 12
    %3376 = vperm.xlu0 %3375, %v3068
    %v3377 = vpop.permute.xlu0 %3376
    %3379 = vset.pattern.permute.xlu0 12
    %3380 = vperm.xlu0 %3379, %v3069
    %v3381 = vpop.permute.xlu0 %3380
    %3383 = vset.pattern.permute.xlu0 12
    %3384 = vperm.xlu0 %3383, %v3070
    %v3385 = vpop.permute.xlu0 %3384
    %3387 = vset.pattern.permute.xlu0 12
    %3388 = vperm.xlu0 %3387, %v3071
    %v3389 = vpop.permute.xlu0 %3388
    %3391 = vset.pattern.permute.xlu0 12
    %3392 = vperm.xlu0 %3391, %v3072
    %v3393 = vpop.permute.xlu0 %3392
    %v3395 = vmul.f32 %v3341, %v614
    %v3396 = vmul.f32 %v3345, %v614
    %v3397 = vmul.f32 %v3349, %v614
    %v3398 = vmul.f32 %v3353, %v614
    %v3399 = vmul.f32 %v3357, %v614
    %v3400 = vmul.f32 %v3361, %v614
    %v3401 = vmul.f32 %v3365, %v614
    %v3402 = vmul.f32 %v3369, %v614
    %v3403 = vmul.f32 %v3373, %v614
    %v3404 = vmul.f32 %v3377, %v614
    %v3405 = vmul.f32 %v3381, %v614
    %v3406 = vmul.f32 %v3385, %v614
    %v3407 = vmul.f32 %v3389, %v614
    %v3408 = vmul.f32 %v3393, %v614
    %v3409 = vadd.f32 %v3325, %v3395
    %v3410 = vadd.f32 %v3326, %v3396
    %v3411 = vadd.f32 %v3327, %v3397
    %v3412 = vadd.f32 %v3328, %v3398
    %v3413 = vadd.f32 %v3329, %v3399
    %v3414 = vadd.f32 %v3330, %v3400
    %v3415 = vadd.f32 %v3331, %v3401
    %v3416 = vadd.f32 %v3332, %v3402
    %v3417 = vadd.f32 %v3333, %v3403
    %v3418 = vadd.f32 %v3334, %v3404
    %v3419 = vadd.f32 %v3335, %v3405
    %v3420 = vadd.f32 %v3336, %v3406
    %v3421 = vadd.f32 %v3337, %v3407
    %v3422 = vadd.f32 %v3338, %v3408
    %v3423 = vld [vmem:[%s2526] sm:$0x7f]
    %v3424 = vld [vmem:[%s2526 + $0x8] sm:$0x7f]
    %v3425 = vld [vmem:[%s2526 + $0x10] sm:$0x7f]
    %v3426 = vld [vmem:[%s2526 + $0x18] sm:$0x7f]
    %v3427 = vld [vmem:[%s2526 + $0x20] sm:$0x7f]
    %v3428 = vld [vmem:[%s2526 + $0x28] sm:$0x7f]
    %v3429 = vld [vmem:[%s2526 + $0x30] sm:$0x7f]
    %v3430 = vld [vmem:[%s2526 + $0x40] sm:$0x7f]
    %v3431 = vld [vmem:[%s2526 + $0x48] sm:$0x7f]
    %v3432 = vld [vmem:[%s2526 + $0x50] sm:$0x7f]
    %v3433 = vld [vmem:[%s2526 + $0x58] sm:$0x7f]
    %v3434 = vld [vmem:[%s2526 + $0x60] sm:$0x7f]
    %v3435 = vld [vmem:[%s2526 + $0x68] sm:$0x7f]
    %v3436 = vld [vmem:[%s2526 + $0x70] sm:$0x7f]
    %3438 = vset.pattern.permute.xlu0 2
    %3439 = vperm.xlu0 %3438, %v3423
    %v3440 = vpop.permute.xlu0 %3439
    %3443 = vset.pattern.permute.xlu0 2
    %3444 = vperm.xlu0 %3443, %v3424
    %v3445 = vpop.permute.xlu0 %3444
    %3448 = vset.pattern.permute.xlu0 2
    %3449 = vperm.xlu0 %3448, %v3425
    %v3450 = vpop.permute.xlu0 %3449
    %3453 = vset.pattern.permute.xlu0 2
    %3454 = vperm.xlu0 %3453, %v3426
    %v3455 = vpop.permute.xlu0 %3454
    %3458 = vset.pattern.permute.xlu0 2
    %3459 = vperm.xlu0 %3458, %v3427
    %v3460 = vpop.permute.xlu0 %3459
    %3463 = vset.pattern.permute.xlu0 2
    %3464 = vperm.xlu0 %3463, %v3428
    %v3465 = vpop.permute.xlu0 %3464
    %3468 = vset.pattern.permute.xlu0 2
    %3469 = vperm.xlu0 %3468, %v3429
    %v3470 = vpop.permute.xlu0 %3469
    %3473 = vset.pattern.permute.xlu0 2
    %3474 = vperm.xlu0 %3473, %v3430
    %v3475 = vpop.permute.xlu0 %3474
    %3478 = vset.pattern.permute.xlu0 2
    %3479 = vperm.xlu0 %3478, %v3431
    %v3480 = vpop.permute.xlu0 %3479
    %3483 = vset.pattern.permute.xlu0 2
    %3484 = vperm.xlu0 %3483, %v3432
    %v3485 = vpop.permute.xlu0 %3484
    %3488 = vset.pattern.permute.xlu0 2
    %3489 = vperm.xlu0 %3488, %v3433
    %v3490 = vpop.permute.xlu0 %3489
    %3493 = vset.pattern.permute.xlu0 2
    %3494 = vperm.xlu0 %3493, %v3434
    %v3495 = vpop.permute.xlu0 %3494
    %3498 = vset.pattern.permute.xlu0 2
    %3499 = vperm.xlu0 %3498, %v3435
    %v3500 = vpop.permute.xlu0 %3499
    %3503 = vset.pattern.permute.xlu0 2
    %3504 = vperm.xlu0 %3503, %v3436
    %v3505 = vpop.permute.xlu0 %3504
    %v3507 = vmul.f32 %v3440, %v714
    %v3508 = vmul.f32 %v3445, %v714
    %v3509 = vmul.f32 %v3450, %v714
    %v3510 = vmul.f32 %v3455, %v714
    %v3511 = vmul.f32 %v3460, %v714
    %v3512 = vmul.f32 %v3465, %v714
    %v3513 = vmul.f32 %v3470, %v714
    %v3514 = vmul.f32 %v3475, %v714
    %v3515 = vmul.f32 %v3480, %v714
    %v3516 = vmul.f32 %v3485, %v714
    %v3517 = vmul.f32 %v3490, %v714
    %v3518 = vmul.f32 %v3495, %v714
    %v3519 = vmul.f32 %v3500, %v714
    %v3520 = vmul.f32 %v3505, %v714
    %v3521 = vadd.f32 %v3409, %v3507
    %v3522 = vadd.f32 %v3410, %v3508
    %v3523 = vadd.f32 %v3411, %v3509
    %v3524 = vadd.f32 %v3412, %v3510
    %v3525 = vadd.f32 %v3413, %v3511
    %v3526 = vadd.f32 %v3414, %v3512
    %v3527 = vadd.f32 %v3415, %v3513
    %v3528 = vadd.f32 %v3416, %v3514
    %v3529 = vadd.f32 %v3417, %v3515
    %v3530 = vadd.f32 %v3418, %v3516
    %v3531 = vadd.f32 %v3419, %v3517
    %v3532 = vadd.f32 %v3420, %v3518
    %v3533 = vadd.f32 %v3421, %v3519
    %v3534 = vadd.f32 %v3422, %v3520
    %3535 = vset.pattern.permute.xlu0 3
    %3536 = vperm.xlu0 %3535, %v3423
    %v3537 = vpop.permute.xlu0 %3536
    %3539 = vset.pattern.permute.xlu0 3
    %3540 = vperm.xlu0 %3539, %v3424
    %v3541 = vpop.permute.xlu0 %3540
    %3543 = vset.pattern.permute.xlu0 3
    %3544 = vperm.xlu0 %3543, %v3425
    %v3545 = vpop.permute.xlu0 %3544
    %3547 = vset.pattern.permute.xlu0 3
    %3548 = vperm.xlu0 %3547, %v3426
    %v3549 = vpop.permute.xlu0 %3548
    %3551 = vset.pattern.permute.xlu0 3
    %3552 = vperm.xlu0 %3551, %v3427
    %v3553 = vpop.permute.xlu0 %3552
    %3555 = vset.pattern.permute.xlu0 3
    %3556 = vperm.xlu0 %3555, %v3428
    %v3557 = vpop.permute.xlu0 %3556
    %3559 = vset.pattern.permute.xlu0 3
    %3560 = vperm.xlu0 %3559, %v3429
    %v3561 = vpop.permute.xlu0 %3560
    %3563 = vset.pattern.permute.xlu0 3
    %3564 = vperm.xlu0 %3563, %v3430
    %v3565 = vpop.permute.xlu0 %3564
    %3567 = vset.pattern.permute.xlu0 3
    %3568 = vperm.xlu0 %3567, %v3431
    %v3569 = vpop.permute.xlu0 %3568
    %3571 = vset.pattern.permute.xlu0 3
    %3572 = vperm.xlu0 %3571, %v3432
    %v3573 = vpop.permute.xlu0 %3572
    %3575 = vset.pattern.permute.xlu0 3
    %3576 = vperm.xlu0 %3575, %v3433
    %v3577 = vpop.permute.xlu0 %3576
    %3579 = vset.pattern.permute.xlu0 3
    %3580 = vperm.xlu0 %3579, %v3434
    %v3581 = vpop.permute.xlu0 %3580
    %3583 = vset.pattern.permute.xlu0 3
    %3584 = vperm.xlu0 %3583, %v3435
    %v3585 = vpop.permute.xlu0 %3584
    %3587 = vset.pattern.permute.xlu0 3
    %3588 = vperm.xlu0 %3587, %v3436
    %v3589 = vpop.permute.xlu0 %3588
    %v3591 = vmul.f32 %v3537, %v814
    %v3592 = vmul.f32 %v3541, %v814
    %v3593 = vmul.f32 %v3545, %v814
    %v3594 = vmul.f32 %v3549, %v814
    %v3595 = vmul.f32 %v3553, %v814
    %v3596 = vmul.f32 %v3557, %v814
    %v3597 = vmul.f32 %v3561, %v814
    %v3598 = vmul.f32 %v3565, %v814
    %v3599 = vmul.f32 %v3569, %v814
    %v3600 = vmul.f32 %v3573, %v814
    %v3601 = vmul.f32 %v3577, %v814
    %v3602 = vmul.f32 %v3581, %v814
    %v3603 = vmul.f32 %v3585, %v814
    %v3604 = vmul.f32 %v3589, %v814
    %v3605 = vadd.f32 %v3521, %v3591
    %v3606 = vadd.f32 %v3522, %v3592
    %v3607 = vadd.f32 %v3523, %v3593
    %v3608 = vadd.f32 %v3524, %v3594
    %v3609 = vadd.f32 %v3525, %v3595
    %v3610 = vadd.f32 %v3526, %v3596
    %v3611 = vadd.f32 %v3527, %v3597
    %v3612 = vadd.f32 %v3528, %v3598
    %v3613 = vadd.f32 %v3529, %v3599
    %v3614 = vadd.f32 %v3530, %v3600
    %v3615 = vadd.f32 %v3531, %v3601
    %v3616 = vadd.f32 %v3532, %v3602
    %v3617 = vadd.f32 %v3533, %v3603
    %v3618 = vadd.f32 %v3534, %v3604
    %v3619 = vld [vmem:[%s2526 + $0x1] sm:$0x7f]
    %v3620 = vld [vmem:[%s2526 + $0x9] sm:$0x7f]
    %v3621 = vld [vmem:[%s2526 + $0x11] sm:$0x7f]
    %v3622 = vld [vmem:[%s2526 + $0x19] sm:$0x7f]
    %v3623 = vld [vmem:[%s2526 + $0x21] sm:$0x7f]
    %v3624 = vld [vmem:[%s2526 + $0x29] sm:$0x7f]
    %v3625 = vld [vmem:[%s2526 + $0x31] sm:$0x7f]
    %v3626 = vld [vmem:[%s2526 + $0x41] sm:$0x7f]
    %v3627 = vld [vmem:[%s2526 + $0x49] sm:$0x7f]
    %v3628 = vld [vmem:[%s2526 + $0x51] sm:$0x7f]
    %v3629 = vld [vmem:[%s2526 + $0x59] sm:$0x7f]
    %v3630 = vld [vmem:[%s2526 + $0x61] sm:$0x7f]
    %v3631 = vld [vmem:[%s2526 + $0x69] sm:$0x7f]
    %v3632 = vld [vmem:[%s2526 + $0x71] sm:$0x7f]
    %3634 = vset.pattern.permute.xlu0 0
    %3635 = vperm.xlu0 %3634, %v3619
    %v3636 = vpop.permute.xlu0 %3635
    %3639 = vset.pattern.permute.xlu0 0
    %3640 = vperm.xlu0 %3639, %v3620
    %v3641 = vpop.permute.xlu0 %3640
    %3644 = vset.pattern.permute.xlu0 0
    %3645 = vperm.xlu0 %3644, %v3621
    %v3646 = vpop.permute.xlu0 %3645
    %3649 = vset.pattern.permute.xlu0 0
    %3650 = vperm.xlu0 %3649, %v3622
    %v3651 = vpop.permute.xlu0 %3650
    %3654 = vset.pattern.permute.xlu0 0
    %3655 = vperm.xlu0 %3654, %v3623
    %v3656 = vpop.permute.xlu0 %3655
    %3659 = vset.pattern.permute.xlu0 0
    %3660 = vperm.xlu0 %3659, %v3624
    %v3661 = vpop.permute.xlu0 %3660
    %3664 = vset.pattern.permute.xlu0 0
    %3665 = vperm.xlu0 %3664, %v3625
    %v3666 = vpop.permute.xlu0 %3665
    %3669 = vset.pattern.permute.xlu0 0
    %3670 = vperm.xlu0 %3669, %v3626
    %v3671 = vpop.permute.xlu0 %3670
    %3674 = vset.pattern.permute.xlu0 0
    %3675 = vperm.xlu0 %3674, %v3627
    %v3676 = vpop.permute.xlu0 %3675
    %3679 = vset.pattern.permute.xlu0 0
    %3680 = vperm.xlu0 %3679, %v3628
    %v3681 = vpop.permute.xlu0 %3680
    %3684 = vset.pattern.permute.xlu0 0
    %3685 = vperm.xlu0 %3684, %v3629
    %v3686 = vpop.permute.xlu0 %3685
    %3689 = vset.pattern.permute.xlu0 0
    %3690 = vperm.xlu0 %3689, %v3630
    %v3691 = vpop.permute.xlu0 %3690
    %3694 = vset.pattern.permute.xlu0 0
    %3695 = vperm.xlu0 %3694, %v3631
    %v3696 = vpop.permute.xlu0 %3695
    %3699 = vset.pattern.permute.xlu0 0
    %3700 = vperm.xlu0 %3699, %v3632
    %v3701 = vpop.permute.xlu0 %3700
    %v3703 = vmul.f32 %v3636, %v914
    %v3704 = vmul.f32 %v3641, %v914
    %v3705 = vmul.f32 %v3646, %v914
    %v3706 = vmul.f32 %v3651, %v914
    %v3707 = vmul.f32 %v3656, %v914
    %v3708 = vmul.f32 %v3661, %v914
    %v3709 = vmul.f32 %v3666, %v914
    %v3710 = vmul.f32 %v3671, %v914
    %v3711 = vmul.f32 %v3676, %v914
    %v3712 = vmul.f32 %v3681, %v914
    %v3713 = vmul.f32 %v3686, %v914
    %v3714 = vmul.f32 %v3691, %v914
    %v3715 = vmul.f32 %v3696, %v914
    %v3716 = vmul.f32 %v3701, %v914
    %v3717 = vadd.f32 %v3605, %v3703
    %v3718 = vadd.f32 %v3606, %v3704
    %v3719 = vadd.f32 %v3607, %v3705
    %v3720 = vadd.f32 %v3608, %v3706
    %v3721 = vadd.f32 %v3609, %v3707
    %v3722 = vadd.f32 %v3610, %v3708
    %v3723 = vadd.f32 %v3611, %v3709
    %v3724 = vadd.f32 %v3612, %v3710
    %v3725 = vadd.f32 %v3613, %v3711
    %v3726 = vadd.f32 %v3614, %v3712
    %v3727 = vadd.f32 %v3615, %v3713
    %v3728 = vadd.f32 %v3616, %v3714
    %v3729 = vadd.f32 %v3617, %v3715
    %v3730 = vadd.f32 %v3618, %v3716
    %v3731 = vadd.f32 %v3717, %v951
    %v3732 = vadd.f32 %v3718, %v951
    %v3733 = vadd.f32 %v3719, %v951
    %v3734 = vadd.f32 %v3720, %v951
    %v3735 = vadd.f32 %v3721, %v951
    %v3736 = vadd.f32 %v3722, %v951
    %v3737 = vadd.f32 %v3723, %v951
    %v3738 = vadd.f32 %v3724, %v951
    %v3739 = vadd.f32 %v3725, %v951
    %v3740 = vadd.f32 %v3726, %v951
    %v3741 = vadd.f32 %v3727, %v951
    %v3742 = vadd.f32 %v3728, %v951
    %v3743 = vadd.f32 %v3729, %v951
    %v3744 = vadd.f32 %v3730, %v951
    %v3745 = vmax.f32 %v3731, 0.0
    %v3746 = vmax.f32 %v3732, 0.0
    %v3747 = vmax.f32 %v3733, 0.0
    %v3748 = vmax.f32 %v3734, 0.0
    %v3749 = vmax.f32 %v3735, 0.0
    %v3750 = vmax.f32 %v3736, 0.0
    %v3751 = vmax.f32 %v3737, 0.0
    %v3752 = vmax.f32 %v3738, 0.0
    %v3753 = vmax.f32 %v3739, 0.0
    %v3754 = vmax.f32 %v3740, 0.0
    %v3755 = vmax.f32 %v3741, 0.0
    %v3756 = vmax.f32 %v3742, 0.0
    %v3757 = vmax.f32 %v3743, 0.0
    %v3758 = vmax.f32 %v3744, 0.0
    %v3759 = vmax.f32 %v2863, %v3745
    %v3760 = vmax.f32 %v2864, %v3746
    %v3761 = vmax.f32 %v2865, %v3747
    %v3762 = vmax.f32 %v2866, %v3748
    %v3763 = vmax.f32 %v2867, %v3749
    %v3764 = vmax.f32 %v2868, %v3750
    %v3765 = vmax.f32 %v2869, %v3751
    %v3766 = vmax.f32 %v2870, %v3752
    %v3767 = vmax.f32 %v2871, %v3753
    %v3768 = vmax.f32 %v2872, %v3754
    %v3769 = vmax.f32 %v2873, %v3755
    %v3770 = vmax.f32 %v2874, %v3756
    %v3771 = vmax.f32 %v2875, %v3757
    %v3772 = vmax.f32 %v2876, %v3758
    %3773 = vst [vmem:[%s1993 + $0x1] sm:$0x7f] %v3759
    %3774 = vst [vmem:[%s1993 + $0x9] sm:$0x7f] %v3760
    %3775 = vst [vmem:[%s1993 + $0x11] sm:$0x7f] %v3761
    %3776 = vst [vmem:[%s1993 + $0x19] sm:$0x7f] %v3762
    %3777 = vst [vmem:[%s1993 + $0x21] sm:$0x7f] %v3763
    %3778 = vst [vmem:[%s1993 + $0x29] sm:$0x7f] %v3764
    %3779 = vst [vmem:[%s1993 + $0x31] sm:$0x7f] %v3765
    %3780 = vst [vmem:[%s1993 + $0x41] sm:$0x7f] %v3766
    %3781 = vst [vmem:[%s1993 + $0x49] sm:$0x7f] %v3767
    %3782 = vst [vmem:[%s1993 + $0x51] sm:$0x7f] %v3768
    %3783 = vst [vmem:[%s1993 + $0x59] sm:$0x7f] %v3769
    %3784 = vst [vmem:[%s1993 + $0x61] sm:$0x7f] %v3770
    %3785 = vst [vmem:[%s1993 + $0x69] sm:$0x7f] %v3771
    %3786 = vst [vmem:[%s1993 + $0x71] sm:$0x7f] %v3772
    %v3787 = vld [vmem:[#allocation2] sm:$0x1]
    %3788 = vst [vmem:[#allocation3] sm:$0x1] %v3787
    %s3789 = scalar_lea.vmem [#allocation2], 64
    %v3790 = vld [vmem:[%s3789] sm:$0x1]
    %3791 = vst [vmem:[#allocation3 + $0x1] sm:$0x1] %v3790
    %v3792 = vld [vmem:[#allocation2 + $0x1] sm:$0x1]
    %3793 = vst [vmem:[#allocation3 + $0x8] sm:$0x1] %v3792
    %v3794 = vld [vmem:[%s3789 + $0x1] sm:$0x1]
    %3795 = vst [vmem:[#allocation3 + $0x9] sm:$0x1] %v3794
    %v3796 = vld [vmem:[#allocation2 + $0x2] sm:$0x1]
    %3797 = vst [vmem:[#allocation3 + $0x10] sm:$0x1] %v3796
    %v3798 = vld [vmem:[%s3789 + $0x2] sm:$0x1]
    %3799 = vst [vmem:[#allocation3 + $0x11] sm:$0x1] %v3798
    %v3800 = vld [vmem:[%s1993] sm:$0x1]
    %3801 = vst [vmem:[#allocation3 + $0x18] sm:$0x1] %v3800
    %s3802 = scalar_lea.vmem [#allocation2], 72
    %v3803 = vld [vmem:[%s3802] sm:$0x1]
    %3804 = vst [vmem:[#allocation3 + $0x19] sm:$0x1] %v3803
    %v3805 = vld [vmem:[%s1993 + $0x1] sm:$0x1]
    %3806 = vst [vmem:[#allocation3 + $0x20] sm:$0x1] %v3805
    %v3807 = vld [vmem:[%s3802 + $0x1] sm:$0x1]
    %3808 = vst [vmem:[#allocation3 + $0x21] sm:$0x1] %v3807
    %v3809 = vld [vmem:[%s1993 + $0x2] sm:$0x1]
    %3810 = vst [vmem:[#allocation3 + $0x28] sm:$0x1] %v3809
    %v3811 = vld [vmem:[%s3802 + $0x2] sm:$0x1]
    %3812 = vst [vmem:[#allocation3 + $0x29] sm:$0x1] %v3811
    %s3813 = scalar_lea.vmem [#allocation2], 16
    %v3814 = vld [vmem:[%s3813] sm:$0x1]
    %3815 = vst [vmem:[#allocation3 + $0x30] sm:$0x1] %v3814
    %s3816 = scalar_lea.vmem [#allocation2], 80
    %v3817 = vld [vmem:[%s3816] sm:$0x1]
    %3818 = vst [vmem:[#allocation3 + $0x31] sm:$0x1] %v3817
    %v3819 = vld [vmem:[%s3813 + $0x1] sm:$0x1]
    %3820 = vst [vmem:[#allocation3 + $0x38] sm:$0x1] %v3819
    %v3821 = vld [vmem:[%s3816 + $0x1] sm:$0x1]
    %3822 = vst [vmem:[#allocation3 + $0x39] sm:$0x1] %v3821
    %v3823 = vld [vmem:[%s3813 + $0x2] sm:$0x1]
    %3824 = vst [vmem:[#allocation3 + $0x40] sm:$0x1] %v3823
    %v3825 = vld [vmem:[%s3816 + $0x2] sm:$0x1]
    %3826 = vst [vmem:[#allocation3 + $0x41] sm:$0x1] %v3825
    %v3827 = vld [vmem:[#allocation2 + $0x2] sm:$0x1]
    %3828 = vst [vmem:[#allocation3 + $0x2] sm:$0x1] %v3827
    %v3829 = vld [vmem:[%s3789 + $0x2] sm:$0x1]
    %3830 = vst [vmem:[#allocation3 + $0x3] sm:$0x1] %v3829
    %v3831 = vld [vmem:[#allocation2 + $0x3] sm:$0x1]
    %3832 = vst [vmem:[#allocation3 + $0xa] sm:$0x1] %v3831
    %v3833 = vld [vmem:[%s3789 + $0x3] sm:$0x1]
    %3834 = vst [vmem:[#allocation3 + $0xb] sm:$0x1] %v3833
    %v3835 = vld [vmem:[#allocation2 + $0x4] sm:$0x1]
    %3836 = vst [vmem:[#allocation3 + $0x12] sm:$0x1] %v3835
    %v3837 = vld [vmem:[%s3789 + $0x4] sm:$0x1]
    %3838 = vst [vmem:[#allocation3 + $0x13] sm:$0x1] %v3837
    %v3839 = vld [vmem:[%s1993 + $0x2] sm:$0x1]
    %3840 = vst [vmem:[#allocation3 + $0x1a] sm:$0x1] %v3839
    %v3841 = vld [vmem:[%s3802 + $0x2] sm:$0x1]
    %3842 = vst [vmem:[#allocation3 + $0x1b] sm:$0x1] %v3841
    %v3843 = vld [vmem:[%s1993 + $0x3] sm:$0x1]
    %3844 = vst [vmem:[#allocation3 + $0x22] sm:$0x1] %v3843
    %v3845 = vld [vmem:[%s3802 + $0x3] sm:$0x1]
    %3846 = vst [vmem:[#allocation3 + $0x23] sm:$0x1] %v3845
    %v3847 = vld [vmem:[%s1993 + $0x4] sm:$0x1]
    %3848 = vst [vmem:[#allocation3 + $0x2a] sm:$0x1] %v3847
    %v3849 = vld [vmem:[%s3802 + $0x4] sm:$0x1]
    %3850 = vst [vmem:[#allocation3 + $0x2b] sm:$0x1] %v3849
    %v3851 = vld [vmem:[%s3813 + $0x2] sm:$0x1]
    %3852 = vst [vmem:[#allocation3 + $0x32] sm:$0x1] %v3851
    %v3853 = vld [vmem:[%s3816 + $0x2] sm:$0x1]
    %3854 = vst [vmem:[#allocation3 + $0x33] sm:$0x1] %v3853
    %v3855 = vld [vmem:[%s3813 + $0x3] sm:$0x1]
    %3856 = vst [vmem:[#allocation3 + $0x3a] sm:$0x1] %v3855
    %v3857 = vld [vmem:[%s3816 + $0x3] sm:$0x1]
    %3858 = vst [vmem:[#allocation3 + $0x3b] sm:$0x1] %v3857
    %v3859 = vld [vmem:[%s3813 + $0x4] sm:$0x1]
    %3860 = vst [vmem:[#allocation3 + $0x42] sm:$0x1] %v3859
    %v3861 = vld [vmem:[%s3816 + $0x4] sm:$0x1]
    %3862 = vst [vmem:[#allocation3 + $0x43] sm:$0x1] %v3861
    %v3863 = vld [vmem:[#allocation2 + $0x4] sm:$0x1]
    %3864 = vst [vmem:[#allocation3 + $0x4] sm:$0x1] %v3863
    %v3865 = vld [vmem:[%s3789 + $0x4] sm:$0x1]
    %3866 = vst [vmem:[#allocation3 + $0x5] sm:$0x1] %v3865
    %v3867 = vld [vmem:[#allocation2 + $0x5] sm:$0x1]
    %3868 = vst [vmem:[#allocation3 + $0xc] sm:$0x1] %v3867
    %v3869 = vld [vmem:[%s3789 + $0x5] sm:$0x1]
    %3870 = vst [vmem:[#allocation3 + $0xd] sm:$0x1] %v3869
    %v3871 = vld [vmem:[#allocation2 + $0x6] sm:$0x1]
    %3872 = vst [vmem:[#allocation3 + $0x14] sm:$0x1] %v3871
    %v3873 = vld [vmem:[%s3789 + $0x6] sm:$0x1]
    %3874 = vst [vmem:[#allocation3 + $0x15] sm:$0x1] %v3873
    %v3875 = vld [vmem:[%s1993 + $0x4] sm:$0x1]
    %3876 = vst [vmem:[#allocation3 + $0x1c] sm:$0x1] %v3875
    %v3877 = vld [vmem:[%s3802 + $0x4] sm:$0x1]
    %3878 = vst [vmem:[#allocation3 + $0x1d] sm:$0x1] %v3877
    %v3879 = vld [vmem:[%s1993 + $0x5] sm:$0x1]
    %3880 = vst [vmem:[#allocation3 + $0x24] sm:$0x1] %v3879
    %v3881 = vld [vmem:[%s3802 + $0x5] sm:$0x1]
    %3882 = vst [vmem:[#allocation3 + $0x25] sm:$0x1] %v3881
    %v3883 = vld [vmem:[%s1993 + $0x6] sm:$0x1]
    %3884 = vst [vmem:[#allocation3 + $0x2c] sm:$0x1] %v3883
    %v3885 = vld [vmem:[%s3802 + $0x6] sm:$0x1]
    %3886 = vst [vmem:[#allocation3 + $0x2d] sm:$0x1] %v3885
    %v3887 = vld [vmem:[%s3813 + $0x4] sm:$0x1]
    %3888 = vst [vmem:[#allocation3 + $0x34] sm:$0x1] %v3887
    %v3889 = vld [vmem:[%s3816 + $0x4] sm:$0x1]
    %3890 = vst [vmem:[#allocation3 + $0x35] sm:$0x1] %v3889
    %v3891 = vld [vmem:[%s3813 + $0x5] sm:$0x1]
    %3892 = vst [vmem:[#allocation3 + $0x3c] sm:$0x1] %v3891
    %v3893 = vld [vmem:[%s3816 + $0x5] sm:$0x1]
    %3894 = vst [vmem:[#allocation3 + $0x3d] sm:$0x1] %v3893
    %v3895 = vld [vmem:[%s3813 + $0x6] sm:$0x1]
    %3896 = vst [vmem:[#allocation3 + $0x44] sm:$0x1] %v3895
    %v3897 = vld [vmem:[%s3816 + $0x6] sm:$0x1]
    %3898 = vst [vmem:[#allocation3 + $0x45] sm:$0x1] %v3897
    %v3899 = vld [vmem:[%s3813] sm:$0x1]
    %3900 = vst [vmem:[#allocation3 + $0x6] sm:$0x1] %v3899
    %v3901 = vld [vmem:[%s3816] sm:$0x1]
    %3902 = vst [vmem:[#allocation3 + $0x7] sm:$0x1] %v3901
    %v3903 = vld [vmem:[%s3813 + $0x1] sm:$0x1]
    %3904 = vst [vmem:[#allocation3 + $0xe] sm:$0x1] %v3903
    %v3905 = vld [vmem:[%s3816 + $0x1] sm:$0x1]
    %3906 = vst [vmem:[#allocation3 + $0xf] sm:$0x1] %v3905
    %v3907 = vld [vmem:[%s3813 + $0x2] sm:$0x1]
    %3908 = vst [vmem:[#allocation3 + $0x16] sm:$0x1] %v3907
    %v3909 = vld [vmem:[%s3816 + $0x2] sm:$0x1]
    %3910 = vst [vmem:[#allocation3 + $0x17] sm:$0x1] %v3909
    %s3911 = scalar_lea.vmem [#allocation2], 24
    %v3912 = vld [vmem:[%s3911] sm:$0x1]
    %3913 = vst [vmem:[#allocation3 + $0x1e] sm:$0x1] %v3912
    %s3914 = scalar_lea.vmem [#allocation2], 88
    %v3915 = vld [vmem:[%s3914] sm:$0x1]
    %3916 = vst [vmem:[#allocation3 + $0x1f] sm:$0x1] %v3915
    %v3917 = vld [vmem:[%s3911 + $0x1] sm:$0x1]
    %3918 = vst [vmem:[#allocation3 + $0x26] sm:$0x1] %v3917
    %v3919 = vld [vmem:[%s3914 + $0x1] sm:$0x1]
    %3920 = vst [vmem:[#allocation3 + $0x27] sm:$0x1] %v3919
    %v3921 = vld [vmem:[%s3911 + $0x2] sm:$0x1]
    %3922 = vst [vmem:[#allocation3 + $0x2e] sm:$0x1] %v3921
    %v3923 = vld [vmem:[%s3914 + $0x2] sm:$0x1]
    %3924 = vst [vmem:[#allocation3 + $0x2f] sm:$0x1] %v3923
    %s3925 = scalar_lea.vmem [#allocation2], 32
    %v3926 = vld [vmem:[%s3925] sm:$0x1]
    %3927 = vst [vmem:[#allocation3 + $0x36] sm:$0x1] %v3926
    %s3928 = scalar_lea.vmem [#allocation2], 96
    %v3929 = vld [vmem:[%s3928] sm:$0x1]
    %3930 = vst [vmem:[#allocation3 + $0x37] sm:$0x1] %v3929
    %v3931 = vld [vmem:[%s3925 + $0x1] sm:$0x1]
    %3932 = vst [vmem:[#allocation3 + $0x3e] sm:$0x1] %v3931
    %v3933 = vld [vmem:[%s3928 + $0x1] sm:$0x1]
    %3934 = vst [vmem:[#allocation3 + $0x3f] sm:$0x1] %v3933
    %v3935 = vld [vmem:[%s3925 + $0x2] sm:$0x1]
    %3936 = vst [vmem:[#allocation3 + $0x46] sm:$0x1] %v3935
    %v3937 = vld [vmem:[%s3928 + $0x2] sm:$0x1]
    %3938 = vst [vmem:[#allocation3 + $0x47] sm:$0x1] %v3937
    %v3939 = vld [vmem:[%s3813 + $0x2] sm:$0x1]
    %3940 = vst [vmem:[#allocation3 + $0x48] sm:$0x1] %v3939
    %v3941 = vld [vmem:[%s3816 + $0x2] sm:$0x1]
    %3942 = vst [vmem:[#allocation3 + $0x49] sm:$0x1] %v3941
    %v3943 = vld [vmem:[%s3813 + $0x3] sm:$0x1]
    %3944 = vst [vmem:[#allocation3 + $0x50] sm:$0x1] %v3943
    %v3945 = vld [vmem:[%s3816 + $0x3] sm:$0x1]
    %3946 = vst [vmem:[#allocation3 + $0x51] sm:$0x1] %v3945
    %v3947 = vld [vmem:[%s3813 + $0x4] sm:$0x1]
    %3948 = vst [vmem:[#allocation3 + $0x58] sm:$0x1] %v3947
    %v3949 = vld [vmem:[%s3816 + $0x4] sm:$0x1]
    %3950 = vst [vmem:[#allocation3 + $0x59] sm:$0x1] %v3949
    %v3951 = vld [vmem:[%s3911 + $0x2] sm:$0x1]
    %3952 = vst [vmem:[#allocation3 + $0x60] sm:$0x1] %v3951
    %v3953 = vld [vmem:[%s3914 + $0x2] sm:$0x1]
    %3954 = vst [vmem:[#allocation3 + $0x61] sm:$0x1] %v3953
    %v3955 = vld [vmem:[%s3911 + $0x3] sm:$0x1]
    %3956 = vst [vmem:[#allocation3 + $0x68] sm:$0x1] %v3955
    %v3957 = vld [vmem:[%s3914 + $0x3] sm:$0x1]
    %3958 = vst [vmem:[#allocation3 + $0x69] sm:$0x1] %v3957
    %v3959 = vld [vmem:[%s3911 + $0x4] sm:$0x1]
    %3960 = vst [vmem:[#allocation3 + $0x70] sm:$0x1] %v3959
    %v3961 = vld [vmem:[%s3914 + $0x4] sm:$0x1]
    %3962 = vst [vmem:[#allocation3 + $0x71] sm:$0x1] %v3961
    %v3963 = vld [vmem:[%s3925 + $0x2] sm:$0x1]
    %3964 = vst [vmem:[#allocation3 + $0x78] sm:$0x1] %v3963
    %v3965 = vld [vmem:[%s3928 + $0x2] sm:$0x1]
    %3966 = vst [vmem:[#allocation3 + $0x79] sm:$0x1] %v3965
    %v3967 = vld [vmem:[%s3925 + $0x3] sm:$0x1]
    %3968 = vst [vmem:[#allocation3 + $0x80] sm:$0x1] %v3967
    %v3969 = vld [vmem:[%s3928 + $0x3] sm:$0x1]
    %3970 = vst [vmem:[#allocation3 + $0x81] sm:$0x1] %v3969
    %v3971 = vld [vmem:[%s3925 + $0x4] sm:$0x1]
    %3972 = vst [vmem:[#allocation3 + $0x88] sm:$0x1] %v3971
    %v3973 = vld [vmem:[%s3928 + $0x4] sm:$0x1]
    %3974 = vst [vmem:[#allocation3 + $0x89] sm:$0x1] %v3973
    %v3975 = vld [vmem:[%s3813 + $0x4] sm:$0x1]
    %3976 = vst [vmem:[#allocation3 + $0x4a] sm:$0x1] %v3975
    %v3977 = vld [vmem:[%s3816 + $0x4] sm:$0x1]
    %3978 = vst [vmem:[#allocation3 + $0x4b] sm:$0x1] %v3977
    %v3979 = vld [vmem:[%s3813 + $0x5] sm:$0x1]
    %3980 = vst [vmem:[#allocation3 + $0x52] sm:$0x1] %v3979
    %v3981 = vld [vmem:[%s3816 + $0x5] sm:$0x1]
    %3982 = vst [vmem:[#allocation3 + $0x53] sm:$0x1] %v3981
    %v3983 = vld [vmem:[%s3813 + $0x6] sm:$0x1]
    %3984 = vst [vmem:[#allocation3 + $0x5a] sm:$0x1] %v3983
    %v3985 = vld [vmem:[%s3816 + $0x6] sm:$0x1]
    %3986 = vst [vmem:[#allocation3 + $0x5b] sm:$0x1] %v3985
    %v3987 = vld [vmem:[%s3911 + $0x4] sm:$0x1]
    %3988 = vst [vmem:[#allocation3 + $0x62] sm:$0x1] %v3987
    %v3989 = vld [vmem:[%s3914 + $0x4] sm:$0x1]
    %3990 = vst [vmem:[#allocation3 + $0x63] sm:$0x1] %v3989
    %v3991 = vld [vmem:[%s3911 + $0x5] sm:$0x1]
    %3992 = vst [vmem:[#allocation3 + $0x6a] sm:$0x1] %v3991
    %v3993 = vld [vmem:[%s3914 + $0x5] sm:$0x1]
    %3994 = vst [vmem:[#allocation3 + $0x6b] sm:$0x1] %v3993
    %v3995 = vld [vmem:[%s3911 + $0x6] sm:$0x1]
    %3996 = vst [vmem:[#allocation3 + $0x72] sm:$0x1] %v3995
    %v3997 = vld [vmem:[%s3914 + $0x6] sm:$0x1]
    %3998 = vst [vmem:[#allocation3 + $0x73] sm:$0x1] %v3997
    %v3999 = vld [vmem:[%s3925 + $0x4] sm:$0x1]
    %4000 = vst [vmem:[#allocation3 + $0x7a] sm:$0x1] %v3999
    %v4001 = vld [vmem:[%s3928 + $0x4] sm:$0x1]
    %4002 = vst [vmem:[#allocation3 + $0x7b] sm:$0x1] %v4001
    %v4003 = vld [vmem:[%s3925 + $0x5] sm:$0x1]
    %4004 = vst [vmem:[#allocation3 + $0x82] sm:$0x1] %v4003
    %v4005 = vld [vmem:[%s3928 + $0x5] sm:$0x1]
    %4006 = vst [vmem:[#allocation3 + $0x83] sm:$0x1] %v4005
    %v4007 = vld [vmem:[%s3925 + $0x6] sm:$0x1]
    %4008 = vst [vmem:[#allocation3 + $0x8a] sm:$0x1] %v4007
    %v4009 = vld [vmem:[%s3928 + $0x6] sm:$0x1]
    %4010 = vst [vmem:[#allocation3 + $0x8b] sm:$0x1] %v4009
    %v4011 = vld [vmem:[%s3925] sm:$0x1]
    %4012 = vst [vmem:[#allocation3 + $0x4c] sm:$0x1] %v4011
    %v4013 = vld [vmem:[%s3928] sm:$0x1]
    %4014 = vst [vmem:[#allocation3 + $0x4d] sm:$0x1] %v4013
    %v4015 = vld [vmem:[%s3925 + $0x1] sm:$0x1]
    %4016 = vst [vmem:[#allocation3 + $0x54] sm:$0x1] %v4015
    %v4017 = vld [vmem:[%s3928 + $0x1] sm:$0x1]
    %4018 = vst [vmem:[#allocation3 + $0x55] sm:$0x1] %v4017
    %v4019 = vld [vmem:[%s3925 + $0x2] sm:$0x1]
    %4020 = vst [vmem:[#allocation3 + $0x5c] sm:$0x1] %v4019
    %v4021 = vld [vmem:[%s3928 + $0x2] sm:$0x1]
    %4022 = vst [vmem:[#allocation3 + $0x5d] sm:$0x1] %v4021
    %s4023 = scalar_lea.vmem [#allocation2], 40
    %v4024 = vld [vmem:[%s4023] sm:$0x1]
    %4025 = vst [vmem:[#allocation3 + $0x64] sm:$0x1] %v4024
    %s4026 = scalar_lea.vmem [#allocation2], 104
    %v4027 = vld [vmem:[%s4026] sm:$0x1]
    %4028 = vst [vmem:[#allocation3 + $0x65] sm:$0x1] %v4027
    %v4029 = vld [vmem:[%s4023 + $0x1] sm:$0x1]
    %4030 = vst [vmem:[#allocation3 + $0x6c] sm:$0x1] %v4029
    %v4031 = vld [vmem:[%s4026 + $0x1] sm:$0x1]
    %4032 = vst [vmem:[#allocation3 + $0x6d] sm:$0x1] %v4031
    %v4033 = vld [vmem:[%s4023 + $0x2] sm:$0x1]
    %4034 = vst [vmem:[#allocation3 + $0x74] sm:$0x1] %v4033
    %v4035 = vld [vmem:[%s4026 + $0x2] sm:$0x1]
    %4036 = vst [vmem:[#allocation3 + $0x75] sm:$0x1] %v4035
    %s4037 = scalar_lea.vmem [#allocation2], 48
    %v4038 = vld [vmem:[%s4037] sm:$0x1]
    %4039 = vst [vmem:[#allocation3 + $0x7c] sm:$0x1] %v4038
    %s4040 = scalar_lea.vmem [#allocation2], 112
    %v4041 = vld [vmem:[%s4040] sm:$0x1]
    %4042 = vst [vmem:[#allocation3 + $0x7d] sm:$0x1] %v4041
    %v4043 = vld [vmem:[%s4037 + $0x1] sm:$0x1]
    %4044 = vst [vmem:[#allocation3 + $0x84] sm:$0x1] %v4043
    %v4045 = vld [vmem:[%s4040 + $0x1] sm:$0x1]
    %4046 = vst [vmem:[#allocation3 + $0x85] sm:$0x1] %v4045
    %v4047 = vld [vmem:[%s4037 + $0x2] sm:$0x1]
    %4048 = vst [vmem:[#allocation3 + $0x8c] sm:$0x1] %v4047
    %v4049 = vld [vmem:[%s4040 + $0x2] sm:$0x1]
    %4050 = vst [vmem:[#allocation3 + $0x8d] sm:$0x1] %v4049
    %v4051 = vld [vmem:[%s3925 + $0x2] sm:$0x1]
    %4052 = vst [vmem:[#allocation3 + $0x4e] sm:$0x1] %v4051
    %v4053 = vld [vmem:[%s3928 + $0x2] sm:$0x1]
    %4054 = vst [vmem:[#allocation3 + $0x4f] sm:$0x1] %v4053
    %v4055 = vld [vmem:[%s3925 + $0x3] sm:$0x1]
    %4056 = vst [vmem:[#allocation3 + $0x56] sm:$0x1] %v4055
    %v4057 = vld [vmem:[%s3928 + $0x3] sm:$0x1]
    %4058 = vst [vmem:[#allocation3 + $0x57] sm:$0x1] %v4057
    %v4059 = vld [vmem:[%s3925 + $0x4] sm:$0x1]
    %4060 = vst [vmem:[#allocation3 + $0x5e] sm:$0x1] %v4059
    %v4061 = vld [vmem:[%s3928 + $0x4] sm:$0x1]
    %4062 = vst [vmem:[#allocation3 + $0x5f] sm:$0x1] %v4061
    %v4063 = vld [vmem:[%s4023 + $0x2] sm:$0x1]
    %4064 = vst [vmem:[#allocation3 + $0x66] sm:$0x1] %v4063
    %v4065 = vld [vmem:[%s4026 + $0x2] sm:$0x1]
    %4066 = vst [vmem:[#allocation3 + $0x67] sm:$0x1] %v4065
    %v4067 = vld [vmem:[%s4023 + $0x3] sm:$0x1]
    %4068 = vst [vmem:[#allocation3 + $0x6e] sm:$0x1] %v4067
    %v4069 = vld [vmem:[%s4026 + $0x3] sm:$0x1]
    %4070 = vst [vmem:[#allocation3 + $0x6f] sm:$0x1] %v4069
    %v4071 = vld [vmem:[%s4023 + $0x4] sm:$0x1]
    %4072 = vst [vmem:[#allocation3 + $0x76] sm:$0x1] %v4071
    %v4073 = vld [vmem:[%s4026 + $0x4] sm:$0x1]
    %4074 = vst [vmem:[#allocation3 + $0x77] sm:$0x1] %v4073
    %v4075 = vld [vmem:[%s4037 + $0x2] sm:$0x1]
    %4076 = vst [vmem:[#allocation3 + $0x7e] sm:$0x1] %v4075
    %v4077 = vld [vmem:[%s4040 + $0x2] sm:$0x1]
    %4078 = vst [vmem:[#allocation3 + $0x7f] sm:$0x1] %v4077
    %v4079 = vld [vmem:[%s4037 + $0x3] sm:$0x1]
    %4080 = vst [vmem:[#allocation3 + $0x86] sm:$0x1] %v4079
    %v4081 = vld [vmem:[%s4040 + $0x3] sm:$0x1]
    %4082 = vst [vmem:[#allocation3 + $0x87] sm:$0x1] %v4081
    %v4083 = vld [vmem:[%s4037 + $0x4] sm:$0x1]
    %4084 = vst [vmem:[#allocation3 + $0x8e] sm:$0x1] %v4083
    %v4085 = vld [vmem:[%s4040 + $0x4] sm:$0x1]
    %4086 = vst [vmem:[#allocation3 + $0x8f] sm:$0x1] %v4085
    %v4087 = vld [vmem:[%s3925 + $0x4] sm:$0x1]
    %4088 = vst [vmem:[#allocation3 + $0x90] sm:$0x1] %v4087
    %v4089 = vld [vmem:[%s3928 + $0x4] sm:$0x1]
    %4090 = vst [vmem:[#allocation3 + $0x91] sm:$0x1] %v4089
    %v4091 = vld [vmem:[%s3925 + $0x5] sm:$0x1]
    %4092 = vst [vmem:[#allocation3 + $0x98] sm:$0x1] %v4091
    %v4093 = vld [vmem:[%s3928 + $0x5] sm:$0x1]
    %4094 = vst [vmem:[#allocation3 + $0x99] sm:$0x1] %v4093
    %v4095 = vld [vmem:[%s3925 + $0x6] sm:$0x1]
    %4096 = vst [vmem:[#allocation3 + $0xa0] sm:$0x1] %v4095
    %v4097 = vld [vmem:[%s3928 + $0x6] sm:$0x1]
    %4098 = vst [vmem:[#allocation3 + $0xa1] sm:$0x1] %v4097
    %v4099 = vld [vmem:[%s4023 + $0x4] sm:$0x1]
    %4100 = vst [vmem:[#allocation3 + $0xa8] sm:$0x1] %v4099
    %v4101 = vld [vmem:[%s4026 + $0x4] sm:$0x1]
    %4102 = vst [vmem:[#allocation3 + $0xa9] sm:$0x1] %v4101
    %v4103 = vld [vmem:[%s4023 + $0x5] sm:$0x1]
    %4104 = vst [vmem:[#allocation3 + $0xb0] sm:$0x1] %v4103
    %v4105 = vld [vmem:[%s4026 + $0x5] sm:$0x1]
    %4106 = vst [vmem:[#allocation3 + $0xb1] sm:$0x1] %v4105
    %v4107 = vld [vmem:[%s4023 + $0x6] sm:$0x1]
    %4108 = vst [vmem:[#allocation3 + $0xb8] sm:$0x1] %v4107
    %v4109 = vld [vmem:[%s4026 + $0x6] sm:$0x1]
    %4110 = vst [vmem:[#allocation3 + $0xb9] sm:$0x1] %v4109
    %v4111 = vld [vmem:[%s4037 + $0x4] sm:$0x1]
    %4112 = vst [vmem:[#allocation3 + $0xc0] sm:$0x1] %v4111
    %v4113 = vld [vmem:[%s4040 + $0x4] sm:$0x1]
    %4114 = vst [vmem:[#allocation3 + $0xc1] sm:$0x1] %v4113
    %v4115 = vld [vmem:[%s4037 + $0x5] sm:$0x1]
    %4116 = vst [vmem:[#allocation3 + $0xc8] sm:$0x1] %v4115
    %v4117 = vld [vmem:[%s4040 + $0x5] sm:$0x1]
    %4118 = vst [vmem:[#allocation3 + $0xc9] sm:$0x1] %v4117
    %v4119 = vld [vmem:[%s4037 + $0x6] sm:$0x1]
    %4120 = vst [vmem:[#allocation3 + $0xd0] sm:$0x1] %v4119
    %v4121 = vld [vmem:[%s4040 + $0x6] sm:$0x1]
    %4122 = vst [vmem:[#allocation3 + $0xd1] sm:$0x1] %v4121
    %v4123 = vld [vmem:[#allocation3] sm:$0xff]
    %v4124 = vld [vmem:[#allocation3 + $0x8] sm:$0xff]
    %v4125 = vld [vmem:[#allocation3 + $0x10] sm:$0xff]
    %v4126 = vld [vmem:[#allocation3 + $0x18] sm:$0xff]
    %v4127 = vld [vmem:[#allocation3 + $0x20] sm:$0xff]
    %v4128 = vld [vmem:[#allocation3 + $0x28] sm:$0xff]
    %v4129 = vld [vmem:[#allocation3 + $0x30] sm:$0xff]
    %v4130 = vld [vmem:[#allocation3 + $0x38] sm:$0xff]
    %v4131 = vld [vmem:[#allocation3 + $0x40] sm:$0xff]
    %v4132 = vld [vmem:[#allocation3 + $0x48] sm:$0xff]
    %v4133 = vld [vmem:[#allocation3 + $0x50] sm:$0xff]
    %v4134 = vld [vmem:[#allocation3 + $0x58] sm:$0xff]
    %v4135 = vld [vmem:[#allocation3 + $0x60] sm:$0xff]
    %v4136 = vld [vmem:[#allocation3 + $0x68] sm:$0xff]
    %v4137 = vld [vmem:[#allocation3 + $0x70] sm:$0xff]
    %v4138 = vld [vmem:[#allocation3 + $0x78] sm:$0xff]
    %v4139 = vld [vmem:[#allocation3 + $0x80] sm:$0xff]
    %v4140 = vld [vmem:[#allocation3 + $0x88] sm:$0xff]
    %v4141 = vld [vmem:[#allocation3 + $0x90] sm:$0x3]
    %v4142 = vld [vmem:[#allocation3 + $0x98] sm:$0x3]
    %v4143 = vld [vmem:[#allocation3 + $0xa0] sm:$0x3]
    %v4144 = vld [vmem:[#allocation3 + $0xa8] sm:$0x3]
    %v4145 = vld [vmem:[#allocation3 + $0xb0] sm:$0x3]
    %v4146 = vld [vmem:[#allocation3 + $0xb8] sm:$0x3]
    %v4147 = vld [vmem:[#allocation3 + $0xc0] sm:$0x3]
    %v4148 = vld [vmem:[#allocation3 + $0xc8] sm:$0x3]
    %v4149 = vld [vmem:[#allocation3 + $0xd0] sm:$0x3]
    %v4150 = vpack.c.bf16 %v4132, %v4123
    %v4151 = vpack.c.bf16 %v4133, %v4124
    %v4152 = vpack.c.bf16 %v4134, %v4125
    %v4153 = vpack.c.bf16 %v4135, %v4126
    %v4154 = vpack.c.bf16 %v4136, %v4127
    %v4155 = vpack.c.bf16 %v4137, %v4128
    %v4156 = vpack.c.bf16 %v4138, %v4129
    %v4157 = vpack.c.bf16 %v4139, %v4130
    %v4158 = vpack.c.bf16 %v4140, %v4131
    %v4159 = vpack.c.bf16 %v4141, %v4141
    %v4160 = vpack.c.bf16 %v4142, %v4142
    %v4161 = vpack.c.bf16 %v4143, %v4143
    %v4162 = vpack.c.bf16 %v4144, %v4144
    %v4163 = vpack.c.bf16 %v4145, %v4145
    %v4164 = vpack.c.bf16 %v4146, %v4146
    %v4165 = vpack.c.bf16 %v4147, %v4147
    %v4166 = vpack.c.bf16 %v4148, %v4148
    %v4167 = vpack.c.bf16 %v4149, %v4149
    %v4168 = vld [vmem:[%s3] sm:$0xf]
    %v4169 = vld [vmem:[%s3 + $0x4] sm:$0xf]
    %v4170 = vld [vmem:[%s3 + $0x8] sm:$0xf]
    %v4171 = vld [vmem:[%s3 + $0xc] sm:$0xf]
    %v4172 = vld [vmem:[%s3 + $0x10] sm:$0xf]
    %v4173 = vld [vmem:[%s3 + $0x14] sm:$0xf]
    %v4174 = vld [vmem:[%s3 + $0x18] sm:$0xf]
    %v4175 = vld [vmem:[%s3 + $0x1c] sm:$0xf]
    %v4176 = vld [vmem:[%s3 + $0x20] sm:$0xf]
    %v4177 = vld [vmem:[%s3 + $0x24] sm:$0xf]
    %v4178 = vld [vmem:[%s3 + $0x28] sm:$0xf]
    %v4179 = vld [vmem:[%s3 + $0x2c] sm:$0xf]
    %v4180 = vld [vmem:[%s3 + $0x30] sm:$0xf]
    %v4181 = vld [vmem:[%s3 + $0x34] sm:$0xf]
    %v4182 = vld [vmem:[%s3 + $0x38] sm:$0xf]
    %v4183 = vld [vmem:[%s3 + $0x3c] sm:$0xf]
    %v4184 = vld [vmem:[%s3 + $0x40] sm:$0xf]
    %v4185 = vld [vmem:[%s3 + $0x44] sm:$0xf]
    %v4186 = vld [vmem:[%s3 + $0x48] sm:$0xf]
    %v4187 = vld [vmem:[%s3 + $0x4c] sm:$0xf]
    %v4188 = vld [vmem:[%s3 + $0x50] sm:$0xf]
    %v4189 = vld [vmem:[%s3 + $0x54] sm:$0xf]
    %v4190 = vld [vmem:[%s3 + $0x58] sm:$0xf]
    %v4191 = vld [vmem:[%s3 + $0x5c] sm:$0xf]
    %v4192 = vld [vmem:[%s3 + $0x60] sm:$0xf]
    %v4193 = vld [vmem:[%s3 + $0x64] sm:$0xf]
    %v4194 = vld [vmem:[%s3 + $0x68] sm:$0xf]
    %v4195 = vld [vmem:[%s3 + $0x6c] sm:$0xf]
    %v4196 = vld [vmem:[%s3 + $0x70] sm:$0xf]
    %v4197 = vld [vmem:[%s3 + $0x74] sm:$0xf]
    %v4198 = vld [vmem:[%s3 + $0x78] sm:$0xf]
    %v4199 = vld [vmem:[%s3 + $0x7c] sm:$0xf]
    %v4200 = vld [vmem:[%s3 + $0x80] sm:$0xf]
    %v4201 = vld [vmem:[%s3 + $0x84] sm:$0xf]
    %v4202 = vld [vmem:[%s3 + $0x88] sm:$0xf]
    %v4203 = vld [vmem:[%s3 + $0x8c] sm:$0xf]
    %v4204 = vld [vmem:[%s3 + $0x90] sm:$0xf]
    %v4205 = vld [vmem:[%s3 + $0x94] sm:$0xf]
    %v4206 = vld [vmem:[%s3 + $0x98] sm:$0xf]
    %v4207 = vld [vmem:[%s3 + $0x9c] sm:$0xf]
    %v4208 = vld [vmem:[%s3 + $0xa0] sm:$0xf]
    %v4209 = vld [vmem:[%s3 + $0xa4] sm:$0xf]
    %v4210 = vld [vmem:[%s3 + $0xa8] sm:$0xf]
    %v4211 = vld [vmem:[%s3 + $0xac] sm:$0xf]
    %v4212 = vld [vmem:[%s3 + $0xb0] sm:$0xf]
    %v4213 = vld [vmem:[%s3 + $0xb4] sm:$0xf]
    %v4214 = vld [vmem:[%s3 + $0xb8] sm:$0xf]
    %v4215 = vld [vmem:[%s3 + $0xbc] sm:$0xf]
    %v4216 = vld [vmem:[%s3 + $0xc0] sm:$0xf]
    %v4217 = vld [vmem:[%s3 + $0xc4] sm:$0xf]
    %v4218 = vld [vmem:[%s3 + $0xc8] sm:$0xf]
    %v4219 = vld [vmem:[%s3 + $0xcc] sm:$0xf]
    %v4220 = vld [vmem:[%s3 + $0xd0] sm:$0xf]
    %v4221 = vld [vmem:[%s3 + $0xd4] sm:$0xf]
    %v4222 = vld [vmem:[%s3 + $0xd8] sm:$0xf]
    %v4223 = vld [vmem:[%s3 + $0xdc] sm:$0xf]
    %v4224 = vld [vmem:[%s3 + $0xe0] sm:$0xf]
    %v4225 = vld [vmem:[%s3 + $0xe4] sm:$0xf]
    %v4226 = vld [vmem:[%s3 + $0xe8] sm:$0xf]
    %v4227 = vld [vmem:[%s3 + $0xec] sm:$0xf]
    %v4228 = vld [vmem:[%s3 + $0xf0] sm:$0xf]
    %v4229 = vld [vmem:[%s3 + $0xf4] sm:$0xf]
    %v4230 = vld [vmem:[%s3 + $0xf8] sm:$0xf]
    %v4231 = vld [vmem:[%s3 + $0xfc] sm:$0xf]
    %v4232 = vld [vmem:[%s3 + $0x100] sm:$0xf]
    %v4233 = vld [vmem:[%s3 + $0x104] sm:$0xf]
    %v4234 = vld [vmem:[%s3 + $0x108] sm:$0xf]
    %v4235 = vld [vmem:[%s3 + $0x10c] sm:$0xf]
    %v4236 = vld [vmem:[%s3 + $0x110] sm:$0xf]
    %v4237 = vld [vmem:[%s3 + $0x114] sm:$0xf]
    %v4238 = vld [vmem:[%s3 + $0x118] sm:$0xf]
    %v4239 = vld [vmem:[%s3 + $0x11c] sm:$0xf]
    %v4240 = vld [vmem:[%s3 + $0x120] sm:$0xf]
    %v4241 = vld [vmem:[%s3 + $0x124] sm:$0xf]
    %v4242 = vld [vmem:[%s3 + $0x128] sm:$0xf]
    %v4243 = vld [vmem:[%s3 + $0x12c] sm:$0xf]
    %v4244 = vld [vmem:[%s3 + $0x130] sm:$0xf]
    %v4245 = vld [vmem:[%s3 + $0x134] sm:$0xf]
    %v4246 = vld [vmem:[%s3 + $0x138] sm:$0xf]
    %v4247 = vld [vmem:[%s3 + $0x13c] sm:$0xf]
    %v4248 = vld [vmem:[%s3 + $0x140] sm:$0xf]
    %v4249 = vld [vmem:[%s3 + $0x144] sm:$0xf]
    %v4250 = vld [vmem:[%s3 + $0x148] sm:$0xf]
    %v4251 = vld [vmem:[%s3 + $0x14c] sm:$0xf]
    %v4252 = vld [vmem:[%s3 + $0x150] sm:$0xf]
    %v4253 = vld [vmem:[%s3 + $0x154] sm:$0xf]
    %v4254 = vld [vmem:[%s3 + $0x158] sm:$0xf]
    %v4255 = vld [vmem:[%s3 + $0x15c] sm:$0xf]
    %v4256 = vld [vmem:[%s3 + $0x160] sm:$0xf]
    %v4257 = vld [vmem:[%s3 + $0x164] sm:$0xf]
    %v4258 = vld [vmem:[%s3 + $0x168] sm:$0xf]
    %v4259 = vld [vmem:[%s3 + $0x16c] sm:$0xf]
    %v4260 = vld [vmem:[%s3 + $0x170] sm:$0xf]
    %v4261 = vld [vmem:[%s3 + $0x174] sm:$0xf]
    %v4262 = vld [vmem:[%s3 + $0x178] sm:$0xf]
    %v4263 = vld [vmem:[%s3 + $0x17c] sm:$0xf]
    %v4264 = vld [vmem:[%s3 + $0x180] sm:$0xf]
    %v4265 = vld [vmem:[%s3 + $0x184] sm:$0xf]
    %v4266 = vld [vmem:[%s3 + $0x188] sm:$0xf]
    %v4267 = vld [vmem:[%s3 + $0x18c] sm:$0xf]
    %v4268 = vld [vmem:[%s3 + $0x190] sm:$0xf]
    %v4269 = vld [vmem:[%s3 + $0x194] sm:$0xf]
    %v4270 = vld [vmem:[%s3 + $0x198] sm:$0xf]
    %v4271 = vld [vmem:[%s3 + $0x19c] sm:$0xf]
    %v4272 = vld [vmem:[%s3 + $0x1a0] sm:$0xf]
    %v4273 = vld [vmem:[%s3 + $0x1a4] sm:$0xf]
    %v4274 = vld [vmem:[%s3 + $0x1a8] sm:$0xf]
    %v4275 = vld [vmem:[%s3 + $0x1ac] sm:$0xf]
    %v4276 = vld [vmem:[%s3 + $0x1b0] sm:$0xf]
    %v4277 = vld [vmem:[%s3 + $0x1b4] sm:$0xf]
    %v4278 = vld [vmem:[%s3 + $0x1b8] sm:$0xf]
    %v4279 = vld [vmem:[%s3 + $0x1bc] sm:$0xf]
    %v4280 = vld [vmem:[%s3 + $0x1c0] sm:$0xf]
    %v4281 = vld [vmem:[%s3 + $0x1c4] sm:$0xf]
    %v4282 = vld [vmem:[%s3 + $0x1c8] sm:$0xf]
    %v4283 = vld [vmem:[%s3 + $0x1cc] sm:$0xf]
    %v4284 = vld [vmem:[%s3 + $0x1d0] sm:$0xf]
    %v4285 = vld [vmem:[%s3 + $0x1d4] sm:$0xf]
    %v4286 = vld [vmem:[%s3 + $0x1d8] sm:$0xf]
    %v4287 = vld [vmem:[%s3 + $0x1dc] sm:$0xf]
    %v4288 = vld [vmem:[%s3 + $0x1e0] sm:$0xf]
    %v4289 = vld [vmem:[%s3 + $0x1e4] sm:$0xf]
    %v4290 = vld [vmem:[%s3 + $0x1e8] sm:$0xf]
    %v4291 = vld [vmem:[%s3 + $0x1ec] sm:$0xf]
    %v4292 = vld [vmem:[%s3 + $0x1f0] sm:$0xf]
    %v4293 = vld [vmem:[%s3 + $0x1f4] sm:$0xf]
    %v4294 = vld [vmem:[%s3 + $0x1f8] sm:$0xf]
    %v4295 = vld [vmem:[%s3 + $0x1fc] sm:$0xf]
    %v4296 = vld [vmem:[%s3 + $0x200] sm:$0xf]
    %v4297 = vld [vmem:[%s3 + $0x204] sm:$0xf]
    %v4298 = vld [vmem:[%s3 + $0x208] sm:$0xf]
    %v4299 = vld [vmem:[%s3 + $0x20c] sm:$0xf]
    %v4300 = vld [vmem:[%s3 + $0x210] sm:$0xf]
    %v4301 = vld [vmem:[%s3 + $0x214] sm:$0xf]
    %v4302 = vld [vmem:[%s3 + $0x218] sm:$0xf]
    %v4303 = vld [vmem:[%s3 + $0x21c] sm:$0xf]
    %v4304 = vld [vmem:[%s3 + $0x220] sm:$0xf]
    %v4305 = vld [vmem:[%s3 + $0x224] sm:$0xf]
    %v4306 = vld [vmem:[%s3 + $0x228] sm:$0xf]
    %v4307 = vld [vmem:[%s3 + $0x22c] sm:$0xf]
    %v4308 = vld [vmem:[%s3 + $0x230] sm:$0xf]
    %v4309 = vld [vmem:[%s3 + $0x234] sm:$0xf]
    %v4310 = vld [vmem:[%s3 + $0x238] sm:$0xf]
    %v4311 = vld [vmem:[%s3 + $0x23c] sm:$0xf]
    %v4312 = vld [vmem:[%s4] sm:$0x1]
    %v4314 = vlaneseq
    %v4315 = vshrl.u32 %v4314, 7
    %v4316 = vsub.s32 0, %v4315
    %v4317 = vrot.slane %v4312, %v4316
    %v4463 = vunpack.c.l.b16 %v4168
    %v4464 = vunpack.c.l.b16 %v4169
    %v4465 = vunpack.c.l.b16 %v4170
    %v4466 = vunpack.c.l.b16 %v4171
    %v4467 = vunpack.c.l.b16 %v4172
    %v4468 = vunpack.c.l.b16 %v4173
    %v4469 = vunpack.c.l.b16 %v4174
    %v4470 = vunpack.c.l.b16 %v4175
    %v4471 = vunpack.c.l.b16 %v4176
    %v4472 = vunpack.c.l.b16 %v4177
    %v4473 = vunpack.c.l.b16 %v4178
    %v4474 = vunpack.c.l.b16 %v4179
    %v4475 = vunpack.c.l.b16 %v4180
    %v4476 = vunpack.c.l.b16 %v4181
    %v4477 = vunpack.c.l.b16 %v4182
    %v4478 = vunpack.c.l.b16 %v4183
    %v4479 = vunpack.c.l.b16 %v4184
    %v4480 = vunpack.c.l.b16 %v4185
    %v4481 = vunpack.c.l.b16 %v4186
    %v4482 = vunpack.c.l.b16 %v4187
    %v4483 = vunpack.c.l.b16 %v4188
    %v4484 = vunpack.c.l.b16 %v4189
    %v4485 = vunpack.c.l.b16 %v4190
    %v4486 = vunpack.c.l.b16 %v4191
    %v4487 = vunpack.c.l.b16 %v4192
    %v4488 = vunpack.c.l.b16 %v4193
    %v4489 = vunpack.c.l.b16 %v4194
    %v4490 = vunpack.c.l.b16 %v4195
    %v4491 = vunpack.c.l.b16 %v4196
    %v4492 = vunpack.c.l.b16 %v4197
    %v4493 = vunpack.c.l.b16 %v4198
    %v4494 = vunpack.c.l.b16 %v4199
    %v4495 = vunpack.c.l.b16 %v4200
    %v4496 = vunpack.c.l.b16 %v4201
    %v4497 = vunpack.c.l.b16 %v4202
    %v4498 = vunpack.c.l.b16 %v4203
    %v4499 = vunpack.c.l.b16 %v4204
    %v4500 = vunpack.c.l.b16 %v4205
    %v4501 = vunpack.c.l.b16 %v4206
    %v4502 = vunpack.c.l.b16 %v4207
    %v4503 = vunpack.c.l.b16 %v4208
    %v4504 = vunpack.c.l.b16 %v4209
    %v4505 = vunpack.c.l.b16 %v4210
    %v4506 = vunpack.c.l.b16 %v4211
    %v4507 = vunpack.c.l.b16 %v4212
    %v4508 = vunpack.c.l.b16 %v4213
    %v4509 = vunpack.c.l.b16 %v4214
    %v4510 = vunpack.c.l.b16 %v4215
    %v4511 = vunpack.c.l.b16 %v4216
    %v4512 = vunpack.c.l.b16 %v4217
    %v4513 = vunpack.c.l.b16 %v4218
    %v4514 = vunpack.c.l.b16 %v4219
    %v4515 = vunpack.c.l.b16 %v4220
    %v4516 = vunpack.c.l.b16 %v4221
    %v4517 = vunpack.c.l.b16 %v4222
    %v4518 = vunpack.c.l.b16 %v4223
    %v4519 = vunpack.c.l.b16 %v4224
    %v4520 = vunpack.c.l.b16 %v4225
    %v4521 = vunpack.c.l.b16 %v4226
    %v4522 = vunpack.c.l.b16 %v4227
    %v4523 = vunpack.c.l.b16 %v4228
    %v4524 = vunpack.c.l.b16 %v4229
    %v4525 = vunpack.c.l.b16 %v4230
    %v4526 = vunpack.c.l.b16 %v4231
    %v4527 = vunpack.c.l.b16 %v4232
    %v4528 = vunpack.c.l.b16 %v4233
    %v4529 = vunpack.c.l.b16 %v4234
    %v4530 = vunpack.c.l.b16 %v4235
    %v4531 = vunpack.c.l.b16 %v4236
    %v4532 = vunpack.c.l.b16 %v4237
    %v4533 = vunpack.c.l.b16 %v4238
    %v4534 = vunpack.c.l.b16 %v4239
    %v4535 = vunpack.c.l.b16 %v4240
    %v4536 = vunpack.c.l.b16 %v4241
    %v4537 = vunpack.c.l.b16 %v4242
    %v4538 = vunpack.c.l.b16 %v4243
    %v4539 = vunpack.c.l.b16 %v4244
    %v4540 = vunpack.c.l.b16 %v4245
    %v4541 = vunpack.c.l.b16 %v4246
    %v4542 = vunpack.c.l.b16 %v4247
    %v4543 = vunpack.c.l.b16 %v4248
    %v4544 = vunpack.c.l.b16 %v4249
    %v4545 = vunpack.c.l.b16 %v4250
    %v4546 = vunpack.c.l.b16 %v4251
    %v4547 = vunpack.c.l.b16 %v4252
    %v4548 = vunpack.c.l.b16 %v4253
    %v4549 = vunpack.c.l.b16 %v4254
    %v4550 = vunpack.c.l.b16 %v4255
    %v4551 = vunpack.c.l.b16 %v4256
    %v4552 = vunpack.c.l.b16 %v4257
    %v4553 = vunpack.c.l.b16 %v4258
    %v4554 = vunpack.c.l.b16 %v4259
    %v4555 = vunpack.c.l.b16 %v4260
    %v4556 = vunpack.c.l.b16 %v4261
    %v4557 = vunpack.c.l.b16 %v4262
    %v4558 = vunpack.c.l.b16 %v4263
    %v4559 = vunpack.c.l.b16 %v4264
    %v4560 = vunpack.c.l.b16 %v4265
    %v4561 = vunpack.c.l.b16 %v4266
    %v4562 = vunpack.c.l.b16 %v4267
    %v4563 = vunpack.c.l.b16 %v4268
    %v4564 = vunpack.c.l.b16 %v4269
    %v4565 = vunpack.c.l.b16 %v4270
    %v4566 = vunpack.c.l.b16 %v4271
    %v4567 = vunpack.c.l.b16 %v4272
    %v4568 = vunpack.c.l.b16 %v4273
    %v4569 = vunpack.c.l.b16 %v4274
    %v4570 = vunpack.c.l.b16 %v4275
    %v4571 = vunpack.c.l.b16 %v4276
    %v4572 = vunpack.c.l.b16 %v4277
    %v4573 = vunpack.c.l.b16 %v4278
    %v4574 = vunpack.c.l.b16 %v4279
    %v4575 = vunpack.c.l.b16 %v4280
    %v4576 = vunpack.c.l.b16 %v4281
    %v4577 = vunpack.c.l.b16 %v4282
    %v4578 = vunpack.c.l.b16 %v4283
    %v4579 = vunpack.c.l.b16 %v4284
    %v4580 = vunpack.c.l.b16 %v4285
    %v4581 = vunpack.c.l.b16 %v4286
    %v4582 = vunpack.c.l.b16 %v4287
    %v4583 = vunpack.c.l.b16 %v4288
    %v4584 = vunpack.c.l.b16 %v4289
    %v4585 = vunpack.c.l.b16 %v4290
    %v4586 = vunpack.c.l.b16 %v4291
    %v4587 = vunpack.c.l.b16 %v4292
    %v4588 = vunpack.c.l.b16 %v4293
    %v4589 = vunpack.c.l.b16 %v4294
    %v4590 = vunpack.c.l.b16 %v4295
    %v4591 = vunpack.c.l.b16 %v4296
    %v4592 = vunpack.c.l.b16 %v4297
    %v4593 = vunpack.c.l.b16 %v4298
    %v4594 = vunpack.c.l.b16 %v4299
    %v4595 = vunpack.c.l.b16 %v4300
    %v4596 = vunpack.c.l.b16 %v4301
    %v4597 = vunpack.c.l.b16 %v4302
    %v4598 = vunpack.c.l.b16 %v4303
    %v4599 = vunpack.c.l.b16 %v4304
    %v4600 = vunpack.c.l.b16 %v4305
    %v4601 = vunpack.c.l.b16 %v4306
    %v4602 = vunpack.c.l.b16 %v4307
    %v4603 = vunpack.c.l.b16 %v4308
    %v4604 = vunpack.c.l.b16 %v4309
    %v4605 = vunpack.c.l.b16 %v4310
    %v4606 = vunpack.c.l.b16 %v4311
    %v4607 = vpack.c.b16 %v4464, %v4463
    %v4608 = vpack.c.b16 %v4466, %v4465
    %v4609 = vpack.c.b16 %v4468, %v4467
    %v4610 = vpack.c.b16 %v4470, %v4469
    %v4611 = vpack.c.b16 %v4472, %v4471
    %v4612 = vpack.c.b16 %v4474, %v4473
    %v4613 = vpack.c.b16 %v4476, %v4475
    %v4614 = vpack.c.b16 %v4478, %v4477
    %v4615 = vpack.c.b16 %v4480, %v4479
    %v4616 = vpack.c.b16 %v4482, %v4481
    %v4617 = vpack.c.b16 %v4484, %v4483
    %v4618 = vpack.c.b16 %v4486, %v4485
    %v4619 = vpack.c.b16 %v4488, %v4487
    %v4620 = vpack.c.b16 %v4490, %v4489
    %v4621 = vpack.c.b16 %v4492, %v4491
    %v4622 = vpack.c.b16 %v4494, %v4493
    %v4623 = vpack.c.b16 %v4496, %v4495
    %v4624 = vpack.c.b16 %v4498, %v4497
    %v4625 = vpack.c.b16 %v4500, %v4499
    %v4626 = vpack.c.b16 %v4502, %v4501
    %v4627 = vpack.c.b16 %v4504, %v4503
    %v4628 = vpack.c.b16 %v4506, %v4505
    %v4629 = vpack.c.b16 %v4508, %v4507
    %v4630 = vpack.c.b16 %v4510, %v4509
    %v4631 = vpack.c.b16 %v4512, %v4511
    %v4632 = vpack.c.b16 %v4514, %v4513
    %v4633 = vpack.c.b16 %v4516, %v4515
    %v4634 = vpack.c.b16 %v4518, %v4517
    %v4635 = vpack.c.b16 %v4520, %v4519
    %v4636 = vpack.c.b16 %v4522, %v4521
    %v4637 = vpack.c.b16 %v4524, %v4523
    %v4638 = vpack.c.b16 %v4526, %v4525
    %v4639 = vpack.c.b16 %v4528, %v4527
    %v4640 = vpack.c.b16 %v4530, %v4529
    %v4641 = vpack.c.b16 %v4532, %v4531
    %v4642 = vpack.c.b16 %v4534, %v4533
    %v4643 = vpack.c.b16 %v4536, %v4535
    %v4644 = vpack.c.b16 %v4538, %v4537
    %v4645 = vpack.c.b16 %v4540, %v4539
    %v4646 = vpack.c.b16 %v4542, %v4541
    %v4647 = vpack.c.b16 %v4544, %v4543
    %v4648 = vpack.c.b16 %v4546, %v4545
    %v4649 = vpack.c.b16 %v4548, %v4547
    %v4650 = vpack.c.b16 %v4550, %v4549
    %v4651 = vpack.c.b16 %v4552, %v4551
    %v4652 = vpack.c.b16 %v4554, %v4553
    %v4653 = vpack.c.b16 %v4556, %v4555
    %v4654 = vpack.c.b16 %v4558, %v4557
    %v4655 = vpack.c.b16 %v4560, %v4559
    %v4656 = vpack.c.b16 %v4562, %v4561
    %v4657 = vpack.c.b16 %v4564, %v4563
    %v4658 = vpack.c.b16 %v4566, %v4565
    %v4659 = vpack.c.b16 %v4568, %v4567
    %v4660 = vpack.c.b16 %v4570, %v4569
    %v4661 = vpack.c.b16 %v4572, %v4571
    %v4662 = vpack.c.b16 %v4574, %v4573
    %v4663 = vpack.c.b16 %v4576, %v4575
    %v4664 = vpack.c.b16 %v4578, %v4577
    %v4665 = vpack.c.b16 %v4580, %v4579
    %v4666 = vpack.c.b16 %v4582, %v4581
    %v4667 = vpack.c.b16 %v4584, %v4583
    %v4668 = vpack.c.b16 %v4586, %v4585
    %v4669 = vpack.c.b16 %v4588, %v4587
    %v4670 = vpack.c.b16 %v4590, %v4589
    %v4671 = vpack.c.b16 %v4592, %v4591
    %v4672 = vpack.c.b16 %v4594, %v4593
    %v4673 = vpack.c.b16 %v4596, %v4595
    %v4674 = vpack.c.b16 %v4598, %v4597
    %v4675 = vpack.c.b16 %v4600, %v4599
    %v4676 = vpack.c.b16 %v4602, %v4601
    %v4677 = vpack.c.b16 %v4604, %v4603
    %v4678 = vpack.c.b16 %v4606, %v4605
    %4751 = vmatprep.subr.bf16.mxu0 0
    %4752 = vmatpush1.bf16.msra.mxu0 %v4607
    %4753 = vmatprep.subr.bf16.mxu0 0
    %4754 = vmatpush1.bf16.msra.mxu0 %v4608
    %4755 = vmatprep.subr.bf16.mxu0 0
    %4756 = vmatpush1.bf16.msra.mxu0 %v4609
    %4757 = vmatprep.subr.bf16.mxu0 0
    %4758 = vmatpush1.bf16.msra.mxu0 %v4610
    %4759 = vmatprep.subr.bf16.mxu0 0
    %4760 = vmatpush1.bf16.msra.mxu0 %v4611
    %4761 = vmatprep.subr.bf16.mxu0 0
    %4762 = vmatpush1.bf16.msra.mxu0 %v4612
    %4763 = vmatprep.subr.bf16.mxu0 0
    %4764 = vmatpush1.bf16.msra.mxu0 %v4613
    %4765 = vmatprep.subr.bf16.mxu0 0
    %4766 = vmatpush1.bf16.msra.mxu0 %v4614
    %4767 = vmatprep.subr.bf16.mxu0 0
    %4768 = vmatpush1.bf16.msra.mxu0 %v4615
    %4769 = vmatprep.subr.bf16.mxu0 0
    %4770 = vmatpush1.bf16.msra.mxu0 %v4616
    %4771 = vmatprep.subr.bf16.mxu0 0
    %4772 = vmatpush1.bf16.msra.mxu0 %v4617
    %4773 = vmatprep.subr.bf16.mxu0 0
    %4774 = vmatpush1.bf16.msra.mxu0 %v4618
    %4775 = vmatprep.subr.bf16.mxu0 0
    %4776 = vmatpush1.bf16.msra.mxu0 %v4619
    %4777 = vmatprep.subr.bf16.mxu0 0
    %4778 = vmatpush1.bf16.msra.mxu0 %v4620
    %4779 = vmatprep.subr.bf16.mxu0 0
    %4780 = vmatpush1.bf16.msra.mxu0 %v4621
    %4781 = vmatprep.subr.bf16.mxu0 0
    %4782 = vmatpush1.bf16.msra.mxu0 %v4622
    %4783 = vmatprep.mubr.bf16.mxu0 %v4151
    %4784 = vmatmul.mubr.bf16.gmra.mrb[0].mxu0 %v4150
    %v4785 = vpop.f32.mrb[0].mxu0
    %v4786 = vadd.f32 %v4317, %v4785
    %v4787 = vpop.f32.mrb[0].mxu0
    %v4788 = vpop.f32.mrb[0].mxu0
    %v4789 = vadd.f32 %v4317, %v4788
    %v4790 = vpop.f32.mrb[0].mxu0
    %4791 = vmatprep.mubr.bf16.mxu0 %v4160
    %4792 = vmatmul.mubr.bf16.gmra.mrb[0].mxu0 %v4159
    %v4793 = vpop.f32.mrb[0].mxu0
    %v4794 = vadd.f32 %v4317, %v4793
    %v4795 = vpop.f32.mrb[0].mxu0
    %v4796 = vpop.f32.mrb[0].mxu0
    %v4797 = vpop.f32.mrb[0].mxu0
    %4798 = vdwg.mxu0
    %4799 = vmatprep.subr.bf16.mxu0 0
    %4800 = vmatpush1.bf16.msra.mxu0 %v4623
    %4801 = vmatprep.subr.bf16.mxu0 0
    %4802 = vmatpush1.bf16.msra.mxu0 %v4624
    %4803 = vmatprep.subr.bf16.mxu0 0
    %4804 = vmatpush1.bf16.msra.mxu0 %v4625
    %4805 = vmatprep.subr.bf16.mxu0 0
    %4806 = vmatpush1.bf16.msra.mxu0 %v4626
    %4807 = vmatprep.subr.bf16.mxu0 0
    %4808 = vmatpush1.bf16.msra.mxu0 %v4627
    %4809 = vmatprep.subr.bf16.mxu0 0
    %4810 = vmatpush1.bf16.msra.mxu0 %v4628
    %4811 = vmatprep.subr.bf16.mxu0 0
    %4812 = vmatpush1.bf16.msra.mxu0 %v4629
    %4813 = vmatprep.subr.bf16.mxu0 0
    %4814 = vmatpush1.bf16.msra.mxu0 %v4630
    %4815 = vmatprep.subr.bf16.mxu0 0
    %4816 = vmatpush1.bf16.msra.mxu0 %v4631
    %4817 = vmatprep.subr.bf16.mxu0 0
    %4818 = vmatpush1.bf16.msra.mxu0 %v4632
    %4819 = vmatprep.subr.bf16.mxu0 0
    %4820 = vmatpush1.bf16.msra.mxu0 %v4633
    %4821 = vmatprep.subr.bf16.mxu0 0
    %4822 = vmatpush1.bf16.msra.mxu0 %v4634
    %4823 = vmatprep.subr.bf16.mxu0 0
    %4824 = vmatpush1.bf16.msra.mxu0 %v4635
    %4825 = vmatprep.subr.bf16.mxu0 0
    %4826 = vmatpush1.bf16.msra.mxu0 %v4636
    %4827 = vmatprep.subr.bf16.mxu0 0
    %4828 = vmatpush1.bf16.msra.mxu0 %v4637
    %4829 = vmatprep.subr.bf16.mxu0 0
    %4830 = vmatpush1.bf16.msra.mxu0 %v4638
    %4831 = vmatprep.mubr.bf16.mxu0 %v4153
    %4832 = vmatmul.mubr.bf16.gmra.mrb[0].mxu0 %v4152
    %v4833 = vpop.f32.mrb[0].mxu0
    %v4834 = vadd.f32 %v4786, %v4833
    %v4835 = vpop.f32.mrb[0].mxu0
    %v4836 = vpop.f32.mrb[0].mxu0
    %v4837 = vadd.f32 %v4789, %v4836
    %v4838 = vpop.f32.mrb[0].mxu0
    %4839 = vmatprep.mubr.bf16.mxu0 %v4162
    %4840 = vmatmul.mubr.bf16.gmra.mrb[0].mxu0 %v4161
    %v4841 = vpop.f32.mrb[0].mxu0
    %v4842 = vadd.f32 %v4794, %v4841
    %v4843 = vpop.f32.mrb[0].mxu0
    %v4844 = vpop.f32.mrb[0].mxu0
    %v4845 = vpop.f32.mrb[0].mxu0
    %4846 = vdwg.mxu0
    %4847 = vmatprep.subr.bf16.mxu0 0
    %4848 = vmatpush1.bf16.msra.mxu0 %v4639
    %4849 = vmatprep.subr.bf16.mxu0 0
    %4850 = vmatpush1.bf16.msra.mxu0 %v4640
    %4851 = vmatprep.subr.bf16.mxu0 0
    %4852 = vmatpush1.bf16.msra.mxu0 %v4641
    %4853 = vmatprep.subr.bf16.mxu0 0
    %4854 = vmatpush1.bf16.msra.mxu0 %v4642
    %4855 = vmatprep.subr.bf16.mxu0 0
    %4856 = vmatpush1.bf16.msra.mxu0 %v4643
    %4857 = vmatprep.subr.bf16.mxu0 0
    %4858 = vmatpush1.bf16.msra.mxu0 %v4644
    %4859 = vmatprep.subr.bf16.mxu0 0
    %4860 = vmatpush1.bf16.msra.mxu0 %v4645
    %4861 = vmatprep.subr.bf16.mxu0 0
    %4862 = vmatpush1.bf16.msra.mxu0 %v4646
    %4863 = vmatprep.subr.bf16.mxu0 0
    %4864 = vmatpush1.bf16.msra.mxu0 %v4647
    %4865 = vmatprep.subr.bf16.mxu0 0
    %4866 = vmatpush1.bf16.msra.mxu0 %v4648
    %4867 = vmatprep.subr.bf16.mxu0 0
    %4868 = vmatpush1.bf16.msra.mxu0 %v4649
    %4869 = vmatprep.subr.bf16.mxu0 0
    %4870 = vmatpush1.bf16.msra.mxu0 %v4650
    %4871 = vmatprep.subr.bf16.mxu0 0
    %4872 = vmatpush1.bf16.msra.mxu0 %v4651
    %4873 = vmatprep.subr.bf16.mxu0 0
    %4874 = vmatpush1.bf16.msra.mxu0 %v4652
    %4875 = vmatprep.subr.bf16.mxu0 0
    %4876 = vmatpush1.bf16.msra.mxu0 %v4653
    %4877 = vmatprep.subr.bf16.mxu0 0
    %4878 = vmatpush1.bf16.msra.mxu0 %v4654
    %4879 = vmatprep.mubr.bf16.mxu0 %v4155
    %4880 = vmatmul.mubr.bf16.gmra.mrb[0].mxu0 %v4154
    %v4881 = vpop.f32.mrb[0].mxu0
    %v4882 = vadd.f32 %v4834, %v4881
    %v4883 = vpop.f32.mrb[0].mxu0
    %v4884 = vpop.f32.mrb[0].mxu0
    %v4885 = vadd.f32 %v4837, %v4884
    %v4886 = vpop.f32.mrb[0].mxu0
    %4887 = vmatprep.mubr.bf16.mxu0 %v4164
    %4888 = vmatmul.mubr.bf16.gmra.mrb[0].mxu0 %v4163
    %v4889 = vpop.f32.mrb[0].mxu0
    %v4890 = vadd.f32 %v4842, %v4889
    %v4891 = vpop.f32.mrb[0].mxu0
    %v4892 = vpop.f32.mrb[0].mxu0
    %v4893 = vpop.f32.mrb[0].mxu0
    %4894 = vdwg.mxu0
    %4895 = vmatprep.subr.bf16.mxu0 0
    %4896 = vmatpush1.bf16.msra.mxu0 %v4655
    %4897 = vmatprep.subr.bf16.mxu0 0
    %4898 = vmatpush1.bf16.msra.mxu0 %v4656
    %4899 = vmatprep.subr.bf16.mxu0 0
    %4900 = vmatpush1.bf16.msra.mxu0 %v4657
    %4901 = vmatprep.subr.bf16.mxu0 0
    %4902 = vmatpush1.bf16.msra.mxu0 %v4658
    %4903 = vmatprep.subr.bf16.mxu0 0
    %4904 = vmatpush1.bf16.msra.mxu0 %v4659
    %4905 = vmatprep.subr.bf16.mxu0 0
    %4906 = vmatpush1.bf16.msra.mxu0 %v4660
    %4907 = vmatprep.subr.bf16.mxu0 0
    %4908 = vmatpush1.bf16.msra.mxu0 %v4661
    %4909 = vmatprep.subr.bf16.mxu0 0
    %4910 = vmatpush1.bf16.msra.mxu0 %v4662
    %4911 = vmatprep.subr.bf16.mxu0 0
    %4912 = vmatpush1.bf16.msra.mxu0 %v4663
    %4913 = vmatprep.subr.bf16.mxu0 0
    %4914 = vmatpush1.bf16.msra.mxu0 %v4664
    %4915 = vmatprep.subr.bf16.mxu0 0
    %4916 = vmatpush1.bf16.msra.mxu0 %v4665
    %4917 = vmatprep.subr.bf16.mxu0 0
    %4918 = vmatpush1.bf16.msra.mxu0 %v4666
    %4919 = vmatprep.subr.bf16.mxu0 0
    %4920 = vmatpush1.bf16.msra.mxu0 %v4667
    %4921 = vmatprep.subr.bf16.mxu0 0
    %4922 = vmatpush1.bf16.msra.mxu0 %v4668
    %4923 = vmatprep.subr.bf16.mxu0 0
    %4924 = vmatpush1.bf16.msra.mxu0 %v4669
    %4925 = vmatprep.subr.bf16.mxu0 0
    %4926 = vmatpush1.bf16.msra.mxu0 %v4670
    %4927 = vmatprep.mubr.bf16.mxu0 %v4157
    %4928 = vmatmul.mubr.bf16.gmra.mrb[0].mxu0 %v4156
    %v4929 = vpop.f32.mrb[0].mxu0
    %v4930 = vadd.f32 %v4882, %v4929
    %v4931 = vpop.f32.mrb[0].mxu0
    %v4932 = vpop.f32.mrb[0].mxu0
    %v4933 = vadd.f32 %v4885, %v4932
    %v4934 = vpop.f32.mrb[0].mxu0
    %4935 = vmatprep.mubr.bf16.mxu0 %v4166
    %4936 = vmatmul.mubr.bf16.gmra.mrb[0].mxu0 %v4165
    %v4937 = vpop.f32.mrb[0].mxu0
    %v4938 = vadd.f32 %v4890, %v4937
    %v4939 = vpop.f32.mrb[0].mxu0
    %v4940 = vpop.f32.mrb[0].mxu0
    %v4941 = vpop.f32.mrb[0].mxu0
    %4942 = vdwg.mxu0
    %4943 = vmatprep.subr.bf16.mxu0 0
    %4944 = vmatpush1.bf16.msra.mxu0 %v4671
    %4945 = vmatprep.subr.bf16.mxu0 0
    %4946 = vmatpush1.bf16.msra.mxu0 %v4672
    %4947 = vmatprep.subr.bf16.mxu0 0
    %4948 = vmatpush1.bf16.msra.mxu0 %v4673
    %4949 = vmatprep.subr.bf16.mxu0 0
    %4950 = vmatpush1.bf16.msra.mxu0 %v4674
    %4951 = vmatprep.subr.bf16.mxu0 0
    %4952 = vmatpush1.bf16.msra.mxu0 %v4675
    %4953 = vmatprep.subr.bf16.mxu0 0
    %4954 = vmatpush1.bf16.msra.mxu0 %v4676
    %4955 = vmatprep.subr.bf16.mxu0 0
    %4956 = vmatpush1.bf16.msra.mxu0 %v4677
    %4957 = vmatprep.subr.bf16.mxu0 0
    %4958 = vmatpush1.bf16.msra.mxu0 %v4678
    %4959 = vmatprep.subr.bf16.mxu0 0
    %4960 = vmatpush1.bf16.msra.mxu0 0
    %4961 = vmatprep.subr.bf16.mxu0 0
    %4962 = vmatpush1.bf16.msra.mxu0 0
    %4963 = vmatprep.subr.bf16.mxu0 0
    %4964 = vmatpush1.bf16.msra.mxu0 0
    %4965 = vmatprep.subr.bf16.mxu0 0
    %4966 = vmatpush1.bf16.msra.mxu0 0
    %4967 = vmatprep.subr.bf16.mxu0 0
    %4968 = vmatpush1.bf16.msra.mxu0 0
    %4969 = vmatprep.subr.bf16.mxu0 0
    %4970 = vmatpush1.bf16.msra.mxu0 0
    %4971 = vmatprep.subr.bf16.mxu0 0
    %4972 = vmatpush1.bf16.msra.mxu0 0
    %4973 = vmatprep.subr.bf16.mxu0 0
    %4974 = vmatpush1.bf16.msra.mxu0 0
    %4975 = vmatprep.mubr.bf16.mxu0 0
    %4976 = vmatmul.mubr.bf16.gmra.mrb[0].mxu0 %v4158
    %v4977 = vpop.f32.mrb[0].mxu0
    %v4978 = vadd.f32 %v4930, %v4977
    %v4979 = vpop.f32.mrb[0].mxu0
    %v4980 = vpop.f32.mrb[0].mxu0
    %v4981 = vadd.f32 %v4933, %v4980
    %v4982 = vpop.f32.mrb[0].mxu0
    %4983 = vmatprep.mubr.bf16.mxu0 0
    %4984 = vmatmul.mubr.bf16.gmra.mrb[0].mxu0 %v4167
    %v4985 = vpop.f32.mrb[0].mxu0
    %v4986 = vadd.f32 %v4938, %v4985
    %v4987 = vpop.f32.mrb[0].mxu0
    %v4988 = vpop.f32.mrb[0].mxu0
    %v4989 = vpop.f32.mrb[0].mxu0
    %4990 = vdwg.mxu0
    %v4991 = vmax.f32 %v4978, 0.0
    %v4992 = vmax.f32 %v4981, 0.0
    %v4993 = vmax.f32 %v4986, 0.0
    %v4995 = vrot.slane %v4991, 2
    %v4997 = vadd.f32 %v4991, %v4995
    %v4998 = vrot.slane %v4991, 4
    %v5000 = vadd.f32 %v4997, %v4998
    %v5001 = vrot.slane %v4991, 6
    %v5003 = vadd.f32 %v5000, %v5001
    %v5004 = vadd.f32 %v5003, %v4992
    %v5006 = vrot.slane %v4992, 2
    %v5008 = vadd.f32 %v5004, %v5006
    %v5009 = vrot.slane %v4992, 4
    %v5011 = vadd.f32 %v5008, %v5009
    %v5012 = vrot.slane %v4992, 6
    %v5014 = vadd.f32 %v5011, %v5012
    %v5015 = vadd.f32 %v5014, %v4993
    %v5016 = vld [vmem:[%s5] sm:$0xff]
    %v5017 = vld [vmem:[%s5 + $0x8] sm:$0xff]
    %v5018 = vld [vmem:[%s5 + $0x10] sm:$0xff]
    %v5019 = vld [vmem:[%s5 + $0x18] sm:$0xff]
    %v5020 = vld [vmem:[%s5 + $0x20] sm:$0xff]
    %v5021 = vld [vmem:[%s5 + $0x28] sm:$0xff]
    %v5022 = vld [vmem:[%s5 + $0x30] sm:$0xff]
    %v5023 = vld [vmem:[%s5 + $0x38] sm:$0xff]
    %v5024 = vld [vmem:[%s5 + $0x40] sm:$0xff]
    %v5025 = vld [vmem:[%s5 + $0x48] sm:$0xff]
    %v5026 = vld [vmem:[%s5 + $0x50] sm:$0xff]
    %v5027 = vld [vmem:[%s5 + $0x58] sm:$0xff]
    %v5028 = vld [vmem:[%s5 + $0x60] sm:$0xff]
    %v5029 = vld [vmem:[%s5 + $0x68] sm:$0xff]
    %v5030 = vld [vmem:[%s5 + $0x70] sm:$0xff]
    %v5031 = vld [vmem:[%s5 + $0x78] sm:$0xff]
    %v5032 = vld [vmem:[%s6] sm:$0x1]
    %v5034 = vlaneseq
    %v5035 = vshrl.u32 %v5034, 7
    %v5036 = vsub.s32 0, %v5035
    %v5037 = vrot.slane %v5032, %v5036
    %5039 = vmatprep.subr.mxu0 0.0
    %5040 = vmatpush1.msra.mxu0 %v5016
    %5041 = vmatprep.subr.mxu0 0.0
    %5042 = vmatpush1.msra.mxu0 %v5017
    %5043 = vmatprep.subr.mxu0 0.0
    %5044 = vmatpush1.msra.mxu0 %v5018
    %5045 = vmatprep.subr.mxu0 0.0
    %5046 = vmatpush1.msra.mxu0 %v5019
    %5047 = vmatprep.subr.mxu0 0.0
    %5048 = vmatpush1.msra.mxu0 %v5020
    %5049 = vmatprep.subr.mxu0 0.0
    %5050 = vmatpush1.msra.mxu0 %v5021
    %5051 = vmatprep.subr.mxu0 0.0
    %5052 = vmatpush1.msra.mxu0 %v5022
    %5053 = vmatprep.subr.mxu0 0.0
    %5054 = vmatpush1.msra.mxu0 %v5023
    %5055 = vmatprep.subr.mxu0 0.0
    %5056 = vmatpush1.msra.mxu0 %v5024
    %5057 = vmatprep.subr.mxu0 0.0
    %5058 = vmatpush1.msra.mxu0 %v5025
    %5059 = vmatprep.subr.mxu0 0.0
    %5060 = vmatpush1.msra.mxu0 %v5026
    %5061 = vmatprep.subr.mxu0 0.0
    %5062 = vmatpush1.msra.mxu0 %v5027
    %5063 = vmatprep.subr.mxu0 0.0
    %5064 = vmatpush1.msra.mxu0 %v5028
    %5065 = vmatprep.subr.mxu0 0.0
    %5066 = vmatpush1.msra.mxu0 %v5029
    %5067 = vmatprep.subr.mxu0 0.0
    %5068 = vmatpush1.msra.mxu0 %v5030
    %5069 = vmatprep.subr.mxu0 0.0
    %5070 = vmatpush1.msra.mxu0 %v5031
    %5071 = vmatprep.subr.mxu0 0.0
    %5072 = vmatpush1.msra.mxu0 0.0
    %5073 = vmatprep.subr.mxu0 0.0
    %5074 = vmatpush1.msra.mxu0 0.0
    %5075 = vmatprep.subr.mxu0 0.0
    %5076 = vmatpush1.msra.mxu0 0.0
    %5077 = vmatprep.subr.mxu0 0.0
    %5078 = vmatpush1.msra.mxu0 0.0
    %5079 = vmatprep.subr.mxu0 0.0
    %5080 = vmatpush1.msra.mxu0 0.0
    %5081 = vmatprep.subr.mxu0 0.0
    %5082 = vmatpush1.msra.mxu0 0.0
    %5083 = vmatprep.subr.mxu0 0.0
    %5084 = vmatpush1.msra.mxu0 0.0
    %5085 = vmatprep.subr.mxu0 0.0
    %5086 = vmatpush1.msra.mxu0 0.0
    %5087 = vmatprep.subr.mxu0 0.0
    %5088 = vmatpush1.msra.mxu0 0.0
    %5089 = vmatprep.subr.mxu0 0.0
    %5090 = vmatpush1.msra.mxu0 0.0
    %5091 = vmatprep.subr.mxu0 0.0
    %5092 = vmatpush1.msra.mxu0 0.0
    %5093 = vmatprep.subr.mxu0 0.0
    %5094 = vmatpush1.msra.mxu0 0.0
    %5095 = vmatprep.subr.mxu0 0.0
    %5096 = vmatpush1.msra.mxu0 0.0
    %5097 = vmatprep.subr.mxu0 0.0
    %5098 = vmatpush1.msra.mxu0 0.0
    %5099 = vmatprep.subr.mxu0 0.0
    %5100 = vmatpush1.msra.mxu0 0.0
    %5101 = vmatprep.subr.mxu0 0.0
    %5102 = vmatpush1.msra.mxu0 0.0
    %5103 = vmatprep.mubr.f32.mxu0 0.0
    %5104 = vmatmul.mubr.f32.gmra.mrb[0].mxu0 %v5015
    %v5105 = vpop.f32.mrb[0].mxu0
    %v5106 = vadd.f32 %v5037, %v5105
    %v5107 = vpop.f32.mrb[0].mxu0
    %5108 = vdwg.mxu0
    %5109 = vst [vmem:[#allocation4] sm:$0x3] %v5106
    // Predicated region
    $region30: #{audio_classifier_forward.1} parent=1 // pred_check
      _
    $region31: #{audio_classifier_forward.1} parent=1 // pred_check_branch
      %5111 = sbr.rel (0) target = $region33
    $region32: #{audio_classifier_forward.1} parent=1 // pred_region
      %s5113 = ssub.s32 32, 32
      %5114 = vsyncadd [#allocation5], %s5113
      %s5116 = sshll.u32 [#allocation4], 4
      %s5117 = int_to_ptr.vmem [resolvable:$true] %s5116
      %5119 = dma.vmem_to_hbm [thread:$0]  %s5117, 32, %s7, [#allocation5]
    $region33: #{audio_classifier_forward.1} parent=1 // pred_fallthru
      _
    // Predicated region
    $region34: #{audio_classifier_forward.1} parent=1 // pred_check
      _
    $region35: #{audio_classifier_forward.1} parent=1 // pred_check_branch
      %5121 = sbr.rel (0) target = $region37
    $region36: #{audio_classifier_forward.1} parent=1 // pred_region
      %5122 = dma.done [#allocation5], 32
    $region37: #{audio_classifier_forward.1} parent=1 // pred_fallthru
      _
    %5123 = vsyncpa [#allocation5], 1

</llo_original>
